<compile_context>
chip_gen: v5e
topology: v5e:2x2
jax: 0.10.0
libtpu: 0.0.40
codegen_flags: <defaults>
</compile_context>

<pallas_src>
import jax
import jax.numpy as jnp
from jax import lax
from jax.experimental import pallas as pl
from jax.experimental.pallas import tpu as pltpu


# ---------------------------------------------------------------------------
# Pallas kernel
# ---------------------------------------------------------------------------
def _dfc_kernel(x_ref,                       # (2, H, Wp, C1)  W-phase-split, channels-last
                w1_ref, b1_ref,              # (C1, C2), (1, C2)    short_conv 1x1 (+BN1)
                wW_ref, b2_ref,              # (5, 1, C2), (1, C2)  short_conv dw(1,5) (+BN2)
                wH_ref, b3_ref,              # (5, 1, C2), (1, C2)  short_conv dw(5,1) (+BN3)
                wg1_ref, bg1_ref,            # (C1, Cg), (1, Cg)    ghost cv1 1x1 (+BN)
                wg2_ref, bg2_ref,            # (25, 1, Cg), (1, Cg) ghost cv2 dw5x5 (+BN)
                out_ref,                     # (2, H, Wp, C2)
                ypad_ref,                    # scratch (2, H+4, Wp+2, Cg)  zero-padded y
                s1_ref,                      # scratch (Hp, Wp+4, C2)
                s2_ref):                     # scratch (Hp+4, Wp, C2)
    _, H, Wp, C1 = x_ref.shape
    C2 = out_ref.shape[-1]
    Cg = C2 // 2
    Hp = H // 2
    f32 = jnp.float32
    hi = jax.lax.Precision.HIGHEST

    def mm(a, w):                            # flat 2D MXU matmul, f32 accumulation
        return jnp.dot(a, w, preferred_element_type=f32, precision=hi)

    x = x_ref[...]                           # (2, H, Wp, C1), kept in input dtype

    # ------------------------------ gate branch ------------------------------
    # avg_pool2d(2,2): W-pairs are the two phases, H-pairs via a free leading split.
    xr = x.reshape(2, Hp, 2, Wp, C1)
    xp = (xr[0, :, 0] + xr[0, :, 1] + xr[1, :, 0] + xr[1, :, 1]).astype(f32) * 0.25

    r1 = mm(xp.reshape(Hp * Wp, C1), w1_ref[...]) + b1_ref[...]       # 1x1 conv (+BN1)
    r1 = r1.reshape(Hp, Wp, C2)

    # depthwise (1,5), padding (0,2): taps are static slices of a zero-padded scratch
    s1_ref[...] = jnp.zeros(s1_ref.shape, s1_ref.dtype)
    s1_ref[:, 2:2 + Wp, :] = r1.astype(s1_ref.dtype)
    wW = wW_ref[...].astype(f32)
    t = [s1_ref[:, k:k + Wp, :].astype(f32) * wW[k] for k in range(5)]
    r2 = (t[0] + t[1]) + (t[2] + t[3]) + t[4] + b2_ref[...].astype(f32)

    # depthwise (5,1), padding (2,0): shifts along the (free) leading axis
    s2_ref[...] = jnp.zeros(s2_ref.shape, s2_ref.dtype)
    s2_ref[2:2 + Hp, :, :] = r2.astype(s2_ref.dtype)
    wH = wH_ref[...].astype(f32)
    t = [s2_ref[j:j + Hp, :, :].astype(f32) * wH[j] for j in range(5)]
    r3 = (t[0] + t[1]) + (t[2] + t[3]) + t[4] + b3_ref[...].astype(f32)

    gate = 1.0 / (1.0 + jnp.exp(-r3))                                 # (Hp, Wp, C2)
    # nearest x2 upsample: H via leading-axis broadcast; W is implicit (phase layout)
    g_up = jnp.broadcast_to(gate[:, None], (Hp, 2, Wp, C2)).reshape(H, Wp, C2)
    g_lo = g_up[:, :, :Cg]                   # gates y  (first ghost half)
    g_hi = g_up[:, :, Cg:]                   # gates y2 (second ghost half)

    # ------------------------------ ghost branch -----------------------------
    # cv1 (1x1 conv + BN) on both W-phases as one flat matmul.
    y = mm(x.reshape(2 * H * Wp, C1), wg1_ref[...]) + bg1_ref[...]
    y = y.reshape(2, H, Wp, Cg)

    ypad_ref[...] = jnp.zeros(ypad_ref.shape, ypad_ref.dtype)
    ypad_ref[:, 2:2 + H, 1:1 + Wp, :] = y.astype(ypad_ref.dtype)

    wg2 = wg2_ref[...].astype(f32)           # (25, 1, Cg)
    bg2 = bg2_ref[...].astype(f32)

    for p in range(2):                       # output W-parity
        # cv2: 5x5 depthwise, padding 2, taps read in phase space; 2 partial accumulators
        acc = [jnp.zeros((H, Wp, Cg), f32), jnp.zeros((H, Wp, Cg), f32)]
        for kh in range(5):
            for kw in range(5):
                d = kw - 2
                q = (p + d) % 2              # phase of the tapped input column
                woff = (p + d - q) // 2      # its offset in phase coordinates (-1..1)
                tap = ypad_ref[q, kh:kh + H, 1 + woff:1 + woff + Wp, :].astype(f32)
                acc[(kh * 5 + kw) % 2] += tap * wg2[kh * 5 + kw]
        y2_p = acc[0] + acc[1] + bg2                                   # (H, Wp, Cg)
        y_p = ypad_ref[p, 2:2 + H, 1:1 + Wp, :].astype(f32)
        out_p = jnp.concatenate([y_p * g_lo, y2_p * g_hi], axis=-1)    # (H, Wp, C2)
        out_ref[p] = out_p.astype(out_ref.dtype)


# ---------------------------------------------------------------------------
# Wrapper: BN folding, phase-split layout glue, pallas_call
# ---------------------------------------------------------------------------
def _fold_bn(gamma, beta, mean, var, eps=1e-5):
    s = gamma / jnp.sqrt(var + eps)
    return s, beta - mean * s


def dfc_forward_pallas(x_nchw, params):
    """DFC.forward (module defaults k=1, s=1). x: (N, C1, H, W) -> (N, C2, H, W)."""
    # TODO(synk): short_conv's first conv is only implemented for k=1, s=1 (the module
    # defaults); a general k/s variant would need an extra im2col / strided path.
    N, C1, H, W = x_nchw.shape
    assert H % 2 == 0 and W % 2 == 0, "avg_pool2d(2,2) + exact x2 nearest upsample path"
    C2 = params["w_sc1"].shape[0]
    assert C2 % 2 == 0
    Cg = C2 // 2
    Hp, Wp = H // 2, W // 2
    dtype = x_nchw.dtype
    f32 = jnp.float32

    # ---- fold the five BatchNorms into conv weights / biases (wrapper glue) ----
    s1, t1 = _fold_bn(*params["bn1"])
    s2, t2 = _fold_bn(*params["bn2"])
    s3, t3 = _fold_bn(*params["bn3"])
    sg1, tg1 = _fold_bn(*params["bng1"])
    sg2, tg2 = _fold_bn(*params["bng2"])

    w1 = (params["w_sc1"] * s1[:, None]).T.astype(f32)                        # (C1, C2)
    b1 = t1.reshape(1, C2).astype(f32)
    wW = (params["w_dw_w"] * s2[:, None]).T.reshape(5, 1, C2).astype(f32)
    b2 = t2.reshape(1, C2).astype(f32)
    wH = (params["w_dw_h"] * s3[:, None]).T.reshape(5, 1, C2).astype(f32)
    b3 = t3.reshape(1, C2).astype(f32)
    wg1 = (params["w_g1"] * sg1[:, None]).T.astype(f32)                       # (C1, Cg)
    bg1 = tg1.reshape(1, Cg).astype(f32)
    wg2 = (params["w_g2"].reshape(Cg, 25) * sg2[:, None]).T.reshape(25, 1, Cg).astype(f32)
    bg2 = tg2.reshape(1, Cg).astype(f32)

    # ---- fold the W-phase split (w = 2*wp + p) into the NCHW -> kernel-layout
    #      transpose we have to do anyway: (N, C1, H, W) -> (N, 2, H, Wp, C1). ----
    xph = jnp.transpose(x_nchw.reshape(N, C1, H, Wp, 2), (0, 4, 2, 3, 1))

    def const_spec(shape):
        r = len(shape)
        return pl.BlockSpec(shape, lambda n, _r=r: (0,) * _r)

    in_specs = [
        pl.BlockSpec((None, 2, H, Wp, C1), lambda n: (n, 0, 0, 0, 0)),
        const_spec((C1, C2)), const_spec((1, C2)),
        const_spec((5, 1, C2)), const_spec((1, C2)),
        const_spec((5, 1, C2)), const_spec((1, C2)),
        const_spec((C1, Cg)), const_spec((1, Cg)),
        const_spec((25, 1, Cg)), const_spec((1, Cg)),
    ]
    out_spec = pl.BlockSpec((None, 2, H, Wp, C2), lambda n: (n, 0, 0, 0, 0))

    out = pl.pallas_call(
        _dfc_kernel,
        out_shape=jax.ShapeDtypeStruct((N, 2, H, Wp, C2), dtype),
        grid_spec=pltpu.PrefetchScalarGridSpec(
            num_scalar_prefetch=0,
            grid=(N,),
            in_specs=in_specs,
            out_specs=out_spec,
            scratch_shapes=[
                pltpu.VMEM((2, H + 4, Wp + 2, Cg), dtype),   # zero-padded y (both phases)
                pltpu.VMEM((Hp, Wp + 4, C2), f32),           # padded dw(1,5) input
                pltpu.VMEM((Hp + 4, Wp, C2), f32),           # padded dw(5,1) input
            ],
        ),
        compiler_params=pltpu.CompilerParams(
            dimension_semantics=("parallel",),
            vmem_limit_bytes=32 * 1024 * 1024,
        ),
    )(xph, w1, b1, wW, b2, wH, b3, wg1, bg1, wg2, bg2)

    # (N, 2, H, Wp, C2) -> (N, C2, H, W): a single transpose+reshape pass (same cost
    # as the plain channels-last -> NCHW transpose the module interface needs anyway).
    return jnp.transpose(out, (0, 4, 2, 3, 1)).reshape(N, C2, H, W)


# ---------------------------------------------------------------------------
# Pure-JAX reference (follows the PyTorch DFC.forward op-for-op, NCHW)
# ---------------------------------------------------------------------------
def dfc_reference(x, params):
    N, C1, H, W = x.shape
    C2 = params["w_sc1"].shape[0]
    Cg = C2 // 2
    hp = lax.Precision.HIGHEST

    def conv(v, w, pad, groups=1):
        return lax.conv_general_dilated(
            v, w, window_strides=(1, 1), padding=pad,
            dimension_numbers=("NCHW", "OIHW", "NCHW"),
            feature_group_count=groups, precision=hp)

    def bn(v, gamma, beta, mean, var, eps=1e-5):
        s = gamma / jnp.sqrt(var + eps)
        t = beta - mean * s
        return v * s[None, :, None, None] + t[None, :, None, None]

    # short_conv(F.avg_pool2d(x, 2, 2))
    xp = x.reshape(N, C1, H // 2, 2, W // 2, 2).mean(axis=(3, 5))
    r = bn(conv(xp, params["w_sc1"][:, :, None, None], [(0, 0), (0, 0)]), *params["bn1"])
    r = bn(conv(r, params["w_dw_w"][:, None, None, :], [(0, 0), (2, 2)], groups=C2), *params["bn2"])
    r = bn(conv(r, params["w_dw_h"][:, None, :, None], [(2, 2), (0, 0)], groups=C2), *params["bn3"])

    # GhostConv (act=False)
    y = bn(conv(x, params["w_g1"][:, :, None, None], [(0, 0), (0, 0)]), *params["bng1"])
    y2 = bn(conv(y, params["w_g2"][:, None, :, :], [(2, 2), (2, 2)], groups=Cg), *params["bng2"])
    ghost = jnp.concatenate([y, y2], axis=1)

    gate = jax.nn.sigmoid(r)
    gate_up = jnp.repeat(jnp.repeat(gate, 2, axis=2), 2, axis=3)   # nearest, exact x2
    return ghost[:, :C2] * gate_up


if __name__ == "__main__":
    key = jax.random.PRNGKey(0)
    N, C1, C2, H, W = 2, 8, 8, 16, 16
    Cg = C2 // 2
    ks = jax.random.split(key, 11)

    def rand_bn(k, c):
        k1, k2, k3, k4 = jax.random.split(k, 4)
        return (jax.random.uniform(k1, (c,), jnp.float32, 0.5, 1.5),
                0.1 * jax.random.normal(k2, (c,), jnp.float32),
                0.1 * jax.random.normal(k3, (c,), jnp.float32),
                jax.random.uniform(k4, (c,), jnp.float32, 0.5, 1.5))

    params = {
        "w_sc1": 0.3 * jax.random.normal(ks[1], (C2, C1), jnp.float32),
        "bn1": rand_bn(ks[2], C2),
        "w_dw_w": 0.3 * jax.random.normal(ks[3], (C2, 5), jnp.float32),
        "bn2": rand_bn(ks[4], C2),
        "w_dw_h": 0.3 * jax.random.normal(ks[5], (C2, 5), jnp.float32),
        "bn3": rand_bn(ks[6], C2),
        "w_g1": 0.3 * jax.random.normal(ks[7], (Cg, C1), jnp.float32),
        "bng1": rand_bn(ks[8], Cg),
        "w_g2": 0.3 * jax.random.normal(ks[9], (Cg, 5, 5), jnp.float32),
        "bng2": rand_bn(ks[10], Cg),
    }
    x = jax.random.normal(ks[0], (N, C1, H, W), jnp.float32)

    out = jax.block_until_ready(dfc_forward_pallas(x, params))
    ref = jax.block_until_ready(dfc_reference(x, params))

    assert out.shape == (N, C2, H, W)
    assert out.dtype == x.dtype
    max_err = float(jnp.max(jnp.abs(out - ref)))
    assert jnp.allclose(out, ref, atol=2e-3, rtol=2e-3), max_err

    print("KERNEL_OK")
</pallas_src>

<mosaic_0001>
module attributes {stable_mosaic.version = 11 : i64} {
  func.func @_dfc_kernel(%arg0: i32, %arg1: memref<1x2x16x8x8xf32, #tpu.memory_space<vmem>>, %arg2: memref<8x8xf32, #tpu.memory_space<vmem>>, %arg3: memref<1x8xf32, #tpu.memory_space<vmem>>, %arg4: memref<5x1x8xf32, #tpu.memory_space<vmem>>, %arg5: memref<1x8xf32, #tpu.memory_space<vmem>>, %arg6: memref<5x1x8xf32, #tpu.memory_space<vmem>>, %arg7: memref<1x8xf32, #tpu.memory_space<vmem>>, %arg8: memref<8x4xf32, #tpu.memory_space<vmem>>, %arg9: memref<1x4xf32, #tpu.memory_space<vmem>>, %arg10: memref<25x1x4xf32, #tpu.memory_space<vmem>>, %arg11: memref<1x4xf32, #tpu.memory_space<vmem>>, %arg12: memref<1x2x16x8x8xf32, #tpu.memory_space<vmem>>, %arg13: memref<2x20x10x4xf32, #tpu.memory_space<vmem>>, %arg14: memref<8x12x8xf32, #tpu.memory_space<vmem>>, %arg15: memref<12x8x8xf32, #tpu.memory_space<vmem>>) attributes {dimension_semantics = [#tpu.dimension_semantics<parallel>], iteration_bounds = array<i64: 2>, scalar_prefetch = 0 : i64, scratch_operands = 3 : i64, tpu.core_type = #tpu.core_type<tc>, window_params = [{transform_indices = @transform_0, window_bounds = array<i64: 1, 2, 16, 8, 8>}, {pipeline_mode = #tpu.pipeline_mode<synchronous>, transform_indices = @transform_1, window_bounds = array<i64: 8, 8>}, {pipeline_mode = #tpu.pipeline_mode<synchronous>, transform_indices = @transform_2, window_bounds = array<i64: 1, 8>}, {pipeline_mode = #tpu.pipeline_mode<synchronous>, transform_indices = @transform_3, window_bounds = array<i64: 5, 1, 8>}, {pipeline_mode = #tpu.pipeline_mode<synchronous>, transform_indices = @transform_4, window_bounds = array<i64: 1, 8>}, {pipeline_mode = #tpu.pipeline_mode<synchronous>, transform_indices = @transform_5, window_bounds = array<i64: 5, 1, 8>}, {pipeline_mode = #tpu.pipeline_mode<synchronous>, transform_indices = @transform_6, window_bounds = array<i64: 1, 8>}, {pipeline_mode = #tpu.pipeline_mode<synchronous>, transform_indices = @transform_7, window_bounds = array<i64: 8, 4>}, {pipeline_mode = #tpu.pipeline_mode<synchronous>, transform_indices = @transform_8, window_bounds = array<i64: 1, 4>}, {pipeline_mode = #tpu.pipeline_mode<synchronous>, transform_indices = @transform_9, window_bounds = array<i64: 25, 1, 4>}, {pipeline_mode = #tpu.pipeline_mode<synchronous>, transform_indices = @transform_10, window_bounds = array<i64: 1, 4>}, {transform_indices = @transform_11, window_bounds = array<i64: 1, 2, 16, 8, 8>}]} {
    %c0 = arith.constant 0 : index
    %c0_0 = arith.constant 0 : index
    %c0_1 = arith.constant 0 : index
    %c0_2 = arith.constant 0 : index
    %c0_3 = arith.constant 0 : index
    %0 = vector.load %arg1[%c0, %c0_0, %c0_1, %c0_2, %c0_3] : memref<1x2x16x8x8xf32, #tpu.memory_space<vmem>>, vector<1x2x16x8x8xf32>
    %1 = vector.shape_cast %0 : vector<1x2x16x8x8xf32> to vector<2x16x8x8xf32>
    %2 = vector.shape_cast %1 : vector<2x16x8x8xf32> to vector<2x8x2x8x8xf32>
    %3 = vector.extract_strided_slice %2 {offsets = [0, 0, 0, 0, 0], sizes = [1, 8, 1, 8, 8], strides = [1, 1, 1, 1, 1]} : vector<2x8x2x8x8xf32> to vector<1x8x1x8x8xf32>
    %4 = vector.shape_cast %3 : vector<1x8x1x8x8xf32> to vector<8x8x8xf32>
    %5 = vector.extract_strided_slice %2 {offsets = [0, 0, 1, 0, 0], sizes = [1, 8, 1, 8, 8], strides = [1, 1, 1, 1, 1]} : vector<2x8x2x8x8xf32> to vector<1x8x1x8x8xf32>
    %6 = vector.shape_cast %5 : vector<1x8x1x8x8xf32> to vector<8x8x8xf32>
    %7 = arith.addf %4, %6 : vector<8x8x8xf32>
    %8 = vector.extract_strided_slice %2 {offsets = [1, 0, 0, 0, 0], sizes = [1, 8, 1, 8, 8], strides = [1, 1, 1, 1, 1]} : vector<2x8x2x8x8xf32> to vector<1x8x1x8x8xf32>
    %9 = vector.shape_cast %8 : vector<1x8x1x8x8xf32> to vector<8x8x8xf32>
    %10 = arith.addf %7, %9 : vector<8x8x8xf32>
    %11 = vector.extract_strided_slice %2 {offsets = [1, 0, 1, 0, 0], sizes = [1, 8, 1, 8, 8], strides = [1, 1, 1, 1, 1]} : vector<2x8x2x8x8xf32> to vector<1x8x1x8x8xf32>
    %12 = vector.shape_cast %11 : vector<1x8x1x8x8xf32> to vector<8x8x8xf32>
    %13 = arith.addf %10, %12 : vector<8x8x8xf32>
    %cst = arith.constant 2.500000e-01 : f32
    %14 = vector.broadcast %cst : f32 to vector<8x8x8xf32>
    %15 = arith.mulf %13, %14 : vector<8x8x8xf32>
    %16 = vector.shape_cast %15 : vector<8x8x8xf32> to vector<64x8xf32>
    %c0_4 = arith.constant 0 : index
    %c0_5 = arith.constant 0 : index
    %17 = vector.load %arg2[%c0_4, %c0_5] : memref<8x8xf32, #tpu.memory_space<vmem>>, vector<8x8xf32>
    %cst_6 = arith.constant dense<0.000000e+00> : vector<64x8xf32>
    %18 = tpu.matmul %16, %17, %cst_6 {dimension_numbers = #tpu.dot_dimension_numbers<[1], [0], [0], [1], [0, 0, 1, 1], [], []>, precision = #tpu.contract_precision<fp32>} : vector<64x8xf32>, vector<8x8xf32>, vector<64x8xf32> -> vector<64x8xf32>
    %c0_7 = arith.constant 0 : index
    %c0_8 = arith.constant 0 : index
    %19 = vector.load %arg3[%c0_7, %c0_8] : memref<1x8xf32, #tpu.memory_space<vmem>>, vector<1x8xf32>
    %20 = vector.broadcast %19 : vector<1x8xf32> to vector<64x8xf32>
    %21 = arith.addf %18, %20 : vector<64x8xf32>
    %22 = vector.shape_cast %21 : vector<64x8xf32> to vector<8x8x8xf32>
    %cst_9 = arith.constant 0.000000e+00 : f32
    %23 = vector.broadcast %cst_9 : f32 to vector<8x12x8xf32>
    %c0_10 = arith.constant 0 : index
    %c0_11 = arith.constant 0 : index
    %c0_12 = arith.constant 0 : index
    %24 = vector.load %arg14[%c0_10, %c0_11, %c0_12] : memref<8x12x8xf32, #tpu.memory_space<vmem>>, vector<8x12x8xf32>
    tpu.vector_store %arg14[%c0_10, %c0_11, %c0_12], %23 {strides = array<i32>} : memref<8x12x8xf32, #tpu.memory_space<vmem>>, vector<8x12x8xf32>,
    %c0_13 = arith.constant 0 : index
    %c2 = arith.constant 2 : index
    %c0_14 = arith.constant 0 : index
    %25 = vector.load %arg14[%c0_13, %c2, %c0_14] : memref<8x12x8xf32, #tpu.memory_space<vmem>>, vector<8x8x8xf32>
    tpu.vector_store %arg14[%c0_13, %c2, %c0_14], %22 {strides = array<i32>} : memref<8x12x8xf32, #tpu.memory_space<vmem>>, vector<8x8x8xf32>,
    %c0_15 = arith.constant 0 : index
    %c0_16 = arith.constant 0 : index
    %c0_17 = arith.constant 0 : index
    %26 = vector.load %arg4[%c0_15, %c0_16, %c0_17] : memref<5x1x8xf32, #tpu.memory_space<vmem>>, vector<5x1x8xf32>
    %c0_18 = arith.constant 0 : index
    %c0_19 = arith.constant 0 : index
    %c0_20 = arith.constant 0 : index
    %27 = vector.load %arg14[%c0_18, %c0_19, %c0_20] : memref<8x12x8xf32, #tpu.memory_space<vmem>>, vector<8x8x8xf32>
    %28 = vector.extract_strided_slice %26 {offsets = [0, 0, 0], sizes = [1, 1, 8], strides = [1, 1, 1]} : vector<5x1x8xf32> to vector<1x1x8xf32>
    %29 = vector.shape_cast %28 : vector<1x1x8xf32> to vector<1x8xf32>
    %30 = vector.shape_cast %29 : vector<1x8xf32> to vector<1x1x8xf32>
    %31 = vector.broadcast %30 : vector<1x1x8xf32> to vector<8x8x8xf32>
    %32 = arith.mulf %27, %31 : vector<8x8x8xf32>
    %c0_21 = arith.constant 0 : index
    %c1 = arith.constant 1 : index
    %c0_22 = arith.constant 0 : index
    %33 = vector.load %arg14[%c0_21, %c1, %c0_22] : memref<8x12x8xf32, #tpu.memory_space<vmem>>, vector<8x8x8xf32>
    %34 = vector.extract_strided_slice %26 {offsets = [1, 0, 0], sizes = [1, 1, 8], strides = [1, 1, 1]} : vector<5x1x8xf32> to vector<1x1x8xf32>
    %35 = vector.shape_cast %34 : vector<1x1x8xf32> to vector<1x8xf32>
    %36 = vector.shape_cast %35 : vector<1x8xf32> to vector<1x1x8xf32>
    %37 = vector.broadcast %36 : vector<1x1x8xf32> to vector<8x8x8xf32>
    %38 = arith.mulf %33, %37 : vector<8x8x8xf32>
    %c0_23 = arith.constant 0 : index
    %c2_24 = arith.constant 2 : index
    %c0_25 = arith.constant 0 : index
    %39 = vector.load %arg14[%c0_23, %c2_24, %c0_25] : memref<8x12x8xf32, #tpu.memory_space<vmem>>, vector<8x8x8xf32>
    %40 = vector.extract_strided_slice %26 {offsets = [2, 0, 0], sizes = [1, 1, 8], strides = [1, 1, 1]} : vector<5x1x8xf32> to vector<1x1x8xf32>
    %41 = vector.shape_cast %40 : vector<1x1x8xf32> to vector<1x8xf32>
    %42 = vector.shape_cast %41 : vector<1x8xf32> to vector<1x1x8xf32>
    %43 = vector.broadcast %42 : vector<1x1x8xf32> to vector<8x8x8xf32>
    %44 = arith.mulf %39, %43 : vector<8x8x8xf32>
    %c0_26 = arith.constant 0 : index
    %c3 = arith.constant 3 : index
    %c0_27 = arith.constant 0 : index
    %45 = vector.load %arg14[%c0_26, %c3, %c0_27] : memref<8x12x8xf32, #tpu.memory_space<vmem>>, vector<8x8x8xf32>
    %46 = vector.extract_strided_slice %26 {offsets = [3, 0, 0], sizes = [1, 1, 8], strides = [1, 1, 1]} : vector<5x1x8xf32> to vector<1x1x8xf32>
    %47 = vector.shape_cast %46 : vector<1x1x8xf32> to vector<1x8xf32>
    %48 = vector.shape_cast %47 : vector<1x8xf32> to vector<1x1x8xf32>
    %49 = vector.broadcast %48 : vector<1x1x8xf32> to vector<8x8x8xf32>
    %50 = arith.mulf %45, %49 : vector<8x8x8xf32>
    %c0_28 = arith.constant 0 : index
    %c4 = arith.constant 4 : index
    %c0_29 = arith.constant 0 : index
    %51 = vector.load %arg14[%c0_28, %c4, %c0_29] : memref<8x12x8xf32, #tpu.memory_space<vmem>>, vector<8x8x8xf32>
    %52 = vector.extract_strided_slice %26 {offsets = [4, 0, 0], sizes = [1, 1, 8], strides = [1, 1, 1]} : vector<5x1x8xf32> to vector<1x1x8xf32>
    %53 = vector.shape_cast %52 : vector<1x1x8xf32> to vector<1x8xf32>
    %54 = vector.shape_cast %53 : vector<1x8xf32> to vector<1x1x8xf32>
    %55 = vector.broadcast %54 : vector<1x1x8xf32> to vector<8x8x8xf32>
    %56 = arith.mulf %51, %55 : vector<8x8x8xf32>
    %57 = arith.addf %32, %38 : vector<8x8x8xf32>
    %58 = arith.addf %44, %50 : vector<8x8x8xf32>
    %59 = arith.addf %57, %58 : vector<8x8x8xf32>
    %60 = arith.addf %59, %56 : vector<8x8x8xf32>
    %c0_30 = arith.constant 0 : index
    %c0_31 = arith.constant 0 : index
    %61 = vector.load %arg5[%c0_30, %c0_31] : memref<1x8xf32, #tpu.memory_space<vmem>>, vector<1x8xf32>
    %62 = vector.shape_cast %61 : vector<1x8xf32> to vector<1x1x8xf32>
    %63 = vector.broadcast %62 : vector<1x1x8xf32> to vector<8x8x8xf32>
    %64 = arith.addf %60, %63 : vector<8x8x8xf32>
    %cst_32 = arith.constant 0.000000e+00 : f32
    %65 = vector.broadcast %cst_32 : f32 to vector<12x8x8xf32>
    %c0_33 = arith.constant 0 : index
    %c0_34 = arith.constant 0 : index
    %c0_35 = arith.constant 0 : index
    %66 = vector.load %arg15[%c0_33, %c0_34, %c0_35] : memref<12x8x8xf32, #tpu.memory_space<vmem>>, vector<12x8x8xf32>
    tpu.vector_store %arg15[%c0_33, %c0_34, %c0_35], %65 {strides = array<i32>} : memref<12x8x8xf32, #tpu.memory_space<vmem>>, vector<12x8x8xf32>,
    %c2_36 = arith.constant 2 : index
    %c0_37 = arith.constant 0 : index
    %c0_38 = arith.constant 0 : index
    %67 = vector.load %arg15[%c2_36, %c0_37, %c0_38] : memref<12x8x8xf32, #tpu.memory_space<vmem>>, vector<8x8x8xf32>
    tpu.vector_store %arg15[%c2_36, %c0_37, %c0_38], %64 {strides = array<i32>} : memref<12x8x8xf32, #tpu.memory_space<vmem>>, vector<8x8x8xf32>,
    %c0_39 = arith.constant 0 : index
    %c0_40 = arith.constant 0 : index
    %c0_41 = arith.constant 0 : index
    %68 = vector.load %arg6[%c0_39, %c0_40, %c0_41] : memref<5x1x8xf32, #tpu.memory_space<vmem>>, vector<5x1x8xf32>
    %c0_42 = arith.constant 0 : index
    %c0_43 = arith.constant 0 : index
    %c0_44 = arith.constant 0 : index
    %69 = vector.load %arg15[%c0_42, %c0_43, %c0_44] : memref<12x8x8xf32, #tpu.memory_space<vmem>>, vector<8x8x8xf32>
    %70 = vector.extract_strided_slice %68 {offsets = [0, 0, 0], sizes = [1, 1, 8], strides = [1, 1, 1]} : vector<5x1x8xf32> to vector<1x1x8xf32>
    %71 = vector.shape_cast %70 : vector<1x1x8xf32> to vector<1x8xf32>
    %72 = vector.shape_cast %71 : vector<1x8xf32> to vector<1x1x8xf32>
    %73 = vector.broadcast %72 : vector<1x1x8xf32> to vector<8x8x8xf32>
    %74 = arith.mulf %69, %73 : vector<8x8x8xf32>
    %c1_45 = arith.constant 1 : index
    %c0_46 = arith.constant 0 : index
    %c0_47 = arith.constant 0 : index
    %75 = vector.load %arg15[%c1_45, %c0_46, %c0_47] : memref<12x8x8xf32, #tpu.memory_space<vmem>>, vector<8x8x8xf32>
    %76 = vector.extract_strided_slice %68 {offsets = [1, 0, 0], sizes = [1, 1, 8], strides = [1, 1, 1]} : vector<5x1x8xf32> to vector<1x1x8xf32>
    %77 = vector.shape_cast %76 : vector<1x1x8xf32> to vector<1x8xf32>
    %78 = vector.shape_cast %77 : vector<1x8xf32> to vector<1x1x8xf32>
    %79 = vector.broadcast %78 : vector<1x1x8xf32> to vector<8x8x8xf32>
    %80 = arith.mulf %75, %79 : vector<8x8x8xf32>
    %c2_48 = arith.constant 2 : index
    %c0_49 = arith.constant 0 : index
    %c0_50 = arith.constant 0 : index
    %81 = vector.load %arg15[%c2_48, %c0_49, %c0_50] : memref<12x8x8xf32, #tpu.memory_space<vmem>>, vector<8x8x8xf32>
    %82 = vector.extract_strided_slice %68 {offsets = [2, 0, 0], sizes = [1, 1, 8], strides = [1, 1, 1]} : vector<5x1x8xf32> to vector<1x1x8xf32>
    %83 = vector.shape_cast %82 : vector<1x1x8xf32> to vector<1x8xf32>
    %84 = vector.shape_cast %83 : vector<1x8xf32> to vector<1x1x8xf32>
    %85 = vector.broadcast %84 : vector<1x1x8xf32> to vector<8x8x8xf32>
    %86 = arith.mulf %81, %85 : vector<8x8x8xf32>
    %c3_51 = arith.constant 3 : index
    %c0_52 = arith.constant 0 : index
    %c0_53 = arith.constant 0 : index
    %87 = vector.load %arg15[%c3_51, %c0_52, %c0_53] : memref<12x8x8xf32, #tpu.memory_space<vmem>>, vector<8x8x8xf32>
    %88 = vector.extract_strided_slice %68 {offsets = [3, 0, 0], sizes = [1, 1, 8], strides = [1, 1, 1]} : vector<5x1x8xf32> to vector<1x1x8xf32>
    %89 = vector.shape_cast %88 : vector<1x1x8xf32> to vector<1x8xf32>
    %90 = vector.shape_cast %89 : vector<1x8xf32> to vector<1x1x8xf32>
    %91 = vector.broadcast %90 : vector<1x1x8xf32> to vector<8x8x8xf32>
    %92 = arith.mulf %87, %91 : vector<8x8x8xf32>
    %c4_54 = arith.constant 4 : index
    %c0_55 = arith.constant 0 : index
    %c0_56 = arith.constant 0 : index
    %93 = vector.load %arg15[%c4_54, %c0_55, %c0_56] : memref<12x8x8xf32, #tpu.memory_space<vmem>>, vector<8x8x8xf32>
    %94 = vector.extract_strided_slice %68 {offsets = [4, 0, 0], sizes = [1, 1, 8], strides = [1, 1, 1]} : vector<5x1x8xf32> to vector<1x1x8xf32>
    %95 = vector.shape_cast %94 : vector<1x1x8xf32> to vector<1x8xf32>
    %96 = vector.shape_cast %95 : vector<1x8xf32> to vector<1x1x8xf32>
    %97 = vector.broadcast %96 : vector<1x1x8xf32> to vector<8x8x8xf32>
    %98 = arith.mulf %93, %97 : vector<8x8x8xf32>
    %99 = arith.addf %74, %80 : vector<8x8x8xf32>
    %100 = arith.addf %86, %92 : vector<8x8x8xf32>
    %101 = arith.addf %99, %100 : vector<8x8x8xf32>
    %102 = arith.addf %101, %98 : vector<8x8x8xf32>
    %c0_57 = arith.constant 0 : index
    %c0_58 = arith.constant 0 : index
    %103 = vector.load %arg7[%c0_57, %c0_58] : memref<1x8xf32, #tpu.memory_space<vmem>>, vector<1x8xf32>
    %104 = vector.shape_cast %103 : vector<1x8xf32> to vector<1x1x8xf32>
    %105 = vector.broadcast %104 : vector<1x1x8xf32> to vector<8x8x8xf32>
    %106 = arith.addf %102, %105 : vector<8x8x8xf32>
    %cst_59 = arith.constant 0.000000e+00 : f32
    %107 = vector.broadcast %cst_59 : f32 to vector<8x8x8xf32>
    %108 = arith.subf %107, %106 : vector<8x8x8xf32>
    %109 = math.exp %108 : vector<8x8x8xf32>
    %cst_60 = arith.constant 1.000000e+00 : f32
    %110 = vector.broadcast %cst_60 : f32 to vector<8x8x8xf32>
    %111 = arith.addf %110, %109 : vector<8x8x8xf32>
    %cst_61 = arith.constant 1.000000e+00 : f32
    %112 = vector.broadcast %cst_61 : f32 to vector<8x8x8xf32>
    %113 = arith.divf %112, %111 : vector<8x8x8xf32>
    %114 = vector.shape_cast %113 : vector<8x8x8xf32> to vector<8x1x8x8xf32>
    %115 = vector.shape_cast %114 : vector<8x1x8x8xf32> to vector<8x1x8x8xf32>
    %116 = vector.broadcast %115 : vector<8x1x8x8xf32> to vector<8x2x8x8xf32>
    %117 = vector.shape_cast %116 : vector<8x2x8x8xf32> to vector<16x8x8xf32>
    %118 = vector.extract_strided_slice %117 {offsets = [0, 0, 0], sizes = [16, 8, 4], strides = [1, 1, 1]} : vector<16x8x8xf32> to vector<16x8x4xf32>
    %119 = vector.extract_strided_slice %117 {offsets = [0, 0, 4], sizes = [16, 8, 4], strides = [1, 1, 1]} : vector<16x8x8xf32> to vector<16x8x4xf32>
    %120 = vector.shape_cast %1 : vector<2x16x8x8xf32> to vector<256x8xf32>
    %c0_62 = arith.constant 0 : index
    %c0_63 = arith.constant 0 : index
    %121 = vector.load %arg8[%c0_62, %c0_63] : memref<8x4xf32, #tpu.memory_space<vmem>>, vector<8x4xf32>
    %cst_64 = arith.constant dense<0.000000e+00> : vector<256x4xf32>
    %122 = tpu.matmul %120, %121, %cst_64 {dimension_numbers = #tpu.dot_dimension_numbers<[1], [0], [0], [1], [0, 0, 1, 1], [], []>, precision = #tpu.contract_precision<fp32>} : vector<256x8xf32>, vector<8x4xf32>, vector<256x4xf32> -> vector<256x4xf32>
    %c0_65 = arith.constant 0 : index
    %c0_66 = arith.constant 0 : index
    %123 = vector.load %arg9[%c0_65, %c0_66] : memref<1x4xf32, #tpu.memory_space<vmem>>, vector<1x4xf32>
    %124 = vector.broadcast %123 : vector<1x4xf32> to vector<256x4xf32>
    %125 = arith.addf %122, %124 : vector<256x4xf32>
    %126 = vector.shape_cast %125 : vector<256x4xf32> to vector<2x16x8x4xf32>
    %cst_67 = arith.constant 0.000000e+00 : f32
    %127 = vector.broadcast %cst_67 : f32 to vector<2x20x10x4xf32>
    %c0_68 = arith.constant 0 : index
    %c0_69 = arith.constant 0 : index
    %c0_70 = arith.constant 0 : index
    %c0_71 = arith.constant 0 : index
    %128 = vector.load %arg13[%c0_68, %c0_69, %c0_70, %c0_71] : memref<2x20x10x4xf32, #tpu.memory_space<vmem>>, vector<2x20x10x4xf32>
    tpu.vector_store %arg13[%c0_68, %c0_69, %c0_70, %c0_71], %127 {strides = array<i32>} : memref<2x20x10x4xf32, #tpu.memory_space<vmem>>, vector<2x20x10x4xf32>,
    %c0_72 = arith.constant 0 : index
    %c2_73 = arith.constant 2 : index
    %c1_74 = arith.constant 1 : index
    %c0_75 = arith.constant 0 : index
    %129 = vector.load %arg13[%c0_72, %c2_73, %c1_74, %c0_75] : memref<2x20x10x4xf32, #tpu.memory_space<vmem>>, vector<2x16x8x4xf32>
    tpu.vector_store %arg13[%c0_72, %c2_73, %c1_74, %c0_75], %126 {strides = array<i32>} : memref<2x20x10x4xf32, #tpu.memory_space<vmem>>, vector<2x16x8x4xf32>,
    %c0_76 = arith.constant 0 : index
    %c0_77 = arith.constant 0 : index
    %c0_78 = arith.constant 0 : index
    %130 = vector.load %arg10[%c0_76, %c0_77, %c0_78] : memref<25x1x4xf32, #tpu.memory_space<vmem>>, vector<25x1x4xf32>
    %c0_79 = arith.constant 0 : index
    %c0_80 = arith.constant 0 : index
    %131 = vector.load %arg11[%c0_79, %c0_80] : memref<1x4xf32, #tpu.memory_space<vmem>>, vector<1x4xf32>
    %cst_81 = arith.constant 0.000000e+00 : f32
    %132 = vector.broadcast %cst_81 : f32 to vector<16x8x4xf32>
    %cst_82 = arith.constant 0.000000e+00 : f32
    %133 = vector.broadcast %cst_82 : f32 to vector<16x8x4xf32>
    %c0_83 = arith.constant 0 : index
    %c0_84 = arith.constant 0 : index
    %c0_85 = arith.constant 0 : index
    %c0_86 = arith.constant 0 : index
    %134 = vector.load %arg13[%c0_83, %c0_84, %c0_85, %c0_86] : memref<2x20x10x4xf32, #tpu.memory_space<vmem>>, vector<1x16x8x4xf32>
    %135 = vector.shape_cast %134 : vector<1x16x8x4xf32> to vector<16x8x4xf32>
    %136 = vector.extract_strided_slice %130 {offsets = [0, 0, 0], sizes = [1, 1, 4], strides = [1, 1, 1]} : vector<25x1x4xf32> to vector<1x1x4xf32>
    %137 = vector.shape_cast %136 : vector<1x1x4xf32> to vector<1x4xf32>
    %138 = vector.shape_cast %137 : vector<1x4xf32> to vector<1x1x4xf32>
    %139 = vector.broadcast %138 : vector<1x1x4xf32> to vector<16x8x4xf32>
    %140 = arith.mulf %135, %139 : vector<16x8x4xf32>
    %141 = arith.addf %132, %140 : vector<16x8x4xf32>
    %c1_87 = arith.constant 1 : index
    %c0_88 = arith.constant 0 : index
    %c0_89 = arith.constant 0 : index
    %c0_90 = arith.constant 0 : index
    %142 = vector.load %arg13[%c1_87, %c0_88, %c0_89, %c0_90] : memref<2x20x10x4xf32, #tpu.memory_space<vmem>>, vector<1x16x8x4xf32>
    %143 = vector.shape_cast %142 : vector<1x16x8x4xf32> to vector<16x8x4xf32>
    %144 = vector.extract_strided_slice %130 {offsets = [1, 0, 0], sizes = [1, 1, 4], strides = [1, 1, 1]} : vector<25x1x4xf32> to vector<1x1x4xf32>
    %145 = vector.shape_cast %144 : vector<1x1x4xf32> to vector<1x4xf32>
    %146 = vector.shape_cast %145 : vector<1x4xf32> to vector<1x1x4xf32>
    %147 = vector.broadcast %146 : vector<1x1x4xf32> to vector<16x8x4xf32>
    %148 = arith.mulf %143, %147 : vector<16x8x4xf32>
    %149 = arith.addf %133, %148 : vector<16x8x4xf32>
    %c0_91 = arith.constant 0 : index
    %c0_92 = arith.constant 0 : index
    %c1_93 = arith.constant 1 : index
    %c0_94 = arith.constant 0 : index
    %150 = vector.load %arg13[%c0_91, %c0_92, %c1_93, %c0_94] : memref<2x20x10x4xf32, #tpu.memory_space<vmem>>, vector<1x16x8x4xf32>
    %151 = vector.shape_cast %150 : vector<1x16x8x4xf32> to vector<16x8x4xf32>
    %152 = vector.extract_strided_slice %130 {offsets = [2, 0, 0], sizes = [1, 1, 4], strides = [1, 1, 1]} : vector<25x1x4xf32> to vector<1x1x4xf32>
    %153 = vector.shape_cast %152 : vector<1x1x4xf32> to vector<1x4xf32>
    %154 = vector.shape_cast %153 : vector<1x4xf32> to vector<1x1x4xf32>
    %155 = vector.broadcast %154 : vector<1x1x4xf32> to vector<16x8x4xf32>
    %156 = arith.mulf %151, %155 : vector<16x8x4xf32>
    %157 = arith.addf %141, %156 : vector<16x8x4xf32>
    %c1_95 = arith.constant 1 : index
    %c0_96 = arith.constant 0 : index
    %c1_97 = arith.constant 1 : index
    %c0_98 = arith.constant 0 : index
    %158 = vector.load %arg13[%c1_95, %c0_96, %c1_97, %c0_98] : memref<2x20x10x4xf32, #tpu.memory_space<vmem>>, vector<1x16x8x4xf32>
    %159 = vector.shape_cast %158 : vector<1x16x8x4xf32> to vector<16x8x4xf32>
    %160 = vector.extract_strided_slice %130 {offsets = [3, 0, 0], sizes = [1, 1, 4], strides = [1, 1, 1]} : vector<25x1x4xf32> to vector<1x1x4xf32>
    %161 = vector.shape_cast %160 : vector<1x1x4xf32> to vector<1x4xf32>
    %162 = vector.shape_cast %161 : vector<1x4xf32> to vector<1x1x4xf32>
    %163 = vector.broadcast %162 : vector<1x1x4xf32> to vector<16x8x4xf32>
    %164 = arith.mulf %159, %163 : vector<16x8x4xf32>
    %165 = arith.addf %149, %164 : vector<16x8x4xf32>
    %c0_99 = arith.constant 0 : index
    %c0_100 = arith.constant 0 : index
    %c2_101 = arith.constant 2 : index
    %c0_102 = arith.constant 0 : index
    %166 = vector.load %arg13[%c0_99, %c0_100, %c2_101, %c0_102] : memref<2x20x10x4xf32, #tpu.memory_space<vmem>>, vector<1x16x8x4xf32>
    %167 = vector.shape_cast %166 : vector<1x16x8x4xf32> to vector<16x8x4xf32>
    %168 = vector.extract_strided_slice %130 {offsets = [4, 0, 0], sizes = [1, 1, 4], strides = [1, 1, 1]} : vector<25x1x4xf32> to vector<1x1x4xf32>
    %169 = vector.shape_cast %168 : vector<1x1x4xf32> to vector<1x4xf32>
    %170 = vector.shape_cast %169 : vector<1x4xf32> to vector<1x1x4xf32>
    %171 = vector.broadcast %170 : vector<1x1x4xf32> to vector<16x8x4xf32>
    %172 = arith.mulf %167, %171 : vector<16x8x4xf32>
    %173 = arith.addf %157, %172 : vector<16x8x4xf32>
    %c0_103 = arith.constant 0 : index
    %c1_104 = arith.constant 1 : index
    %c0_105 = arith.constant 0 : index
    %c0_106 = arith.constant 0 : index
    %174 = vector.load %arg13[%c0_103, %c1_104, %c0_105, %c0_106] : memref<2x20x10x4xf32, #tpu.memory_space<vmem>>, vector<1x16x8x4xf32>
    %175 = vector.shape_cast %174 : vector<1x16x8x4xf32> to vector<16x8x4xf32>
    %176 = vector.extract_strided_slice %130 {offsets = [5, 0, 0], sizes = [1, 1, 4], strides = [1, 1, 1]} : vector<25x1x4xf32> to vector<1x1x4xf32>
    %177 = vector.shape_cast %176 : vector<1x1x4xf32> to vector<1x4xf32>
    %178 = vector.shape_cast %177 : vector<1x4xf32> to vector<1x1x4xf32>
    %179 = vector.broadcast %178 : vector<1x1x4xf32> to vector<16x8x4xf32>
    %180 = arith.mulf %175, %179 : vector<16x8x4xf32>
    %181 = arith.addf %165, %180 : vector<16x8x4xf32>
    %c1_107 = arith.constant 1 : index
    %c1_108 = arith.constant 1 : index
    %c0_109 = arith.constant 0 : index
    %c0_110 = arith.constant 0 : index
    %182 = vector.load %arg13[%c1_107, %c1_108, %c0_109, %c0_110] : memref<2x20x10x4xf32, #tpu.memory_space<vmem>>, vector<1x16x8x4xf32>
    %183 = vector.shape_cast %182 : vector<1x16x8x4xf32> to vector<16x8x4xf32>
    %184 = vector.extract_strided_slice %130 {offsets = [6, 0, 0], sizes = [1, 1, 4], strides = [1, 1, 1]} : vector<25x1x4xf32> to vector<1x1x4xf32>
    %185 = vector.shape_cast %184 : vector<1x1x4xf32> to vector<1x4xf32>
    %186 = vector.shape_cast %185 : vector<1x4xf32> to vector<1x1x4xf32>
    %187 = vector.broadcast %186 : vector<1x1x4xf32> to vector<16x8x4xf32>
    %188 = arith.mulf %183, %187 : vector<16x8x4xf32>
    %189 = arith.addf %173, %188 : vector<16x8x4xf32>
    %c0_111 = arith.constant 0 : index
    %c1_112 = arith.constant 1 : index
    %c1_113 = arith.constant 1 : index
    %c0_114 = arith.constant 0 : index
    %190 = vector.load %arg13[%c0_111, %c1_112, %c1_113, %c0_114] : memref<2x20x10x4xf32, #tpu.memory_space<vmem>>, vector<1x16x8x4xf32>
    %191 = vector.shape_cast %190 : vector<1x16x8x4xf32> to vector<16x8x4xf32>
    %192 = vector.extract_strided_slice %130 {offsets = [7, 0, 0], sizes = [1, 1, 4], strides = [1, 1, 1]} : vector<25x1x4xf32> to vector<1x1x4xf32>
    %193 = vector.shape_cast %192 : vector<1x1x4xf32> to vector<1x4xf32>
    %194 = vector.shape_cast %193 : vector<1x4xf32> to vector<1x1x4xf32>
    %195 = vector.broadcast %194 : vector<1x1x4xf32> to vector<16x8x4xf32>
    %196 = arith.mulf %191, %195 : vector<16x8x4xf32>
    %197 = arith.addf %181, %196 : vector<16x8x4xf32>
    %c1_115 = arith.constant 1 : index
    %c1_116 = arith.constant 1 : index
    %c1_117 = arith.constant 1 : index
    %c0_118 = arith.constant 0 : index
    %198 = vector.load %arg13[%c1_115, %c1_116, %c1_117, %c0_118] : memref<2x20x10x4xf32, #tpu.memory_space<vmem>>, vector<1x16x8x4xf32>
    %199 = vector.shape_cast %198 : vector<1x16x8x4xf32> to vector<16x8x4xf32>
    %200 = vector.extract_strided_slice %130 {offsets = [8, 0, 0], sizes = [1, 1, 4], strides = [1, 1, 1]} : vector<25x1x4xf32> to vector<1x1x4xf32>
    %201 = vector.shape_cast %200 : vector<1x1x4xf32> to vector<1x4xf32>
    %202 = vector.shape_cast %201 : vector<1x4xf32> to vector<1x1x4xf32>
    %203 = vector.broadcast %202 : vector<1x1x4xf32> to vector<16x8x4xf32>
    %204 = arith.mulf %199, %203 : vector<16x8x4xf32>
    %205 = arith.addf %189, %204 : vector<16x8x4xf32>
    %c0_119 = arith.constant 0 : index
    %c1_120 = arith.constant 1 : index
    %c2_121 = arith.constant 2 : index
    %c0_122 = arith.constant 0 : index
    %206 = vector.load %arg13[%c0_119, %c1_120, %c2_121, %c0_122] : memref<2x20x10x4xf32, #tpu.memory_space<vmem>>, vector<1x16x8x4xf32>
    %207 = vector.shape_cast %206 : vector<1x16x8x4xf32> to vector<16x8x4xf32>
    %208 = vector.extract_strided_slice %130 {offsets = [9, 0, 0], sizes = [1, 1, 4], strides = [1, 1, 1]} : vector<25x1x4xf32> to vector<1x1x4xf32>
    %209 = vector.shape_cast %208 : vector<1x1x4xf32> to vector<1x4xf32>
    %210 = vector.shape_cast %209 : vector<1x4xf32> to vector<1x1x4xf32>
    %211 = vector.broadcast %210 : vector<1x1x4xf32> to vector<16x8x4xf32>
    %212 = arith.mulf %207, %211 : vector<16x8x4xf32>
    %213 = arith.addf %197, %212 : vector<16x8x4xf32>
    %c0_123 = arith.constant 0 : index
    %c2_124 = arith.constant 2 : index
    %c0_125 = arith.constant 0 : index
    %c0_126 = arith.constant 0 : index
    %214 = vector.load %arg13[%c0_123, %c2_124, %c0_125, %c0_126] : memref<2x20x10x4xf32, #tpu.memory_space<vmem>>, vector<1x16x8x4xf32>
    %215 = vector.shape_cast %214 : vector<1x16x8x4xf32> to vector<16x8x4xf32>
    %216 = vector.extract_strided_slice %130 {offsets = [10, 0, 0], sizes = [1, 1, 4], strides = [1, 1, 1]} : vector<25x1x4xf32> to vector<1x1x4xf32>
    %217 = vector.shape_cast %216 : vector<1x1x4xf32> to vector<1x4xf32>
    %218 = vector.shape_cast %217 : vector<1x4xf32> to vector<1x1x4xf32>
    %219 = vector.broadcast %218 : vector<1x1x4xf32> to vector<16x8x4xf32>
    %220 = arith.mulf %215, %219 : vector<16x8x4xf32>
    %221 = arith.addf %205, %220 : vector<16x8x4xf32>
    %c1_127 = arith.constant 1 : index
    %c2_128 = arith.constant 2 : index
    %c0_129 = arith.constant 0 : index
    %c0_130 = arith.constant 0 : index
    %222 = vector.load %arg13[%c1_127, %c2_128, %c0_129, %c0_130] : memref<2x20x10x4xf32, #tpu.memory_space<vmem>>, vector<1x16x8x4xf32>
    %223 = vector.shape_cast %222 : vector<1x16x8x4xf32> to vector<16x8x4xf32>
    %224 = vector.extract_strided_slice %130 {offsets = [11, 0, 0], sizes = [1, 1, 4], strides = [1, 1, 1]} : vector<25x1x4xf32> to vector<1x1x4xf32>
    %225 = vector.shape_cast %224 : vector<1x1x4xf32> to vector<1x4xf32>
    %226 = vector.shape_cast %225 : vector<1x4xf32> to vector<1x1x4xf32>
    %227 = vector.broadcast %226 : vector<1x1x4xf32> to vector<16x8x4xf32>
    %228 = arith.mulf %223, %227 : vector<16x8x4xf32>
    %229 = arith.addf %213, %228 : vector<16x8x4xf32>
    %c0_131 = arith.constant 0 : index
    %c2_132 = arith.constant 2 : index
    %c1_133 = arith.constant 1 : index
    %c0_134 = arith.constant 0 : index
    %230 = vector.load %arg13[%c0_131, %c2_132, %c1_133, %c0_134] : memref<2x20x10x4xf32, #tpu.memory_space<vmem>>, vector<1x16x8x4xf32>
    %231 = vector.shape_cast %230 : vector<1x16x8x4xf32> to vector<16x8x4xf32>
    %232 = vector.extract_strided_slice %130 {offsets = [12, 0, 0], sizes = [1, 1, 4], strides = [1, 1, 1]} : vector<25x1x4xf32> to vector<1x1x4xf32>
    %233 = vector.shape_cast %232 : vector<1x1x4xf32> to vector<1x4xf32>
    %234 = vector.shape_cast %233 : vector<1x4xf32> to vector<1x1x4xf32>
    %235 = vector.broadcast %234 : vector<1x1x4xf32> to vector<16x8x4xf32>
    %236 = arith.mulf %231, %235 : vector<16x8x4xf32>
    %237 = arith.addf %221, %236 : vector<16x8x4xf32>
    %c1_135 = arith.constant 1 : index
    %c2_136 = arith.constant 2 : index
    %c1_137 = arith.constant 1 : index
    %c0_138 = arith.constant 0 : index
    %238 = vector.load %arg13[%c1_135, %c2_136, %c1_137, %c0_138] : memref<2x20x10x4xf32, #tpu.memory_space<vmem>>, vector<1x16x8x4xf32>
    %239 = vector.shape_cast %238 : vector<1x16x8x4xf32> to vector<16x8x4xf32>
    %240 = vector.extract_strided_slice %130 {offsets = [13, 0, 0], sizes = [1, 1, 4], strides = [1, 1, 1]} : vector<25x1x4xf32> to vector<1x1x4xf32>
    %241 = vector.shape_cast %240 : vector<1x1x4xf32> to vector<1x4xf32>
    %242 = vector.shape_cast %241 : vector<1x4xf32> to vector<1x1x4xf32>
    %243 = vector.broadcast %242 : vector<1x1x4xf32> to vector<16x8x4xf32>
    %244 = arith.mulf %239, %243 : vector<16x8x4xf32>
    %245 = arith.addf %229, %244 : vector<16x8x4xf32>
    %c0_139 = arith.constant 0 : index
    %c2_140 = arith.constant 2 : index
    %c2_141 = arith.constant 2 : index
    %c0_142 = arith.constant 0 : index
    %246 = vector.load %arg13[%c0_139, %c2_140, %c2_141, %c0_142] : memref<2x20x10x4xf32, #tpu.memory_space<vmem>>, vector<1x16x8x4xf32>
    %247 = vector.shape_cast %246 : vector<1x16x8x4xf32> to vector<16x8x4xf32>
    %248 = vector.extract_strided_slice %130 {offsets = [14, 0, 0], sizes = [1, 1, 4], strides = [1, 1, 1]} : vector<25x1x4xf32> to vector<1x1x4xf32>
    %249 = vector.shape_cast %248 : vector<1x1x4xf32> to vector<1x4xf32>
    %250 = vector.shape_cast %249 : vector<1x4xf32> to vector<1x1x4xf32>
    %251 = vector.broadcast %250 : vector<1x1x4xf32> to vector<16x8x4xf32>
    %252 = arith.mulf %247, %251 : vector<16x8x4xf32>
    %253 = arith.addf %237, %252 : vector<16x8x4xf32>
    %c0_143 = arith.constant 0 : index
    %c3_144 = arith.constant 3 : index
    %c0_145 = arith.constant 0 : index
    %c0_146 = arith.constant 0 : index
    %254 = vector.load %arg13[%c0_143, %c3_144, %c0_145, %c0_146] : memref<2x20x10x4xf32, #tpu.memory_space<vmem>>, vector<1x16x8x4xf32>
    %255 = vector.shape_cast %254 : vector<1x16x8x4xf32> to vector<16x8x4xf32>
    %256 = vector.extract_strided_slice %130 {offsets = [15, 0, 0], sizes = [1, 1, 4], strides = [1, 1, 1]} : vector<25x1x4xf32> to vector<1x1x4xf32>
    %257 = vector.shape_cast %256 : vector<1x1x4xf32> to vector<1x4xf32>
    %258 = vector.shape_cast %257 : vector<1x4xf32> to vector<1x1x4xf32>
    %259 = vector.broadcast %258 : vector<1x1x4xf32> to vector<16x8x4xf32>
    %260 = arith.mulf %255, %259 : vector<16x8x4xf32>
    %261 = arith.addf %245, %260 : vector<16x8x4xf32>
    %c1_147 = arith.constant 1 : index
    %c3_148 = arith.constant 3 : index
    %c0_149 = arith.constant 0 : index
    %c0_150 = arith.constant 0 : index
    %262 = vector.load %arg13[%c1_147, %c3_148, %c0_149, %c0_150] : memref<2x20x10x4xf32, #tpu.memory_space<vmem>>, vector<1x16x8x4xf32>
    %263 = vector.shape_cast %262 : vector<1x16x8x4xf32> to vector<16x8x4xf32>
    %264 = vector.extract_strided_slice %130 {offsets = [16, 0, 0], sizes = [1, 1, 4], strides = [1, 1, 1]} : vector<25x1x4xf32> to vector<1x1x4xf32>
    %265 = vector.shape_cast %264 : vector<1x1x4xf32> to vector<1x4xf32>
    %266 = vector.shape_cast %265 : vector<1x4xf32> to vector<1x1x4xf32>
    %267 = vector.broadcast %266 : vector<1x1x4xf32> to vector<16x8x4xf32>
    %268 = arith.mulf %263, %267 : vector<16x8x4xf32>
    %269 = arith.addf %253, %268 : vector<16x8x4xf32>
    %c0_151 = arith.constant 0 : index
    %c3_152 = arith.constant 3 : index
    %c1_153 = arith.constant 1 : index
    %c0_154 = arith.constant 0 : index
    %270 = vector.load %arg13[%c0_151, %c3_152, %c1_153, %c0_154] : memref<2x20x10x4xf32, #tpu.memory_space<vmem>>, vector<1x16x8x4xf32>
    %271 = vector.shape_cast %270 : vector<1x16x8x4xf32> to vector<16x8x4xf32>
    %272 = vector.extract_strided_slice %130 {offsets = [17, 0, 0], sizes = [1, 1, 4], strides = [1, 1, 1]} : vector<25x1x4xf32> to vector<1x1x4xf32>
    %273 = vector.shape_cast %272 : vector<1x1x4xf32> to vector<1x4xf32>
    %274 = vector.shape_cast %273 : vector<1x4xf32> to vector<1x1x4xf32>
    %275 = vector.broadcast %274 : vector<1x1x4xf32> to vector<16x8x4xf32>
    %276 = arith.mulf %271, %275 : vector<16x8x4xf32>
    %277 = arith.addf %261, %276 : vector<16x8x4xf32>
    %c1_155 = arith.constant 1 : index
    %c3_156 = arith.constant 3 : index
    %c1_157 = arith.constant 1 : index
    %c0_158 = arith.constant 0 : index
    %278 = vector.load %arg13[%c1_155, %c3_156, %c1_157, %c0_158] : memref<2x20x10x4xf32, #tpu.memory_space<vmem>>, vector<1x16x8x4xf32>
    %279 = vector.shape_cast %278 : vector<1x16x8x4xf32> to vector<16x8x4xf32>
    %280 = vector.extract_strided_slice %130 {offsets = [18, 0, 0], sizes = [1, 1, 4], strides = [1, 1, 1]} : vector<25x1x4xf32> to vector<1x1x4xf32>
    %281 = vector.shape_cast %280 : vector<1x1x4xf32> to vector<1x4xf32>
    %282 = vector.shape_cast %281 : vector<1x4xf32> to vector<1x1x4xf32>
    %283 = vector.broadcast %282 : vector<1x1x4xf32> to vector<16x8x4xf32>
    %284 = arith.mulf %279, %283 : vector<16x8x4xf32>
    %285 = arith.addf %269, %284 : vector<16x8x4xf32>
    %c0_159 = arith.constant 0 : index
    %c3_160 = arith.constant 3 : index
    %c2_161 = arith.constant 2 : index
    %c0_162 = arith.constant 0 : index
    %286 = vector.load %arg13[%c0_159, %c3_160, %c2_161, %c0_162] : memref<2x20x10x4xf32, #tpu.memory_space<vmem>>, vector<1x16x8x4xf32>
    %287 = vector.shape_cast %286 : vector<1x16x8x4xf32> to vector<16x8x4xf32>
    %288 = vector.extract_strided_slice %130 {offsets = [19, 0, 0], sizes = [1, 1, 4], strides = [1, 1, 1]} : vector<25x1x4xf32> to vector<1x1x4xf32>
    %289 = vector.shape_cast %288 : vector<1x1x4xf32> to vector<1x4xf32>
    %290 = vector.shape_cast %289 : vector<1x4xf32> to vector<1x1x4xf32>
    %291 = vector.broadcast %290 : vector<1x1x4xf32> to vector<16x8x4xf32>
    %292 = arith.mulf %287, %291 : vector<16x8x4xf32>
    %293 = arith.addf %277, %292 : vector<16x8x4xf32>
    %c0_163 = arith.constant 0 : index
    %c4_164 = arith.constant 4 : index
    %c0_165 = arith.constant 0 : index
    %c0_166 = arith.constant 0 : index
    %294 = vector.load %arg13[%c0_163, %c4_164, %c0_165, %c0_166] : memref<2x20x10x4xf32, #tpu.memory_space<vmem>>, vector<1x16x8x4xf32>
    %295 = vector.shape_cast %294 : vector<1x16x8x4xf32> to vector<16x8x4xf32>
    %296 = vector.extract_strided_slice %130 {offsets = [20, 0, 0], sizes = [1, 1, 4], strides = [1, 1, 1]} : vector<25x1x4xf32> to vector<1x1x4xf32>
    %297 = vector.shape_cast %296 : vector<1x1x4xf32> to vector<1x4xf32>
    %298 = vector.shape_cast %297 : vector<1x4xf32> to vector<1x1x4xf32>
    %299 = vector.broadcast %298 : vector<1x1x4xf32> to vector<16x8x4xf32>
    %300 = arith.mulf %295, %299 : vector<16x8x4xf32>
    %301 = arith.addf %285, %300 : vector<16x8x4xf32>
    %c1_167 = arith.constant 1 : index
    %c4_168 = arith.constant 4 : index
    %c0_169 = arith.constant 0 : index
    %c0_170 = arith.constant 0 : index
    %302 = vector.load %arg13[%c1_167, %c4_168, %c0_169, %c0_170] : memref<2x20x10x4xf32, #tpu.memory_space<vmem>>, vector<1x16x8x4xf32>
    %303 = vector.shape_cast %302 : vector<1x16x8x4xf32> to vector<16x8x4xf32>
    %304 = vector.extract_strided_slice %130 {offsets = [21, 0, 0], sizes = [1, 1, 4], strides = [1, 1, 1]} : vector<25x1x4xf32> to vector<1x1x4xf32>
    %305 = vector.shape_cast %304 : vector<1x1x4xf32> to vector<1x4xf32>
    %306 = vector.shape_cast %305 : vector<1x4xf32> to vector<1x1x4xf32>
    %307 = vector.broadcast %306 : vector<1x1x4xf32> to vector<16x8x4xf32>
    %308 = arith.mulf %303, %307 : vector<16x8x4xf32>
    %309 = arith.addf %293, %308 : vector<16x8x4xf32>
    %c0_171 = arith.constant 0 : index
    %c4_172 = arith.constant 4 : index
    %c1_173 = arith.constant 1 : index
    %c0_174 = arith.constant 0 : index
    %310 = vector.load %arg13[%c0_171, %c4_172, %c1_173, %c0_174] : memref<2x20x10x4xf32, #tpu.memory_space<vmem>>, vector<1x16x8x4xf32>
    %311 = vector.shape_cast %310 : vector<1x16x8x4xf32> to vector<16x8x4xf32>
    %312 = vector.extract_strided_slice %130 {offsets = [22, 0, 0], sizes = [1, 1, 4], strides = [1, 1, 1]} : vector<25x1x4xf32> to vector<1x1x4xf32>
    %313 = vector.shape_cast %312 : vector<1x1x4xf32> to vector<1x4xf32>
    %314 = vector.shape_cast %313 : vector<1x4xf32> to vector<1x1x4xf32>
    %315 = vector.broadcast %314 : vector<1x1x4xf32> to vector<16x8x4xf32>
    %316 = arith.mulf %311, %315 : vector<16x8x4xf32>
    %317 = arith.addf %301, %316 : vector<16x8x4xf32>
    %c1_175 = arith.constant 1 : index
    %c4_176 = arith.constant 4 : index
    %c1_177 = arith.constant 1 : index
    %c0_178 = arith.constant 0 : index
    %318 = vector.load %arg13[%c1_175, %c4_176, %c1_177, %c0_178] : memref<2x20x10x4xf32, #tpu.memory_space<vmem>>, vector<1x16x8x4xf32>
    %319 = vector.shape_cast %318 : vector<1x16x8x4xf32> to vector<16x8x4xf32>
    %320 = vector.extract_strided_slice %130 {offsets = [23, 0, 0], sizes = [1, 1, 4], strides = [1, 1, 1]} : vector<25x1x4xf32> to vector<1x1x4xf32>
    %321 = vector.shape_cast %320 : vector<1x1x4xf32> to vector<1x4xf32>
    %322 = vector.shape_cast %321 : vector<1x4xf32> to vector<1x1x4xf32>
    %323 = vector.broadcast %322 : vector<1x1x4xf32> to vector<16x8x4xf32>
    %324 = arith.mulf %319, %323 : vector<16x8x4xf32>
    %325 = arith.addf %309, %324 : vector<16x8x4xf32>
    %c0_179 = arith.constant 0 : index
    %c4_180 = arith.constant 4 : index
    %c2_181 = arith.constant 2 : index
    %c0_182 = arith.constant 0 : index
    %326 = vector.load %arg13[%c0_179, %c4_180, %c2_181, %c0_182] : memref<2x20x10x4xf32, #tpu.memory_space<vmem>>, vector<1x16x8x4xf32>
    %327 = vector.shape_cast %326 : vector<1x16x8x4xf32> to vector<16x8x4xf32>
    %328 = vector.extract_strided_slice %130 {offsets = [24, 0, 0], sizes = [1, 1, 4], strides = [1, 1, 1]} : vector<25x1x4xf32> to vector<1x1x4xf32>
    %329 = vector.shape_cast %328 : vector<1x1x4xf32> to vector<1x4xf32>
    %330 = vector.shape_cast %329 : vector<1x4xf32> to vector<1x1x4xf32>
    %331 = vector.broadcast %330 : vector<1x1x4xf32> to vector<16x8x4xf32>
    %332 = arith.mulf %327, %331 : vector<16x8x4xf32>
    %333 = arith.addf %317, %332 : vector<16x8x4xf32>
    %334 = arith.addf %333, %325 : vector<16x8x4xf32>
    %335 = vector.shape_cast %131 : vector<1x4xf32> to vector<1x1x4xf32>
    %336 = vector.broadcast %335 : vector<1x1x4xf32> to vector<16x8x4xf32>
    %337 = arith.addf %334, %336 : vector<16x8x4xf32>
    %c0_183 = arith.constant 0 : index
    %c2_184 = arith.constant 2 : index
    %c1_185 = arith.constant 1 : index
    %c0_186 = arith.constant 0 : index
    %338 = vector.load %arg13[%c0_183, %c2_184, %c1_185, %c0_186] : memref<2x20x10x4xf32, #tpu.memory_space<vmem>>, vector<1x16x8x4xf32>
    %339 = vector.shape_cast %338 : vector<1x16x8x4xf32> to vector<16x8x4xf32>
    %340 = arith.mulf %339, %118 : vector<16x8x4xf32>
    %341 = arith.mulf %337, %119 : vector<16x8x4xf32>
    %342 = tpu.concatenate %340, %341 in 2 : vector<16x8x4xf32>, vector<16x8x4xf32> -> vector<16x8x8xf32>
    %c0_187 = arith.constant 0 : index
    %c0_188 = arith.constant 0 : index
    %c0_189 = arith.constant 0 : index
    %c0_190 = arith.constant 0 : index
    %c0_191 = arith.constant 0 : index
    %343 = vector.load %arg12[%c0_187, %c0_188, %c0_189, %c0_190, %c0_191] : memref<1x2x16x8x8xf32, #tpu.memory_space<vmem>>, vector<1x1x16x8x8xf32>
    %344 = vector.shape_cast %343 : vector<1x1x16x8x8xf32> to vector<16x8x8xf32>
    %345 = vector.shape_cast %342 : vector<16x8x8xf32> to vector<1x1x16x8x8xf32>
    tpu.vector_store %arg12[%c0_187, %c0_188, %c0_189, %c0_190, %c0_191], %345 {strides = array<i32>} : memref<1x2x16x8x8xf32, #tpu.memory_space<vmem>>, vector<1x1x16x8x8xf32>,
    %cst_192 = arith.constant 0.000000e+00 : f32
    %346 = vector.broadcast %cst_192 : f32 to vector<16x8x4xf32>
    %cst_193 = arith.constant 0.000000e+00 : f32
    %347 = vector.broadcast %cst_193 : f32 to vector<16x8x4xf32>
    %c1_194 = arith.constant 1 : index
    %c0_195 = arith.constant 0 : index
    %c0_196 = arith.constant 0 : index
    %c0_197 = arith.constant 0 : index
    %348 = vector.load %arg13[%c1_194, %c0_195, %c0_196, %c0_197] : memref<2x20x10x4xf32, #tpu.memory_space<vmem>>, vector<1x16x8x4xf32>
    %349 = vector.shape_cast %348 : vector<1x16x8x4xf32> to vector<16x8x4xf32>
    %350 = vector.extract_strided_slice %130 {offsets = [0, 0, 0], sizes = [1, 1, 4], strides = [1, 1, 1]} : vector<25x1x4xf32> to vector<1x1x4xf32>
    %351 = vector.shape_cast %350 : vector<1x1x4xf32> to vector<1x4xf32>
    %352 = vector.shape_cast %351 : vector<1x4xf32> to vector<1x1x4xf32>
    %353 = vector.broadcast %352 : vector<1x1x4xf32> to vector<16x8x4xf32>
    %354 = arith.mulf %349, %353 : vector<16x8x4xf32>
    %355 = arith.addf %346, %354 : vector<16x8x4xf32>
    %c0_198 = arith.constant 0 : index
    %c0_199 = arith.constant 0 : index
    %c1_200 = arith.constant 1 : index
    %c0_201 = arith.constant 0 : index
    %356 = vector.load %arg13[%c0_198, %c0_199, %c1_200, %c0_201] : memref<2x20x10x4xf32, #tpu.memory_space<vmem>>, vector<1x16x8x4xf32>
    %357 = vector.shape_cast %356 : vector<1x16x8x4xf32> to vector<16x8x4xf32>
    %358 = vector.extract_strided_slice %130 {offsets = [1, 0, 0], sizes = [1, 1, 4], strides = [1, 1, 1]} : vector<25x1x4xf32> to vector<1x1x4xf32>
    %359 = vector.shape_cast %358 : vector<1x1x4xf32> to vector<1x4xf32>
    %360 = vector.shape_cast %359 : vector<1x4xf32> to vector<1x1x4xf32>
    %361 = vector.broadcast %360 : vector<1x1x4xf32> to vector<16x8x4xf32>
    %362 = arith.mulf %357, %361 : vector<16x8x4xf32>
    %363 = arith.addf %347, %362 : vector<16x8x4xf32>
    %c1_202 = arith.constant 1 : index
    %c0_203 = arith.constant 0 : index
    %c1_204 = arith.constant 1 : index
    %c0_205 = arith.constant 0 : index
    %364 = vector.load %arg13[%c1_202, %c0_203, %c1_204, %c0_205] : memref<2x20x10x4xf32, #tpu.memory_space<vmem>>, vector<1x16x8x4xf32>
    %365 = vector.shape_cast %364 : vector<1x16x8x4xf32> to vector<16x8x4xf32>
    %366 = vector.extract_strided_slice %130 {offsets = [2, 0, 0], sizes = [1, 1, 4], strides = [1, 1, 1]} : vector<25x1x4xf32> to vector<1x1x4xf32>
    %367 = vector.shape_cast %366 : vector<1x1x4xf32> to vector<1x4xf32>
    %368 = vector.shape_cast %367 : vector<1x4xf32> to vector<1x1x4xf32>
    %369 = vector.broadcast %368 : vector<1x1x4xf32> to vector<16x8x4xf32>
    %370 = arith.mulf %365, %369 : vector<16x8x4xf32>
    %371 = arith.addf %355, %370 : vector<16x8x4xf32>
    %c0_206 = arith.constant 0 : index
    %c0_207 = arith.constant 0 : index
    %c2_208 = arith.constant 2 : index
    %c0_209 = arith.constant 0 : index
    %372 = vector.load %arg13[%c0_206, %c0_207, %c2_208, %c0_209] : memref<2x20x10x4xf32, #tpu.memory_space<vmem>>, vector<1x16x8x4xf32>
    %373 = vector.shape_cast %372 : vector<1x16x8x4xf32> to vector<16x8x4xf32>
    %374 = vector.extract_strided_slice %130 {offsets = [3, 0, 0], sizes = [1, 1, 4], strides = [1, 1, 1]} : vector<25x1x4xf32> to vector<1x1x4xf32>
    %375 = vector.shape_cast %374 : vector<1x1x4xf32> to vector<1x4xf32>
    %376 = vector.shape_cast %375 : vector<1x4xf32> to vector<1x1x4xf32>
    %377 = vector.broadcast %376 : vector<1x1x4xf32> to vector<16x8x4xf32>
    %378 = arith.mulf %373, %377 : vector<16x8x4xf32>
    %379 = arith.addf %363, %378 : vector<16x8x4xf32>
    %c1_210 = arith.constant 1 : index
    %c0_211 = arith.constant 0 : index
    %c2_212 = arith.constant 2 : index
    %c0_213 = arith.constant 0 : index
    %380 = vector.load %arg13[%c1_210, %c0_211, %c2_212, %c0_213] : memref<2x20x10x4xf32, #tpu.memory_space<vmem>>, vector<1x16x8x4xf32>
    %381 = vector.shape_cast %380 : vector<1x16x8x4xf32> to vector<16x8x4xf32>
    %382 = vector.extract_strided_slice %130 {offsets = [4, 0, 0], sizes = [1, 1, 4], strides = [1, 1, 1]} : vector<25x1x4xf32> to vector<1x1x4xf32>
    %383 = vector.shape_cast %382 : vector<1x1x4xf32> to vector<1x4xf32>
    %384 = vector.shape_cast %383 : vector<1x4xf32> to vector<1x1x4xf32>
    %385 = vector.broadcast %384 : vector<1x1x4xf32> to vector<16x8x4xf32>
    %386 = arith.mulf %381, %385 : vector<16x8x4xf32>
    %387 = arith.addf %371, %386 : vector<16x8x4xf32>
    %c1_214 = arith.constant 1 : index
    %c1_215 = arith.constant 1 : index
    %c0_216 = arith.constant 0 : index
    %c0_217 = arith.constant 0 : index
    %388 = vector.load %arg13[%c1_214, %c1_215, %c0_216, %c0_217] : memref<2x20x10x4xf32, #tpu.memory_space<vmem>>, vector<1x16x8x4xf32>
    %389 = vector.shape_cast %388 : vector<1x16x8x4xf32> to vector<16x8x4xf32>
    %390 = vector.extract_strided_slice %130 {offsets = [5, 0, 0], sizes = [1, 1, 4], strides = [1, 1, 1]} : vector<25x1x4xf32> to vector<1x1x4xf32>
    %391 = vector.shape_cast %390 : vector<1x1x4xf32> to vector<1x4xf32>
    %392 = vector.shape_cast %391 : vector<1x4xf32> to vector<1x1x4xf32>
    %393 = vector.broadcast %392 : vector<1x1x4xf32> to vector<16x8x4xf32>
    %394 = arith.mulf %389, %393 : vector<16x8x4xf32>
    %395 = arith.addf %379, %394 : vector<16x8x4xf32>
    %c0_218 = arith.constant 0 : index
    %c1_219 = arith.constant 1 : index
    %c1_220 = arith.constant 1 : index
    %c0_221 = arith.constant 0 : index
    %396 = vector.load %arg13[%c0_218, %c1_219, %c1_220, %c0_221] : memref<2x20x10x4xf32, #tpu.memory_space<vmem>>, vector<1x16x8x4xf32>
    %397 = vector.shape_cast %396 : vector<1x16x8x4xf32> to vector<16x8x4xf32>
    %398 = vector.extract_strided_slice %130 {offsets = [6, 0, 0], sizes = [1, 1, 4], strides = [1, 1, 1]} : vector<25x1x4xf32> to vector<1x1x4xf32>
    %399 = vector.shape_cast %398 : vector<1x1x4xf32> to vector<1x4xf32>
    %400 = vector.shape_cast %399 : vector<1x4xf32> to vector<1x1x4xf32>
    %401 = vector.broadcast %400 : vector<1x1x4xf32> to vector<16x8x4xf32>
    %402 = arith.mulf %397, %401 : vector<16x8x4xf32>
    %403 = arith.addf %387, %402 : vector<16x8x4xf32>
    %c1_222 = arith.constant 1 : index
    %c1_223 = arith.constant 1 : index
    %c1_224 = arith.constant 1 : index
    %c0_225 = arith.constant 0 : index
    %404 = vector.load %arg13[%c1_222, %c1_223, %c1_224, %c0_225] : memref<2x20x10x4xf32, #tpu.memory_space<vmem>>, vector<1x16x8x4xf32>
    %405 = vector.shape_cast %404 : vector<1x16x8x4xf32> to vector<16x8x4xf32>
    %406 = vector.extract_strided_slice %130 {offsets = [7, 0, 0], sizes = [1, 1, 4], strides = [1, 1, 1]} : vector<25x1x4xf32> to vector<1x1x4xf32>
    %407 = vector.shape_cast %406 : vector<1x1x4xf32> to vector<1x4xf32>
    %408 = vector.shape_cast %407 : vector<1x4xf32> to vector<1x1x4xf32>
    %409 = vector.broadcast %408 : vector<1x1x4xf32> to vector<16x8x4xf32>
    %410 = arith.mulf %405, %409 : vector<16x8x4xf32>
    %411 = arith.addf %395, %410 : vector<16x8x4xf32>
    %c0_226 = arith.constant 0 : index
    %c1_227 = arith.constant 1 : index
    %c2_228 = arith.constant 2 : index
    %c0_229 = arith.constant 0 : index
    %412 = vector.load %arg13[%c0_226, %c1_227, %c2_228, %c0_229] : memref<2x20x10x4xf32, #tpu.memory_space<vmem>>, vector<1x16x8x4xf32>
    %413 = vector.shape_cast %412 : vector<1x16x8x4xf32> to vector<16x8x4xf32>
    %414 = vector.extract_strided_slice %130 {offsets = [8, 0, 0], sizes = [1, 1, 4], strides = [1, 1, 1]} : vector<25x1x4xf32> to vector<1x1x4xf32>
    %415 = vector.shape_cast %414 : vector<1x1x4xf32> to vector<1x4xf32>
    %416 = vector.shape_cast %415 : vector<1x4xf32> to vector<1x1x4xf32>
    %417 = vector.broadcast %416 : vector<1x1x4xf32> to vector<16x8x4xf32>
    %418 = arith.mulf %413, %417 : vector<16x8x4xf32>
    %419 = arith.addf %403, %418 : vector<16x8x4xf32>
    %c1_230 = arith.constant 1 : index
    %c1_231 = arith.constant 1 : index
    %c2_232 = arith.constant 2 : index
    %c0_233 = arith.constant 0 : index
    %420 = vector.load %arg13[%c1_230, %c1_231, %c2_232, %c0_233] : memref<2x20x10x4xf32, #tpu.memory_space<vmem>>, vector<1x16x8x4xf32>
    %421 = vector.shape_cast %420 : vector<1x16x8x4xf32> to vector<16x8x4xf32>
    %422 = vector.extract_strided_slice %130 {offsets = [9, 0, 0], sizes = [1, 1, 4], strides = [1, 1, 1]} : vector<25x1x4xf32> to vector<1x1x4xf32>
    %423 = vector.shape_cast %422 : vector<1x1x4xf32> to vector<1x4xf32>
    %424 = vector.shape_cast %423 : vector<1x4xf32> to vector<1x1x4xf32>
    %425 = vector.broadcast %424 : vector<1x1x4xf32> to vector<16x8x4xf32>
    %426 = arith.mulf %421, %425 : vector<16x8x4xf32>
    %427 = arith.addf %411, %426 : vector<16x8x4xf32>
    %c1_234 = arith.constant 1 : index
    %c2_235 = arith.constant 2 : index
    %c0_236 = arith.constant 0 : index
    %c0_237 = arith.constant 0 : index
    %428 = vector.load %arg13[%c1_234, %c2_235, %c0_236, %c0_237] : memref<2x20x10x4xf32, #tpu.memory_space<vmem>>, vector<1x16x8x4xf32>
    %429 = vector.shape_cast %428 : vector<1x16x8x4xf32> to vector<16x8x4xf32>
    %430 = vector.extract_strided_slice %130 {offsets = [10, 0, 0], sizes = [1, 1, 4], strides = [1, 1, 1]} : vector<25x1x4xf32> to vector<1x1x4xf32>
    %431 = vector.shape_cast %430 : vector<1x1x4xf32> to vector<1x4xf32>
    %432 = vector.shape_cast %431 : vector<1x4xf32> to vector<1x1x4xf32>
    %433 = vector.broadcast %432 : vector<1x1x4xf32> to vector<16x8x4xf32>
    %434 = arith.mulf %429, %433 : vector<16x8x4xf32>
    %435 = arith.addf %419, %434 : vector<16x8x4xf32>
    %c0_238 = arith.constant 0 : index
    %c2_239 = arith.constant 2 : index
    %c1_240 = arith.constant 1 : index
    %c0_241 = arith.constant 0 : index
    %436 = vector.load %arg13[%c0_238, %c2_239, %c1_240, %c0_241] : memref<2x20x10x4xf32, #tpu.memory_space<vmem>>, vector<1x16x8x4xf32>
    %437 = vector.shape_cast %436 : vector<1x16x8x4xf32> to vector<16x8x4xf32>
    %438 = vector.extract_strided_slice %130 {offsets = [11, 0, 0], sizes = [1, 1, 4], strides = [1, 1, 1]} : vector<25x1x4xf32> to vector<1x1x4xf32>
    %439 = vector.shape_cast %438 : vector<1x1x4xf32> to vector<1x4xf32>
    %440 = vector.shape_cast %439 : vector<1x4xf32> to vector<1x1x4xf32>
    %441 = vector.broadcast %440 : vector<1x1x4xf32> to vector<16x8x4xf32>
    %442 = arith.mulf %437, %441 : vector<16x8x4xf32>
    %443 = arith.addf %427, %442 : vector<16x8x4xf32>
    %c1_242 = arith.constant 1 : index
    %c2_243 = arith.constant 2 : index
    %c1_244 = arith.constant 1 : index
    %c0_245 = arith.constant 0 : index
    %444 = vector.load %arg13[%c1_242, %c2_243, %c1_244, %c0_245] : memref<2x20x10x4xf32, #tpu.memory_space<vmem>>, vector<1x16x8x4xf32>
    %445 = vector.shape_cast %444 : vector<1x16x8x4xf32> to vector<16x8x4xf32>
    %446 = vector.extract_strided_slice %130 {offsets = [12, 0, 0], sizes = [1, 1, 4], strides = [1, 1, 1]} : vector<25x1x4xf32> to vector<1x1x4xf32>
    %447 = vector.shape_cast %446 : vector<1x1x4xf32> to vector<1x4xf32>
    %448 = vector.shape_cast %447 : vector<1x4xf32> to vector<1x1x4xf32>
    %449 = vector.broadcast %448 : vector<1x1x4xf32> to vector<16x8x4xf32>
    %450 = arith.mulf %445, %449 : vector<16x8x4xf32>
    %451 = arith.addf %435, %450 : vector<16x8x4xf32>
    %c0_246 = arith.constant 0 : index
    %c2_247 = arith.constant 2 : index
    %c2_248 = arith.constant 2 : index
    %c0_249 = arith.constant 0 : index
    %452 = vector.load %arg13[%c0_246, %c2_247, %c2_248, %c0_249] : memref<2x20x10x4xf32, #tpu.memory_space<vmem>>, vector<1x16x8x4xf32>
    %453 = vector.shape_cast %452 : vector<1x16x8x4xf32> to vector<16x8x4xf32>
    %454 = vector.extract_strided_slice %130 {offsets = [13, 0, 0], sizes = [1, 1, 4], strides = [1, 1, 1]} : vector<25x1x4xf32> to vector<1x1x4xf32>
    %455 = vector.shape_cast %454 : vector<1x1x4xf32> to vector<1x4xf32>
    %456 = vector.shape_cast %455 : vector<1x4xf32> to vector<1x1x4xf32>
    %457 = vector.broadcast %456 : vector<1x1x4xf32> to vector<16x8x4xf32>
    %458 = arith.mulf %453, %457 : vector<16x8x4xf32>
    %459 = arith.addf %443, %458 : vector<16x8x4xf32>
    %c1_250 = arith.constant 1 : index
    %c2_251 = arith.constant 2 : index
    %c2_252 = arith.constant 2 : index
    %c0_253 = arith.constant 0 : index
    %460 = vector.load %arg13[%c1_250, %c2_251, %c2_252, %c0_253] : memref<2x20x10x4xf32, #tpu.memory_space<vmem>>, vector<1x16x8x4xf32>
    %461 = vector.shape_cast %460 : vector<1x16x8x4xf32> to vector<16x8x4xf32>
    %462 = vector.extract_strided_slice %130 {offsets = [14, 0, 0], sizes = [1, 1, 4], strides = [1, 1, 1]} : vector<25x1x4xf32> to vector<1x1x4xf32>
    %463 = vector.shape_cast %462 : vector<1x1x4xf32> to vector<1x4xf32>
    %464 = vector.shape_cast %463 : vector<1x4xf32> to vector<1x1x4xf32>
    %465 = vector.broadcast %464 : vector<1x1x4xf32> to vector<16x8x4xf32>
    %466 = arith.mulf %461, %465 : vector<16x8x4xf32>
    %467 = arith.addf %451, %466 : vector<16x8x4xf32>
    %c1_254 = arith.constant 1 : index
    %c3_255 = arith.constant 3 : index
    %c0_256 = arith.constant 0 : index
    %c0_257 = arith.constant 0 : index
    %468 = vector.load %arg13[%c1_254, %c3_255, %c0_256, %c0_257] : memref<2x20x10x4xf32, #tpu.memory_space<vmem>>, vector<1x16x8x4xf32>
    %469 = vector.shape_cast %468 : vector<1x16x8x4xf32> to vector<16x8x4xf32>
    %470 = vector.extract_strided_slice %130 {offsets = [15, 0, 0], sizes = [1, 1, 4], strides = [1, 1, 1]} : vector<25x1x4xf32> to vector<1x1x4xf32>
    %471 = vector.shape_cast %470 : vector<1x1x4xf32> to vector<1x4xf32>
    %472 = vector.shape_cast %471 : vector<1x4xf32> to vector<1x1x4xf32>
    %473 = vector.broadcast %472 : vector<1x1x4xf32> to vector<16x8x4xf32>
    %474 = arith.mulf %469, %473 : vector<16x8x4xf32>
    %475 = arith.addf %459, %474 : vector<16x8x4xf32>
    %c0_258 = arith.constant 0 : index
    %c3_259 = arith.constant 3 : index
    %c1_260 = arith.constant 1 : index
    %c0_261 = arith.constant 0 : index
    %476 = vector.load %arg13[%c0_258, %c3_259, %c1_260, %c0_261] : memref<2x20x10x4xf32, #tpu.memory_space<vmem>>, vector<1x16x8x4xf32>
    %477 = vector.shape_cast %476 : vector<1x16x8x4xf32> to vector<16x8x4xf32>
    %478 = vector.extract_strided_slice %130 {offsets = [16, 0, 0], sizes = [1, 1, 4], strides = [1, 1, 1]} : vector<25x1x4xf32> to vector<1x1x4xf32>
    %479 = vector.shape_cast %478 : vector<1x1x4xf32> to vector<1x4xf32>
    %480 = vector.shape_cast %479 : vector<1x4xf32> to vector<1x1x4xf32>
    %481 = vector.broadcast %480 : vector<1x1x4xf32> to vector<16x8x4xf32>
    %482 = arith.mulf %477, %481 : vector<16x8x4xf32>
    %483 = arith.addf %467, %482 : vector<16x8x4xf32>
    %c1_262 = arith.constant 1 : index
    %c3_263 = arith.constant 3 : index
    %c1_264 = arith.constant 1 : index
    %c0_265 = arith.constant 0 : index
    %484 = vector.load %arg13[%c1_262, %c3_263, %c1_264, %c0_265] : memref<2x20x10x4xf32, #tpu.memory_space<vmem>>, vector<1x16x8x4xf32>
    %485 = vector.shape_cast %484 : vector<1x16x8x4xf32> to vector<16x8x4xf32>
    %486 = vector.extract_strided_slice %130 {offsets = [17, 0, 0], sizes = [1, 1, 4], strides = [1, 1, 1]} : vector<25x1x4xf32> to vector<1x1x4xf32>
    %487 = vector.shape_cast %486 : vector<1x1x4xf32> to vector<1x4xf32>
    %488 = vector.shape_cast %487 : vector<1x4xf32> to vector<1x1x4xf32>
    %489 = vector.broadcast %488 : vector<1x1x4xf32> to vector<16x8x4xf32>
    %490 = arith.mulf %485, %489 : vector<16x8x4xf32>
    %491 = arith.addf %475, %490 : vector<16x8x4xf32>
    %c0_266 = arith.constant 0 : index
    %c3_267 = arith.constant 3 : index
    %c2_268 = arith.constant 2 : index
    %c0_269 = arith.constant 0 : index
    %492 = vector.load %arg13[%c0_266, %c3_267, %c2_268, %c0_269] : memref<2x20x10x4xf32, #tpu.memory_space<vmem>>, vector<1x16x8x4xf32>
    %493 = vector.shape_cast %492 : vector<1x16x8x4xf32> to vector<16x8x4xf32>
    %494 = vector.extract_strided_slice %130 {offsets = [18, 0, 0], sizes = [1, 1, 4], strides = [1, 1, 1]} : vector<25x1x4xf32> to vector<1x1x4xf32>
    %495 = vector.shape_cast %494 : vector<1x1x4xf32> to vector<1x4xf32>
    %496 = vector.shape_cast %495 : vector<1x4xf32> to vector<1x1x4xf32>
    %497 = vector.broadcast %496 : vector<1x1x4xf32> to vector<16x8x4xf32>
    %498 = arith.mulf %493, %497 : vector<16x8x4xf32>
    %499 = arith.addf %483, %498 : vector<16x8x4xf32>
    %c1_270 = arith.constant 1 : index
    %c3_271 = arith.constant 3 : index
    %c2_272 = arith.constant 2 : index
    %c0_273 = arith.constant 0 : index
    %500 = vector.load %arg13[%c1_270, %c3_271, %c2_272, %c0_273] : memref<2x20x10x4xf32, #tpu.memory_space<vmem>>, vector<1x16x8x4xf32>
    %501 = vector.shape_cast %500 : vector<1x16x8x4xf32> to vector<16x8x4xf32>
    %502 = vector.extract_strided_slice %130 {offsets = [19, 0, 0], sizes = [1, 1, 4], strides = [1, 1, 1]} : vector<25x1x4xf32> to vector<1x1x4xf32>
    %503 = vector.shape_cast %502 : vector<1x1x4xf32> to vector<1x4xf32>
    %504 = vector.shape_cast %503 : vector<1x4xf32> to vector<1x1x4xf32>
    %505 = vector.broadcast %504 : vector<1x1x4xf32> to vector<16x8x4xf32>
    %506 = arith.mulf %501, %505 : vector<16x8x4xf32>
    %507 = arith.addf %491, %506 : vector<16x8x4xf32>
    %c1_274 = arith.constant 1 : index
    %c4_275 = arith.constant 4 : index
    %c0_276 = arith.constant 0 : index
    %c0_277 = arith.constant 0 : index
    %508 = vector.load %arg13[%c1_274, %c4_275, %c0_276, %c0_277] : memref<2x20x10x4xf32, #tpu.memory_space<vmem>>, vector<1x16x8x4xf32>
    %509 = vector.shape_cast %508 : vector<1x16x8x4xf32> to vector<16x8x4xf32>
    %510 = vector.extract_strided_slice %130 {offsets = [20, 0, 0], sizes = [1, 1, 4], strides = [1, 1, 1]} : vector<25x1x4xf32> to vector<1x1x4xf32>
    %511 = vector.shape_cast %510 : vector<1x1x4xf32> to vector<1x4xf32>
    %512 = vector.shape_cast %511 : vector<1x4xf32> to vector<1x1x4xf32>
    %513 = vector.broadcast %512 : vector<1x1x4xf32> to vector<16x8x4xf32>
    %514 = arith.mulf %509, %513 : vector<16x8x4xf32>
    %515 = arith.addf %499, %514 : vector<16x8x4xf32>
    %c0_278 = arith.constant 0 : index
    %c4_279 = arith.constant 4 : index
    %c1_280 = arith.constant 1 : index
    %c0_281 = arith.constant 0 : index
    %516 = vector.load %arg13[%c0_278, %c4_279, %c1_280, %c0_281] : memref<2x20x10x4xf32, #tpu.memory_space<vmem>>, vector<1x16x8x4xf32>
    %517 = vector.shape_cast %516 : vector<1x16x8x4xf32> to vector<16x8x4xf32>
    %518 = vector.extract_strided_slice %130 {offsets = [21, 0, 0], sizes = [1, 1, 4], strides = [1, 1, 1]} : vector<25x1x4xf32> to vector<1x1x4xf32>
    %519 = vector.shape_cast %518 : vector<1x1x4xf32> to vector<1x4xf32>
    %520 = vector.shape_cast %519 : vector<1x4xf32> to vector<1x1x4xf32>
    %521 = vector.broadcast %520 : vector<1x1x4xf32> to vector<16x8x4xf32>
    %522 = arith.mulf %517, %521 : vector<16x8x4xf32>
    %523 = arith.addf %507, %522 : vector<16x8x4xf32>
    %c1_282 = arith.constant 1 : index
    %c4_283 = arith.constant 4 : index
    %c1_284 = arith.constant 1 : index
    %c0_285 = arith.constant 0 : index
    %524 = vector.load %arg13[%c1_282, %c4_283, %c1_284, %c0_285] : memref<2x20x10x4xf32, #tpu.memory_space<vmem>>, vector<1x16x8x4xf32>
    %525 = vector.shape_cast %524 : vector<1x16x8x4xf32> to vector<16x8x4xf32>
    %526 = vector.extract_strided_slice %130 {offsets = [22, 0, 0], sizes = [1, 1, 4], strides = [1, 1, 1]} : vector<25x1x4xf32> to vector<1x1x4xf32>
    %527 = vector.shape_cast %526 : vector<1x1x4xf32> to vector<1x4xf32>
    %528 = vector.shape_cast %527 : vector<1x4xf32> to vector<1x1x4xf32>
    %529 = vector.broadcast %528 : vector<1x1x4xf32> to vector<16x8x4xf32>
    %530 = arith.mulf %525, %529 : vector<16x8x4xf32>
    %531 = arith.addf %515, %530 : vector<16x8x4xf32>
    %c0_286 = arith.constant 0 : index
    %c4_287 = arith.constant 4 : index
    %c2_288 = arith.constant 2 : index
    %c0_289 = arith.constant 0 : index
    %532 = vector.load %arg13[%c0_286, %c4_287, %c2_288, %c0_289] : memref<2x20x10x4xf32, #tpu.memory_space<vmem>>, vector<1x16x8x4xf32>
    %533 = vector.shape_cast %532 : vector<1x16x8x4xf32> to vector<16x8x4xf32>
    %534 = vector.extract_strided_slice %130 {offsets = [23, 0, 0], sizes = [1, 1, 4], strides = [1, 1, 1]} : vector<25x1x4xf32> to vector<1x1x4xf32>
    %535 = vector.shape_cast %534 : vector<1x1x4xf32> to vector<1x4xf32>
    %536 = vector.shape_cast %535 : vector<1x4xf32> to vector<1x1x4xf32>
    %537 = vector.broadcast %536 : vector<1x1x4xf32> to vector<16x8x4xf32>
    %538 = arith.mulf %533, %537 : vector<16x8x4xf32>
    %539 = arith.addf %523, %538 : vector<16x8x4xf32>
    %c1_290 = arith.constant 1 : index
    %c4_291 = arith.constant 4 : index
    %c2_292 = arith.constant 2 : index
    %c0_293 = arith.constant 0 : index
    %540 = vector.load %arg13[%c1_290, %c4_291, %c2_292, %c0_293] : memref<2x20x10x4xf32, #tpu.memory_space<vmem>>, vector<1x16x8x4xf32>
    %541 = vector.shape_cast %540 : vector<1x16x8x4xf32> to vector<16x8x4xf32>
    %542 = vector.extract_strided_slice %130 {offsets = [24, 0, 0], sizes = [1, 1, 4], strides = [1, 1, 1]} : vector<25x1x4xf32> to vector<1x1x4xf32>
    %543 = vector.shape_cast %542 : vector<1x1x4xf32> to vector<1x4xf32>
    %544 = vector.shape_cast %543 : vector<1x4xf32> to vector<1x1x4xf32>
    %545 = vector.broadcast %544 : vector<1x1x4xf32> to vector<16x8x4xf32>
    %546 = arith.mulf %541, %545 : vector<16x8x4xf32>
    %547 = arith.addf %531, %546 : vector<16x8x4xf32>
    %548 = arith.addf %547, %539 : vector<16x8x4xf32>
    %549 = vector.shape_cast %131 : vector<1x4xf32> to vector<1x1x4xf32>
    %550 = vector.broadcast %549 : vector<1x1x4xf32> to vector<16x8x4xf32>
    %551 = arith.addf %548, %550 : vector<16x8x4xf32>
    %c1_294 = arith.constant 1 : index
    %c2_295 = arith.constant 2 : index
    %c1_296 = arith.constant 1 : index
    %c0_297 = arith.constant 0 : index
    %552 = vector.load %arg13[%c1_294, %c2_295, %c1_296, %c0_297] : memref<2x20x10x4xf32, #tpu.memory_space<vmem>>, vector<1x16x8x4xf32>
    %553 = vector.shape_cast %552 : vector<1x16x8x4xf32> to vector<16x8x4xf32>
    %554 = arith.mulf %553, %118 : vector<16x8x4xf32>
    %555 = arith.mulf %551, %119 : vector<16x8x4xf32>
    %556 = tpu.concatenate %554, %555 in 2 : vector<16x8x4xf32>, vector<16x8x4xf32> -> vector<16x8x8xf32>
    %c0_298 = arith.constant 0 : index
    %c1_299 = arith.constant 1 : index
    %c0_300 = arith.constant 0 : index
    %c0_301 = arith.constant 0 : index
    %c0_302 = arith.constant 0 : index
    %557 = vector.load %arg12[%c0_298, %c1_299, %c0_300, %c0_301, %c0_302] : memref<1x2x16x8x8xf32, #tpu.memory_space<vmem>>, vector<1x1x16x8x8xf32>
    %558 = vector.shape_cast %557 : vector<1x1x16x8x8xf32> to vector<16x8x8xf32>
    %559 = vector.shape_cast %556 : vector<16x8x8xf32> to vector<1x1x16x8x8xf32>
    tpu.vector_store %arg12[%c0_298, %c1_299, %c0_300, %c0_301, %c0_302], %559 {strides = array<i32>} : memref<1x2x16x8x8xf32, #tpu.memory_space<vmem>>, vector<1x1x16x8x8xf32>,
    return
  }
  func.func @transform_0(%arg0: i32) -> (i32, i32, i32, i32, i32) {
    %c0_i32 = arith.constant 0 : i32
    %c0_i32_0 = arith.constant 0 : i32
    %c0_i32_1 = arith.constant 0 : i32
    %c0_i32_2 = arith.constant 0 : i32
    %c0_i32_3 = arith.constant 0 : i32
    return %arg0, %c0_i32, %c0_i32_0, %c0_i32_1, %c0_i32_2 : i32, i32, i32, i32, i32
  }
  func.func @transform_1(%arg0: i32) -> (i32, i32) {
    %c0_i32 = arith.constant 0 : i32
    %c0_i32_0 = arith.constant 0 : i32
    %c0_i32_1 = arith.constant 0 : i32
    return %c0_i32, %c0_i32_0 : i32, i32
  }
  func.func @transform_2(%arg0: i32) -> (i32, i32) {
    %c0_i32 = arith.constant 0 : i32
    %c0_i32_0 = arith.constant 0 : i32
    %c0_i32_1 = arith.constant 0 : i32
    return %c0_i32, %c0_i32_0 : i32, i32
  }
  func.func @transform_3(%arg0: i32) -> (i32, i32, i32) {
    %c0_i32 = arith.constant 0 : i32
    %c0_i32_0 = arith.constant 0 : i32
    %c0_i32_1 = arith.constant 0 : i32
    %c0_i32_2 = arith.constant 0 : i32
    return %c0_i32, %c0_i32_0, %c0_i32_1 : i32, i32, i32
  }
  func.func @transform_4(%arg0: i32) -> (i32, i32) {
    %c0_i32 = arith.constant 0 : i32
    %c0_i32_0 = arith.constant 0 : i32
    %c0_i32_1 = arith.constant 0 : i32
    return %c0_i32, %c0_i32_0 : i32, i32
  }
  func.func @transform_5(%arg0: i32) -> (i32, i32, i32) {
    %c0_i32 = arith.constant 0 : i32
    %c0_i32_0 = arith.constant 0 : i32
    %c0_i32_1 = arith.constant 0 : i32
    %c0_i32_2 = arith.constant 0 : i32
    return %c0_i32, %c0_i32_0, %c0_i32_1 : i32, i32, i32
  }
  func.func @transform_6(%arg0: i32) -> (i32, i32) {
    %c0_i32 = arith.constant 0 : i32
    %c0_i32_0 = arith.constant 0 : i32
    %c0_i32_1 = arith.constant 0 : i32
    return %c0_i32, %c0_i32_0 : i32, i32
  }
  func.func @transform_7(%arg0: i32) -> (i32, i32) {
    %c0_i32 = arith.constant 0 : i32
    %c0_i32_0 = arith.constant 0 : i32
    %c0_i32_1 = arith.constant 0 : i32
    return %c0_i32, %c0_i32_0 : i32, i32
  }
  func.func @transform_8(%arg0: i32) -> (i32, i32) {
    %c0_i32 = arith.constant 0 : i32
    %c0_i32_0 = arith.constant 0 : i32
    %c0_i32_1 = arith.constant 0 : i32
    return %c0_i32, %c0_i32_0 : i32, i32
  }
  func.func @transform_9(%arg0: i32) -> (i32, i32, i32) {
    %c0_i32 = arith.constant 0 : i32
    %c0_i32_0 = arith.constant 0 : i32
    %c0_i32_1 = arith.constant 0 : i32
    %c0_i32_2 = arith.constant 0 : i32
    return %c0_i32, %c0_i32_0, %c0_i32_1 : i32, i32, i32
  }
  func.func @transform_10(%arg0: i32) -> (i32, i32) {
    %c0_i32 = arith.constant 0 : i32
    %c0_i32_0 = arith.constant 0 : i32
    %c0_i32_1 = arith.constant 0 : i32
    return %c0_i32, %c0_i32_0 : i32, i32
  }
  func.func @transform_11(%arg0: i32) -> (i32, i32, i32, i32, i32) {
    %c0_i32 = arith.constant 0 : i32
    %c0_i32_0 = arith.constant 0 : i32
    %c0_i32_1 = arith.constant 0 : i32
    %c0_i32_2 = arith.constant 0 : i32
    %c0_i32_3 = arith.constant 0 : i32
    return %arg0, %c0_i32, %c0_i32_0, %c0_i32_1, %c0_i32_2 : i32, i32, i32, i32, i32
  }
}

</mosaic_0001>

<llo_original>
// kernel: tpu_custom_call.1
$region0: #{tpu_custom_call.1}
  #allocation0 [shape = 'u32[]', space=smem, size = 0x4, offset = 0x4, fixed_abs, tag = 'smem constant byte address 0x4 - core index']
  #allocation1 [shape = 'u32[72,128]{1,0:T(1,128)}', space=vmem, size = 0x9000, scoped, tag = 'internal scratch']
  #allocation2 [shape = 'f32[2,20,10,4]{3,2,1,0:T(8,128)}', space=vmem, size = 0x50000, scoped, tag = 'scratch operand']
  #allocation3 [shape = 'f32[8,12,8]{2,1,0:T(8,128)}', space=vmem, size = 0x10000, scoped, tag = 'scratch operand']
  #allocation4 [shape = 'f32[12,8,8]{2,1,0:T(8,128)}', space=vmem, size = 0xc000, scoped, tag = 'scratch operand']
  %s0 = inlined_call_operand.vmem [shape: f32[2,2,16,8,8], index: 0, kind: input, shape index: {}]
  %s1 = inlined_call_operand.vmem [shape: f32[8,8], index: 1, kind: input, shape index: {}]
  %s2 = inlined_call_operand.vmem [shape: f32[1,8], index: 2, kind: input, shape index: {}]
  %s3 = inlined_call_operand.vmem [shape: f32[5,1,8], index: 3, kind: input, shape index: {}]
  %s4 = inlined_call_operand.vmem [shape: f32[1,8], index: 4, kind: input, shape index: {}]
  %s5 = inlined_call_operand.vmem [shape: f32[5,1,8], index: 5, kind: input, shape index: {}]
  %s6 = inlined_call_operand.vmem [shape: f32[1,8], index: 6, kind: input, shape index: {}]
  %s7 = inlined_call_operand.vmem [shape: f32[8,4], index: 7, kind: input, shape index: {}]
  %s8 = inlined_call_operand.vmem [shape: f32[1,4], index: 8, kind: input, shape index: {}]
  %s9 = inlined_call_operand.vmem [shape: f32[25,1,4], index: 9, kind: input, shape index: {}]
  %s10 = inlined_call_operand.vmem [shape: f32[1,4], index: 10, kind: input, shape index: {}]
  %s11 = inlined_call_operand.vmem [shape: f32[2,2,16,8,8], index: 11, kind: output, shape index: {}]
  %s12 = sld [smem:[#allocation0]]
  $region77: #{tpu_custom_call.1} parent=0
    _
  %s14 = ssub.s32 1, %s12
  %s15 = scalar_select 0, %s14, %s12
  loop: start=0, step=1, limit=4
  $region2: #{tpu_custom_call.1} parent=0 // loop_pre_header
    _
  $region3: #{tpu_custom_call.1} parent=0 // loop_header
    %s17 = sphi 0, %s21
    %p18 = scmp.ge.s32.totalorder %s17, 4
    %s27 = sphi 0, %s29
    %s30 = sphi 0, %s27
    %s31 = sphi 0, %s30
    %s47 = sphi 0, %s31
    %s51 = sphi 0, %s51
    %s53 = sphi 0, %s51
    %s54 = sphi 0, %s53
    %s68 = sphi 0, %s54
    %s72 = sphi 0, %s72
    %s74 = sphi 0, %s72
    %s75 = sphi 0, %s74
    %s89 = sphi 0, %s75
    %s93 = sphi 0, %s93
    %s95 = sphi 0, %s93
    %s96 = sphi 0, %s95
    %s110 = sphi 0, %s96
    %s114 = sphi 0, %s114
    %s116 = sphi 0, %s114
    %s117 = sphi 0, %s116
    %s131 = sphi 0, %s117
    %s135 = sphi 0, %s135
    %s137 = sphi 0, %s135
    %s138 = sphi 0, %s137
    %s152 = sphi 0, %s138
    %s156 = sphi 0, %s156
    %s158 = sphi 0, %s156
    %s159 = sphi 0, %s158
    %s173 = sphi 0, %s159
    %s177 = sphi 0, %s177
    %s179 = sphi 0, %s177
    %s180 = sphi 0, %s179
    %s194 = sphi 0, %s180
    %s198 = sphi 0, %s198
    %s200 = sphi 0, %s198
    %s201 = sphi 0, %s200
    %s215 = sphi 0, %s201
    %s219 = sphi 0, %s219
    %s221 = sphi 0, %s219
    %s222 = sphi 0, %s221
    %s236 = sphi 0, %s222
    %s240 = sphi 0, %s240
    %s242 = sphi 0, %s240
    %s243 = sphi 0, %s242
    %s257 = sphi 0, %s243
    %s263 = sphi 0, %s265
    %s266 = sphi 0, %s263
    %s267 = sphi 0, %s266
    %s283 = sphi 0, %s267
  $region4: #{tpu_custom_call.1} parent=0 // loop_header_branch
    %20 = sbr.rel (%p18) target = $region8
  $region5: #{tpu_custom_call.1} parent=0 // loop_body
    %s22 = ssub.s32 %s17, 1
    %s23 = ssub.s32 %s17, 2
    %s24 = sadd.s32 %s17, 1
    %s25 = ssub.s32 %s17, %s24
    %p26 = scmp.eq.s32.totalorder %s25, 0
    %s28 = sadd.s32 %s27, 1
    %s29 = scalar_select %p26, %s27, %s28
    %p32 = pneg %p26
    %p33 = scmp.eq.s32.totalorder %s17, 1
    %p34 = por %p32, %p33
    %p35 = scmp.ne.s32.totalorder %s27, %s30
    %p36 = scmp.eq.s32.totalorder %s17, 0
    %p37 = por %p35, %p36
    %p38 = scmp.ne.s32.totalorder %s27, %s30
    %p39 = scmp.eq.s32.totalorder %s22, 1
    %p40 = por %p38, %p39
    %p41 = scmp.ne.s32.totalorder %s30, %s31
    %p42 = scmp.eq.s32.totalorder %s22, 0
    %p43 = por %p41, %p42
    %p44 = scmp.ne.s32.totalorder %s30, %s31
    %p45 = scmp.eq.s32.totalorder %s23, 1
    %p46 = por %p44, %p45
    %p48 = scmp.ne.s32.totalorder %s31, %s47
    %p49 = scmp.eq.s32.totalorder %s23, 0
    %p50 = por %p48, %p49
    %s52 = sadd.s32 %s51, 1
    %p55 = scmp.eq.s32.totalorder %s17, 1
    %p56 = scmp.ne.s32.totalorder %s51, %s53
    %p57 = scmp.eq.s32.totalorder %s17, 0
    %p58 = por %p56, %p57
    %p59 = scmp.ne.s32.totalorder %s51, %s53
    %p60 = scmp.eq.s32.totalorder %s22, 1
    %p61 = por %p59, %p60
    %p62 = scmp.ne.s32.totalorder %s53, %s54
    %p63 = scmp.eq.s32.totalorder %s22, 0
    %p64 = por %p62, %p63
    %p65 = scmp.ne.s32.totalorder %s53, %s54
    %p66 = scmp.eq.s32.totalorder %s23, 1
    %p67 = por %p65, %p66
    %p69 = scmp.ne.s32.totalorder %s54, %s68
    %p70 = scmp.eq.s32.totalorder %s23, 0
    %p71 = por %p69, %p70
    %s73 = sadd.s32 %s72, 1
    %p76 = scmp.eq.s32.totalorder %s17, 1
    %p77 = scmp.ne.s32.totalorder %s72, %s74
    %p78 = scmp.eq.s32.totalorder %s17, 0
    %p79 = por %p77, %p78
    %p80 = scmp.ne.s32.totalorder %s72, %s74
    %p81 = scmp.eq.s32.totalorder %s22, 1
    %p82 = por %p80, %p81
    %p83 = scmp.ne.s32.totalorder %s74, %s75
    %p84 = scmp.eq.s32.totalorder %s22, 0
    %p85 = por %p83, %p84
    %p86 = scmp.ne.s32.totalorder %s74, %s75
    %p87 = scmp.eq.s32.totalorder %s23, 1
    %p88 = por %p86, %p87
    %p90 = scmp.ne.s32.totalorder %s75, %s89
    %p91 = scmp.eq.s32.totalorder %s23, 0
    %p92 = por %p90, %p91
    %s94 = sadd.s32 %s93, 1
    %p97 = scmp.eq.s32.totalorder %s17, 1
    %p98 = scmp.ne.s32.totalorder %s93, %s95
    %p99 = scmp.eq.s32.totalorder %s17, 0
    %p100 = por %p98, %p99
    %p101 = scmp.ne.s32.totalorder %s93, %s95
    %p102 = scmp.eq.s32.totalorder %s22, 1
    %p103 = por %p101, %p102
    %p104 = scmp.ne.s32.totalorder %s95, %s96
    %p105 = scmp.eq.s32.totalorder %s22, 0
    %p106 = por %p104, %p105
    %p107 = scmp.ne.s32.totalorder %s95, %s96
    %p108 = scmp.eq.s32.totalorder %s23, 1
    %p109 = por %p107, %p108
    %p111 = scmp.ne.s32.totalorder %s96, %s110
    %p112 = scmp.eq.s32.totalorder %s23, 0
    %p113 = por %p111, %p112
    %s115 = sadd.s32 %s114, 1
    %p118 = scmp.eq.s32.totalorder %s17, 1
    %p119 = scmp.ne.s32.totalorder %s114, %s116
    %p120 = scmp.eq.s32.totalorder %s17, 0
    %p121 = por %p119, %p120
    %p122 = scmp.ne.s32.totalorder %s114, %s116
    %p123 = scmp.eq.s32.totalorder %s22, 1
    %p124 = por %p122, %p123
    %p125 = scmp.ne.s32.totalorder %s116, %s117
    %p126 = scmp.eq.s32.totalorder %s22, 0
    %p127 = por %p125, %p126
    %p128 = scmp.ne.s32.totalorder %s116, %s117
    %p129 = scmp.eq.s32.totalorder %s23, 1
    %p130 = por %p128, %p129
    %p132 = scmp.ne.s32.totalorder %s117, %s131
    %p133 = scmp.eq.s32.totalorder %s23, 0
    %p134 = por %p132, %p133
    %s136 = sadd.s32 %s135, 1
    %p139 = scmp.eq.s32.totalorder %s17, 1
    %p140 = scmp.ne.s32.totalorder %s135, %s137
    %p141 = scmp.eq.s32.totalorder %s17, 0
    %p142 = por %p140, %p141
    %p143 = scmp.ne.s32.totalorder %s135, %s137
    %p144 = scmp.eq.s32.totalorder %s22, 1
    %p145 = por %p143, %p144
    %p146 = scmp.ne.s32.totalorder %s137, %s138
    %p147 = scmp.eq.s32.totalorder %s22, 0
    %p148 = por %p146, %p147
    %p149 = scmp.ne.s32.totalorder %s137, %s138
    %p150 = scmp.eq.s32.totalorder %s23, 1
    %p151 = por %p149, %p150
    %p153 = scmp.ne.s32.totalorder %s138, %s152
    %p154 = scmp.eq.s32.totalorder %s23, 0
    %p155 = por %p153, %p154
    %s157 = sadd.s32 %s156, 1
    %p160 = scmp.eq.s32.totalorder %s17, 1
    %p161 = scmp.ne.s32.totalorder %s156, %s158
    %p162 = scmp.eq.s32.totalorder %s17, 0
    %p163 = por %p161, %p162
    %p164 = scmp.ne.s32.totalorder %s156, %s158
    %p165 = scmp.eq.s32.totalorder %s22, 1
    %p166 = por %p164, %p165
    %p167 = scmp.ne.s32.totalorder %s158, %s159
    %p168 = scmp.eq.s32.totalorder %s22, 0
    %p169 = por %p167, %p168
    %p170 = scmp.ne.s32.totalorder %s158, %s159
    %p171 = scmp.eq.s32.totalorder %s23, 1
    %p172 = por %p170, %p171
    %p174 = scmp.ne.s32.totalorder %s159, %s173
    %p175 = scmp.eq.s32.totalorder %s23, 0
    %p176 = por %p174, %p175
    %s178 = sadd.s32 %s177, 1
    %p181 = scmp.eq.s32.totalorder %s17, 1
    %p182 = scmp.ne.s32.totalorder %s177, %s179
    %p183 = scmp.eq.s32.totalorder %s17, 0
    %p184 = por %p182, %p183
    %p185 = scmp.ne.s32.totalorder %s177, %s179
    %p186 = scmp.eq.s32.totalorder %s22, 1
    %p187 = por %p185, %p186
    %p188 = scmp.ne.s32.totalorder %s179, %s180
    %p189 = scmp.eq.s32.totalorder %s22, 0
    %p190 = por %p188, %p189
    %p191 = scmp.ne.s32.totalorder %s179, %s180
    %p192 = scmp.eq.s32.totalorder %s23, 1
    %p193 = por %p191, %p192
    %p195 = scmp.ne.s32.totalorder %s180, %s194
    %p196 = scmp.eq.s32.totalorder %s23, 0
    %p197 = por %p195, %p196
    %s199 = sadd.s32 %s198, 1
    %p202 = scmp.eq.s32.totalorder %s17, 1
    %p203 = scmp.ne.s32.totalorder %s198, %s200
    %p204 = scmp.eq.s32.totalorder %s17, 0
    %p205 = por %p203, %p204
    %p206 = scmp.ne.s32.totalorder %s198, %s200
    %p207 = scmp.eq.s32.totalorder %s22, 1
    %p208 = por %p206, %p207
    %p209 = scmp.ne.s32.totalorder %s200, %s201
    %p210 = scmp.eq.s32.totalorder %s22, 0
    %p211 = por %p209, %p210
    %p212 = scmp.ne.s32.totalorder %s200, %s201
    %p213 = scmp.eq.s32.totalorder %s23, 1
    %p214 = por %p212, %p213
    %p216 = scmp.ne.s32.totalorder %s201, %s215
    %p217 = scmp.eq.s32.totalorder %s23, 0
    %p218 = por %p216, %p217
    %s220 = sadd.s32 %s219, 1
    %p223 = scmp.eq.s32.totalorder %s17, 1
    %p224 = scmp.ne.s32.totalorder %s219, %s221
    %p225 = scmp.eq.s32.totalorder %s17, 0
    %p226 = por %p224, %p225
    %p227 = scmp.ne.s32.totalorder %s219, %s221
    %p228 = scmp.eq.s32.totalorder %s22, 1
    %p229 = por %p227, %p228
    %p230 = scmp.ne.s32.totalorder %s221, %s222
    %p231 = scmp.eq.s32.totalorder %s22, 0
    %p232 = por %p230, %p231
    %p233 = scmp.ne.s32.totalorder %s221, %s222
    %p234 = scmp.eq.s32.totalorder %s23, 1
    %p235 = por %p233, %p234
    %p237 = scmp.ne.s32.totalorder %s222, %s236
    %p238 = scmp.eq.s32.totalorder %s23, 0
    %p239 = por %p237, %p238
    %s241 = sadd.s32 %s240, 1
    %p244 = scmp.eq.s32.totalorder %s17, 1
    %p245 = scmp.ne.s32.totalorder %s240, %s242
    %p246 = scmp.eq.s32.totalorder %s17, 0
    %p247 = por %p245, %p246
    %p248 = scmp.ne.s32.totalorder %s240, %s242
    %p249 = scmp.eq.s32.totalorder %s22, 1
    %p250 = por %p248, %p249
    %p251 = scmp.ne.s32.totalorder %s242, %s243
    %p252 = scmp.eq.s32.totalorder %s22, 0
    %p253 = por %p251, %p252
    %p254 = scmp.ne.s32.totalorder %s242, %s243
    %p255 = scmp.eq.s32.totalorder %s23, 1
    %p256 = por %p254, %p255
    %p258 = scmp.ne.s32.totalorder %s243, %s257
    %p259 = scmp.eq.s32.totalorder %s23, 0
    %p260 = por %p258, %p259
    %s261 = ssub.s32 %s17, %s24
    %p262 = scmp.eq.s32.totalorder %s261, 0
    %s264 = sadd.s32 %s263, 1
    %s265 = scalar_select %p262, %s263, %s264
    %p268 = pneg %p262
    %p269 = scmp.eq.s32.totalorder %s17, 1
    %p270 = por %p268, %p269
    %p271 = scmp.ne.s32.totalorder %s263, %s266
    %p272 = scmp.eq.s32.totalorder %s17, 0
    %p273 = por %p271, %p272
    %p274 = scmp.ne.s32.totalorder %s263, %s266
    %p275 = scmp.eq.s32.totalorder %s22, 1
    %p276 = por %p274, %p275
    %p277 = scmp.ne.s32.totalorder %s266, %s267
    %p278 = scmp.eq.s32.totalorder %s22, 0
    %p279 = por %p277, %p278
    %p280 = scmp.ne.s32.totalorder %s266, %s267
    %p281 = scmp.eq.s32.totalorder %s23, 1
    %p282 = por %p280, %p281
    %p284 = scmp.ne.s32.totalorder %s267, %s283
    %p285 = scmp.eq.s32.totalorder %s23, 0
    %p286 = por %p284, %p285
    %p287 = scmp.le.s32.totalorder 1, %s17
    %p288 = scmp.lt.s32.totalorder %s17, 3
    %p289 = pnand %p287, %p288
    %p290 = pneg %p289
    // Predicated region
    $region9: #{tpu_custom_call.1} parent=5 // pred_check
      _
    $region10: #{tpu_custom_call.1} parent=5 // pred_check_branch
      %292 = sbr.rel (%p289) target = $region12
    $region11: #{tpu_custom_call.1} parent=5 // pred_region
      %s293 = ssub.s32 %s17, 1
      // Predicated region
      $region13: #{tpu_custom_call.1} parent=11 // pred_check
        %p294 = pneg %p64
      $region14: #{tpu_custom_call.1} parent=11 // pred_check_branch
        %296 = sbr.rel (%p294) target = $region16
      $region15: #{tpu_custom_call.1} parent=11 // pred_region
        _
      $region16: #{tpu_custom_call.1} parent=11 // pred_fallthru
        _
      // Predicated region
      $region17: #{tpu_custom_call.1} parent=11 // pred_check
        %p297 = pneg %p85
      $region18: #{tpu_custom_call.1} parent=11 // pred_check_branch
        %299 = sbr.rel (%p297) target = $region20
      $region19: #{tpu_custom_call.1} parent=11 // pred_region
        _
      $region20: #{tpu_custom_call.1} parent=11 // pred_fallthru
        _
      // Predicated region
      $region21: #{tpu_custom_call.1} parent=11 // pred_check
        %p300 = pneg %p106
      $region22: #{tpu_custom_call.1} parent=11 // pred_check_branch
        %302 = sbr.rel (%p300) target = $region24
      $region23: #{tpu_custom_call.1} parent=11 // pred_region
        _
      $region24: #{tpu_custom_call.1} parent=11 // pred_fallthru
        _
      // Predicated region
      $region25: #{tpu_custom_call.1} parent=11 // pred_check
        %p303 = pneg %p127
      $region26: #{tpu_custom_call.1} parent=11 // pred_check_branch
        %305 = sbr.rel (%p303) target = $region28
      $region27: #{tpu_custom_call.1} parent=11 // pred_region
        _
      $region28: #{tpu_custom_call.1} parent=11 // pred_fallthru
        _
      // Predicated region
      $region29: #{tpu_custom_call.1} parent=11 // pred_check
        %p306 = pneg %p148
      $region30: #{tpu_custom_call.1} parent=11 // pred_check_branch
        %308 = sbr.rel (%p306) target = $region32
      $region31: #{tpu_custom_call.1} parent=11 // pred_region
        _
      $region32: #{tpu_custom_call.1} parent=11 // pred_fallthru
        _
      // Predicated region
      $region33: #{tpu_custom_call.1} parent=11 // pred_check
        %p309 = pneg %p169
      $region34: #{tpu_custom_call.1} parent=11 // pred_check_branch
        %311 = sbr.rel (%p309) target = $region36
      $region35: #{tpu_custom_call.1} parent=11 // pred_region
        _
      $region36: #{tpu_custom_call.1} parent=11 // pred_fallthru
        _
      // Predicated region
      $region37: #{tpu_custom_call.1} parent=11 // pred_check
        %p312 = pneg %p190
      $region38: #{tpu_custom_call.1} parent=11 // pred_check_branch
        %314 = sbr.rel (%p312) target = $region40
      $region39: #{tpu_custom_call.1} parent=11 // pred_region
        _
      $region40: #{tpu_custom_call.1} parent=11 // pred_fallthru
        _
      // Predicated region
      $region41: #{tpu_custom_call.1} parent=11 // pred_check
        %p315 = pneg %p211
      $region42: #{tpu_custom_call.1} parent=11 // pred_check_branch
        %317 = sbr.rel (%p315) target = $region44
      $region43: #{tpu_custom_call.1} parent=11 // pred_region
        _
      $region44: #{tpu_custom_call.1} parent=11 // pred_fallthru
        _
      // Predicated region
      $region45: #{tpu_custom_call.1} parent=11 // pred_check
        %p318 = pneg %p232
      $region46: #{tpu_custom_call.1} parent=11 // pred_check_branch
        %320 = sbr.rel (%p318) target = $region48
      $region47: #{tpu_custom_call.1} parent=11 // pred_region
        _
      $region48: #{tpu_custom_call.1} parent=11 // pred_fallthru
        _
      // Predicated region
      $region49: #{tpu_custom_call.1} parent=11 // pred_check
        %p321 = pneg %p253
      $region50: #{tpu_custom_call.1} parent=11 // pred_check_branch
        %323 = sbr.rel (%p321) target = $region52
      $region51: #{tpu_custom_call.1} parent=11 // pred_region
        _
      $region52: #{tpu_custom_call.1} parent=11 // pred_fallthru
        _
    $region12: #{tpu_custom_call.1} parent=5 // pred_fallthru
      _
    %p324 = scmp.lt.s32.totalorder %s17, 2
    // Predicated region
    $region53: #{tpu_custom_call.1} parent=5 // pred_check
      %p325 = pneg %p324
    $region54: #{tpu_custom_call.1} parent=5 // pred_check_branch
      %327 = sbr.rel (%p325) target = $region56
    $region55: #{tpu_custom_call.1} parent=5 // pred_region
      // Predicated region
      $region57: #{tpu_custom_call.1} parent=55 // pred_check
        %p328 = pneg %p37
      $region58: #{tpu_custom_call.1} parent=55 // pred_check_branch
        %330 = sbr.rel (%p328) target = $region60
      $region59: #{tpu_custom_call.1} parent=55 // pred_region
        %p331 = scmp.lt.s32.totalorder %s17, 1
        %s332 = scalar_select %p331, %s17, 1
        %s333 = smul.addr %s332, 32
        %s334 = smul.addr %s333, 8
        %s335 = scalar_lea.vmem %s0, %s334
      $region60: #{tpu_custom_call.1} parent=55 // pred_fallthru
        _
    $region56: #{tpu_custom_call.1} parent=5 // pred_fallthru
      _
    %p336 = scmp.le.s32.totalorder 1, %s17
    %p337 = scmp.lt.s32.totalorder %s17, 3
    %p338 = pnand %p336, %p337
    %p339 = pneg %p338
    // Predicated region
    $region61: #{tpu_custom_call.1} parent=5 // pred_check
      _
    $region62: #{tpu_custom_call.1} parent=5 // pred_check_branch
      %341 = sbr.rel (%p338) target = $region64
    $region63: #{tpu_custom_call.1} parent=5 // pred_region
      %s342 = ssub.s32 %s17, 1
      %p343 = scmp.lt.s32.totalorder %s22, 1
      %s344 = scalar_select %p343, %s22, 1
      %s345 = smul.addr %s344, 32
      %s346 = smul.addr %s345, 8
      %s347 = scalar_lea.vmem %s0, %s346
      %p348 = pneg %p43
      %p349 = pneg %p40
      %p350 = pneg %p64
      %p351 = pneg %p61
      %p352 = pneg %p85
      %p353 = pneg %p82
      %p354 = pneg %p106
      %p355 = pneg %p103
      %p356 = pneg %p127
      %p357 = pneg %p124
      %p358 = pneg %p148
      %p359 = pneg %p145
      %p360 = pneg %p169
      %p361 = pneg %p166
      %p362 = pneg %p190
      %p363 = pneg %p187
      %p364 = pneg %p211
      %p365 = pneg %p208
      %p366 = pneg %p232
      %p367 = pneg %p229
      %p368 = pneg %p253
      %p369 = pneg %p250
      %p370 = pneg %p279
      %p371 = pneg %p276
      %p372 = scmp.lt.s32.totalorder %s22, 1
      %s373 = scalar_select %p372, %s22, 1
      %s374 = smul.addr %s373, 32
      %s375 = smul.addr %s374, 8
      %s376 = scalar_lea.vmem %s11, %s375
      %p377 = scmp.lt.s32.totalorder %s22, 1
      %s378 = scalar_select %p377, %s22, 1
      %s379 = smul.addr %s378, 32
      %s380 = smul.addr %s379, 8
      %s381 = scalar_lea.vmem %s0, %s380
      %p382 = scmp.lt.s32.totalorder %s22, 1
      %s383 = scalar_select %p382, %s22, 1
      %s384 = smul.addr %s383, 32
      %s385 = smul.addr %s384, 8
      %s386 = scalar_lea.vmem %s11, %s385
      %v387 = vld [vmem:[%s381] sm:$0xff]
      %v388 = vld [vmem:[%s381 + $0x8] sm:$0xff]
      %v389 = vld [vmem:[%s381 + $0x10] sm:$0xff]
      %v390 = vld [vmem:[%s381 + $0x18] sm:$0xff]
      %v391 = vld [vmem:[%s381 + $0x20] sm:$0xff]
      %v392 = vld [vmem:[%s381 + $0x28] sm:$0xff]
      %v393 = vld [vmem:[%s381 + $0x30] sm:$0xff]
      %v394 = vld [vmem:[%s381 + $0x38] sm:$0xff]
      %v395 = vld [vmem:[%s381 + $0x40] sm:$0xff]
      %v396 = vld [vmem:[%s381 + $0x48] sm:$0xff]
      %v397 = vld [vmem:[%s381 + $0x50] sm:$0xff]
      %v398 = vld [vmem:[%s381 + $0x58] sm:$0xff]
      %v399 = vld [vmem:[%s381 + $0x60] sm:$0xff]
      %v400 = vld [vmem:[%s381 + $0x68] sm:$0xff]
      %v401 = vld [vmem:[%s381 + $0x70] sm:$0xff]
      %v402 = vld [vmem:[%s381 + $0x78] sm:$0xff]
      %v403 = vld [vmem:[%s381 + $0x80] sm:$0xff]
      %v404 = vld [vmem:[%s381 + $0x88] sm:$0xff]
      %v405 = vld [vmem:[%s381 + $0x90] sm:$0xff]
      %v406 = vld [vmem:[%s381 + $0x98] sm:$0xff]
      %v407 = vld [vmem:[%s381 + $0xa0] sm:$0xff]
      %v408 = vld [vmem:[%s381 + $0xa8] sm:$0xff]
      %v409 = vld [vmem:[%s381 + $0xb0] sm:$0xff]
      %v410 = vld [vmem:[%s381 + $0xb8] sm:$0xff]
      %v411 = vld [vmem:[%s381 + $0xc0] sm:$0xff]
      %v412 = vld [vmem:[%s381 + $0xc8] sm:$0xff]
      %v413 = vld [vmem:[%s381 + $0xd0] sm:$0xff]
      %v414 = vld [vmem:[%s381 + $0xd8] sm:$0xff]
      %v415 = vld [vmem:[%s381 + $0xe0] sm:$0xff]
      %v416 = vld [vmem:[%s381 + $0xe8] sm:$0xff]
      %v417 = vld [vmem:[%s381 + $0xf0] sm:$0xff]
      %v418 = vld [vmem:[%s381 + $0xf8] sm:$0xff]
      %v419 = vadd.f32 %v387, %v388
      %v420 = vadd.f32 %v389, %v390
      %v421 = vadd.f32 %v391, %v392
      %v422 = vadd.f32 %v393, %v394
      %v423 = vadd.f32 %v395, %v396
      %v424 = vadd.f32 %v397, %v398
      %v425 = vadd.f32 %v399, %v400
      %v426 = vadd.f32 %v401, %v402
      %v427 = vadd.f32 %v419, %v403
      %v428 = vadd.f32 %v420, %v405
      %v429 = vadd.f32 %v421, %v407
      %v430 = vadd.f32 %v422, %v409
      %v431 = vadd.f32 %v423, %v411
      %v432 = vadd.f32 %v424, %v413
      %v433 = vadd.f32 %v425, %v415
      %v434 = vadd.f32 %v426, %v417
      %v435 = vadd.f32 %v427, %v404
      %v436 = vadd.f32 %v428, %v406
      %v437 = vadd.f32 %v429, %v408
      %v438 = vadd.f32 %v430, %v410
      %v439 = vadd.f32 %v431, %v412
      %v440 = vadd.f32 %v432, %v414
      %v441 = vadd.f32 %v433, %v416
      %v442 = vadd.f32 %v434, %v418
      %v443 = vmul.f32 %v435, 0.25
      %v444 = vmul.f32 %v436, 0.25
      %v445 = vmul.f32 %v437, 0.25
      %v446 = vmul.f32 %v438, 0.25
      %v447 = vmul.f32 %v439, 0.25
      %v448 = vmul.f32 %v440, 0.25
      %v449 = vmul.f32 %v441, 0.25
      %v450 = vmul.f32 %v442, 0.25
      %v451 = vld [vmem:[%s1] sm:$0xff]
      %v452 = vld [vmem:[%s2] sm:$0x1]
      %v454 = vperm.slane %v452, 0
      %vm456 = vcmask 64512
      %v458 = vsel %vm456, %v443, 0
      %v461 = vsel %vm456, %v444, 0
      %v464 = vsel %vm456, %v445, 0
      %v467 = vsel %vm456, %v446, 0
      %v470 = vsel %vm456, %v447, 0
      %v473 = vsel %vm456, %v448, 0
      %v476 = vsel %vm456, %v449, 0
      %v479 = vsel %vm456, %v450, 0
      %481 = vmatpush.msra.mxu0 0.0
      %482 = vmatpush.msra.mxu0 0.0
      %483 = vmatpush.msra.mxu0 0.0
      %484 = vmatpush.msra.mxu0 0.0
      %485 = vmatpush.msra.mxu0 0.0
      %486 = vmatpush.msra.mxu0 0.0
      %487 = vmatpush.msra.mxu0 0.0
      %488 = vmatpush.msra.mxu0 0.0
      %489 = vmatpush.msra.mxu0 0.0
      %490 = vmatpush.msra.mxu0 0.0
      %491 = vmatpush.msra.mxu0 0.0
      %492 = vmatpush.msra.mxu0 0.0
      %493 = vmatpush.msra.mxu0 0.0
      %494 = vmatpush.msra.mxu0 0.0
      %495 = vmatpush.msra.mxu0 0.0
      %v496 = vand.u32 %v451, 4294901760
      %497 = vmatpush.msra.mxu0 %v496
      %v498 = vand.u32 %v458, 4294901760
      %v499 = vsub.f32 %v458, %v498
      %v500 = vand.u32 %v499, 4294901760
      %v501 = vsub.f32 %v499, %v500
      %v502 = vand.u32 %v501, 4294901760
      %503 = vmatmul.f32.gmra.mxu0 %v502
      %v504 = vpop.f32.mrf.mxu0
      %v505 = vadd.f32 %v454, %v504
      %v506 = vand.u32 %v461, 4294901760
      %v507 = vsub.f32 %v461, %v506
      %v508 = vand.u32 %v507, 4294901760
      %v509 = vsub.f32 %v507, %v508
      %v510 = vand.u32 %v509, 4294901760
      %511 = vmatmul.f32.gmra.mxu0 %v510
      %v512 = vpop.f32.mrf.mxu0
      %v513 = vadd.f32 %v454, %v512
      %v514 = vand.u32 %v464, 4294901760
      %v515 = vsub.f32 %v464, %v514
      %v516 = vand.u32 %v515, 4294901760
      %v517 = vsub.f32 %v515, %v516
      %v518 = vand.u32 %v517, 4294901760
      %519 = vmatmul.f32.gmra.mxu0 %v518
      %v520 = vpop.f32.mrf.mxu0
      %v521 = vadd.f32 %v454, %v520
      %v522 = vand.u32 %v467, 4294901760
      %v523 = vsub.f32 %v467, %v522
      %v524 = vand.u32 %v523, 4294901760
      %v525 = vsub.f32 %v523, %v524
      %v526 = vand.u32 %v525, 4294901760
      %527 = vmatmul.f32.gmra.mxu0 %v526
      %v528 = vpop.f32.mrf.mxu0
      %v529 = vadd.f32 %v454, %v528
      %v530 = vand.u32 %v470, 4294901760
      %v531 = vsub.f32 %v470, %v530
      %v532 = vand.u32 %v531, 4294901760
      %v533 = vsub.f32 %v531, %v532
      %v534 = vand.u32 %v533, 4294901760
      %535 = vmatmul.f32.gmra.mxu0 %v534
      %v536 = vpop.f32.mrf.mxu0
      %v537 = vadd.f32 %v454, %v536
      %v538 = vand.u32 %v473, 4294901760
      %v539 = vsub.f32 %v473, %v538
      %v540 = vand.u32 %v539, 4294901760
      %v541 = vsub.f32 %v539, %v540
      %v542 = vand.u32 %v541, 4294901760
      %543 = vmatmul.f32.gmra.mxu0 %v542
      %v544 = vpop.f32.mrf.mxu0
      %v545 = vadd.f32 %v454, %v544
      %v546 = vand.u32 %v476, 4294901760
      %v547 = vsub.f32 %v476, %v546
      %v548 = vand.u32 %v547, 4294901760
      %v549 = vsub.f32 %v547, %v548
      %v550 = vand.u32 %v549, 4294901760
      %551 = vmatmul.f32.gmra.mxu0 %v550
      %v552 = vpop.f32.mrf.mxu0
      %v553 = vadd.f32 %v454, %v552
      %v554 = vand.u32 %v479, 4294901760
      %v555 = vsub.f32 %v479, %v554
      %v556 = vand.u32 %v555, 4294901760
      %v557 = vsub.f32 %v555, %v556
      %v558 = vand.u32 %v557, 4294901760
      %559 = vmatmul.f32.gmra.mxu0 %v558
      %v560 = vpop.f32.mrf.mxu0
      %v561 = vadd.f32 %v454, %v560
      %562 = vdwg.mxu0
      %563 = vmatpush.msra.mxu0 0.0
      %564 = vmatpush.msra.mxu0 0.0
      %565 = vmatpush.msra.mxu0 0.0
      %566 = vmatpush.msra.mxu0 0.0
      %567 = vmatpush.msra.mxu0 0.0
      %568 = vmatpush.msra.mxu0 0.0
      %569 = vmatpush.msra.mxu0 0.0
      %570 = vmatpush.msra.mxu0 0.0
      %571 = vmatpush.msra.mxu0 0.0
      %572 = vmatpush.msra.mxu0 0.0
      %573 = vmatpush.msra.mxu0 0.0
      %574 = vmatpush.msra.mxu0 0.0
      %575 = vmatpush.msra.mxu0 0.0
      %576 = vmatpush.msra.mxu0 0.0
      %577 = vmatpush.msra.mxu0 0.0
      %v578 = vand.u32 %v451, 4294901760
      %v579 = vsub.f32 %v451, %v578
      %v580 = vand.u32 %v579, 4294901760
      %v581 = vsub.f32 %v579, %v580
      %v582 = vand.u32 %v581, 4294901760
      %583 = vmatpush.msra.mxu0 %v582
      %v584 = vand.u32 %v458, 4294901760
      %585 = vmatmul.f32.gmra.mxu0 %v584
      %v586 = vpop.f32.mrf.mxu0
      %v587 = vadd.f32 %v505, %v586
      %v588 = vand.u32 %v461, 4294901760
      %589 = vmatmul.f32.gmra.mxu0 %v588
      %v590 = vpop.f32.mrf.mxu0
      %v591 = vadd.f32 %v513, %v590
      %v592 = vand.u32 %v464, 4294901760
      %593 = vmatmul.f32.gmra.mxu0 %v592
      %v594 = vpop.f32.mrf.mxu0
      %v595 = vadd.f32 %v521, %v594
      %v596 = vand.u32 %v467, 4294901760
      %597 = vmatmul.f32.gmra.mxu0 %v596
      %v598 = vpop.f32.mrf.mxu0
      %v599 = vadd.f32 %v529, %v598
      %v600 = vand.u32 %v470, 4294901760
      %601 = vmatmul.f32.gmra.mxu0 %v600
      %v602 = vpop.f32.mrf.mxu0
      %v603 = vadd.f32 %v537, %v602
      %v604 = vand.u32 %v473, 4294901760
      %605 = vmatmul.f32.gmra.mxu0 %v604
      %v606 = vpop.f32.mrf.mxu0
      %v607 = vadd.f32 %v545, %v606
      %v608 = vand.u32 %v476, 4294901760
      %609 = vmatmul.f32.gmra.mxu0 %v608
      %v610 = vpop.f32.mrf.mxu0
      %v611 = vadd.f32 %v553, %v610
      %v612 = vand.u32 %v479, 4294901760
      %613 = vmatmul.f32.gmra.mxu0 %v612
      %v614 = vpop.f32.mrf.mxu0
      %v615 = vadd.f32 %v561, %v614
      %616 = vdwg.mxu0
      %617 = vmatpush.msra.mxu0 0.0
      %618 = vmatpush.msra.mxu0 0.0
      %619 = vmatpush.msra.mxu0 0.0
      %620 = vmatpush.msra.mxu0 0.0
      %621 = vmatpush.msra.mxu0 0.0
      %622 = vmatpush.msra.mxu0 0.0
      %623 = vmatpush.msra.mxu0 0.0
      %624 = vmatpush.msra.mxu0 0.0
      %625 = vmatpush.msra.mxu0 0.0
      %626 = vmatpush.msra.mxu0 0.0
      %627 = vmatpush.msra.mxu0 0.0
      %628 = vmatpush.msra.mxu0 0.0
      %629 = vmatpush.msra.mxu0 0.0
      %630 = vmatpush.msra.mxu0 0.0
      %631 = vmatpush.msra.mxu0 0.0
      %v632 = vand.u32 %v451, 4294901760
      %v633 = vsub.f32 %v451, %v632
      %634 = vmatpush.msra.mxu0 %v633
      %v635 = vand.u32 %v458, 4294901760
      %v636 = vsub.f32 %v458, %v635
      %637 = vmatmul.f32.gmra.mxu0 %v636
      %v638 = vpop.f32.mrf.mxu0
      %v639 = vadd.f32 %v587, %v638
      %v640 = vand.u32 %v461, 4294901760
      %v641 = vsub.f32 %v461, %v640
      %642 = vmatmul.f32.gmra.mxu0 %v641
      %v643 = vpop.f32.mrf.mxu0
      %v644 = vadd.f32 %v591, %v643
      %v645 = vand.u32 %v464, 4294901760
      %v646 = vsub.f32 %v464, %v645
      %647 = vmatmul.f32.gmra.mxu0 %v646
      %v648 = vpop.f32.mrf.mxu0
      %v649 = vadd.f32 %v595, %v648
      %v650 = vand.u32 %v467, 4294901760
      %v651 = vsub.f32 %v467, %v650
      %652 = vmatmul.f32.gmra.mxu0 %v651
      %v653 = vpop.f32.mrf.mxu0
      %v654 = vadd.f32 %v599, %v653
      %v655 = vand.u32 %v470, 4294901760
      %v656 = vsub.f32 %v470, %v655
      %657 = vmatmul.f32.gmra.mxu0 %v656
      %v658 = vpop.f32.mrf.mxu0
      %v659 = vadd.f32 %v603, %v658
      %v660 = vand.u32 %v473, 4294901760
      %v661 = vsub.f32 %v473, %v660
      %662 = vmatmul.f32.gmra.mxu0 %v661
      %v663 = vpop.f32.mrf.mxu0
      %v664 = vadd.f32 %v607, %v663
      %v665 = vand.u32 %v476, 4294901760
      %v666 = vsub.f32 %v476, %v665
      %667 = vmatmul.f32.gmra.mxu0 %v666
      %v668 = vpop.f32.mrf.mxu0
      %v669 = vadd.f32 %v611, %v668
      %v670 = vand.u32 %v479, 4294901760
      %v671 = vsub.f32 %v479, %v670
      %672 = vmatmul.f32.gmra.mxu0 %v671
      %v673 = vpop.f32.mrf.mxu0
      %v674 = vadd.f32 %v615, %v673
      %675 = vdwg.mxu0
      %676 = vmatpush.msra.mxu0 0.0
      %677 = vmatpush.msra.mxu0 0.0
      %678 = vmatpush.msra.mxu0 0.0
      %679 = vmatpush.msra.mxu0 0.0
      %680 = vmatpush.msra.mxu0 0.0
      %681 = vmatpush.msra.mxu0 0.0
      %682 = vmatpush.msra.mxu0 0.0
      %683 = vmatpush.msra.mxu0 0.0
      %684 = vmatpush.msra.mxu0 0.0
      %685 = vmatpush.msra.mxu0 0.0
      %686 = vmatpush.msra.mxu0 0.0
      %687 = vmatpush.msra.mxu0 0.0
      %688 = vmatpush.msra.mxu0 0.0
      %689 = vmatpush.msra.mxu0 0.0
      %690 = vmatpush.msra.mxu0 0.0
      %v691 = vand.u32 %v451, 4294901760
      %692 = vmatpush.msra.mxu0 %v691
      %v693 = vand.u32 %v458, 4294901760
      %v694 = vsub.f32 %v458, %v693
      %v695 = vand.u32 %v694, 4294901760
      %696 = vmatmul.f32.gmra.mxu0 %v695
      %v697 = vpop.f32.mrf.mxu0
      %v698 = vadd.f32 %v639, %v697
      %v699 = vand.u32 %v461, 4294901760
      %v700 = vsub.f32 %v461, %v699
      %v701 = vand.u32 %v700, 4294901760
      %702 = vmatmul.f32.gmra.mxu0 %v701
      %v703 = vpop.f32.mrf.mxu0
      %v704 = vadd.f32 %v644, %v703
      %v705 = vand.u32 %v464, 4294901760
      %v706 = vsub.f32 %v464, %v705
      %v707 = vand.u32 %v706, 4294901760
      %708 = vmatmul.f32.gmra.mxu0 %v707
      %v709 = vpop.f32.mrf.mxu0
      %v710 = vadd.f32 %v649, %v709
      %v711 = vand.u32 %v467, 4294901760
      %v712 = vsub.f32 %v467, %v711
      %v713 = vand.u32 %v712, 4294901760
      %714 = vmatmul.f32.gmra.mxu0 %v713
      %v715 = vpop.f32.mrf.mxu0
      %v716 = vadd.f32 %v654, %v715
      %v717 = vand.u32 %v470, 4294901760
      %v718 = vsub.f32 %v470, %v717
      %v719 = vand.u32 %v718, 4294901760
      %720 = vmatmul.f32.gmra.mxu0 %v719
      %v721 = vpop.f32.mrf.mxu0
      %v722 = vadd.f32 %v659, %v721
      %v723 = vand.u32 %v473, 4294901760
      %v724 = vsub.f32 %v473, %v723
      %v725 = vand.u32 %v724, 4294901760
      %726 = vmatmul.f32.gmra.mxu0 %v725
      %v727 = vpop.f32.mrf.mxu0
      %v728 = vadd.f32 %v664, %v727
      %v729 = vand.u32 %v476, 4294901760
      %v730 = vsub.f32 %v476, %v729
      %v731 = vand.u32 %v730, 4294901760
      %732 = vmatmul.f32.gmra.mxu0 %v731
      %v733 = vpop.f32.mrf.mxu0
      %v734 = vadd.f32 %v669, %v733
      %v735 = vand.u32 %v479, 4294901760
      %v736 = vsub.f32 %v479, %v735
      %v737 = vand.u32 %v736, 4294901760
      %738 = vmatmul.f32.gmra.mxu0 %v737
      %v739 = vpop.f32.mrf.mxu0
      %v740 = vadd.f32 %v674, %v739
      %741 = vdwg.mxu0
      %742 = vmatpush.msra.mxu0 0.0
      %743 = vmatpush.msra.mxu0 0.0
      %744 = vmatpush.msra.mxu0 0.0
      %745 = vmatpush.msra.mxu0 0.0
      %746 = vmatpush.msra.mxu0 0.0
      %747 = vmatpush.msra.mxu0 0.0
      %748 = vmatpush.msra.mxu0 0.0
      %749 = vmatpush.msra.mxu0 0.0
      %750 = vmatpush.msra.mxu0 0.0
      %751 = vmatpush.msra.mxu0 0.0
      %752 = vmatpush.msra.mxu0 0.0
      %753 = vmatpush.msra.mxu0 0.0
      %754 = vmatpush.msra.mxu0 0.0
      %755 = vmatpush.msra.mxu0 0.0
      %756 = vmatpush.msra.mxu0 0.0
      %v757 = vand.u32 %v451, 4294901760
      %v758 = vsub.f32 %v451, %v757
      %v759 = vand.u32 %v758, 4294901760
      %760 = vmatpush.msra.mxu0 %v759
      %v761 = vand.u32 %v458, 4294901760
      %762 = vmatmul.f32.gmra.mxu0 %v761
      %v763 = vpop.f32.mrf.mxu0
      %v764 = vadd.f32 %v698, %v763
      %v765 = vand.u32 %v461, 4294901760
      %766 = vmatmul.f32.gmra.mxu0 %v765
      %v767 = vpop.f32.mrf.mxu0
      %v768 = vadd.f32 %v704, %v767
      %v769 = vand.u32 %v464, 4294901760
      %770 = vmatmul.f32.gmra.mxu0 %v769
      %v771 = vpop.f32.mrf.mxu0
      %v772 = vadd.f32 %v710, %v771
      %v773 = vand.u32 %v467, 4294901760
      %774 = vmatmul.f32.gmra.mxu0 %v773
      %v775 = vpop.f32.mrf.mxu0
      %v776 = vadd.f32 %v716, %v775
      %v777 = vand.u32 %v470, 4294901760
      %778 = vmatmul.f32.gmra.mxu0 %v777
      %v779 = vpop.f32.mrf.mxu0
      %v780 = vadd.f32 %v722, %v779
      %v781 = vand.u32 %v473, 4294901760
      %782 = vmatmul.f32.gmra.mxu0 %v781
      %v783 = vpop.f32.mrf.mxu0
      %v784 = vadd.f32 %v728, %v783
      %v785 = vand.u32 %v476, 4294901760
      %786 = vmatmul.f32.gmra.mxu0 %v785
      %v787 = vpop.f32.mrf.mxu0
      %v788 = vadd.f32 %v734, %v787
      %v789 = vand.u32 %v479, 4294901760
      %790 = vmatmul.f32.gmra.mxu0 %v789
      %v791 = vpop.f32.mrf.mxu0
      %v792 = vadd.f32 %v740, %v791
      %793 = vdwg.mxu0
      %794 = vmatpush.msra.mxu0 0.0
      %795 = vmatpush.msra.mxu0 0.0
      %796 = vmatpush.msra.mxu0 0.0
      %797 = vmatpush.msra.mxu0 0.0
      %798 = vmatpush.msra.mxu0 0.0
      %799 = vmatpush.msra.mxu0 0.0
      %800 = vmatpush.msra.mxu0 0.0
      %801 = vmatpush.msra.mxu0 0.0
      %802 = vmatpush.msra.mxu0 0.0
      %803 = vmatpush.msra.mxu0 0.0
      %804 = vmatpush.msra.mxu0 0.0
      %805 = vmatpush.msra.mxu0 0.0
      %806 = vmatpush.msra.mxu0 0.0
      %807 = vmatpush.msra.mxu0 0.0
      %808 = vmatpush.msra.mxu0 0.0
      %v809 = vand.u32 %v451, 4294901760
      %810 = vmatpush.msra.mxu0 %v809
      %v811 = vand.u32 %v458, 4294901760
      %812 = vmatmul.f32.gmra.mxu0 %v811
      %v813 = vpop.f32.mrf.mxu0
      %v814 = vadd.f32 %v764, %v813
      %v815 = vand.u32 %v461, 4294901760
      %816 = vmatmul.f32.gmra.mxu0 %v815
      %v817 = vpop.f32.mrf.mxu0
      %v818 = vadd.f32 %v768, %v817
      %v819 = vand.u32 %v464, 4294901760
      %820 = vmatmul.f32.gmra.mxu0 %v819
      %v821 = vpop.f32.mrf.mxu0
      %v822 = vadd.f32 %v772, %v821
      %v823 = vand.u32 %v467, 4294901760
      %824 = vmatmul.f32.gmra.mxu0 %v823
      %v825 = vpop.f32.mrf.mxu0
      %v826 = vadd.f32 %v776, %v825
      %v827 = vand.u32 %v470, 4294901760
      %828 = vmatmul.f32.gmra.mxu0 %v827
      %v829 = vpop.f32.mrf.mxu0
      %v830 = vadd.f32 %v780, %v829
      %v831 = vand.u32 %v473, 4294901760
      %832 = vmatmul.f32.gmra.mxu0 %v831
      %v833 = vpop.f32.mrf.mxu0
      %v834 = vadd.f32 %v784, %v833
      %v835 = vand.u32 %v476, 4294901760
      %836 = vmatmul.f32.gmra.mxu0 %v835
      %v837 = vpop.f32.mrf.mxu0
      %v838 = vadd.f32 %v788, %v837
      %v839 = vand.u32 %v479, 4294901760
      %840 = vmatmul.f32.gmra.mxu0 %v839
      %v841 = vpop.f32.mrf.mxu0
      %v842 = vadd.f32 %v792, %v841
      %843 = vdwg.mxu0
      %844 = vst.msk [vmem:[#allocation3] sm:$0xff] %vm456, 0.0
      %vm845 = vcmask 60416
      %846 = vst.msk [vmem:[#allocation3 + $0x8] sm:$0xf] %vm845, 0.0
      %847 = vst.msk [vmem:[#allocation3 + $0x10] sm:$0xff] %vm456, 0.0
      %848 = vst.msk [vmem:[#allocation3 + $0x18] sm:$0xf] %vm845, 0.0
      %849 = vst.msk [vmem:[#allocation3 + $0x20] sm:$0xff] %vm456, 0.0
      %850 = vst.msk [vmem:[#allocation3 + $0x28] sm:$0xf] %vm845, 0.0
      %851 = vst.msk [vmem:[#allocation3 + $0x30] sm:$0xff] %vm456, 0.0
      %852 = vst.msk [vmem:[#allocation3 + $0x38] sm:$0xf] %vm845, 0.0
      %853 = vst.msk [vmem:[#allocation3 + $0x40] sm:$0xff] %vm456, 0.0
      %854 = vst.msk [vmem:[#allocation3 + $0x48] sm:$0xf] %vm845, 0.0
      %855 = vst.msk [vmem:[#allocation3 + $0x50] sm:$0xff] %vm456, 0.0
      %856 = vst.msk [vmem:[#allocation3 + $0x58] sm:$0xf] %vm845, 0.0
      %857 = vst.msk [vmem:[#allocation3 + $0x60] sm:$0xff] %vm456, 0.0
      %858 = vst.msk [vmem:[#allocation3 + $0x68] sm:$0xf] %vm845, 0.0
      %859 = vst.msk [vmem:[#allocation3 + $0x70] sm:$0xff] %vm456, 0.0
      %860 = vst.msk [vmem:[#allocation3 + $0x78] sm:$0xf] %vm845, 0.0
      %861 = vst.msk [vmem:[#allocation3 + $0x2] sm:$0xff] %vm456, %v814
      %862 = vst.msk [vmem:[#allocation3 + $0x12] sm:$0xff] %vm456, %v818
      %863 = vst.msk [vmem:[#allocation3 + $0x22] sm:$0xff] %vm456, %v822
      %864 = vst.msk [vmem:[#allocation3 + $0x32] sm:$0xff] %vm456, %v826
      %865 = vst.msk [vmem:[#allocation3 + $0x42] sm:$0xff] %vm456, %v830
      %866 = vst.msk [vmem:[#allocation3 + $0x52] sm:$0xff] %vm456, %v834
      %867 = vst.msk [vmem:[#allocation3 + $0x62] sm:$0xff] %vm456, %v838
      %868 = vst.msk [vmem:[#allocation3 + $0x72] sm:$0xff] %vm456, %v842
      %v869 = vld [vmem:[%s3] sm:$0x1]
      %v870 = vld [vmem:[%s3 + $0x1] sm:$0x1]
      %v871 = vld [vmem:[%s3 + $0x2] sm:$0x1]
      %v872 = vld [vmem:[%s3 + $0x3] sm:$0x1]
      %v873 = vld [vmem:[%s3 + $0x4] sm:$0x1]
      %v874 = vld [vmem:[#allocation3] sm:$0xff]
      %v875 = vld [vmem:[#allocation3 + $0x10] sm:$0xff]
      %v876 = vld [vmem:[#allocation3 + $0x20] sm:$0xff]
      %v877 = vld [vmem:[#allocation3 + $0x30] sm:$0xff]
      %v878 = vld [vmem:[#allocation3 + $0x40] sm:$0xff]
      %v879 = vld [vmem:[#allocation3 + $0x50] sm:$0xff]
      %v880 = vld [vmem:[#allocation3 + $0x60] sm:$0xff]
      %v881 = vld [vmem:[#allocation3 + $0x70] sm:$0xff]
      %v883 = vperm.slane %v869, 0
      %v885 = vmul.f32 %v874, %v883
      %v886 = vmul.f32 %v875, %v883
      %v887 = vmul.f32 %v876, %v883
      %v888 = vmul.f32 %v877, %v883
      %v889 = vmul.f32 %v878, %v883
      %v890 = vmul.f32 %v879, %v883
      %v891 = vmul.f32 %v880, %v883
      %v892 = vmul.f32 %v881, %v883
      %v893 = vld [vmem:[#allocation3 + $0x1] sm:$0xff]
      %v894 = vld [vmem:[#allocation3 + $0x11] sm:$0xff]
      %v895 = vld [vmem:[#allocation3 + $0x21] sm:$0xff]
      %v896 = vld [vmem:[#allocation3 + $0x31] sm:$0xff]
      %v897 = vld [vmem:[#allocation3 + $0x41] sm:$0xff]
      %v898 = vld [vmem:[#allocation3 + $0x51] sm:$0xff]
      %v899 = vld [vmem:[#allocation3 + $0x61] sm:$0xff]
      %v900 = vld [vmem:[#allocation3 + $0x71] sm:$0xff]
      %v902 = vperm.slane %v870, 0
      %v904 = vmul.f32 %v893, %v902
      %v905 = vmul.f32 %v894, %v902
      %v906 = vmul.f32 %v895, %v902
      %v907 = vmul.f32 %v896, %v902
      %v908 = vmul.f32 %v897, %v902
      %v909 = vmul.f32 %v898, %v902
      %v910 = vmul.f32 %v899, %v902
      %v911 = vmul.f32 %v900, %v902
      %v912 = vld [vmem:[#allocation3 + $0x2] sm:$0xff]
      %v913 = vld [vmem:[#allocation3 + $0x12] sm:$0xff]
      %v914 = vld [vmem:[#allocation3 + $0x22] sm:$0xff]
      %v915 = vld [vmem:[#allocation3 + $0x32] sm:$0xff]
      %v916 = vld [vmem:[#allocation3 + $0x42] sm:$0xff]
      %v917 = vld [vmem:[#allocation3 + $0x52] sm:$0xff]
      %v918 = vld [vmem:[#allocation3 + $0x62] sm:$0xff]
      %v919 = vld [vmem:[#allocation3 + $0x72] sm:$0xff]
      %v921 = vperm.slane %v871, 0
      %v923 = vmul.f32 %v912, %v921
      %v924 = vmul.f32 %v913, %v921
      %v925 = vmul.f32 %v914, %v921
      %v926 = vmul.f32 %v915, %v921
      %v927 = vmul.f32 %v916, %v921
      %v928 = vmul.f32 %v917, %v921
      %v929 = vmul.f32 %v918, %v921
      %v930 = vmul.f32 %v919, %v921
      %v931 = vld [vmem:[#allocation3 + $0x3] sm:$0xff]
      %v932 = vld [vmem:[#allocation3 + $0x13] sm:$0xff]
      %v933 = vld [vmem:[#allocation3 + $0x23] sm:$0xff]
      %v934 = vld [vmem:[#allocation3 + $0x33] sm:$0xff]
      %v935 = vld [vmem:[#allocation3 + $0x43] sm:$0xff]
      %v936 = vld [vmem:[#allocation3 + $0x53] sm:$0xff]
      %v937 = vld [vmem:[#allocation3 + $0x63] sm:$0xff]
      %v938 = vld [vmem:[#allocation3 + $0x73] sm:$0xff]
      %v940 = vperm.slane %v872, 0
      %v942 = vmul.f32 %v931, %v940
      %v943 = vmul.f32 %v932, %v940
      %v944 = vmul.f32 %v933, %v940
      %v945 = vmul.f32 %v934, %v940
      %v946 = vmul.f32 %v935, %v940
      %v947 = vmul.f32 %v936, %v940
      %v948 = vmul.f32 %v937, %v940
      %v949 = vmul.f32 %v938, %v940
      %v950 = vld [vmem:[#allocation3 + $0x4] sm:$0xff]
      %v951 = vld [vmem:[#allocation3 + $0x14] sm:$0xff]
      %v952 = vld [vmem:[#allocation3 + $0x24] sm:$0xff]
      %v953 = vld [vmem:[#allocation3 + $0x34] sm:$0xff]
      %v954 = vld [vmem:[#allocation3 + $0x44] sm:$0xff]
      %v955 = vld [vmem:[#allocation3 + $0x54] sm:$0xff]
      %v956 = vld [vmem:[#allocation3 + $0x64] sm:$0xff]
      %v957 = vld [vmem:[#allocation3 + $0x74] sm:$0xff]
      %v959 = vperm.slane %v873, 0
      %v961 = vmul.f32 %v950, %v959
      %v962 = vmul.f32 %v951, %v959
      %v963 = vmul.f32 %v952, %v959
      %v964 = vmul.f32 %v953, %v959
      %v965 = vmul.f32 %v954, %v959
      %v966 = vmul.f32 %v955, %v959
      %v967 = vmul.f32 %v956, %v959
      %v968 = vmul.f32 %v957, %v959
      %v969 = vadd.f32 %v885, %v904
      %v970 = vadd.f32 %v886, %v905
      %v971 = vadd.f32 %v887, %v906
      %v972 = vadd.f32 %v888, %v907
      %v973 = vadd.f32 %v889, %v908
      %v974 = vadd.f32 %v890, %v909
      %v975 = vadd.f32 %v891, %v910
      %v976 = vadd.f32 %v892, %v911
      %v977 = vadd.f32 %v923, %v942
      %v978 = vadd.f32 %v924, %v943
      %v979 = vadd.f32 %v925, %v944
      %v980 = vadd.f32 %v926, %v945
      %v981 = vadd.f32 %v927, %v946
      %v982 = vadd.f32 %v928, %v947
      %v983 = vadd.f32 %v929, %v948
      %v984 = vadd.f32 %v930, %v949
      %v985 = vadd.f32 %v969, %v977
      %v986 = vadd.f32 %v970, %v978
      %v987 = vadd.f32 %v971, %v979
      %v988 = vadd.f32 %v972, %v980
      %v989 = vadd.f32 %v973, %v981
      %v990 = vadd.f32 %v974, %v982
      %v991 = vadd.f32 %v975, %v983
      %v992 = vadd.f32 %v976, %v984
      %v993 = vadd.f32 %v985, %v961
      %v994 = vadd.f32 %v986, %v962
      %v995 = vadd.f32 %v987, %v963
      %v996 = vadd.f32 %v988, %v964
      %v997 = vadd.f32 %v989, %v965
      %v998 = vadd.f32 %v990, %v966
      %v999 = vadd.f32 %v991, %v967
      %v1000 = vadd.f32 %v992, %v968
      %v1001 = vld [vmem:[%s4] sm:$0x1]
      %v1003 = vperm.slane %v1001, 0
      %v1005 = vadd.f32 %v993, %v1003
      %v1006 = vadd.f32 %v994, %v1003
      %v1007 = vadd.f32 %v995, %v1003
      %v1008 = vadd.f32 %v996, %v1003
      %v1009 = vadd.f32 %v997, %v1003
      %v1010 = vadd.f32 %v998, %v1003
      %v1011 = vadd.f32 %v999, %v1003
      %v1012 = vadd.f32 %v1000, %v1003
      %1013 = vst.msk [vmem:[#allocation4] sm:$0xff] %vm456, 0.0
      %1014 = vst.msk [vmem:[#allocation4 + $0x8] sm:$0xff] %vm456, 0.0
      %1015 = vst.msk [vmem:[#allocation4 + $0x10] sm:$0xff] %vm456, 0.0
      %1016 = vst.msk [vmem:[#allocation4 + $0x18] sm:$0xff] %vm456, 0.0
      %1017 = vst.msk [vmem:[#allocation4 + $0x20] sm:$0xff] %vm456, 0.0
      %1018 = vst.msk [vmem:[#allocation4 + $0x28] sm:$0xff] %vm456, 0.0
      %1019 = vst.msk [vmem:[#allocation4 + $0x30] sm:$0xff] %vm456, 0.0
      %1020 = vst.msk [vmem:[#allocation4 + $0x38] sm:$0xff] %vm456, 0.0
      %1021 = vst.msk [vmem:[#allocation4 + $0x40] sm:$0xff] %vm456, 0.0
      %1022 = vst.msk [vmem:[#allocation4 + $0x48] sm:$0xff] %vm456, 0.0
      %1023 = vst.msk [vmem:[#allocation4 + $0x50] sm:$0xff] %vm456, 0.0
      %1024 = vst.msk [vmem:[#allocation4 + $0x58] sm:$0xff] %vm456, 0.0
      %s1025 = scalar_lea.vmem [#allocation4], 16
      %1026 = vst.msk [vmem:[%s1025] sm:$0xff] %vm456, %v1005
      %1027 = vst.msk [vmem:[%s1025 + $0x8] sm:$0xff] %vm456, %v1006
      %1028 = vst.msk [vmem:[%s1025 + $0x10] sm:$0xff] %vm456, %v1007
      %1029 = vst.msk [vmem:[%s1025 + $0x18] sm:$0xff] %vm456, %v1008
      %1030 = vst.msk [vmem:[%s1025 + $0x20] sm:$0xff] %vm456, %v1009
      %1031 = vst.msk [vmem:[%s1025 + $0x28] sm:$0xff] %vm456, %v1010
      %1032 = vst.msk [vmem:[%s1025 + $0x30] sm:$0xff] %vm456, %v1011
      %1033 = vst.msk [vmem:[%s1025 + $0x38] sm:$0xff] %vm456, %v1012
      %v1034 = vld [vmem:[%s5] sm:$0x1]
      %v1035 = vld [vmem:[%s5 + $0x1] sm:$0x1]
      %v1036 = vld [vmem:[%s5 + $0x2] sm:$0x1]
      %v1037 = vld [vmem:[%s5 + $0x3] sm:$0x1]
      %v1038 = vld [vmem:[%s5 + $0x4] sm:$0x1]
      %v1039 = vld [vmem:[#allocation4] sm:$0xff]
      %v1040 = vld [vmem:[#allocation4 + $0x8] sm:$0xff]
      %v1041 = vld [vmem:[#allocation4 + $0x10] sm:$0xff]
      %v1042 = vld [vmem:[#allocation4 + $0x18] sm:$0xff]
      %v1043 = vld [vmem:[#allocation4 + $0x20] sm:$0xff]
      %v1044 = vld [vmem:[#allocation4 + $0x28] sm:$0xff]
      %v1045 = vld [vmem:[#allocation4 + $0x30] sm:$0xff]
      %v1046 = vld [vmem:[#allocation4 + $0x38] sm:$0xff]
      %v1048 = vperm.slane %v1034, 0
      %v1050 = vmul.f32 %v1039, %v1048
      %v1051 = vmul.f32 %v1040, %v1048
      %v1052 = vmul.f32 %v1041, %v1048
      %v1053 = vmul.f32 %v1042, %v1048
      %v1054 = vmul.f32 %v1043, %v1048
      %v1055 = vmul.f32 %v1044, %v1048
      %v1056 = vmul.f32 %v1045, %v1048
      %v1057 = vmul.f32 %v1046, %v1048
      %s1058 = scalar_lea.vmem [#allocation4], 8
      %v1059 = vld [vmem:[%s1058] sm:$0xff]
      %v1060 = vld [vmem:[%s1058 + $0x8] sm:$0xff]
      %v1061 = vld [vmem:[%s1058 + $0x10] sm:$0xff]
      %v1062 = vld [vmem:[%s1058 + $0x18] sm:$0xff]
      %v1063 = vld [vmem:[%s1058 + $0x20] sm:$0xff]
      %v1064 = vld [vmem:[%s1058 + $0x28] sm:$0xff]
      %v1065 = vld [vmem:[%s1058 + $0x30] sm:$0xff]
      %v1066 = vld [vmem:[%s1058 + $0x38] sm:$0xff]
      %v1068 = vperm.slane %v1035, 0
      %v1070 = vmul.f32 %v1059, %v1068
      %v1071 = vmul.f32 %v1060, %v1068
      %v1072 = vmul.f32 %v1061, %v1068
      %v1073 = vmul.f32 %v1062, %v1068
      %v1074 = vmul.f32 %v1063, %v1068
      %v1075 = vmul.f32 %v1064, %v1068
      %v1076 = vmul.f32 %v1065, %v1068
      %v1077 = vmul.f32 %v1066, %v1068
      %v1078 = vld [vmem:[%s1025] sm:$0xff]
      %v1079 = vld [vmem:[%s1025 + $0x8] sm:$0xff]
      %v1080 = vld [vmem:[%s1025 + $0x10] sm:$0xff]
      %v1081 = vld [vmem:[%s1025 + $0x18] sm:$0xff]
      %v1082 = vld [vmem:[%s1025 + $0x20] sm:$0xff]
      %v1083 = vld [vmem:[%s1025 + $0x28] sm:$0xff]
      %v1084 = vld [vmem:[%s1025 + $0x30] sm:$0xff]
      %v1085 = vld [vmem:[%s1025 + $0x38] sm:$0xff]
      %v1087 = vperm.slane %v1036, 0
      %v1089 = vmul.f32 %v1078, %v1087
      %v1090 = vmul.f32 %v1079, %v1087
      %v1091 = vmul.f32 %v1080, %v1087
      %v1092 = vmul.f32 %v1081, %v1087
      %v1093 = vmul.f32 %v1082, %v1087
      %v1094 = vmul.f32 %v1083, %v1087
      %v1095 = vmul.f32 %v1084, %v1087
      %v1096 = vmul.f32 %v1085, %v1087
      %s1097 = scalar_lea.vmem [#allocation4], 24
      %v1098 = vld [vmem:[%s1097] sm:$0xff]
      %v1099 = vld [vmem:[%s1097 + $0x8] sm:$0xff]
      %v1100 = vld [vmem:[%s1097 + $0x10] sm:$0xff]
      %v1101 = vld [vmem:[%s1097 + $0x18] sm:$0xff]
      %v1102 = vld [vmem:[%s1097 + $0x20] sm:$0xff]
      %v1103 = vld [vmem:[%s1097 + $0x28] sm:$0xff]
      %v1104 = vld [vmem:[%s1097 + $0x30] sm:$0xff]
      %v1105 = vld [vmem:[%s1097 + $0x38] sm:$0xff]
      %v1107 = vperm.slane %v1037, 0
      %v1109 = vmul.f32 %v1098, %v1107
      %v1110 = vmul.f32 %v1099, %v1107
      %v1111 = vmul.f32 %v1100, %v1107
      %v1112 = vmul.f32 %v1101, %v1107
      %v1113 = vmul.f32 %v1102, %v1107
      %v1114 = vmul.f32 %v1103, %v1107
      %v1115 = vmul.f32 %v1104, %v1107
      %v1116 = vmul.f32 %v1105, %v1107
      %s1117 = scalar_lea.vmem [#allocation4], 32
      %v1118 = vld [vmem:[%s1117] sm:$0xff]
      %v1119 = vld [vmem:[%s1117 + $0x8] sm:$0xff]
      %v1120 = vld [vmem:[%s1117 + $0x10] sm:$0xff]
      %v1121 = vld [vmem:[%s1117 + $0x18] sm:$0xff]
      %v1122 = vld [vmem:[%s1117 + $0x20] sm:$0xff]
      %v1123 = vld [vmem:[%s1117 + $0x28] sm:$0xff]
      %v1124 = vld [vmem:[%s1117 + $0x30] sm:$0xff]
      %v1125 = vld [vmem:[%s1117 + $0x38] sm:$0xff]
      %v1127 = vperm.slane %v1038, 0
      %v1129 = vmul.f32 %v1118, %v1127
      %v1130 = vmul.f32 %v1119, %v1127
      %v1131 = vmul.f32 %v1120, %v1127
      %v1132 = vmul.f32 %v1121, %v1127
      %v1133 = vmul.f32 %v1122, %v1127
      %v1134 = vmul.f32 %v1123, %v1127
      %v1135 = vmul.f32 %v1124, %v1127
      %v1136 = vmul.f32 %v1125, %v1127
      %v1137 = vadd.f32 %v1050, %v1070
      %v1138 = vadd.f32 %v1051, %v1071
      %v1139 = vadd.f32 %v1052, %v1072
      %v1140 = vadd.f32 %v1053, %v1073
      %v1141 = vadd.f32 %v1054, %v1074
      %v1142 = vadd.f32 %v1055, %v1075
      %v1143 = vadd.f32 %v1056, %v1076
      %v1144 = vadd.f32 %v1057, %v1077
      %v1145 = vadd.f32 %v1089, %v1109
      %v1146 = vadd.f32 %v1090, %v1110
      %v1147 = vadd.f32 %v1091, %v1111
      %v1148 = vadd.f32 %v1092, %v1112
      %v1149 = vadd.f32 %v1093, %v1113
      %v1150 = vadd.f32 %v1094, %v1114
      %v1151 = vadd.f32 %v1095, %v1115
      %v1152 = vadd.f32 %v1096, %v1116
      %v1153 = vadd.f32 %v1137, %v1145
      %v1154 = vadd.f32 %v1138, %v1146
      %v1155 = vadd.f32 %v1139, %v1147
      %v1156 = vadd.f32 %v1140, %v1148
      %v1157 = vadd.f32 %v1141, %v1149
      %v1158 = vadd.f32 %v1142, %v1150
      %v1159 = vadd.f32 %v1143, %v1151
      %v1160 = vadd.f32 %v1144, %v1152
      %v1161 = vadd.f32 %v1153, %v1129
      %v1162 = vadd.f32 %v1154, %v1130
      %v1163 = vadd.f32 %v1155, %v1131
      %v1164 = vadd.f32 %v1156, %v1132
      %v1165 = vadd.f32 %v1157, %v1133
      %v1166 = vadd.f32 %v1158, %v1134
      %v1167 = vadd.f32 %v1159, %v1135
      %v1168 = vadd.f32 %v1160, %v1136
      %v1169 = vld [vmem:[%s6] sm:$0x1]
      %v1171 = vperm.slane %v1169, 0
      %v1173 = vadd.f32 %v1161, %v1171
      %v1174 = vadd.f32 %v1162, %v1171
      %v1175 = vadd.f32 %v1163, %v1171
      %v1176 = vadd.f32 %v1164, %v1171
      %v1177 = vadd.f32 %v1165, %v1171
      %v1178 = vadd.f32 %v1166, %v1171
      %v1179 = vadd.f32 %v1167, %v1171
      %v1180 = vadd.f32 %v1168, %v1171
      %v1181 = vsub.f32 0.0, %v1173
      %v1182 = vsub.f32 0.0, %v1174
      %v1183 = vsub.f32 0.0, %v1175
      %v1184 = vsub.f32 0.0, %v1176
      %v1185 = vsub.f32 0.0, %v1177
      %v1186 = vsub.f32 0.0, %v1178
      %v1187 = vsub.f32 0.0, %v1179
      %v1188 = vsub.f32 0.0, %v1180
      %v1189 = vmul.f32 %v1181, 1.442695
      %v1190 = vpow.pop %v1189
      %v1191 = vmul.f32 %v1182, 1.442695
      %v1192 = vpow.pop %v1191
      %v1193 = vmul.f32 %v1183, 1.442695
      %v1194 = vpow.pop %v1193
      %v1195 = vmul.f32 %v1184, 1.442695
      %v1196 = vpow.pop %v1195
      %v1197 = vmul.f32 %v1185, 1.442695
      %v1198 = vpow.pop %v1197
      %v1199 = vmul.f32 %v1186, 1.442695
      %v1200 = vpow.pop %v1199
      %v1201 = vmul.f32 %v1187, 1.442695
      %v1202 = vpow.pop %v1201
      %v1203 = vmul.f32 %v1188, 1.442695
      %v1204 = vpow.pop %v1203
      %v1205 = vadd.f32 %v1190, 1.0
      %v1206 = vadd.f32 %v1192, 1.0
      %v1207 = vadd.f32 %v1194, 1.0
      %v1208 = vadd.f32 %v1196, 1.0
      %v1209 = vadd.f32 %v1198, 1.0
      %v1210 = vadd.f32 %v1200, 1.0
      %v1211 = vadd.f32 %v1202, 1.0
      %v1212 = vadd.f32 %v1204, 1.0
      %v1213 = vrcp.pop %v1205
      %v1214 = vmul.f32 %v1205, %v1213
      %v1215 = vsub.f32 1.0, %v1214
      %v1216 = vmul.f32 %v1213, %v1215
      %v1217 = vadd.f32 %v1213, %v1216
      %vm1218 = vweird.f32 %v1205
      %vm1219 = vweird.f32 %v1213
      %vm1220 = vmor %vm1218, %vm1219
      %v1221 = vsel %vm1220, %v1213, %v1217
      %v1222 = vand.u32 2147483647, %v1205
      %vm1223 = vcmp.eq.f32.partialorder %v1222, 8.507059e+37
      %v1224 = vand.u32 %v1205, 2147483648
      %v1225 = vor.u32 1.1754944e-38, %v1224
      %v1226 = vsel %vm1223, %v1225, %v1221
      %v1227 = vmul.f32 1.0, %v1226
      %v1228 = vrcp.pop %v1206
      %v1229 = vmul.f32 %v1206, %v1228
      %v1230 = vsub.f32 1.0, %v1229
      %v1231 = vmul.f32 %v1228, %v1230
      %v1232 = vadd.f32 %v1228, %v1231
      %vm1233 = vweird.f32 %v1206
      %vm1234 = vweird.f32 %v1228
      %vm1235 = vmor %vm1233, %vm1234
      %v1236 = vsel %vm1235, %v1228, %v1232
      %v1237 = vand.u32 2147483647, %v1206
      %vm1238 = vcmp.eq.f32.partialorder %v1237, 8.507059e+37
      %v1239 = vand.u32 %v1206, 2147483648
      %v1240 = vor.u32 1.1754944e-38, %v1239
      %v1241 = vsel %vm1238, %v1240, %v1236
      %v1242 = vmul.f32 1.0, %v1241
      %v1243 = vrcp.pop %v1207
      %v1244 = vmul.f32 %v1207, %v1243
      %v1245 = vsub.f32 1.0, %v1244
      %v1246 = vmul.f32 %v1243, %v1245
      %v1247 = vadd.f32 %v1243, %v1246
      %vm1248 = vweird.f32 %v1207
      %vm1249 = vweird.f32 %v1243
      %vm1250 = vmor %vm1248, %vm1249
      %v1251 = vsel %vm1250, %v1243, %v1247
      %v1252 = vand.u32 2147483647, %v1207
      %vm1253 = vcmp.eq.f32.partialorder %v1252, 8.507059e+37
      %v1254 = vand.u32 %v1207, 2147483648
      %v1255 = vor.u32 1.1754944e-38, %v1254
      %v1256 = vsel %vm1253, %v1255, %v1251
      %v1257 = vmul.f32 1.0, %v1256
      %v1258 = vrcp.pop %v1208
      %v1259 = vmul.f32 %v1208, %v1258
      %v1260 = vsub.f32 1.0, %v1259
      %v1261 = vmul.f32 %v1258, %v1260
      %v1262 = vadd.f32 %v1258, %v1261
      %vm1263 = vweird.f32 %v1208
      %vm1264 = vweird.f32 %v1258
      %vm1265 = vmor %vm1263, %vm1264
      %v1266 = vsel %vm1265, %v1258, %v1262
      %v1267 = vand.u32 2147483647, %v1208
      %vm1268 = vcmp.eq.f32.partialorder %v1267, 8.507059e+37
      %v1269 = vand.u32 %v1208, 2147483648
      %v1270 = vor.u32 1.1754944e-38, %v1269
      %v1271 = vsel %vm1268, %v1270, %v1266
      %v1272 = vmul.f32 1.0, %v1271
      %v1273 = vrcp.pop %v1209
      %v1274 = vmul.f32 %v1209, %v1273
      %v1275 = vsub.f32 1.0, %v1274
      %v1276 = vmul.f32 %v1273, %v1275
      %v1277 = vadd.f32 %v1273, %v1276
      %vm1278 = vweird.f32 %v1209
      %vm1279 = vweird.f32 %v1273
      %vm1280 = vmor %vm1278, %vm1279
      %v1281 = vsel %vm1280, %v1273, %v1277
      %v1282 = vand.u32 2147483647, %v1209
      %vm1283 = vcmp.eq.f32.partialorder %v1282, 8.507059e+37
      %v1284 = vand.u32 %v1209, 2147483648
      %v1285 = vor.u32 1.1754944e-38, %v1284
      %v1286 = vsel %vm1283, %v1285, %v1281
      %v1287 = vmul.f32 1.0, %v1286
      %v1288 = vrcp.pop %v1210
      %v1289 = vmul.f32 %v1210, %v1288
      %v1290 = vsub.f32 1.0, %v1289
      %v1291 = vmul.f32 %v1288, %v1290
      %v1292 = vadd.f32 %v1288, %v1291
      %vm1293 = vweird.f32 %v1210
      %vm1294 = vweird.f32 %v1288
      %vm1295 = vmor %vm1293, %vm1294
      %v1296 = vsel %vm1295, %v1288, %v1292
      %v1297 = vand.u32 2147483647, %v1210
      %vm1298 = vcmp.eq.f32.partialorder %v1297, 8.507059e+37
      %v1299 = vand.u32 %v1210, 2147483648
      %v1300 = vor.u32 1.1754944e-38, %v1299
      %v1301 = vsel %vm1298, %v1300, %v1296
      %v1302 = vmul.f32 1.0, %v1301
      %v1303 = vrcp.pop %v1211
      %v1304 = vmul.f32 %v1211, %v1303
      %v1305 = vsub.f32 1.0, %v1304
      %v1306 = vmul.f32 %v1303, %v1305
      %v1307 = vadd.f32 %v1303, %v1306
      %vm1308 = vweird.f32 %v1211
      %vm1309 = vweird.f32 %v1303
      %vm1310 = vmor %vm1308, %vm1309
      %v1311 = vsel %vm1310, %v1303, %v1307
      %v1312 = vand.u32 2147483647, %v1211
      %vm1313 = vcmp.eq.f32.partialorder %v1312, 8.507059e+37
      %v1314 = vand.u32 %v1211, 2147483648
      %v1315 = vor.u32 1.1754944e-38, %v1314
      %v1316 = vsel %vm1313, %v1315, %v1311
      %v1317 = vmul.f32 1.0, %v1316
      %v1318 = vrcp.pop %v1212
      %v1319 = vmul.f32 %v1212, %v1318
      %v1320 = vsub.f32 1.0, %v1319
      %v1321 = vmul.f32 %v1318, %v1320
      %v1322 = vadd.f32 %v1318, %v1321
      %vm1323 = vweird.f32 %v1212
      %vm1324 = vweird.f32 %v1318
      %vm1325 = vmor %vm1323, %vm1324
      %v1326 = vsel %vm1325, %v1318, %v1322
      %v1327 = vand.u32 2147483647, %v1212
      %vm1328 = vcmp.eq.f32.partialorder %v1327, 8.507059e+37
      %v1329 = vand.u32 %v1212, 2147483648
      %v1330 = vor.u32 1.1754944e-38, %v1329
      %v1331 = vsel %vm1328, %v1330, %v1326
      %v1332 = vmul.f32 1.0, %v1331
      %v1333 = vld [vmem:[%s7] sm:$0xff]
      %v1334 = vld [vmem:[%s8] sm:$0x1]
      %v1336 = vperm.slane %v1334, 0
      %v1339 = vsel %vm456, %v387, 0
      %v1342 = vsel %vm456, %v388, 0
      %v1345 = vsel %vm456, %v389, 0
      %v1348 = vsel %vm456, %v390, 0
      %v1351 = vsel %vm456, %v391, 0
      %v1354 = vsel %vm456, %v392, 0
      %v1357 = vsel %vm456, %v393, 0
      %v1360 = vsel %vm456, %v394, 0
      %v1363 = vsel %vm456, %v395, 0
      %v1366 = vsel %vm456, %v396, 0
      %v1369 = vsel %vm456, %v397, 0
      %v1372 = vsel %vm456, %v398, 0
      %v1375 = vsel %vm456, %v399, 0
      %v1378 = vsel %vm456, %v400, 0
      %v1381 = vsel %vm456, %v401, 0
      %v1384 = vsel %vm456, %v402, 0
      %v1387 = vsel %vm456, %v403, 0
      %v1390 = vsel %vm456, %v404, 0
      %v1393 = vsel %vm456, %v405, 0
      %v1396 = vsel %vm456, %v406, 0
      %v1399 = vsel %vm456, %v407, 0
      %v1402 = vsel %vm456, %v408, 0
      %v1405 = vsel %vm456, %v409, 0
      %v1408 = vsel %vm456, %v410, 0
      %v1411 = vsel %vm456, %v411, 0
      %v1414 = vsel %vm456, %v412, 0
      %v1417 = vsel %vm456, %v413, 0
      %v1420 = vsel %vm456, %v414, 0
      %v1423 = vsel %vm456, %v415, 0
      %v1426 = vsel %vm456, %v416, 0
      %v1429 = vsel %vm456, %v417, 0
      %v1432 = vsel %vm456, %v418, 0
      %1434 = vmatpush.msra.mxu0 0.0
      %1435 = vmatpush.msra.mxu0 0.0
      %1436 = vmatpush.msra.mxu0 0.0
      %1437 = vmatpush.msra.mxu0 0.0
      %1438 = vmatpush.msra.mxu0 0.0
      %1439 = vmatpush.msra.mxu0 0.0
      %1440 = vmatpush.msra.mxu0 0.0
      %1441 = vmatpush.msra.mxu0 0.0
      %1442 = vmatpush.msra.mxu0 0.0
      %1443 = vmatpush.msra.mxu0 0.0
      %1444 = vmatpush.msra.mxu0 0.0
      %1445 = vmatpush.msra.mxu0 0.0
      %1446 = vmatpush.msra.mxu0 0.0
      %1447 = vmatpush.msra.mxu0 0.0
      %1448 = vmatpush.msra.mxu0 0.0
      %v1449 = vand.u32 %v1333, 4294901760
      %1450 = vmatpush.msra.mxu0 %v1449
      %v1451 = vand.u32 %v1339, 4294901760
      %v1452 = vsub.f32 %v1339, %v1451
      %v1453 = vand.u32 %v1452, 4294901760
      %v1454 = vsub.f32 %v1452, %v1453
      %v1455 = vand.u32 %v1454, 4294901760
      %1456 = vmatmul.f32.gmra.mxu0 %v1455
      %v1457 = vpop.f32.mrf.mxu0
      %v1458 = vadd.f32 %v1336, %v1457
      %v1459 = vand.u32 %v1342, 4294901760
      %v1460 = vsub.f32 %v1342, %v1459
      %v1461 = vand.u32 %v1460, 4294901760
      %v1462 = vsub.f32 %v1460, %v1461
      %v1463 = vand.u32 %v1462, 4294901760
      %1464 = vmatmul.f32.gmra.mxu0 %v1463
      %v1465 = vpop.f32.mrf.mxu0
      %v1466 = vadd.f32 %v1336, %v1465
      %v1467 = vand.u32 %v1345, 4294901760
      %v1468 = vsub.f32 %v1345, %v1467
      %v1469 = vand.u32 %v1468, 4294901760
      %v1470 = vsub.f32 %v1468, %v1469
      %v1471 = vand.u32 %v1470, 4294901760
      %1472 = vmatmul.f32.gmra.mxu0 %v1471
      %v1473 = vpop.f32.mrf.mxu0
      %v1474 = vadd.f32 %v1336, %v1473
      %v1475 = vand.u32 %v1348, 4294901760
      %v1476 = vsub.f32 %v1348, %v1475
      %v1477 = vand.u32 %v1476, 4294901760
      %v1478 = vsub.f32 %v1476, %v1477
      %v1479 = vand.u32 %v1478, 4294901760
      %1480 = vmatmul.f32.gmra.mxu0 %v1479
      %v1481 = vpop.f32.mrf.mxu0
      %v1482 = vadd.f32 %v1336, %v1481
      %v1483 = vand.u32 %v1351, 4294901760
      %v1484 = vsub.f32 %v1351, %v1483
      %v1485 = vand.u32 %v1484, 4294901760
      %v1486 = vsub.f32 %v1484, %v1485
      %v1487 = vand.u32 %v1486, 4294901760
      %1488 = vmatmul.f32.gmra.mxu0 %v1487
      %v1489 = vpop.f32.mrf.mxu0
      %v1490 = vadd.f32 %v1336, %v1489
      %v1491 = vand.u32 %v1354, 4294901760
      %v1492 = vsub.f32 %v1354, %v1491
      %v1493 = vand.u32 %v1492, 4294901760
      %v1494 = vsub.f32 %v1492, %v1493
      %v1495 = vand.u32 %v1494, 4294901760
      %1496 = vmatmul.f32.gmra.mxu0 %v1495
      %v1497 = vpop.f32.mrf.mxu0
      %v1498 = vadd.f32 %v1336, %v1497
      %v1499 = vand.u32 %v1357, 4294901760
      %v1500 = vsub.f32 %v1357, %v1499
      %v1501 = vand.u32 %v1500, 4294901760
      %v1502 = vsub.f32 %v1500, %v1501
      %v1503 = vand.u32 %v1502, 4294901760
      %1504 = vmatmul.f32.gmra.mxu0 %v1503
      %v1505 = vpop.f32.mrf.mxu0
      %v1506 = vadd.f32 %v1336, %v1505
      %v1507 = vand.u32 %v1360, 4294901760
      %v1508 = vsub.f32 %v1360, %v1507
      %v1509 = vand.u32 %v1508, 4294901760
      %v1510 = vsub.f32 %v1508, %v1509
      %v1511 = vand.u32 %v1510, 4294901760
      %1512 = vmatmul.f32.gmra.mxu0 %v1511
      %v1513 = vpop.f32.mrf.mxu0
      %v1514 = vadd.f32 %v1336, %v1513
      %v1515 = vand.u32 %v1363, 4294901760
      %v1516 = vsub.f32 %v1363, %v1515
      %v1517 = vand.u32 %v1516, 4294901760
      %v1518 = vsub.f32 %v1516, %v1517
      %v1519 = vand.u32 %v1518, 4294901760
      %1520 = vmatmul.f32.gmra.mxu0 %v1519
      %v1521 = vpop.f32.mrf.mxu0
      %v1522 = vadd.f32 %v1336, %v1521
      %v1523 = vand.u32 %v1366, 4294901760
      %v1524 = vsub.f32 %v1366, %v1523
      %v1525 = vand.u32 %v1524, 4294901760
      %v1526 = vsub.f32 %v1524, %v1525
      %v1527 = vand.u32 %v1526, 4294901760
      %1528 = vmatmul.f32.gmra.mxu0 %v1527
      %v1529 = vpop.f32.mrf.mxu0
      %v1530 = vadd.f32 %v1336, %v1529
      %v1531 = vand.u32 %v1369, 4294901760
      %v1532 = vsub.f32 %v1369, %v1531
      %v1533 = vand.u32 %v1532, 4294901760
      %v1534 = vsub.f32 %v1532, %v1533
      %v1535 = vand.u32 %v1534, 4294901760
      %1536 = vmatmul.f32.gmra.mxu0 %v1535
      %v1537 = vpop.f32.mrf.mxu0
      %v1538 = vadd.f32 %v1336, %v1537
      %v1539 = vand.u32 %v1372, 4294901760
      %v1540 = vsub.f32 %v1372, %v1539
      %v1541 = vand.u32 %v1540, 4294901760
      %v1542 = vsub.f32 %v1540, %v1541
      %v1543 = vand.u32 %v1542, 4294901760
      %1544 = vmatmul.f32.gmra.mxu0 %v1543
      %v1545 = vpop.f32.mrf.mxu0
      %v1546 = vadd.f32 %v1336, %v1545
      %v1547 = vand.u32 %v1375, 4294901760
      %v1548 = vsub.f32 %v1375, %v1547
      %v1549 = vand.u32 %v1548, 4294901760
      %v1550 = vsub.f32 %v1548, %v1549
      %v1551 = vand.u32 %v1550, 4294901760
      %1552 = vmatmul.f32.gmra.mxu0 %v1551
      %v1553 = vpop.f32.mrf.mxu0
      %v1554 = vadd.f32 %v1336, %v1553
      %v1555 = vand.u32 %v1378, 4294901760
      %v1556 = vsub.f32 %v1378, %v1555
      %v1557 = vand.u32 %v1556, 4294901760
      %v1558 = vsub.f32 %v1556, %v1557
      %v1559 = vand.u32 %v1558, 4294901760
      %1560 = vmatmul.f32.gmra.mxu0 %v1559
      %v1561 = vpop.f32.mrf.mxu0
      %v1562 = vadd.f32 %v1336, %v1561
      %v1563 = vand.u32 %v1381, 4294901760
      %v1564 = vsub.f32 %v1381, %v1563
      %v1565 = vand.u32 %v1564, 4294901760
      %v1566 = vsub.f32 %v1564, %v1565
      %v1567 = vand.u32 %v1566, 4294901760
      %1568 = vmatmul.f32.gmra.mxu0 %v1567
      %v1569 = vpop.f32.mrf.mxu0
      %v1570 = vadd.f32 %v1336, %v1569
      %v1571 = vand.u32 %v1384, 4294901760
      %v1572 = vsub.f32 %v1384, %v1571
      %v1573 = vand.u32 %v1572, 4294901760
      %v1574 = vsub.f32 %v1572, %v1573
      %v1575 = vand.u32 %v1574, 4294901760
      %1576 = vmatmul.f32.gmra.mxu0 %v1575
      %v1577 = vpop.f32.mrf.mxu0
      %v1578 = vadd.f32 %v1336, %v1577
      %v1579 = vand.u32 %v1387, 4294901760
      %v1580 = vsub.f32 %v1387, %v1579
      %v1581 = vand.u32 %v1580, 4294901760
      %v1582 = vsub.f32 %v1580, %v1581
      %v1583 = vand.u32 %v1582, 4294901760
      %1584 = vmatmul.f32.gmra.mxu0 %v1583
      %v1585 = vpop.f32.mrf.mxu0
      %v1586 = vadd.f32 %v1336, %v1585
      %v1587 = vand.u32 %v1390, 4294901760
      %v1588 = vsub.f32 %v1390, %v1587
      %v1589 = vand.u32 %v1588, 4294901760
      %v1590 = vsub.f32 %v1588, %v1589
      %v1591 = vand.u32 %v1590, 4294901760
      %1592 = vmatmul.f32.gmra.mxu0 %v1591
      %v1593 = vpop.f32.mrf.mxu0
      %v1594 = vadd.f32 %v1336, %v1593
      %v1595 = vand.u32 %v1393, 4294901760
      %v1596 = vsub.f32 %v1393, %v1595
      %v1597 = vand.u32 %v1596, 4294901760
      %v1598 = vsub.f32 %v1596, %v1597
      %v1599 = vand.u32 %v1598, 4294901760
      %1600 = vmatmul.f32.gmra.mxu0 %v1599
      %v1601 = vpop.f32.mrf.mxu0
      %v1602 = vadd.f32 %v1336, %v1601
      %v1603 = vand.u32 %v1396, 4294901760
      %v1604 = vsub.f32 %v1396, %v1603
      %v1605 = vand.u32 %v1604, 4294901760
      %v1606 = vsub.f32 %v1604, %v1605
      %v1607 = vand.u32 %v1606, 4294901760
      %1608 = vmatmul.f32.gmra.mxu0 %v1607
      %v1609 = vpop.f32.mrf.mxu0
      %v1610 = vadd.f32 %v1336, %v1609
      %v1611 = vand.u32 %v1399, 4294901760
      %v1612 = vsub.f32 %v1399, %v1611
      %v1613 = vand.u32 %v1612, 4294901760
      %v1614 = vsub.f32 %v1612, %v1613
      %v1615 = vand.u32 %v1614, 4294901760
      %1616 = vmatmul.f32.gmra.mxu0 %v1615
      %v1617 = vpop.f32.mrf.mxu0
      %v1618 = vadd.f32 %v1336, %v1617
      %v1619 = vand.u32 %v1402, 4294901760
      %v1620 = vsub.f32 %v1402, %v1619
      %v1621 = vand.u32 %v1620, 4294901760
      %v1622 = vsub.f32 %v1620, %v1621
      %v1623 = vand.u32 %v1622, 4294901760
      %1624 = vmatmul.f32.gmra.mxu0 %v1623
      %v1625 = vpop.f32.mrf.mxu0
      %v1626 = vadd.f32 %v1336, %v1625
      %v1627 = vand.u32 %v1405, 4294901760
      %v1628 = vsub.f32 %v1405, %v1627
      %v1629 = vand.u32 %v1628, 4294901760
      %v1630 = vsub.f32 %v1628, %v1629
      %v1631 = vand.u32 %v1630, 4294901760
      %1632 = vmatmul.f32.gmra.mxu0 %v1631
      %v1633 = vpop.f32.mrf.mxu0
      %v1634 = vadd.f32 %v1336, %v1633
      %v1635 = vand.u32 %v1408, 4294901760
      %v1636 = vsub.f32 %v1408, %v1635
      %v1637 = vand.u32 %v1636, 4294901760
      %v1638 = vsub.f32 %v1636, %v1637
      %v1639 = vand.u32 %v1638, 4294901760
      %1640 = vmatmul.f32.gmra.mxu0 %v1639
      %v1641 = vpop.f32.mrf.mxu0
      %v1642 = vadd.f32 %v1336, %v1641
      %v1643 = vand.u32 %v1411, 4294901760
      %v1644 = vsub.f32 %v1411, %v1643
      %v1645 = vand.u32 %v1644, 4294901760
      %v1646 = vsub.f32 %v1644, %v1645
      %v1647 = vand.u32 %v1646, 4294901760
      %1648 = vmatmul.f32.gmra.mxu0 %v1647
      %v1649 = vpop.f32.mrf.mxu0
      %v1650 = vadd.f32 %v1336, %v1649
      %v1651 = vand.u32 %v1414, 4294901760
      %v1652 = vsub.f32 %v1414, %v1651
      %v1653 = vand.u32 %v1652, 4294901760
      %v1654 = vsub.f32 %v1652, %v1653
      %v1655 = vand.u32 %v1654, 4294901760
      %1656 = vmatmul.f32.gmra.mxu0 %v1655
      %v1657 = vpop.f32.mrf.mxu0
      %v1658 = vadd.f32 %v1336, %v1657
      %v1659 = vand.u32 %v1417, 4294901760
      %v1660 = vsub.f32 %v1417, %v1659
      %v1661 = vand.u32 %v1660, 4294901760
      %v1662 = vsub.f32 %v1660, %v1661
      %v1663 = vand.u32 %v1662, 4294901760
      %1664 = vmatmul.f32.gmra.mxu0 %v1663
      %v1665 = vpop.f32.mrf.mxu0
      %v1666 = vadd.f32 %v1336, %v1665
      %v1667 = vand.u32 %v1420, 4294901760
      %v1668 = vsub.f32 %v1420, %v1667
      %v1669 = vand.u32 %v1668, 4294901760
      %v1670 = vsub.f32 %v1668, %v1669
      %v1671 = vand.u32 %v1670, 4294901760
      %1672 = vmatmul.f32.gmra.mxu0 %v1671
      %v1673 = vpop.f32.mrf.mxu0
      %v1674 = vadd.f32 %v1336, %v1673
      %v1675 = vand.u32 %v1423, 4294901760
      %v1676 = vsub.f32 %v1423, %v1675
      %v1677 = vand.u32 %v1676, 4294901760
      %v1678 = vsub.f32 %v1676, %v1677
      %v1679 = vand.u32 %v1678, 4294901760
      %1680 = vmatmul.f32.gmra.mxu0 %v1679
      %v1681 = vpop.f32.mrf.mxu0
      %v1682 = vadd.f32 %v1336, %v1681
      %v1683 = vand.u32 %v1426, 4294901760
      %v1684 = vsub.f32 %v1426, %v1683
      %v1685 = vand.u32 %v1684, 4294901760
      %v1686 = vsub.f32 %v1684, %v1685
      %v1687 = vand.u32 %v1686, 4294901760
      %1688 = vmatmul.f32.gmra.mxu0 %v1687
      %v1689 = vpop.f32.mrf.mxu0
      %v1690 = vadd.f32 %v1336, %v1689
      %v1691 = vand.u32 %v1429, 4294901760
      %v1692 = vsub.f32 %v1429, %v1691
      %v1693 = vand.u32 %v1692, 4294901760
      %v1694 = vsub.f32 %v1692, %v1693
      %v1695 = vand.u32 %v1694, 4294901760
      %1696 = vmatmul.f32.gmra.mxu0 %v1695
      %v1697 = vpop.f32.mrf.mxu0
      %v1698 = vadd.f32 %v1336, %v1697
      %v1699 = vand.u32 %v1432, 4294901760
      %v1700 = vsub.f32 %v1432, %v1699
      %v1701 = vand.u32 %v1700, 4294901760
      %v1702 = vsub.f32 %v1700, %v1701
      %v1703 = vand.u32 %v1702, 4294901760
      %1704 = vmatmul.f32.gmra.mxu0 %v1703
      %v1705 = vpop.f32.mrf.mxu0
      %v1706 = vadd.f32 %v1336, %v1705
      %1707 = vdwg.mxu0
      %1708 = vmatpush.msra.mxu0 0.0
      %1709 = vmatpush.msra.mxu0 0.0
      %1710 = vmatpush.msra.mxu0 0.0
      %1711 = vmatpush.msra.mxu0 0.0
      %1712 = vmatpush.msra.mxu0 0.0
      %1713 = vmatpush.msra.mxu0 0.0
      %1714 = vmatpush.msra.mxu0 0.0
      %1715 = vmatpush.msra.mxu0 0.0
      %1716 = vmatpush.msra.mxu0 0.0
      %1717 = vmatpush.msra.mxu0 0.0
      %1718 = vmatpush.msra.mxu0 0.0
      %1719 = vmatpush.msra.mxu0 0.0
      %1720 = vmatpush.msra.mxu0 0.0
      %1721 = vmatpush.msra.mxu0 0.0
      %1722 = vmatpush.msra.mxu0 0.0
      %v1723 = vand.u32 %v1333, 4294901760
      %v1724 = vsub.f32 %v1333, %v1723
      %v1725 = vand.u32 %v1724, 4294901760
      %v1726 = vsub.f32 %v1724, %v1725
      %v1727 = vand.u32 %v1726, 4294901760
      %1728 = vmatpush.msra.mxu0 %v1727
      %v1729 = vand.u32 %v1339, 4294901760
      %1730 = vmatmul.f32.gmra.mxu0 %v1729
      %v1731 = vpop.f32.mrf.mxu0
      %v1732 = vadd.f32 %v1458, %v1731
      %v1733 = vand.u32 %v1342, 4294901760
      %1734 = vmatmul.f32.gmra.mxu0 %v1733
      %v1735 = vpop.f32.mrf.mxu0
      %v1736 = vadd.f32 %v1466, %v1735
      %v1737 = vand.u32 %v1345, 4294901760
      %1738 = vmatmul.f32.gmra.mxu0 %v1737
      %v1739 = vpop.f32.mrf.mxu0
      %v1740 = vadd.f32 %v1474, %v1739
      %v1741 = vand.u32 %v1348, 4294901760
      %1742 = vmatmul.f32.gmra.mxu0 %v1741
      %v1743 = vpop.f32.mrf.mxu0
      %v1744 = vadd.f32 %v1482, %v1743
      %v1745 = vand.u32 %v1351, 4294901760
      %1746 = vmatmul.f32.gmra.mxu0 %v1745
      %v1747 = vpop.f32.mrf.mxu0
      %v1748 = vadd.f32 %v1490, %v1747
      %v1749 = vand.u32 %v1354, 4294901760
      %1750 = vmatmul.f32.gmra.mxu0 %v1749
      %v1751 = vpop.f32.mrf.mxu0
      %v1752 = vadd.f32 %v1498, %v1751
      %v1753 = vand.u32 %v1357, 4294901760
      %1754 = vmatmul.f32.gmra.mxu0 %v1753
      %v1755 = vpop.f32.mrf.mxu0
      %v1756 = vadd.f32 %v1506, %v1755
      %v1757 = vand.u32 %v1360, 4294901760
      %1758 = vmatmul.f32.gmra.mxu0 %v1757
      %v1759 = vpop.f32.mrf.mxu0
      %v1760 = vadd.f32 %v1514, %v1759
      %v1761 = vand.u32 %v1363, 4294901760
      %1762 = vmatmul.f32.gmra.mxu0 %v1761
      %v1763 = vpop.f32.mrf.mxu0
      %v1764 = vadd.f32 %v1522, %v1763
      %v1765 = vand.u32 %v1366, 4294901760
      %1766 = vmatmul.f32.gmra.mxu0 %v1765
      %v1767 = vpop.f32.mrf.mxu0
      %v1768 = vadd.f32 %v1530, %v1767
      %v1769 = vand.u32 %v1369, 4294901760
      %1770 = vmatmul.f32.gmra.mxu0 %v1769
      %v1771 = vpop.f32.mrf.mxu0
      %v1772 = vadd.f32 %v1538, %v1771
      %v1773 = vand.u32 %v1372, 4294901760
      %1774 = vmatmul.f32.gmra.mxu0 %v1773
      %v1775 = vpop.f32.mrf.mxu0
      %v1776 = vadd.f32 %v1546, %v1775
      %v1777 = vand.u32 %v1375, 4294901760
      %1778 = vmatmul.f32.gmra.mxu0 %v1777
      %v1779 = vpop.f32.mrf.mxu0
      %v1780 = vadd.f32 %v1554, %v1779
      %v1781 = vand.u32 %v1378, 4294901760
      %1782 = vmatmul.f32.gmra.mxu0 %v1781
      %v1783 = vpop.f32.mrf.mxu0
      %v1784 = vadd.f32 %v1562, %v1783
      %v1785 = vand.u32 %v1381, 4294901760
      %1786 = vmatmul.f32.gmra.mxu0 %v1785
      %v1787 = vpop.f32.mrf.mxu0
      %v1788 = vadd.f32 %v1570, %v1787
      %v1789 = vand.u32 %v1384, 4294901760
      %1790 = vmatmul.f32.gmra.mxu0 %v1789
      %v1791 = vpop.f32.mrf.mxu0
      %v1792 = vadd.f32 %v1578, %v1791
      %v1793 = vand.u32 %v1387, 4294901760
      %1794 = vmatmul.f32.gmra.mxu0 %v1793
      %v1795 = vpop.f32.mrf.mxu0
      %v1796 = vadd.f32 %v1586, %v1795
      %v1797 = vand.u32 %v1390, 4294901760
      %1798 = vmatmul.f32.gmra.mxu0 %v1797
      %v1799 = vpop.f32.mrf.mxu0
      %v1800 = vadd.f32 %v1594, %v1799
      %v1801 = vand.u32 %v1393, 4294901760
      %1802 = vmatmul.f32.gmra.mxu0 %v1801
      %v1803 = vpop.f32.mrf.mxu0
      %v1804 = vadd.f32 %v1602, %v1803
      %v1805 = vand.u32 %v1396, 4294901760
      %1806 = vmatmul.f32.gmra.mxu0 %v1805
      %v1807 = vpop.f32.mrf.mxu0
      %v1808 = vadd.f32 %v1610, %v1807
      %v1809 = vand.u32 %v1399, 4294901760
      %1810 = vmatmul.f32.gmra.mxu0 %v1809
      %v1811 = vpop.f32.mrf.mxu0
      %v1812 = vadd.f32 %v1618, %v1811
      %v1813 = vand.u32 %v1402, 4294901760
      %1814 = vmatmul.f32.gmra.mxu0 %v1813
      %v1815 = vpop.f32.mrf.mxu0
      %v1816 = vadd.f32 %v1626, %v1815
      %v1817 = vand.u32 %v1405, 4294901760
      %1818 = vmatmul.f32.gmra.mxu0 %v1817
      %v1819 = vpop.f32.mrf.mxu0
      %v1820 = vadd.f32 %v1634, %v1819
      %v1821 = vand.u32 %v1408, 4294901760
      %1822 = vmatmul.f32.gmra.mxu0 %v1821
      %v1823 = vpop.f32.mrf.mxu0
      %v1824 = vadd.f32 %v1642, %v1823
      %v1825 = vand.u32 %v1411, 4294901760
      %1826 = vmatmul.f32.gmra.mxu0 %v1825
      %v1827 = vpop.f32.mrf.mxu0
      %v1828 = vadd.f32 %v1650, %v1827
      %v1829 = vand.u32 %v1414, 4294901760
      %1830 = vmatmul.f32.gmra.mxu0 %v1829
      %v1831 = vpop.f32.mrf.mxu0
      %v1832 = vadd.f32 %v1658, %v1831
      %v1833 = vand.u32 %v1417, 4294901760
      %1834 = vmatmul.f32.gmra.mxu0 %v1833
      %v1835 = vpop.f32.mrf.mxu0
      %v1836 = vadd.f32 %v1666, %v1835
      %v1837 = vand.u32 %v1420, 4294901760
      %1838 = vmatmul.f32.gmra.mxu0 %v1837
      %v1839 = vpop.f32.mrf.mxu0
      %v1840 = vadd.f32 %v1674, %v1839
      %v1841 = vand.u32 %v1423, 4294901760
      %1842 = vmatmul.f32.gmra.mxu0 %v1841
      %v1843 = vpop.f32.mrf.mxu0
      %v1844 = vadd.f32 %v1682, %v1843
      %v1845 = vand.u32 %v1426, 4294901760
      %1846 = vmatmul.f32.gmra.mxu0 %v1845
      %v1847 = vpop.f32.mrf.mxu0
      %v1848 = vadd.f32 %v1690, %v1847
      %v1849 = vand.u32 %v1429, 4294901760
      %1850 = vmatmul.f32.gmra.mxu0 %v1849
      %v1851 = vpop.f32.mrf.mxu0
      %v1852 = vadd.f32 %v1698, %v1851
      %v1853 = vand.u32 %v1432, 4294901760
      %1854 = vmatmul.f32.gmra.mxu0 %v1853
      %v1855 = vpop.f32.mrf.mxu0
      %v1856 = vadd.f32 %v1706, %v1855
      %1857 = vdwg.mxu0
      %1858 = vmatpush.msra.mxu0 0.0
      %1859 = vmatpush.msra.mxu0 0.0
      %1860 = vmatpush.msra.mxu0 0.0
      %1861 = vmatpush.msra.mxu0 0.0
      %1862 = vmatpush.msra.mxu0 0.0
      %1863 = vmatpush.msra.mxu0 0.0
      %1864 = vmatpush.msra.mxu0 0.0
      %1865 = vmatpush.msra.mxu0 0.0
      %1866 = vmatpush.msra.mxu0 0.0
      %1867 = vmatpush.msra.mxu0 0.0
      %1868 = vmatpush.msra.mxu0 0.0
      %1869 = vmatpush.msra.mxu0 0.0
      %1870 = vmatpush.msra.mxu0 0.0
      %1871 = vmatpush.msra.mxu0 0.0
      %1872 = vmatpush.msra.mxu0 0.0
      %v1873 = vand.u32 %v1333, 4294901760
      %v1874 = vsub.f32 %v1333, %v1873
      %1875 = vmatpush.msra.mxu0 %v1874
      %v1876 = vand.u32 %v1339, 4294901760
      %v1877 = vsub.f32 %v1339, %v1876
      %1878 = vmatmul.f32.gmra.mxu0 %v1877
      %v1879 = vpop.f32.mrf.mxu0
      %v1880 = vadd.f32 %v1732, %v1879
      %v1881 = vand.u32 %v1342, 4294901760
      %v1882 = vsub.f32 %v1342, %v1881
      %1883 = vmatmul.f32.gmra.mxu0 %v1882
      %v1884 = vpop.f32.mrf.mxu0
      %v1885 = vadd.f32 %v1736, %v1884
      %v1886 = vand.u32 %v1345, 4294901760
      %v1887 = vsub.f32 %v1345, %v1886
      %1888 = vmatmul.f32.gmra.mxu0 %v1887
      %v1889 = vpop.f32.mrf.mxu0
      %v1890 = vadd.f32 %v1740, %v1889
      %v1891 = vand.u32 %v1348, 4294901760
      %v1892 = vsub.f32 %v1348, %v1891
      %1893 = vmatmul.f32.gmra.mxu0 %v1892
      %v1894 = vpop.f32.mrf.mxu0
      %v1895 = vadd.f32 %v1744, %v1894
      %v1896 = vand.u32 %v1351, 4294901760
      %v1897 = vsub.f32 %v1351, %v1896
      %1898 = vmatmul.f32.gmra.mxu0 %v1897
      %v1899 = vpop.f32.mrf.mxu0
      %v1900 = vadd.f32 %v1748, %v1899
      %v1901 = vand.u32 %v1354, 4294901760
      %v1902 = vsub.f32 %v1354, %v1901
      %1903 = vmatmul.f32.gmra.mxu0 %v1902
      %v1904 = vpop.f32.mrf.mxu0
      %v1905 = vadd.f32 %v1752, %v1904
      %v1906 = vand.u32 %v1357, 4294901760
      %v1907 = vsub.f32 %v1357, %v1906
      %1908 = vmatmul.f32.gmra.mxu0 %v1907
      %v1909 = vpop.f32.mrf.mxu0
      %v1910 = vadd.f32 %v1756, %v1909
      %v1911 = vand.u32 %v1360, 4294901760
      %v1912 = vsub.f32 %v1360, %v1911
      %1913 = vmatmul.f32.gmra.mxu0 %v1912
      %v1914 = vpop.f32.mrf.mxu0
      %v1915 = vadd.f32 %v1760, %v1914
      %v1916 = vand.u32 %v1363, 4294901760
      %v1917 = vsub.f32 %v1363, %v1916
      %1918 = vmatmul.f32.gmra.mxu0 %v1917
      %v1919 = vpop.f32.mrf.mxu0
      %v1920 = vadd.f32 %v1764, %v1919
      %v1921 = vand.u32 %v1366, 4294901760
      %v1922 = vsub.f32 %v1366, %v1921
      %1923 = vmatmul.f32.gmra.mxu0 %v1922
      %v1924 = vpop.f32.mrf.mxu0
      %v1925 = vadd.f32 %v1768, %v1924
      %v1926 = vand.u32 %v1369, 4294901760
      %v1927 = vsub.f32 %v1369, %v1926
      %1928 = vmatmul.f32.gmra.mxu0 %v1927
      %v1929 = vpop.f32.mrf.mxu0
      %v1930 = vadd.f32 %v1772, %v1929
      %v1931 = vand.u32 %v1372, 4294901760
      %v1932 = vsub.f32 %v1372, %v1931
      %1933 = vmatmul.f32.gmra.mxu0 %v1932
      %v1934 = vpop.f32.mrf.mxu0
      %v1935 = vadd.f32 %v1776, %v1934
      %v1936 = vand.u32 %v1375, 4294901760
      %v1937 = vsub.f32 %v1375, %v1936
      %1938 = vmatmul.f32.gmra.mxu0 %v1937
      %v1939 = vpop.f32.mrf.mxu0
      %v1940 = vadd.f32 %v1780, %v1939
      %v1941 = vand.u32 %v1378, 4294901760
      %v1942 = vsub.f32 %v1378, %v1941
      %1943 = vmatmul.f32.gmra.mxu0 %v1942
      %v1944 = vpop.f32.mrf.mxu0
      %v1945 = vadd.f32 %v1784, %v1944
      %v1946 = vand.u32 %v1381, 4294901760
      %v1947 = vsub.f32 %v1381, %v1946
      %1948 = vmatmul.f32.gmra.mxu0 %v1947
      %v1949 = vpop.f32.mrf.mxu0
      %v1950 = vadd.f32 %v1788, %v1949
      %v1951 = vand.u32 %v1384, 4294901760
      %v1952 = vsub.f32 %v1384, %v1951
      %1953 = vmatmul.f32.gmra.mxu0 %v1952
      %v1954 = vpop.f32.mrf.mxu0
      %v1955 = vadd.f32 %v1792, %v1954
      %v1956 = vand.u32 %v1387, 4294901760
      %v1957 = vsub.f32 %v1387, %v1956
      %1958 = vmatmul.f32.gmra.mxu0 %v1957
      %v1959 = vpop.f32.mrf.mxu0
      %v1960 = vadd.f32 %v1796, %v1959
      %v1961 = vand.u32 %v1390, 4294901760
      %v1962 = vsub.f32 %v1390, %v1961
      %1963 = vmatmul.f32.gmra.mxu0 %v1962
      %v1964 = vpop.f32.mrf.mxu0
      %v1965 = vadd.f32 %v1800, %v1964
      %v1966 = vand.u32 %v1393, 4294901760
      %v1967 = vsub.f32 %v1393, %v1966
      %1968 = vmatmul.f32.gmra.mxu0 %v1967
      %v1969 = vpop.f32.mrf.mxu0
      %v1970 = vadd.f32 %v1804, %v1969
      %v1971 = vand.u32 %v1396, 4294901760
      %v1972 = vsub.f32 %v1396, %v1971
      %1973 = vmatmul.f32.gmra.mxu0 %v1972
      %v1974 = vpop.f32.mrf.mxu0
      %v1975 = vadd.f32 %v1808, %v1974
      %v1976 = vand.u32 %v1399, 4294901760
      %v1977 = vsub.f32 %v1399, %v1976
      %1978 = vmatmul.f32.gmra.mxu0 %v1977
      %v1979 = vpop.f32.mrf.mxu0
      %v1980 = vadd.f32 %v1812, %v1979
      %v1981 = vand.u32 %v1402, 4294901760
      %v1982 = vsub.f32 %v1402, %v1981
      %1983 = vmatmul.f32.gmra.mxu0 %v1982
      %v1984 = vpop.f32.mrf.mxu0
      %v1985 = vadd.f32 %v1816, %v1984
      %v1986 = vand.u32 %v1405, 4294901760
      %v1987 = vsub.f32 %v1405, %v1986
      %1988 = vmatmul.f32.gmra.mxu0 %v1987
      %v1989 = vpop.f32.mrf.mxu0
      %v1990 = vadd.f32 %v1820, %v1989
      %v1991 = vand.u32 %v1408, 4294901760
      %v1992 = vsub.f32 %v1408, %v1991
      %1993 = vmatmul.f32.gmra.mxu0 %v1992
      %v1994 = vpop.f32.mrf.mxu0
      %v1995 = vadd.f32 %v1824, %v1994
      %v1996 = vand.u32 %v1411, 4294901760
      %v1997 = vsub.f32 %v1411, %v1996
      %1998 = vmatmul.f32.gmra.mxu0 %v1997
      %v1999 = vpop.f32.mrf.mxu0
      %v2000 = vadd.f32 %v1828, %v1999
      %v2001 = vand.u32 %v1414, 4294901760
      %v2002 = vsub.f32 %v1414, %v2001
      %2003 = vmatmul.f32.gmra.mxu0 %v2002
      %v2004 = vpop.f32.mrf.mxu0
      %v2005 = vadd.f32 %v1832, %v2004
      %v2006 = vand.u32 %v1417, 4294901760
      %v2007 = vsub.f32 %v1417, %v2006
      %2008 = vmatmul.f32.gmra.mxu0 %v2007
      %v2009 = vpop.f32.mrf.mxu0
      %v2010 = vadd.f32 %v1836, %v2009
      %v2011 = vand.u32 %v1420, 4294901760
      %v2012 = vsub.f32 %v1420, %v2011
      %2013 = vmatmul.f32.gmra.mxu0 %v2012
      %v2014 = vpop.f32.mrf.mxu0
      %v2015 = vadd.f32 %v1840, %v2014
      %v2016 = vand.u32 %v1423, 4294901760
      %v2017 = vsub.f32 %v1423, %v2016
      %2018 = vmatmul.f32.gmra.mxu0 %v2017
      %v2019 = vpop.f32.mrf.mxu0
      %v2020 = vadd.f32 %v1844, %v2019
      %v2021 = vand.u32 %v1426, 4294901760
      %v2022 = vsub.f32 %v1426, %v2021
      %2023 = vmatmul.f32.gmra.mxu0 %v2022
      %v2024 = vpop.f32.mrf.mxu0
      %v2025 = vadd.f32 %v1848, %v2024
      %v2026 = vand.u32 %v1429, 4294901760
      %v2027 = vsub.f32 %v1429, %v2026
      %2028 = vmatmul.f32.gmra.mxu0 %v2027
      %v2029 = vpop.f32.mrf.mxu0
      %v2030 = vadd.f32 %v1852, %v2029
      %v2031 = vand.u32 %v1432, 4294901760
      %v2032 = vsub.f32 %v1432, %v2031
      %2033 = vmatmul.f32.gmra.mxu0 %v2032
      %v2034 = vpop.f32.mrf.mxu0
      %v2035 = vadd.f32 %v1856, %v2034
      %2036 = vdwg.mxu0
      %2037 = vmatpush.msra.mxu0 0.0
      %2038 = vmatpush.msra.mxu0 0.0
      %2039 = vmatpush.msra.mxu0 0.0
      %2040 = vmatpush.msra.mxu0 0.0
      %2041 = vmatpush.msra.mxu0 0.0
      %2042 = vmatpush.msra.mxu0 0.0
      %2043 = vmatpush.msra.mxu0 0.0
      %2044 = vmatpush.msra.mxu0 0.0
      %2045 = vmatpush.msra.mxu0 0.0
      %2046 = vmatpush.msra.mxu0 0.0
      %2047 = vmatpush.msra.mxu0 0.0
      %2048 = vmatpush.msra.mxu0 0.0
      %2049 = vmatpush.msra.mxu0 0.0
      %2050 = vmatpush.msra.mxu0 0.0
      %2051 = vmatpush.msra.mxu0 0.0
      %v2052 = vand.u32 %v1333, 4294901760
      %2053 = vmatpush.msra.mxu0 %v2052
      %v2054 = vand.u32 %v1339, 4294901760
      %v2055 = vsub.f32 %v1339, %v2054
      %v2056 = vand.u32 %v2055, 4294901760
      %2057 = vmatmul.f32.gmra.mxu0 %v2056
      %v2058 = vpop.f32.mrf.mxu0
      %v2059 = vadd.f32 %v1880, %v2058
      %v2060 = vand.u32 %v1342, 4294901760
      %v2061 = vsub.f32 %v1342, %v2060
      %v2062 = vand.u32 %v2061, 4294901760
      %2063 = vmatmul.f32.gmra.mxu0 %v2062
      %v2064 = vpop.f32.mrf.mxu0
      %v2065 = vadd.f32 %v1885, %v2064
      %v2066 = vand.u32 %v1345, 4294901760
      %v2067 = vsub.f32 %v1345, %v2066
      %v2068 = vand.u32 %v2067, 4294901760
      %2069 = vmatmul.f32.gmra.mxu0 %v2068
      %v2070 = vpop.f32.mrf.mxu0
      %v2071 = vadd.f32 %v1890, %v2070
      %v2072 = vand.u32 %v1348, 4294901760
      %v2073 = vsub.f32 %v1348, %v2072
      %v2074 = vand.u32 %v2073, 4294901760
      %2075 = vmatmul.f32.gmra.mxu0 %v2074
      %v2076 = vpop.f32.mrf.mxu0
      %v2077 = vadd.f32 %v1895, %v2076
      %v2078 = vand.u32 %v1351, 4294901760
      %v2079 = vsub.f32 %v1351, %v2078
      %v2080 = vand.u32 %v2079, 4294901760
      %2081 = vmatmul.f32.gmra.mxu0 %v2080
      %v2082 = vpop.f32.mrf.mxu0
      %v2083 = vadd.f32 %v1900, %v2082
      %v2084 = vand.u32 %v1354, 4294901760
      %v2085 = vsub.f32 %v1354, %v2084
      %v2086 = vand.u32 %v2085, 4294901760
      %2087 = vmatmul.f32.gmra.mxu0 %v2086
      %v2088 = vpop.f32.mrf.mxu0
      %v2089 = vadd.f32 %v1905, %v2088
      %v2090 = vand.u32 %v1357, 4294901760
      %v2091 = vsub.f32 %v1357, %v2090
      %v2092 = vand.u32 %v2091, 4294901760
      %2093 = vmatmul.f32.gmra.mxu0 %v2092
      %v2094 = vpop.f32.mrf.mxu0
      %v2095 = vadd.f32 %v1910, %v2094
      %v2096 = vand.u32 %v1360, 4294901760
      %v2097 = vsub.f32 %v1360, %v2096
      %v2098 = vand.u32 %v2097, 4294901760
      %2099 = vmatmul.f32.gmra.mxu0 %v2098
      %v2100 = vpop.f32.mrf.mxu0
      %v2101 = vadd.f32 %v1915, %v2100
      %v2102 = vand.u32 %v1363, 4294901760
      %v2103 = vsub.f32 %v1363, %v2102
      %v2104 = vand.u32 %v2103, 4294901760
      %2105 = vmatmul.f32.gmra.mxu0 %v2104
      %v2106 = vpop.f32.mrf.mxu0
      %v2107 = vadd.f32 %v1920, %v2106
      %v2108 = vand.u32 %v1366, 4294901760
      %v2109 = vsub.f32 %v1366, %v2108
      %v2110 = vand.u32 %v2109, 4294901760
      %2111 = vmatmul.f32.gmra.mxu0 %v2110
      %v2112 = vpop.f32.mrf.mxu0
      %v2113 = vadd.f32 %v1925, %v2112
      %v2114 = vand.u32 %v1369, 4294901760
      %v2115 = vsub.f32 %v1369, %v2114
      %v2116 = vand.u32 %v2115, 4294901760
      %2117 = vmatmul.f32.gmra.mxu0 %v2116
      %v2118 = vpop.f32.mrf.mxu0
      %v2119 = vadd.f32 %v1930, %v2118
      %v2120 = vand.u32 %v1372, 4294901760
      %v2121 = vsub.f32 %v1372, %v2120
      %v2122 = vand.u32 %v2121, 4294901760
      %2123 = vmatmul.f32.gmra.mxu0 %v2122
      %v2124 = vpop.f32.mrf.mxu0
      %v2125 = vadd.f32 %v1935, %v2124
      %v2126 = vand.u32 %v1375, 4294901760
      %v2127 = vsub.f32 %v1375, %v2126
      %v2128 = vand.u32 %v2127, 4294901760
      %2129 = vmatmul.f32.gmra.mxu0 %v2128
      %v2130 = vpop.f32.mrf.mxu0
      %v2131 = vadd.f32 %v1940, %v2130
      %v2132 = vand.u32 %v1378, 4294901760
      %v2133 = vsub.f32 %v1378, %v2132
      %v2134 = vand.u32 %v2133, 4294901760
      %2135 = vmatmul.f32.gmra.mxu0 %v2134
      %v2136 = vpop.f32.mrf.mxu0
      %v2137 = vadd.f32 %v1945, %v2136
      %v2138 = vand.u32 %v1381, 4294901760
      %v2139 = vsub.f32 %v1381, %v2138
      %v2140 = vand.u32 %v2139, 4294901760
      %2141 = vmatmul.f32.gmra.mxu0 %v2140
      %v2142 = vpop.f32.mrf.mxu0
      %v2143 = vadd.f32 %v1950, %v2142
      %v2144 = vand.u32 %v1384, 4294901760
      %v2145 = vsub.f32 %v1384, %v2144
      %v2146 = vand.u32 %v2145, 4294901760
      %2147 = vmatmul.f32.gmra.mxu0 %v2146
      %v2148 = vpop.f32.mrf.mxu0
      %v2149 = vadd.f32 %v1955, %v2148
      %v2150 = vand.u32 %v1387, 4294901760
      %v2151 = vsub.f32 %v1387, %v2150
      %v2152 = vand.u32 %v2151, 4294901760
      %2153 = vmatmul.f32.gmra.mxu0 %v2152
      %v2154 = vpop.f32.mrf.mxu0
      %v2155 = vadd.f32 %v1960, %v2154
      %v2156 = vand.u32 %v1390, 4294901760
      %v2157 = vsub.f32 %v1390, %v2156
      %v2158 = vand.u32 %v2157, 4294901760
      %2159 = vmatmul.f32.gmra.mxu0 %v2158
      %v2160 = vpop.f32.mrf.mxu0
      %v2161 = vadd.f32 %v1965, %v2160
      %v2162 = vand.u32 %v1393, 4294901760
      %v2163 = vsub.f32 %v1393, %v2162
      %v2164 = vand.u32 %v2163, 4294901760
      %2165 = vmatmul.f32.gmra.mxu0 %v2164
      %v2166 = vpop.f32.mrf.mxu0
      %v2167 = vadd.f32 %v1970, %v2166
      %v2168 = vand.u32 %v1396, 4294901760
      %v2169 = vsub.f32 %v1396, %v2168
      %v2170 = vand.u32 %v2169, 4294901760
      %2171 = vmatmul.f32.gmra.mxu0 %v2170
      %v2172 = vpop.f32.mrf.mxu0
      %v2173 = vadd.f32 %v1975, %v2172
      %v2174 = vand.u32 %v1399, 4294901760
      %v2175 = vsub.f32 %v1399, %v2174
      %v2176 = vand.u32 %v2175, 4294901760
      %2177 = vmatmul.f32.gmra.mxu0 %v2176
      %v2178 = vpop.f32.mrf.mxu0
      %v2179 = vadd.f32 %v1980, %v2178
      %v2180 = vand.u32 %v1402, 4294901760
      %v2181 = vsub.f32 %v1402, %v2180
      %v2182 = vand.u32 %v2181, 4294901760
      %2183 = vmatmul.f32.gmra.mxu0 %v2182
      %v2184 = vpop.f32.mrf.mxu0
      %v2185 = vadd.f32 %v1985, %v2184
      %v2186 = vand.u32 %v1405, 4294901760
      %v2187 = vsub.f32 %v1405, %v2186
      %v2188 = vand.u32 %v2187, 4294901760
      %2189 = vmatmul.f32.gmra.mxu0 %v2188
      %v2190 = vpop.f32.mrf.mxu0
      %v2191 = vadd.f32 %v1990, %v2190
      %v2192 = vand.u32 %v1408, 4294901760
      %v2193 = vsub.f32 %v1408, %v2192
      %v2194 = vand.u32 %v2193, 4294901760
      %2195 = vmatmul.f32.gmra.mxu0 %v2194
      %v2196 = vpop.f32.mrf.mxu0
      %v2197 = vadd.f32 %v1995, %v2196
      %v2198 = vand.u32 %v1411, 4294901760
      %v2199 = vsub.f32 %v1411, %v2198
      %v2200 = vand.u32 %v2199, 4294901760
      %2201 = vmatmul.f32.gmra.mxu0 %v2200
      %v2202 = vpop.f32.mrf.mxu0
      %v2203 = vadd.f32 %v2000, %v2202
      %v2204 = vand.u32 %v1414, 4294901760
      %v2205 = vsub.f32 %v1414, %v2204
      %v2206 = vand.u32 %v2205, 4294901760
      %2207 = vmatmul.f32.gmra.mxu0 %v2206
      %v2208 = vpop.f32.mrf.mxu0
      %v2209 = vadd.f32 %v2005, %v2208
      %v2210 = vand.u32 %v1417, 4294901760
      %v2211 = vsub.f32 %v1417, %v2210
      %v2212 = vand.u32 %v2211, 4294901760
      %2213 = vmatmul.f32.gmra.mxu0 %v2212
      %v2214 = vpop.f32.mrf.mxu0
      %v2215 = vadd.f32 %v2010, %v2214
      %v2216 = vand.u32 %v1420, 4294901760
      %v2217 = vsub.f32 %v1420, %v2216
      %v2218 = vand.u32 %v2217, 4294901760
      %2219 = vmatmul.f32.gmra.mxu0 %v2218
      %v2220 = vpop.f32.mrf.mxu0
      %v2221 = vadd.f32 %v2015, %v2220
      %v2222 = vand.u32 %v1423, 4294901760
      %v2223 = vsub.f32 %v1423, %v2222
      %v2224 = vand.u32 %v2223, 4294901760
      %2225 = vmatmul.f32.gmra.mxu0 %v2224
      %v2226 = vpop.f32.mrf.mxu0
      %v2227 = vadd.f32 %v2020, %v2226
      %v2228 = vand.u32 %v1426, 4294901760
      %v2229 = vsub.f32 %v1426, %v2228
      %v2230 = vand.u32 %v2229, 4294901760
      %2231 = vmatmul.f32.gmra.mxu0 %v2230
      %v2232 = vpop.f32.mrf.mxu0
      %v2233 = vadd.f32 %v2025, %v2232
      %v2234 = vand.u32 %v1429, 4294901760
      %v2235 = vsub.f32 %v1429, %v2234
      %v2236 = vand.u32 %v2235, 4294901760
      %2237 = vmatmul.f32.gmra.mxu0 %v2236
      %v2238 = vpop.f32.mrf.mxu0
      %v2239 = vadd.f32 %v2030, %v2238
      %v2240 = vand.u32 %v1432, 4294901760
      %v2241 = vsub.f32 %v1432, %v2240
      %v2242 = vand.u32 %v2241, 4294901760
      %2243 = vmatmul.f32.gmra.mxu0 %v2242
      %v2244 = vpop.f32.mrf.mxu0
      %v2245 = vadd.f32 %v2035, %v2244
      %2246 = vdwg.mxu0
      %2247 = vmatpush.msra.mxu0 0.0
      %2248 = vmatpush.msra.mxu0 0.0
      %2249 = vmatpush.msra.mxu0 0.0
      %2250 = vmatpush.msra.mxu0 0.0
      %2251 = vmatpush.msra.mxu0 0.0
      %2252 = vmatpush.msra.mxu0 0.0
      %2253 = vmatpush.msra.mxu0 0.0
      %2254 = vmatpush.msra.mxu0 0.0
      %2255 = vmatpush.msra.mxu0 0.0
      %2256 = vmatpush.msra.mxu0 0.0
      %2257 = vmatpush.msra.mxu0 0.0
      %2258 = vmatpush.msra.mxu0 0.0
      %2259 = vmatpush.msra.mxu0 0.0
      %2260 = vmatpush.msra.mxu0 0.0
      %2261 = vmatpush.msra.mxu0 0.0
      %v2262 = vand.u32 %v1333, 4294901760
      %v2263 = vsub.f32 %v1333, %v2262
      %v2264 = vand.u32 %v2263, 4294901760
      %2265 = vmatpush.msra.mxu0 %v2264
      %v2266 = vand.u32 %v1339, 4294901760
      %2267 = vmatmul.f32.gmra.mxu0 %v2266
      %v2268 = vpop.f32.mrf.mxu0
      %v2269 = vadd.f32 %v2059, %v2268
      %v2270 = vand.u32 %v1342, 4294901760
      %2271 = vmatmul.f32.gmra.mxu0 %v2270
      %v2272 = vpop.f32.mrf.mxu0
      %v2273 = vadd.f32 %v2065, %v2272
      %v2274 = vand.u32 %v1345, 4294901760
      %2275 = vmatmul.f32.gmra.mxu0 %v2274
      %v2276 = vpop.f32.mrf.mxu0
      %v2277 = vadd.f32 %v2071, %v2276
      %v2278 = vand.u32 %v1348, 4294901760
      %2279 = vmatmul.f32.gmra.mxu0 %v2278
      %v2280 = vpop.f32.mrf.mxu0
      %v2281 = vadd.f32 %v2077, %v2280
      %v2282 = vand.u32 %v1351, 4294901760
      %2283 = vmatmul.f32.gmra.mxu0 %v2282
      %v2284 = vpop.f32.mrf.mxu0
      %v2285 = vadd.f32 %v2083, %v2284
      %v2286 = vand.u32 %v1354, 4294901760
      %2287 = vmatmul.f32.gmra.mxu0 %v2286
      %v2288 = vpop.f32.mrf.mxu0
      %v2289 = vadd.f32 %v2089, %v2288
      %v2290 = vand.u32 %v1357, 4294901760
      %2291 = vmatmul.f32.gmra.mxu0 %v2290
      %v2292 = vpop.f32.mrf.mxu0
      %v2293 = vadd.f32 %v2095, %v2292
      %v2294 = vand.u32 %v1360, 4294901760
      %2295 = vmatmul.f32.gmra.mxu0 %v2294
      %v2296 = vpop.f32.mrf.mxu0
      %v2297 = vadd.f32 %v2101, %v2296
      %v2298 = vand.u32 %v1363, 4294901760
      %2299 = vmatmul.f32.gmra.mxu0 %v2298
      %v2300 = vpop.f32.mrf.mxu0
      %v2301 = vadd.f32 %v2107, %v2300
      %v2302 = vand.u32 %v1366, 4294901760
      %2303 = vmatmul.f32.gmra.mxu0 %v2302
      %v2304 = vpop.f32.mrf.mxu0
      %v2305 = vadd.f32 %v2113, %v2304
      %v2306 = vand.u32 %v1369, 4294901760
      %2307 = vmatmul.f32.gmra.mxu0 %v2306
      %v2308 = vpop.f32.mrf.mxu0
      %v2309 = vadd.f32 %v2119, %v2308
      %v2310 = vand.u32 %v1372, 4294901760
      %2311 = vmatmul.f32.gmra.mxu0 %v2310
      %v2312 = vpop.f32.mrf.mxu0
      %v2313 = vadd.f32 %v2125, %v2312
      %v2314 = vand.u32 %v1375, 4294901760
      %2315 = vmatmul.f32.gmra.mxu0 %v2314
      %v2316 = vpop.f32.mrf.mxu0
      %v2317 = vadd.f32 %v2131, %v2316
      %v2318 = vand.u32 %v1378, 4294901760
      %2319 = vmatmul.f32.gmra.mxu0 %v2318
      %v2320 = vpop.f32.mrf.mxu0
      %v2321 = vadd.f32 %v2137, %v2320
      %v2322 = vand.u32 %v1381, 4294901760
      %2323 = vmatmul.f32.gmra.mxu0 %v2322
      %v2324 = vpop.f32.mrf.mxu0
      %v2325 = vadd.f32 %v2143, %v2324
      %v2326 = vand.u32 %v1384, 4294901760
      %2327 = vmatmul.f32.gmra.mxu0 %v2326
      %v2328 = vpop.f32.mrf.mxu0
      %v2329 = vadd.f32 %v2149, %v2328
      %v2330 = vand.u32 %v1387, 4294901760
      %2331 = vmatmul.f32.gmra.mxu0 %v2330
      %v2332 = vpop.f32.mrf.mxu0
      %v2333 = vadd.f32 %v2155, %v2332
      %v2334 = vand.u32 %v1390, 4294901760
      %2335 = vmatmul.f32.gmra.mxu0 %v2334
      %v2336 = vpop.f32.mrf.mxu0
      %v2337 = vadd.f32 %v2161, %v2336
      %v2338 = vand.u32 %v1393, 4294901760
      %2339 = vmatmul.f32.gmra.mxu0 %v2338
      %v2340 = vpop.f32.mrf.mxu0
      %v2341 = vadd.f32 %v2167, %v2340
      %v2342 = vand.u32 %v1396, 4294901760
      %2343 = vmatmul.f32.gmra.mxu0 %v2342
      %v2344 = vpop.f32.mrf.mxu0
      %v2345 = vadd.f32 %v2173, %v2344
      %v2346 = vand.u32 %v1399, 4294901760
      %2347 = vmatmul.f32.gmra.mxu0 %v2346
      %v2348 = vpop.f32.mrf.mxu0
      %v2349 = vadd.f32 %v2179, %v2348
      %v2350 = vand.u32 %v1402, 4294901760
      %2351 = vmatmul.f32.gmra.mxu0 %v2350
      %v2352 = vpop.f32.mrf.mxu0
      %v2353 = vadd.f32 %v2185, %v2352
      %v2354 = vand.u32 %v1405, 4294901760
      %2355 = vmatmul.f32.gmra.mxu0 %v2354
      %v2356 = vpop.f32.mrf.mxu0
      %v2357 = vadd.f32 %v2191, %v2356
      %v2358 = vand.u32 %v1408, 4294901760
      %2359 = vmatmul.f32.gmra.mxu0 %v2358
      %v2360 = vpop.f32.mrf.mxu0
      %v2361 = vadd.f32 %v2197, %v2360
      %v2362 = vand.u32 %v1411, 4294901760
      %2363 = vmatmul.f32.gmra.mxu0 %v2362
      %v2364 = vpop.f32.mrf.mxu0
      %v2365 = vadd.f32 %v2203, %v2364
      %v2366 = vand.u32 %v1414, 4294901760
      %2367 = vmatmul.f32.gmra.mxu0 %v2366
      %v2368 = vpop.f32.mrf.mxu0
      %v2369 = vadd.f32 %v2209, %v2368
      %v2370 = vand.u32 %v1417, 4294901760
      %2371 = vmatmul.f32.gmra.mxu0 %v2370
      %v2372 = vpop.f32.mrf.mxu0
      %v2373 = vadd.f32 %v2215, %v2372
      %v2374 = vand.u32 %v1420, 4294901760
      %2375 = vmatmul.f32.gmra.mxu0 %v2374
      %v2376 = vpop.f32.mrf.mxu0
      %v2377 = vadd.f32 %v2221, %v2376
      %v2378 = vand.u32 %v1423, 4294901760
      %2379 = vmatmul.f32.gmra.mxu0 %v2378
      %v2380 = vpop.f32.mrf.mxu0
      %v2381 = vadd.f32 %v2227, %v2380
      %v2382 = vand.u32 %v1426, 4294901760
      %2383 = vmatmul.f32.gmra.mxu0 %v2382
      %v2384 = vpop.f32.mrf.mxu0
      %v2385 = vadd.f32 %v2233, %v2384
      %v2386 = vand.u32 %v1429, 4294901760
      %2387 = vmatmul.f32.gmra.mxu0 %v2386
      %v2388 = vpop.f32.mrf.mxu0
      %v2389 = vadd.f32 %v2239, %v2388
      %v2390 = vand.u32 %v1432, 4294901760
      %2391 = vmatmul.f32.gmra.mxu0 %v2390
      %v2392 = vpop.f32.mrf.mxu0
      %v2393 = vadd.f32 %v2245, %v2392
      %2394 = vdwg.mxu0
      %2395 = vmatpush.msra.mxu0 0.0
      %2396 = vmatpush.msra.mxu0 0.0
      %2397 = vmatpush.msra.mxu0 0.0
      %2398 = vmatpush.msra.mxu0 0.0
      %2399 = vmatpush.msra.mxu0 0.0
      %2400 = vmatpush.msra.mxu0 0.0
      %2401 = vmatpush.msra.mxu0 0.0
      %2402 = vmatpush.msra.mxu0 0.0
      %2403 = vmatpush.msra.mxu0 0.0
      %2404 = vmatpush.msra.mxu0 0.0
      %2405 = vmatpush.msra.mxu0 0.0
      %2406 = vmatpush.msra.mxu0 0.0
      %2407 = vmatpush.msra.mxu0 0.0
      %2408 = vmatpush.msra.mxu0 0.0
      %2409 = vmatpush.msra.mxu0 0.0
      %v2410 = vand.u32 %v1333, 4294901760
      %2411 = vmatpush.msra.mxu0 %v2410
      %v2412 = vand.u32 %v1339, 4294901760
      %2413 = vmatmul.f32.gmra.mxu0 %v2412
      %v2414 = vpop.f32.mrf.mxu0
      %v2415 = vadd.f32 %v2269, %v2414
      %v2416 = vand.u32 %v1342, 4294901760
      %2417 = vmatmul.f32.gmra.mxu0 %v2416
      %v2418 = vpop.f32.mrf.mxu0
      %v2419 = vadd.f32 %v2273, %v2418
      %v2420 = vand.u32 %v1345, 4294901760
      %2421 = vmatmul.f32.gmra.mxu0 %v2420
      %v2422 = vpop.f32.mrf.mxu0
      %v2423 = vadd.f32 %v2277, %v2422
      %v2424 = vand.u32 %v1348, 4294901760
      %2425 = vmatmul.f32.gmra.mxu0 %v2424
      %v2426 = vpop.f32.mrf.mxu0
      %v2427 = vadd.f32 %v2281, %v2426
      %v2428 = vand.u32 %v1351, 4294901760
      %2429 = vmatmul.f32.gmra.mxu0 %v2428
      %v2430 = vpop.f32.mrf.mxu0
      %v2431 = vadd.f32 %v2285, %v2430
      %v2432 = vand.u32 %v1354, 4294901760
      %2433 = vmatmul.f32.gmra.mxu0 %v2432
      %v2434 = vpop.f32.mrf.mxu0
      %v2435 = vadd.f32 %v2289, %v2434
      %v2436 = vand.u32 %v1357, 4294901760
      %2437 = vmatmul.f32.gmra.mxu0 %v2436
      %v2438 = vpop.f32.mrf.mxu0
      %v2439 = vadd.f32 %v2293, %v2438
      %v2440 = vand.u32 %v1360, 4294901760
      %2441 = vmatmul.f32.gmra.mxu0 %v2440
      %v2442 = vpop.f32.mrf.mxu0
      %v2443 = vadd.f32 %v2297, %v2442
      %v2444 = vand.u32 %v1363, 4294901760
      %2445 = vmatmul.f32.gmra.mxu0 %v2444
      %v2446 = vpop.f32.mrf.mxu0
      %v2447 = vadd.f32 %v2301, %v2446
      %v2448 = vand.u32 %v1366, 4294901760
      %2449 = vmatmul.f32.gmra.mxu0 %v2448
      %v2450 = vpop.f32.mrf.mxu0
      %v2451 = vadd.f32 %v2305, %v2450
      %v2452 = vand.u32 %v1369, 4294901760
      %2453 = vmatmul.f32.gmra.mxu0 %v2452
      %v2454 = vpop.f32.mrf.mxu0
      %v2455 = vadd.f32 %v2309, %v2454
      %v2456 = vand.u32 %v1372, 4294901760
      %2457 = vmatmul.f32.gmra.mxu0 %v2456
      %v2458 = vpop.f32.mrf.mxu0
      %v2459 = vadd.f32 %v2313, %v2458
      %v2460 = vand.u32 %v1375, 4294901760
      %2461 = vmatmul.f32.gmra.mxu0 %v2460
      %v2462 = vpop.f32.mrf.mxu0
      %v2463 = vadd.f32 %v2317, %v2462
      %v2464 = vand.u32 %v1378, 4294901760
      %2465 = vmatmul.f32.gmra.mxu0 %v2464
      %v2466 = vpop.f32.mrf.mxu0
      %v2467 = vadd.f32 %v2321, %v2466
      %v2468 = vand.u32 %v1381, 4294901760
      %2469 = vmatmul.f32.gmra.mxu0 %v2468
      %v2470 = vpop.f32.mrf.mxu0
      %v2471 = vadd.f32 %v2325, %v2470
      %v2472 = vand.u32 %v1384, 4294901760
      %2473 = vmatmul.f32.gmra.mxu0 %v2472
      %v2474 = vpop.f32.mrf.mxu0
      %v2475 = vadd.f32 %v2329, %v2474
      %v2476 = vand.u32 %v1387, 4294901760
      %2477 = vmatmul.f32.gmra.mxu0 %v2476
      %v2478 = vpop.f32.mrf.mxu0
      %v2479 = vadd.f32 %v2333, %v2478
      %v2480 = vand.u32 %v1390, 4294901760
      %2481 = vmatmul.f32.gmra.mxu0 %v2480
      %v2482 = vpop.f32.mrf.mxu0
      %v2483 = vadd.f32 %v2337, %v2482
      %v2484 = vand.u32 %v1393, 4294901760
      %2485 = vmatmul.f32.gmra.mxu0 %v2484
      %v2486 = vpop.f32.mrf.mxu0
      %v2487 = vadd.f32 %v2341, %v2486
      %v2488 = vand.u32 %v1396, 4294901760
      %2489 = vmatmul.f32.gmra.mxu0 %v2488
      %v2490 = vpop.f32.mrf.mxu0
      %v2491 = vadd.f32 %v2345, %v2490
      %v2492 = vand.u32 %v1399, 4294901760
      %2493 = vmatmul.f32.gmra.mxu0 %v2492
      %v2494 = vpop.f32.mrf.mxu0
      %v2495 = vadd.f32 %v2349, %v2494
      %v2496 = vand.u32 %v1402, 4294901760
      %2497 = vmatmul.f32.gmra.mxu0 %v2496
      %v2498 = vpop.f32.mrf.mxu0
      %v2499 = vadd.f32 %v2353, %v2498
      %v2500 = vand.u32 %v1405, 4294901760
      %2501 = vmatmul.f32.gmra.mxu0 %v2500
      %v2502 = vpop.f32.mrf.mxu0
      %v2503 = vadd.f32 %v2357, %v2502
      %v2504 = vand.u32 %v1408, 4294901760
      %2505 = vmatmul.f32.gmra.mxu0 %v2504
      %v2506 = vpop.f32.mrf.mxu0
      %v2507 = vadd.f32 %v2361, %v2506
      %v2508 = vand.u32 %v1411, 4294901760
      %2509 = vmatmul.f32.gmra.mxu0 %v2508
      %v2510 = vpop.f32.mrf.mxu0
      %v2511 = vadd.f32 %v2365, %v2510
      %v2512 = vand.u32 %v1414, 4294901760
      %2513 = vmatmul.f32.gmra.mxu0 %v2512
      %v2514 = vpop.f32.mrf.mxu0
      %v2515 = vadd.f32 %v2369, %v2514
      %v2516 = vand.u32 %v1417, 4294901760
      %2517 = vmatmul.f32.gmra.mxu0 %v2516
      %v2518 = vpop.f32.mrf.mxu0
      %v2519 = vadd.f32 %v2373, %v2518
      %v2520 = vand.u32 %v1420, 4294901760
      %2521 = vmatmul.f32.gmra.mxu0 %v2520
      %v2522 = vpop.f32.mrf.mxu0
      %v2523 = vadd.f32 %v2377, %v2522
      %v2524 = vand.u32 %v1423, 4294901760
      %2525 = vmatmul.f32.gmra.mxu0 %v2524
      %v2526 = vpop.f32.mrf.mxu0
      %v2527 = vadd.f32 %v2381, %v2526
      %v2528 = vand.u32 %v1426, 4294901760
      %2529 = vmatmul.f32.gmra.mxu0 %v2528
      %v2530 = vpop.f32.mrf.mxu0
      %v2531 = vadd.f32 %v2385, %v2530
      %v2532 = vand.u32 %v1429, 4294901760
      %2533 = vmatmul.f32.gmra.mxu0 %v2532
      %v2534 = vpop.f32.mrf.mxu0
      %v2535 = vadd.f32 %v2389, %v2534
      %v2536 = vand.u32 %v1432, 4294901760
      %2537 = vmatmul.f32.gmra.mxu0 %v2536
      %v2538 = vpop.f32.mrf.mxu0
      %v2539 = vadd.f32 %v2393, %v2538
      %2540 = vdwg.mxu0
      %vm2541 = vcmask 31744
      %2542 = vst.msk [vmem:[#allocation2] sm:$0xff] %vm2541, 0.0
      %vm2543 = vcmask 25600
      %2544 = vst.msk [vmem:[#allocation2 + $0x8] sm:$0x3] %vm2543, 0.0
      %2545 = vst.msk [vmem:[#allocation2 + $0x10] sm:$0xff] %vm2541, 0.0
      %2546 = vst.msk [vmem:[#allocation2 + $0x18] sm:$0x3] %vm2543, 0.0
      %2547 = vst.msk [vmem:[#allocation2 + $0x20] sm:$0xff] %vm2541, 0.0
      %2548 = vst.msk [vmem:[#allocation2 + $0x28] sm:$0x3] %vm2543, 0.0
      %2549 = vst.msk [vmem:[#allocation2 + $0x30] sm:$0xff] %vm2541, 0.0
      %2550 = vst.msk [vmem:[#allocation2 + $0x38] sm:$0x3] %vm2543, 0.0
      %2551 = vst.msk [vmem:[#allocation2 + $0x40] sm:$0xff] %vm2541, 0.0
      %2552 = vst.msk [vmem:[#allocation2 + $0x48] sm:$0x3] %vm2543, 0.0
      %2553 = vst.msk [vmem:[#allocation2 + $0x50] sm:$0xff] %vm2541, 0.0
      %2554 = vst.msk [vmem:[#allocation2 + $0x58] sm:$0x3] %vm2543, 0.0
      %2555 = vst.msk [vmem:[#allocation2 + $0x60] sm:$0xff] %vm2541, 0.0
      %2556 = vst.msk [vmem:[#allocation2 + $0x68] sm:$0x3] %vm2543, 0.0
      %2557 = vst.msk [vmem:[#allocation2 + $0x70] sm:$0xff] %vm2541, 0.0
      %2558 = vst.msk [vmem:[#allocation2 + $0x78] sm:$0x3] %vm2543, 0.0
      %2559 = vst.msk [vmem:[#allocation2 + $0x80] sm:$0xff] %vm2541, 0.0
      %2560 = vst.msk [vmem:[#allocation2 + $0x88] sm:$0x3] %vm2543, 0.0
      %2561 = vst.msk [vmem:[#allocation2 + $0x90] sm:$0xff] %vm2541, 0.0
      %2562 = vst.msk [vmem:[#allocation2 + $0x98] sm:$0x3] %vm2543, 0.0
      %2563 = vst.msk [vmem:[#allocation2 + $0xa0] sm:$0xff] %vm2541, 0.0
      %2564 = vst.msk [vmem:[#allocation2 + $0xa8] sm:$0x3] %vm2543, 0.0
      %2565 = vst.msk [vmem:[#allocation2 + $0xb0] sm:$0xff] %vm2541, 0.0
      %2566 = vst.msk [vmem:[#allocation2 + $0xb8] sm:$0x3] %vm2543, 0.0
      %2567 = vst.msk [vmem:[#allocation2 + $0xc0] sm:$0xff] %vm2541, 0.0
      %2568 = vst.msk [vmem:[#allocation2 + $0xc8] sm:$0x3] %vm2543, 0.0
      %2569 = vst.msk [vmem:[#allocation2 + $0xd0] sm:$0xff] %vm2541, 0.0
      %2570 = vst.msk [vmem:[#allocation2 + $0xd8] sm:$0x3] %vm2543, 0.0
      %2571 = vst.msk [vmem:[#allocation2 + $0xe0] sm:$0xff] %vm2541, 0.0
      %2572 = vst.msk [vmem:[#allocation2 + $0xe8] sm:$0x3] %vm2543, 0.0
      %2573 = vst.msk [vmem:[#allocation2 + $0xf0] sm:$0xff] %vm2541, 0.0
      %2574 = vst.msk [vmem:[#allocation2 + $0xf8] sm:$0x3] %vm2543, 0.0
      %2575 = vst.msk [vmem:[#allocation2 + $0x100] sm:$0xff] %vm2541, 0.0
      %2576 = vst.msk [vmem:[#allocation2 + $0x108] sm:$0x3] %vm2543, 0.0
      %2577 = vst.msk [vmem:[#allocation2 + $0x110] sm:$0xff] %vm2541, 0.0
      %2578 = vst.msk [vmem:[#allocation2 + $0x118] sm:$0x3] %vm2543, 0.0
      %2579 = vst.msk [vmem:[#allocation2 + $0x120] sm:$0xff] %vm2541, 0.0
      %2580 = vst.msk [vmem:[#allocation2 + $0x128] sm:$0x3] %vm2543, 0.0
      %2581 = vst.msk [vmem:[#allocation2 + $0x130] sm:$0xff] %vm2541, 0.0
      %2582 = vst.msk [vmem:[#allocation2 + $0x138] sm:$0x3] %vm2543, 0.0
      %2583 = vst.msk [vmem:[#allocation2 + $0x140] sm:$0xff] %vm2541, 0.0
      %2584 = vst.msk [vmem:[#allocation2 + $0x148] sm:$0x3] %vm2543, 0.0
      %2585 = vst.msk [vmem:[#allocation2 + $0x150] sm:$0xff] %vm2541, 0.0
      %2586 = vst.msk [vmem:[#allocation2 + $0x158] sm:$0x3] %vm2543, 0.0
      %2587 = vst.msk [vmem:[#allocation2 + $0x160] sm:$0xff] %vm2541, 0.0
      %2588 = vst.msk [vmem:[#allocation2 + $0x168] sm:$0x3] %vm2543, 0.0
      %2589 = vst.msk [vmem:[#allocation2 + $0x170] sm:$0xff] %vm2541, 0.0
      %2590 = vst.msk [vmem:[#allocation2 + $0x178] sm:$0x3] %vm2543, 0.0
      %2591 = vst.msk [vmem:[#allocation2 + $0x180] sm:$0xff] %vm2541, 0.0
      %2592 = vst.msk [vmem:[#allocation2 + $0x188] sm:$0x3] %vm2543, 0.0
      %2593 = vst.msk [vmem:[#allocation2 + $0x190] sm:$0xff] %vm2541, 0.0
      %2594 = vst.msk [vmem:[#allocation2 + $0x198] sm:$0x3] %vm2543, 0.0
      %2595 = vst.msk [vmem:[#allocation2 + $0x1a0] sm:$0xff] %vm2541, 0.0
      %2596 = vst.msk [vmem:[#allocation2 + $0x1a8] sm:$0x3] %vm2543, 0.0
      %2597 = vst.msk [vmem:[#allocation2 + $0x1b0] sm:$0xff] %vm2541, 0.0
      %2598 = vst.msk [vmem:[#allocation2 + $0x1b8] sm:$0x3] %vm2543, 0.0
      %2599 = vst.msk [vmem:[#allocation2 + $0x1c0] sm:$0xff] %vm2541, 0.0
      %2600 = vst.msk [vmem:[#allocation2 + $0x1c8] sm:$0x3] %vm2543, 0.0
      %2601 = vst.msk [vmem:[#allocation2 + $0x1d0] sm:$0xff] %vm2541, 0.0
      %2602 = vst.msk [vmem:[#allocation2 + $0x1d8] sm:$0x3] %vm2543, 0.0
      %2603 = vst.msk [vmem:[#allocation2 + $0x1e0] sm:$0xff] %vm2541, 0.0
      %2604 = vst.msk [vmem:[#allocation2 + $0x1e8] sm:$0x3] %vm2543, 0.0
      %2605 = vst.msk [vmem:[#allocation2 + $0x1f0] sm:$0xff] %vm2541, 0.0
      %2606 = vst.msk [vmem:[#allocation2 + $0x1f8] sm:$0x3] %vm2543, 0.0
      %2607 = vst.msk [vmem:[#allocation2 + $0x200] sm:$0xff] %vm2541, 0.0
      %2608 = vst.msk [vmem:[#allocation2 + $0x208] sm:$0x3] %vm2543, 0.0
      %2609 = vst.msk [vmem:[#allocation2 + $0x210] sm:$0xff] %vm2541, 0.0
      %2610 = vst.msk [vmem:[#allocation2 + $0x218] sm:$0x3] %vm2543, 0.0
      %2611 = vst.msk [vmem:[#allocation2 + $0x220] sm:$0xff] %vm2541, 0.0
      %2612 = vst.msk [vmem:[#allocation2 + $0x228] sm:$0x3] %vm2543, 0.0
      %2613 = vst.msk [vmem:[#allocation2 + $0x230] sm:$0xff] %vm2541, 0.0
      %2614 = vst.msk [vmem:[#allocation2 + $0x238] sm:$0x3] %vm2543, 0.0
      %2615 = vst.msk [vmem:[#allocation2 + $0x240] sm:$0xff] %vm2541, 0.0
      %2616 = vst.msk [vmem:[#allocation2 + $0x248] sm:$0x3] %vm2543, 0.0
      %2617 = vst.msk [vmem:[#allocation2 + $0x250] sm:$0xff] %vm2541, 0.0
      %2618 = vst.msk [vmem:[#allocation2 + $0x258] sm:$0x3] %vm2543, 0.0
      %2619 = vst.msk [vmem:[#allocation2 + $0x260] sm:$0xff] %vm2541, 0.0
      %2620 = vst.msk [vmem:[#allocation2 + $0x268] sm:$0x3] %vm2543, 0.0
      %2621 = vst.msk [vmem:[#allocation2 + $0x270] sm:$0xff] %vm2541, 0.0
      %2622 = vst.msk [vmem:[#allocation2 + $0x278] sm:$0x3] %vm2543, 0.0
      %s2623 = scalar_lea.vmem [#allocation2], 32
      %2624 = vst.msk [vmem:[%s2623 + $0x1] sm:$0xff] %vm2541, %v2415
      %2625 = vst.msk [vmem:[%s2623 + $0x11] sm:$0xff] %vm2541, %v2419
      %2626 = vst.msk [vmem:[%s2623 + $0x21] sm:$0xff] %vm2541, %v2423
      %2627 = vst.msk [vmem:[%s2623 + $0x31] sm:$0xff] %vm2541, %v2427
      %2628 = vst.msk [vmem:[%s2623 + $0x41] sm:$0xff] %vm2541, %v2431
      %2629 = vst.msk [vmem:[%s2623 + $0x51] sm:$0xff] %vm2541, %v2435
      %2630 = vst.msk [vmem:[%s2623 + $0x61] sm:$0xff] %vm2541, %v2439
      %2631 = vst.msk [vmem:[%s2623 + $0x71] sm:$0xff] %vm2541, %v2443
      %2632 = vst.msk [vmem:[%s2623 + $0x81] sm:$0xff] %vm2541, %v2447
      %2633 = vst.msk [vmem:[%s2623 + $0x91] sm:$0xff] %vm2541, %v2451
      %2634 = vst.msk [vmem:[%s2623 + $0xa1] sm:$0xff] %vm2541, %v2455
      %2635 = vst.msk [vmem:[%s2623 + $0xb1] sm:$0xff] %vm2541, %v2459
      %2636 = vst.msk [vmem:[%s2623 + $0xc1] sm:$0xff] %vm2541, %v2463
      %2637 = vst.msk [vmem:[%s2623 + $0xd1] sm:$0xff] %vm2541, %v2467
      %2638 = vst.msk [vmem:[%s2623 + $0xe1] sm:$0xff] %vm2541, %v2471
      %2639 = vst.msk [vmem:[%s2623 + $0xf1] sm:$0xff] %vm2541, %v2475
      %2640 = vst.msk [vmem:[%s2623 + $0x141] sm:$0xff] %vm2541, %v2479
      %2641 = vst.msk [vmem:[%s2623 + $0x151] sm:$0xff] %vm2541, %v2483
      %2642 = vst.msk [vmem:[%s2623 + $0x161] sm:$0xff] %vm2541, %v2487
      %2643 = vst.msk [vmem:[%s2623 + $0x171] sm:$0xff] %vm2541, %v2491
      %2644 = vst.msk [vmem:[%s2623 + $0x181] sm:$0xff] %vm2541, %v2495
      %2645 = vst.msk [vmem:[%s2623 + $0x191] sm:$0xff] %vm2541, %v2499
      %2646 = vst.msk [vmem:[%s2623 + $0x1a1] sm:$0xff] %vm2541, %v2503
      %2647 = vst.msk [vmem:[%s2623 + $0x1b1] sm:$0xff] %vm2541, %v2507
      %2648 = vst.msk [vmem:[%s2623 + $0x1c1] sm:$0xff] %vm2541, %v2511
      %2649 = vst.msk [vmem:[%s2623 + $0x1d1] sm:$0xff] %vm2541, %v2515
      %2650 = vst.msk [vmem:[%s2623 + $0x1e1] sm:$0xff] %vm2541, %v2519
      %2651 = vst.msk [vmem:[%s2623 + $0x1f1] sm:$0xff] %vm2541, %v2523
      %2652 = vst.msk [vmem:[%s2623 + $0x201] sm:$0xff] %vm2541, %v2527
      %2653 = vst.msk [vmem:[%s2623 + $0x211] sm:$0xff] %vm2541, %v2531
      %2654 = vst.msk [vmem:[%s2623 + $0x221] sm:$0xff] %vm2541, %v2535
      %2655 = vst.msk [vmem:[%s2623 + $0x231] sm:$0xff] %vm2541, %v2539
      %v2656 = vld [vmem:[%s9] sm:$0x1]
      %v2657 = vld [vmem:[%s9 + $0x1] sm:$0x1]
      %v2658 = vld [vmem:[%s9 + $0x2] sm:$0x1]
      %v2659 = vld [vmem:[%s9 + $0x3] sm:$0x1]
      %v2660 = vld [vmem:[%s9 + $0x4] sm:$0x1]
      %v2661 = vld [vmem:[%s9 + $0x5] sm:$0x1]
      %v2662 = vld [vmem:[%s9 + $0x6] sm:$0x1]
      %v2663 = vld [vmem:[%s9 + $0x7] sm:$0x1]
      %v2664 = vld [vmem:[%s9 + $0x8] sm:$0x1]
      %v2665 = vld [vmem:[%s9 + $0x9] sm:$0x1]
      %v2666 = vld [vmem:[%s9 + $0xa] sm:$0x1]
      %v2667 = vld [vmem:[%s9 + $0xb] sm:$0x1]
      %v2668 = vld [vmem:[%s9 + $0xc] sm:$0x1]
      %v2669 = vld [vmem:[%s9 + $0xd] sm:$0x1]
      %v2670 = vld [vmem:[%s9 + $0xe] sm:$0x1]
      %v2671 = vld [vmem:[%s9 + $0xf] sm:$0x1]
      %v2672 = vld [vmem:[%s9 + $0x10] sm:$0x1]
      %v2673 = vld [vmem:[%s9 + $0x11] sm:$0x1]
      %v2674 = vld [vmem:[%s9 + $0x12] sm:$0x1]
      %v2675 = vld [vmem:[%s9 + $0x13] sm:$0x1]
      %v2676 = vld [vmem:[%s9 + $0x14] sm:$0x1]
      %v2677 = vld [vmem:[%s9 + $0x15] sm:$0x1]
      %v2678 = vld [vmem:[%s9 + $0x16] sm:$0x1]
      %v2679 = vld [vmem:[%s9 + $0x17] sm:$0x1]
      %v2680 = vld [vmem:[%s9 + $0x18] sm:$0x1]
      %v2681 = vld [vmem:[%s10] sm:$0x1]
      %v2682 = vld [vmem:[#allocation2] sm:$0xff]
      %v2683 = vld [vmem:[#allocation2 + $0x10] sm:$0xff]
      %v2684 = vld [vmem:[#allocation2 + $0x20] sm:$0xff]
      %v2685 = vld [vmem:[#allocation2 + $0x30] sm:$0xff]
      %v2686 = vld [vmem:[#allocation2 + $0x40] sm:$0xff]
      %v2687 = vld [vmem:[#allocation2 + $0x50] sm:$0xff]
      %v2688 = vld [vmem:[#allocation2 + $0x60] sm:$0xff]
      %v2689 = vld [vmem:[#allocation2 + $0x70] sm:$0xff]
      %v2690 = vld [vmem:[#allocation2 + $0x80] sm:$0xff]
      %v2691 = vld [vmem:[#allocation2 + $0x90] sm:$0xff]
      %v2692 = vld [vmem:[#allocation2 + $0xa0] sm:$0xff]
      %v2693 = vld [vmem:[#allocation2 + $0xb0] sm:$0xff]
      %v2694 = vld [vmem:[#allocation2 + $0xc0] sm:$0xff]
      %v2695 = vld [vmem:[#allocation2 + $0xd0] sm:$0xff]
      %v2696 = vld [vmem:[#allocation2 + $0xe0] sm:$0xff]
      %v2697 = vld [vmem:[#allocation2 + $0xf0] sm:$0xff]
      %v2699 = vperm.slane %v2656, 0
      %v2701 = vmul.f32 %v2682, %v2699
      %v2702 = vmul.f32 %v2683, %v2699
      %v2703 = vmul.f32 %v2684, %v2699
      %v2704 = vmul.f32 %v2685, %v2699
      %v2705 = vmul.f32 %v2686, %v2699
      %v2706 = vmul.f32 %v2687, %v2699
      %v2707 = vmul.f32 %v2688, %v2699
      %v2708 = vmul.f32 %v2689, %v2699
      %v2709 = vmul.f32 %v2690, %v2699
      %v2710 = vmul.f32 %v2691, %v2699
      %v2711 = vmul.f32 %v2692, %v2699
      %v2712 = vmul.f32 %v2693, %v2699
      %v2713 = vmul.f32 %v2694, %v2699
      %v2714 = vmul.f32 %v2695, %v2699
      %v2715 = vmul.f32 %v2696, %v2699
      %v2716 = vmul.f32 %v2697, %v2699
      %v2717 = vadd.f32 %v2701, 0.0
      %v2718 = vadd.f32 %v2702, 0.0
      %v2719 = vadd.f32 %v2703, 0.0
      %v2720 = vadd.f32 %v2704, 0.0
      %v2721 = vadd.f32 %v2705, 0.0
      %v2722 = vadd.f32 %v2706, 0.0
      %v2723 = vadd.f32 %v2707, 0.0
      %v2724 = vadd.f32 %v2708, 0.0
      %v2725 = vadd.f32 %v2709, 0.0
      %v2726 = vadd.f32 %v2710, 0.0
      %v2727 = vadd.f32 %v2711, 0.0
      %v2728 = vadd.f32 %v2712, 0.0
      %v2729 = vadd.f32 %v2713, 0.0
      %v2730 = vadd.f32 %v2714, 0.0
      %v2731 = vadd.f32 %v2715, 0.0
      %v2732 = vadd.f32 %v2716, 0.0
      %s2733 = scalar_lea.vmem [#allocation2], 320
      %v2734 = vld [vmem:[%s2733] sm:$0xff]
      %v2735 = vld [vmem:[%s2733 + $0x10] sm:$0xff]
      %v2736 = vld [vmem:[%s2733 + $0x20] sm:$0xff]
      %v2737 = vld [vmem:[%s2733 + $0x30] sm:$0xff]
      %v2738 = vld [vmem:[%s2733 + $0x40] sm:$0xff]
      %v2739 = vld [vmem:[%s2733 + $0x50] sm:$0xff]
      %v2740 = vld [vmem:[%s2733 + $0x60] sm:$0xff]
      %v2741 = vld [vmem:[%s2733 + $0x70] sm:$0xff]
      %v2742 = vld [vmem:[%s2733 + $0x80] sm:$0xff]
      %v2743 = vld [vmem:[%s2733 + $0x90] sm:$0xff]
      %v2744 = vld [vmem:[%s2733 + $0xa0] sm:$0xff]
      %v2745 = vld [vmem:[%s2733 + $0xb0] sm:$0xff]
      %v2746 = vld [vmem:[%s2733 + $0xc0] sm:$0xff]
      %v2747 = vld [vmem:[%s2733 + $0xd0] sm:$0xff]
      %v2748 = vld [vmem:[%s2733 + $0xe0] sm:$0xff]
      %v2749 = vld [vmem:[%s2733 + $0xf0] sm:$0xff]
      %v2751 = vperm.slane %v2657, 0
      %v2753 = vmul.f32 %v2734, %v2751
      %v2754 = vmul.f32 %v2735, %v2751
      %v2755 = vmul.f32 %v2736, %v2751
      %v2756 = vmul.f32 %v2737, %v2751
      %v2757 = vmul.f32 %v2738, %v2751
      %v2758 = vmul.f32 %v2739, %v2751
      %v2759 = vmul.f32 %v2740, %v2751
      %v2760 = vmul.f32 %v2741, %v2751
      %v2761 = vmul.f32 %v2742, %v2751
      %v2762 = vmul.f32 %v2743, %v2751
      %v2763 = vmul.f32 %v2744, %v2751
      %v2764 = vmul.f32 %v2745, %v2751
      %v2765 = vmul.f32 %v2746, %v2751
      %v2766 = vmul.f32 %v2747, %v2751
      %v2767 = vmul.f32 %v2748, %v2751
      %v2768 = vmul.f32 %v2749, %v2751
      %v2769 = vadd.f32 %v2753, 0.0
      %v2770 = vadd.f32 %v2754, 0.0
      %v2771 = vadd.f32 %v2755, 0.0
      %v2772 = vadd.f32 %v2756, 0.0
      %v2773 = vadd.f32 %v2757, 0.0
      %v2774 = vadd.f32 %v2758, 0.0
      %v2775 = vadd.f32 %v2759, 0.0
      %v2776 = vadd.f32 %v2760, 0.0
      %v2777 = vadd.f32 %v2761, 0.0
      %v2778 = vadd.f32 %v2762, 0.0
      %v2779 = vadd.f32 %v2763, 0.0
      %v2780 = vadd.f32 %v2764, 0.0
      %v2781 = vadd.f32 %v2765, 0.0
      %v2782 = vadd.f32 %v2766, 0.0
      %v2783 = vadd.f32 %v2767, 0.0
      %v2784 = vadd.f32 %v2768, 0.0
      %v2785 = vld [vmem:[#allocation2 + $0x1] sm:$0xff]
      %v2786 = vld [vmem:[#allocation2 + $0x11] sm:$0xff]
      %v2787 = vld [vmem:[#allocation2 + $0x21] sm:$0xff]
      %v2788 = vld [vmem:[#allocation2 + $0x31] sm:$0xff]
      %v2789 = vld [vmem:[#allocation2 + $0x41] sm:$0xff]
      %v2790 = vld [vmem:[#allocation2 + $0x51] sm:$0xff]
      %v2791 = vld [vmem:[#allocation2 + $0x61] sm:$0xff]
      %v2792 = vld [vmem:[#allocation2 + $0x71] sm:$0xff]
      %v2793 = vld [vmem:[#allocation2 + $0x81] sm:$0xff]
      %v2794 = vld [vmem:[#allocation2 + $0x91] sm:$0xff]
      %v2795 = vld [vmem:[#allocation2 + $0xa1] sm:$0xff]
      %v2796 = vld [vmem:[#allocation2 + $0xb1] sm:$0xff]
      %v2797 = vld [vmem:[#allocation2 + $0xc1] sm:$0xff]
      %v2798 = vld [vmem:[#allocation2 + $0xd1] sm:$0xff]
      %v2799 = vld [vmem:[#allocation2 + $0xe1] sm:$0xff]
      %v2800 = vld [vmem:[#allocation2 + $0xf1] sm:$0xff]
      %v2802 = vperm.slane %v2658, 0
      %v2804 = vmul.f32 %v2785, %v2802
      %v2805 = vmul.f32 %v2786, %v2802
      %v2806 = vmul.f32 %v2787, %v2802
      %v2807 = vmul.f32 %v2788, %v2802
      %v2808 = vmul.f32 %v2789, %v2802
      %v2809 = vmul.f32 %v2790, %v2802
      %v2810 = vmul.f32 %v2791, %v2802
      %v2811 = vmul.f32 %v2792, %v2802
      %v2812 = vmul.f32 %v2793, %v2802
      %v2813 = vmul.f32 %v2794, %v2802
      %v2814 = vmul.f32 %v2795, %v2802
      %v2815 = vmul.f32 %v2796, %v2802
      %v2816 = vmul.f32 %v2797, %v2802
      %v2817 = vmul.f32 %v2798, %v2802
      %v2818 = vmul.f32 %v2799, %v2802
      %v2819 = vmul.f32 %v2800, %v2802
      %v2820 = vadd.f32 %v2717, %v2804
      %v2821 = vadd.f32 %v2718, %v2805
      %v2822 = vadd.f32 %v2719, %v2806
      %v2823 = vadd.f32 %v2720, %v2807
      %v2824 = vadd.f32 %v2721, %v2808
      %v2825 = vadd.f32 %v2722, %v2809
      %v2826 = vadd.f32 %v2723, %v2810
      %v2827 = vadd.f32 %v2724, %v2811
      %v2828 = vadd.f32 %v2725, %v2812
      %v2829 = vadd.f32 %v2726, %v2813
      %v2830 = vadd.f32 %v2727, %v2814
      %v2831 = vadd.f32 %v2728, %v2815
      %v2832 = vadd.f32 %v2729, %v2816
      %v2833 = vadd.f32 %v2730, %v2817
      %v2834 = vadd.f32 %v2731, %v2818
      %v2835 = vadd.f32 %v2732, %v2819
      %v2836 = vld [vmem:[%s2733 + $0x1] sm:$0xff]
      %v2837 = vld [vmem:[%s2733 + $0x11] sm:$0xff]
      %v2838 = vld [vmem:[%s2733 + $0x21] sm:$0xff]
      %v2839 = vld [vmem:[%s2733 + $0x31] sm:$0xff]
      %v2840 = vld [vmem:[%s2733 + $0x41] sm:$0xff]
      %v2841 = vld [vmem:[%s2733 + $0x51] sm:$0xff]
      %v2842 = vld [vmem:[%s2733 + $0x61] sm:$0xff]
      %v2843 = vld [vmem:[%s2733 + $0x71] sm:$0xff]
      %v2844 = vld [vmem:[%s2733 + $0x81] sm:$0xff]
      %v2845 = vld [vmem:[%s2733 + $0x91] sm:$0xff]
      %v2846 = vld [vmem:[%s2733 + $0xa1] sm:$0xff]
      %v2847 = vld [vmem:[%s2733 + $0xb1] sm:$0xff]
      %v2848 = vld [vmem:[%s2733 + $0xc1] sm:$0xff]
      %v2849 = vld [vmem:[%s2733 + $0xd1] sm:$0xff]
      %v2850 = vld [vmem:[%s2733 + $0xe1] sm:$0xff]
      %v2851 = vld [vmem:[%s2733 + $0xf1] sm:$0xff]
      %v2853 = vperm.slane %v2659, 0
      %v2855 = vmul.f32 %v2836, %v2853
      %v2856 = vmul.f32 %v2837, %v2853
      %v2857 = vmul.f32 %v2838, %v2853
      %v2858 = vmul.f32 %v2839, %v2853
      %v2859 = vmul.f32 %v2840, %v2853
      %v2860 = vmul.f32 %v2841, %v2853
      %v2861 = vmul.f32 %v2842, %v2853
      %v2862 = vmul.f32 %v2843, %v2853
      %v2863 = vmul.f32 %v2844, %v2853
      %v2864 = vmul.f32 %v2845, %v2853
      %v2865 = vmul.f32 %v2846, %v2853
      %v2866 = vmul.f32 %v2847, %v2853
      %v2867 = vmul.f32 %v2848, %v2853
      %v2868 = vmul.f32 %v2849, %v2853
      %v2869 = vmul.f32 %v2850, %v2853
      %v2870 = vmul.f32 %v2851, %v2853
      %v2871 = vadd.f32 %v2769, %v2855
      %v2872 = vadd.f32 %v2770, %v2856
      %v2873 = vadd.f32 %v2771, %v2857
      %v2874 = vadd.f32 %v2772, %v2858
      %v2875 = vadd.f32 %v2773, %v2859
      %v2876 = vadd.f32 %v2774, %v2860
      %v2877 = vadd.f32 %v2775, %v2861
      %v2878 = vadd.f32 %v2776, %v2862
      %v2879 = vadd.f32 %v2777, %v2863
      %v2880 = vadd.f32 %v2778, %v2864
      %v2881 = vadd.f32 %v2779, %v2865
      %v2882 = vadd.f32 %v2780, %v2866
      %v2883 = vadd.f32 %v2781, %v2867
      %v2884 = vadd.f32 %v2782, %v2868
      %v2885 = vadd.f32 %v2783, %v2869
      %v2886 = vadd.f32 %v2784, %v2870
      %v2887 = vld [vmem:[#allocation2 + $0x2] sm:$0xff]
      %v2888 = vld [vmem:[#allocation2 + $0x12] sm:$0xff]
      %v2889 = vld [vmem:[#allocation2 + $0x22] sm:$0xff]
      %v2890 = vld [vmem:[#allocation2 + $0x32] sm:$0xff]
      %v2891 = vld [vmem:[#allocation2 + $0x42] sm:$0xff]
      %v2892 = vld [vmem:[#allocation2 + $0x52] sm:$0xff]
      %v2893 = vld [vmem:[#allocation2 + $0x62] sm:$0xff]
      %v2894 = vld [vmem:[#allocation2 + $0x72] sm:$0xff]
      %v2895 = vld [vmem:[#allocation2 + $0x82] sm:$0xff]
      %v2896 = vld [vmem:[#allocation2 + $0x92] sm:$0xff]
      %v2897 = vld [vmem:[#allocation2 + $0xa2] sm:$0xff]
      %v2898 = vld [vmem:[#allocation2 + $0xb2] sm:$0xff]
      %v2899 = vld [vmem:[#allocation2 + $0xc2] sm:$0xff]
      %v2900 = vld [vmem:[#allocation2 + $0xd2] sm:$0xff]
      %v2901 = vld [vmem:[#allocation2 + $0xe2] sm:$0xff]
      %v2902 = vld [vmem:[#allocation2 + $0xf2] sm:$0xff]
      %v2904 = vperm.slane %v2660, 0
      %v2906 = vmul.f32 %v2887, %v2904
      %v2907 = vmul.f32 %v2888, %v2904
      %v2908 = vmul.f32 %v2889, %v2904
      %v2909 = vmul.f32 %v2890, %v2904
      %v2910 = vmul.f32 %v2891, %v2904
      %v2911 = vmul.f32 %v2892, %v2904
      %v2912 = vmul.f32 %v2893, %v2904
      %v2913 = vmul.f32 %v2894, %v2904
      %v2914 = vmul.f32 %v2895, %v2904
      %v2915 = vmul.f32 %v2896, %v2904
      %v2916 = vmul.f32 %v2897, %v2904
      %v2917 = vmul.f32 %v2898, %v2904
      %v2918 = vmul.f32 %v2899, %v2904
      %v2919 = vmul.f32 %v2900, %v2904
      %v2920 = vmul.f32 %v2901, %v2904
      %v2921 = vmul.f32 %v2902, %v2904
      %v2922 = vadd.f32 %v2820, %v2906
      %v2923 = vadd.f32 %v2821, %v2907
      %v2924 = vadd.f32 %v2822, %v2908
      %v2925 = vadd.f32 %v2823, %v2909
      %v2926 = vadd.f32 %v2824, %v2910
      %v2927 = vadd.f32 %v2825, %v2911
      %v2928 = vadd.f32 %v2826, %v2912
      %v2929 = vadd.f32 %v2827, %v2913
      %v2930 = vadd.f32 %v2828, %v2914
      %v2931 = vadd.f32 %v2829, %v2915
      %v2932 = vadd.f32 %v2830, %v2916
      %v2933 = vadd.f32 %v2831, %v2917
      %v2934 = vadd.f32 %v2832, %v2918
      %v2935 = vadd.f32 %v2833, %v2919
      %v2936 = vadd.f32 %v2834, %v2920
      %v2937 = vadd.f32 %v2835, %v2921
      %s2938 = scalar_lea.vmem [#allocation2], 16
      %v2939 = vld [vmem:[%s2938] sm:$0xff]
      %v2940 = vld [vmem:[%s2938 + $0x10] sm:$0xff]
      %v2941 = vld [vmem:[%s2938 + $0x20] sm:$0xff]
      %v2942 = vld [vmem:[%s2938 + $0x30] sm:$0xff]
      %v2943 = vld [vmem:[%s2938 + $0x40] sm:$0xff]
      %v2944 = vld [vmem:[%s2938 + $0x50] sm:$0xff]
      %v2945 = vld [vmem:[%s2938 + $0x60] sm:$0xff]
      %v2946 = vld [vmem:[%s2938 + $0x70] sm:$0xff]
      %v2947 = vld [vmem:[%s2938 + $0x80] sm:$0xff]
      %v2948 = vld [vmem:[%s2938 + $0x90] sm:$0xff]
      %v2949 = vld [vmem:[%s2938 + $0xa0] sm:$0xff]
      %v2950 = vld [vmem:[%s2938 + $0xb0] sm:$0xff]
      %v2951 = vld [vmem:[%s2938 + $0xc0] sm:$0xff]
      %v2952 = vld [vmem:[%s2938 + $0xd0] sm:$0xff]
      %v2953 = vld [vmem:[%s2938 + $0xe0] sm:$0xff]
      %v2954 = vld [vmem:[%s2938 + $0xf0] sm:$0xff]
      %v2956 = vperm.slane %v2661, 0
      %v2958 = vmul.f32 %v2939, %v2956
      %v2959 = vmul.f32 %v2940, %v2956
      %v2960 = vmul.f32 %v2941, %v2956
      %v2961 = vmul.f32 %v2942, %v2956
      %v2962 = vmul.f32 %v2943, %v2956
      %v2963 = vmul.f32 %v2944, %v2956
      %v2964 = vmul.f32 %v2945, %v2956
      %v2965 = vmul.f32 %v2946, %v2956
      %v2966 = vmul.f32 %v2947, %v2956
      %v2967 = vmul.f32 %v2948, %v2956
      %v2968 = vmul.f32 %v2949, %v2956
      %v2969 = vmul.f32 %v2950, %v2956
      %v2970 = vmul.f32 %v2951, %v2956
      %v2971 = vmul.f32 %v2952, %v2956
      %v2972 = vmul.f32 %v2953, %v2956
      %v2973 = vmul.f32 %v2954, %v2956
      %v2974 = vadd.f32 %v2871, %v2958
      %v2975 = vadd.f32 %v2872, %v2959
      %v2976 = vadd.f32 %v2873, %v2960
      %v2977 = vadd.f32 %v2874, %v2961
      %v2978 = vadd.f32 %v2875, %v2962
      %v2979 = vadd.f32 %v2876, %v2963
      %v2980 = vadd.f32 %v2877, %v2964
      %v2981 = vadd.f32 %v2878, %v2965
      %v2982 = vadd.f32 %v2879, %v2966
      %v2983 = vadd.f32 %v2880, %v2967
      %v2984 = vadd.f32 %v2881, %v2968
      %v2985 = vadd.f32 %v2882, %v2969
      %v2986 = vadd.f32 %v2883, %v2970
      %v2987 = vadd.f32 %v2884, %v2971
      %v2988 = vadd.f32 %v2885, %v2972
      %v2989 = vadd.f32 %v2886, %v2973
      %s2990 = scalar_lea.vmem [#allocation2], 336
      %v2991 = vld [vmem:[%s2990] sm:$0xff]
      %v2992 = vld [vmem:[%s2990 + $0x10] sm:$0xff]
      %v2993 = vld [vmem:[%s2990 + $0x20] sm:$0xff]
      %v2994 = vld [vmem:[%s2990 + $0x30] sm:$0xff]
      %v2995 = vld [vmem:[%s2990 + $0x40] sm:$0xff]
      %v2996 = vld [vmem:[%s2990 + $0x50] sm:$0xff]
      %v2997 = vld [vmem:[%s2990 + $0x60] sm:$0xff]
      %v2998 = vld [vmem:[%s2990 + $0x70] sm:$0xff]
      %v2999 = vld [vmem:[%s2990 + $0x80] sm:$0xff]
      %v3000 = vld [vmem:[%s2990 + $0x90] sm:$0xff]
      %v3001 = vld [vmem:[%s2990 + $0xa0] sm:$0xff]
      %v3002 = vld [vmem:[%s2990 + $0xb0] sm:$0xff]
      %v3003 = vld [vmem:[%s2990 + $0xc0] sm:$0xff]
      %v3004 = vld [vmem:[%s2990 + $0xd0] sm:$0xff]
      %v3005 = vld [vmem:[%s2990 + $0xe0] sm:$0xff]
      %v3006 = vld [vmem:[%s2990 + $0xf0] sm:$0xff]
      %v3008 = vperm.slane %v2662, 0
      %v3010 = vmul.f32 %v2991, %v3008
      %v3011 = vmul.f32 %v2992, %v3008
      %v3012 = vmul.f32 %v2993, %v3008
      %v3013 = vmul.f32 %v2994, %v3008
      %v3014 = vmul.f32 %v2995, %v3008
      %v3015 = vmul.f32 %v2996, %v3008
      %v3016 = vmul.f32 %v2997, %v3008
      %v3017 = vmul.f32 %v2998, %v3008
      %v3018 = vmul.f32 %v2999, %v3008
      %v3019 = vmul.f32 %v3000, %v3008
      %v3020 = vmul.f32 %v3001, %v3008
      %v3021 = vmul.f32 %v3002, %v3008
      %v3022 = vmul.f32 %v3003, %v3008
      %v3023 = vmul.f32 %v3004, %v3008
      %v3024 = vmul.f32 %v3005, %v3008
      %v3025 = vmul.f32 %v3006, %v3008
      %v3026 = vadd.f32 %v2922, %v3010
      %v3027 = vadd.f32 %v2923, %v3011
      %v3028 = vadd.f32 %v2924, %v3012
      %v3029 = vadd.f32 %v2925, %v3013
      %v3030 = vadd.f32 %v2926, %v3014
      %v3031 = vadd.f32 %v2927, %v3015
      %v3032 = vadd.f32 %v2928, %v3016
      %v3033 = vadd.f32 %v2929, %v3017
      %v3034 = vadd.f32 %v2930, %v3018
      %v3035 = vadd.f32 %v2931, %v3019
      %v3036 = vadd.f32 %v2932, %v3020
      %v3037 = vadd.f32 %v2933, %v3021
      %v3038 = vadd.f32 %v2934, %v3022
      %v3039 = vadd.f32 %v2935, %v3023
      %v3040 = vadd.f32 %v2936, %v3024
      %v3041 = vadd.f32 %v2937, %v3025
      %v3042 = vld [vmem:[%s2938 + $0x1] sm:$0xff]
      %v3043 = vld [vmem:[%s2938 + $0x11] sm:$0xff]
      %v3044 = vld [vmem:[%s2938 + $0x21] sm:$0xff]
      %v3045 = vld [vmem:[%s2938 + $0x31] sm:$0xff]
      %v3046 = vld [vmem:[%s2938 + $0x41] sm:$0xff]
      %v3047 = vld [vmem:[%s2938 + $0x51] sm:$0xff]
      %v3048 = vld [vmem:[%s2938 + $0x61] sm:$0xff]
      %v3049 = vld [vmem:[%s2938 + $0x71] sm:$0xff]
      %v3050 = vld [vmem:[%s2938 + $0x81] sm:$0xff]
      %v3051 = vld [vmem:[%s2938 + $0x91] sm:$0xff]
      %v3052 = vld [vmem:[%s2938 + $0xa1] sm:$0xff]
      %v3053 = vld [vmem:[%s2938 + $0xb1] sm:$0xff]
      %v3054 = vld [vmem:[%s2938 + $0xc1] sm:$0xff]
      %v3055 = vld [vmem:[%s2938 + $0xd1] sm:$0xff]
      %v3056 = vld [vmem:[%s2938 + $0xe1] sm:$0xff]
      %v3057 = vld [vmem:[%s2938 + $0xf1] sm:$0xff]
      %v3059 = vperm.slane %v2663, 0
      %v3061 = vmul.f32 %v3042, %v3059
      %v3062 = vmul.f32 %v3043, %v3059
      %v3063 = vmul.f32 %v3044, %v3059
      %v3064 = vmul.f32 %v3045, %v3059
      %v3065 = vmul.f32 %v3046, %v3059
      %v3066 = vmul.f32 %v3047, %v3059
      %v3067 = vmul.f32 %v3048, %v3059
      %v3068 = vmul.f32 %v3049, %v3059
      %v3069 = vmul.f32 %v3050, %v3059
      %v3070 = vmul.f32 %v3051, %v3059
      %v3071 = vmul.f32 %v3052, %v3059
      %v3072 = vmul.f32 %v3053, %v3059
      %v3073 = vmul.f32 %v3054, %v3059
      %v3074 = vmul.f32 %v3055, %v3059
      %v3075 = vmul.f32 %v3056, %v3059
      %v3076 = vmul.f32 %v3057, %v3059
      %v3077 = vadd.f32 %v2974, %v3061
      %v3078 = vadd.f32 %v2975, %v3062
      %v3079 = vadd.f32 %v2976, %v3063
      %v3080 = vadd.f32 %v2977, %v3064
      %v3081 = vadd.f32 %v2978, %v3065
      %v3082 = vadd.f32 %v2979, %v3066
      %v3083 = vadd.f32 %v2980, %v3067
      %v3084 = vadd.f32 %v2981, %v3068
      %v3085 = vadd.f32 %v2982, %v3069
      %v3086 = vadd.f32 %v2983, %v3070
      %v3087 = vadd.f32 %v2984, %v3071
      %v3088 = vadd.f32 %v2985, %v3072
      %v3089 = vadd.f32 %v2986, %v3073
      %v3090 = vadd.f32 %v2987, %v3074
      %v3091 = vadd.f32 %v2988, %v3075
      %v3092 = vadd.f32 %v2989, %v3076
      %v3093 = vld [vmem:[%s2990 + $0x1] sm:$0xff]
      %v3094 = vld [vmem:[%s2990 + $0x11] sm:$0xff]
      %v3095 = vld [vmem:[%s2990 + $0x21] sm:$0xff]
      %v3096 = vld [vmem:[%s2990 + $0x31] sm:$0xff]
      %v3097 = vld [vmem:[%s2990 + $0x41] sm:$0xff]
      %v3098 = vld [vmem:[%s2990 + $0x51] sm:$0xff]
      %v3099 = vld [vmem:[%s2990 + $0x61] sm:$0xff]
      %v3100 = vld [vmem:[%s2990 + $0x71] sm:$0xff]
      %v3101 = vld [vmem:[%s2990 + $0x81] sm:$0xff]
      %v3102 = vld [vmem:[%s2990 + $0x91] sm:$0xff]
      %v3103 = vld [vmem:[%s2990 + $0xa1] sm:$0xff]
      %v3104 = vld [vmem:[%s2990 + $0xb1] sm:$0xff]
      %v3105 = vld [vmem:[%s2990 + $0xc1] sm:$0xff]
      %v3106 = vld [vmem:[%s2990 + $0xd1] sm:$0xff]
      %v3107 = vld [vmem:[%s2990 + $0xe1] sm:$0xff]
      %v3108 = vld [vmem:[%s2990 + $0xf1] sm:$0xff]
      %v3110 = vperm.slane %v2664, 0
      %v3112 = vmul.f32 %v3093, %v3110
      %v3113 = vmul.f32 %v3094, %v3110
      %v3114 = vmul.f32 %v3095, %v3110
      %v3115 = vmul.f32 %v3096, %v3110
      %v3116 = vmul.f32 %v3097, %v3110
      %v3117 = vmul.f32 %v3098, %v3110
      %v3118 = vmul.f32 %v3099, %v3110
      %v3119 = vmul.f32 %v3100, %v3110
      %v3120 = vmul.f32 %v3101, %v3110
      %v3121 = vmul.f32 %v3102, %v3110
      %v3122 = vmul.f32 %v3103, %v3110
      %v3123 = vmul.f32 %v3104, %v3110
      %v3124 = vmul.f32 %v3105, %v3110
      %v3125 = vmul.f32 %v3106, %v3110
      %v3126 = vmul.f32 %v3107, %v3110
      %v3127 = vmul.f32 %v3108, %v3110
      %v3128 = vadd.f32 %v3026, %v3112
      %v3129 = vadd.f32 %v3027, %v3113
      %v3130 = vadd.f32 %v3028, %v3114
      %v3131 = vadd.f32 %v3029, %v3115
      %v3132 = vadd.f32 %v3030, %v3116
      %v3133 = vadd.f32 %v3031, %v3117
      %v3134 = vadd.f32 %v3032, %v3118
      %v3135 = vadd.f32 %v3033, %v3119
      %v3136 = vadd.f32 %v3034, %v3120
      %v3137 = vadd.f32 %v3035, %v3121
      %v3138 = vadd.f32 %v3036, %v3122
      %v3139 = vadd.f32 %v3037, %v3123
      %v3140 = vadd.f32 %v3038, %v3124
      %v3141 = vadd.f32 %v3039, %v3125
      %v3142 = vadd.f32 %v3040, %v3126
      %v3143 = vadd.f32 %v3041, %v3127
      %v3144 = vld [vmem:[%s2938 + $0x2] sm:$0xff]
      %v3145 = vld [vmem:[%s2938 + $0x12] sm:$0xff]
      %v3146 = vld [vmem:[%s2938 + $0x22] sm:$0xff]
      %v3147 = vld [vmem:[%s2938 + $0x32] sm:$0xff]
      %v3148 = vld [vmem:[%s2938 + $0x42] sm:$0xff]
      %v3149 = vld [vmem:[%s2938 + $0x52] sm:$0xff]
      %v3150 = vld [vmem:[%s2938 + $0x62] sm:$0xff]
      %v3151 = vld [vmem:[%s2938 + $0x72] sm:$0xff]
      %v3152 = vld [vmem:[%s2938 + $0x82] sm:$0xff]
      %v3153 = vld [vmem:[%s2938 + $0x92] sm:$0xff]
      %v3154 = vld [vmem:[%s2938 + $0xa2] sm:$0xff]
      %v3155 = vld [vmem:[%s2938 + $0xb2] sm:$0xff]
      %v3156 = vld [vmem:[%s2938 + $0xc2] sm:$0xff]
      %v3157 = vld [vmem:[%s2938 + $0xd2] sm:$0xff]
      %v3158 = vld [vmem:[%s2938 + $0xe2] sm:$0xff]
      %v3159 = vld [vmem:[%s2938 + $0xf2] sm:$0xff]
      %v3161 = vperm.slane %v2665, 0
      %v3163 = vmul.f32 %v3144, %v3161
      %v3164 = vmul.f32 %v3145, %v3161
      %v3165 = vmul.f32 %v3146, %v3161
      %v3166 = vmul.f32 %v3147, %v3161
      %v3167 = vmul.f32 %v3148, %v3161
      %v3168 = vmul.f32 %v3149, %v3161
      %v3169 = vmul.f32 %v3150, %v3161
      %v3170 = vmul.f32 %v3151, %v3161
      %v3171 = vmul.f32 %v3152, %v3161
      %v3172 = vmul.f32 %v3153, %v3161
      %v3173 = vmul.f32 %v3154, %v3161
      %v3174 = vmul.f32 %v3155, %v3161
      %v3175 = vmul.f32 %v3156, %v3161
      %v3176 = vmul.f32 %v3157, %v3161
      %v3177 = vmul.f32 %v3158, %v3161
      %v3178 = vmul.f32 %v3159, %v3161
      %v3179 = vadd.f32 %v3077, %v3163
      %v3180 = vadd.f32 %v3078, %v3164
      %v3181 = vadd.f32 %v3079, %v3165
      %v3182 = vadd.f32 %v3080, %v3166
      %v3183 = vadd.f32 %v3081, %v3167
      %v3184 = vadd.f32 %v3082, %v3168
      %v3185 = vadd.f32 %v3083, %v3169
      %v3186 = vadd.f32 %v3084, %v3170
      %v3187 = vadd.f32 %v3085, %v3171
      %v3188 = vadd.f32 %v3086, %v3172
      %v3189 = vadd.f32 %v3087, %v3173
      %v3190 = vadd.f32 %v3088, %v3174
      %v3191 = vadd.f32 %v3089, %v3175
      %v3192 = vadd.f32 %v3090, %v3176
      %v3193 = vadd.f32 %v3091, %v3177
      %v3194 = vadd.f32 %v3092, %v3178
      %v3195 = vld [vmem:[%s2623] sm:$0xff]
      %v3196 = vld [vmem:[%s2623 + $0x10] sm:$0xff]
      %v3197 = vld [vmem:[%s2623 + $0x20] sm:$0xff]
      %v3198 = vld [vmem:[%s2623 + $0x30] sm:$0xff]
      %v3199 = vld [vmem:[%s2623 + $0x40] sm:$0xff]
      %v3200 = vld [vmem:[%s2623 + $0x50] sm:$0xff]
      %v3201 = vld [vmem:[%s2623 + $0x60] sm:$0xff]
      %v3202 = vld [vmem:[%s2623 + $0x70] sm:$0xff]
      %v3203 = vld [vmem:[%s2623 + $0x80] sm:$0xff]
      %v3204 = vld [vmem:[%s2623 + $0x90] sm:$0xff]
      %v3205 = vld [vmem:[%s2623 + $0xa0] sm:$0xff]
      %v3206 = vld [vmem:[%s2623 + $0xb0] sm:$0xff]
      %v3207 = vld [vmem:[%s2623 + $0xc0] sm:$0xff]
      %v3208 = vld [vmem:[%s2623 + $0xd0] sm:$0xff]
      %v3209 = vld [vmem:[%s2623 + $0xe0] sm:$0xff]
      %v3210 = vld [vmem:[%s2623 + $0xf0] sm:$0xff]
      %v3212 = vperm.slane %v2666, 0
      %v3214 = vmul.f32 %v3195, %v3212
      %v3215 = vmul.f32 %v3196, %v3212
      %v3216 = vmul.f32 %v3197, %v3212
      %v3217 = vmul.f32 %v3198, %v3212
      %v3218 = vmul.f32 %v3199, %v3212
      %v3219 = vmul.f32 %v3200, %v3212
      %v3220 = vmul.f32 %v3201, %v3212
      %v3221 = vmul.f32 %v3202, %v3212
      %v3222 = vmul.f32 %v3203, %v3212
      %v3223 = vmul.f32 %v3204, %v3212
      %v3224 = vmul.f32 %v3205, %v3212
      %v3225 = vmul.f32 %v3206, %v3212
      %v3226 = vmul.f32 %v3207, %v3212
      %v3227 = vmul.f32 %v3208, %v3212
      %v3228 = vmul.f32 %v3209, %v3212
      %v3229 = vmul.f32 %v3210, %v3212
      %v3230 = vadd.f32 %v3128, %v3214
      %v3231 = vadd.f32 %v3129, %v3215
      %v3232 = vadd.f32 %v3130, %v3216
      %v3233 = vadd.f32 %v3131, %v3217
      %v3234 = vadd.f32 %v3132, %v3218
      %v3235 = vadd.f32 %v3133, %v3219
      %v3236 = vadd.f32 %v3134, %v3220
      %v3237 = vadd.f32 %v3135, %v3221
      %v3238 = vadd.f32 %v3136, %v3222
      %v3239 = vadd.f32 %v3137, %v3223
      %v3240 = vadd.f32 %v3138, %v3224
      %v3241 = vadd.f32 %v3139, %v3225
      %v3242 = vadd.f32 %v3140, %v3226
      %v3243 = vadd.f32 %v3141, %v3227
      %v3244 = vadd.f32 %v3142, %v3228
      %v3245 = vadd.f32 %v3143, %v3229
      %s3246 = scalar_lea.vmem [#allocation2], 352
      %v3247 = vld [vmem:[%s3246] sm:$0xff]
      %v3248 = vld [vmem:[%s3246 + $0x10] sm:$0xff]
      %v3249 = vld [vmem:[%s3246 + $0x20] sm:$0xff]
      %v3250 = vld [vmem:[%s3246 + $0x30] sm:$0xff]
      %v3251 = vld [vmem:[%s3246 + $0x40] sm:$0xff]
      %v3252 = vld [vmem:[%s3246 + $0x50] sm:$0xff]
      %v3253 = vld [vmem:[%s3246 + $0x60] sm:$0xff]
      %v3254 = vld [vmem:[%s3246 + $0x70] sm:$0xff]
      %v3255 = vld [vmem:[%s3246 + $0x80] sm:$0xff]
      %v3256 = vld [vmem:[%s3246 + $0x90] sm:$0xff]
      %v3257 = vld [vmem:[%s3246 + $0xa0] sm:$0xff]
      %v3258 = vld [vmem:[%s3246 + $0xb0] sm:$0xff]
      %v3259 = vld [vmem:[%s3246 + $0xc0] sm:$0xff]
      %v3260 = vld [vmem:[%s3246 + $0xd0] sm:$0xff]
      %v3261 = vld [vmem:[%s3246 + $0xe0] sm:$0xff]
      %v3262 = vld [vmem:[%s3246 + $0xf0] sm:$0xff]
      %v3264 = vperm.slane %v2667, 0
      %v3266 = vmul.f32 %v3247, %v3264
      %v3267 = vmul.f32 %v3248, %v3264
      %v3268 = vmul.f32 %v3249, %v3264
      %v3269 = vmul.f32 %v3250, %v3264
      %v3270 = vmul.f32 %v3251, %v3264
      %v3271 = vmul.f32 %v3252, %v3264
      %v3272 = vmul.f32 %v3253, %v3264
      %v3273 = vmul.f32 %v3254, %v3264
      %v3274 = vmul.f32 %v3255, %v3264
      %v3275 = vmul.f32 %v3256, %v3264
      %v3276 = vmul.f32 %v3257, %v3264
      %v3277 = vmul.f32 %v3258, %v3264
      %v3278 = vmul.f32 %v3259, %v3264
      %v3279 = vmul.f32 %v3260, %v3264
      %v3280 = vmul.f32 %v3261, %v3264
      %v3281 = vmul.f32 %v3262, %v3264
      %v3282 = vadd.f32 %v3179, %v3266
      %v3283 = vadd.f32 %v3180, %v3267
      %v3284 = vadd.f32 %v3181, %v3268
      %v3285 = vadd.f32 %v3182, %v3269
      %v3286 = vadd.f32 %v3183, %v3270
      %v3287 = vadd.f32 %v3184, %v3271
      %v3288 = vadd.f32 %v3185, %v3272
      %v3289 = vadd.f32 %v3186, %v3273
      %v3290 = vadd.f32 %v3187, %v3274
      %v3291 = vadd.f32 %v3188, %v3275
      %v3292 = vadd.f32 %v3189, %v3276
      %v3293 = vadd.f32 %v3190, %v3277
      %v3294 = vadd.f32 %v3191, %v3278
      %v3295 = vadd.f32 %v3192, %v3279
      %v3296 = vadd.f32 %v3193, %v3280
      %v3297 = vadd.f32 %v3194, %v3281
      %v3298 = vld [vmem:[%s2623 + $0x1] sm:$0xff]
      %v3299 = vld [vmem:[%s2623 + $0x11] sm:$0xff]
      %v3300 = vld [vmem:[%s2623 + $0x21] sm:$0xff]
      %v3301 = vld [vmem:[%s2623 + $0x31] sm:$0xff]
      %v3302 = vld [vmem:[%s2623 + $0x41] sm:$0xff]
      %v3303 = vld [vmem:[%s2623 + $0x51] sm:$0xff]
      %v3304 = vld [vmem:[%s2623 + $0x61] sm:$0xff]
      %v3305 = vld [vmem:[%s2623 + $0x71] sm:$0xff]
      %v3306 = vld [vmem:[%s2623 + $0x81] sm:$0xff]
      %v3307 = vld [vmem:[%s2623 + $0x91] sm:$0xff]
      %v3308 = vld [vmem:[%s2623 + $0xa1] sm:$0xff]
      %v3309 = vld [vmem:[%s2623 + $0xb1] sm:$0xff]
      %v3310 = vld [vmem:[%s2623 + $0xc1] sm:$0xff]
      %v3311 = vld [vmem:[%s2623 + $0xd1] sm:$0xff]
      %v3312 = vld [vmem:[%s2623 + $0xe1] sm:$0xff]
      %v3313 = vld [vmem:[%s2623 + $0xf1] sm:$0xff]
      %v3315 = vperm.slane %v2668, 0
      %v3317 = vmul.f32 %v3298, %v3315
      %v3318 = vmul.f32 %v3299, %v3315
      %v3319 = vmul.f32 %v3300, %v3315
      %v3320 = vmul.f32 %v3301, %v3315
      %v3321 = vmul.f32 %v3302, %v3315
      %v3322 = vmul.f32 %v3303, %v3315
      %v3323 = vmul.f32 %v3304, %v3315
      %v3324 = vmul.f32 %v3305, %v3315
      %v3325 = vmul.f32 %v3306, %v3315
      %v3326 = vmul.f32 %v3307, %v3315
      %v3327 = vmul.f32 %v3308, %v3315
      %v3328 = vmul.f32 %v3309, %v3315
      %v3329 = vmul.f32 %v3310, %v3315
      %v3330 = vmul.f32 %v3311, %v3315
      %v3331 = vmul.f32 %v3312, %v3315
      %v3332 = vmul.f32 %v3313, %v3315
      %v3333 = vadd.f32 %v3230, %v3317
      %v3334 = vadd.f32 %v3231, %v3318
      %v3335 = vadd.f32 %v3232, %v3319
      %v3336 = vadd.f32 %v3233, %v3320
      %v3337 = vadd.f32 %v3234, %v3321
      %v3338 = vadd.f32 %v3235, %v3322
      %v3339 = vadd.f32 %v3236, %v3323
      %v3340 = vadd.f32 %v3237, %v3324
      %v3341 = vadd.f32 %v3238, %v3325
      %v3342 = vadd.f32 %v3239, %v3326
      %v3343 = vadd.f32 %v3240, %v3327
      %v3344 = vadd.f32 %v3241, %v3328
      %v3345 = vadd.f32 %v3242, %v3329
      %v3346 = vadd.f32 %v3243, %v3330
      %v3347 = vadd.f32 %v3244, %v3331
      %v3348 = vadd.f32 %v3245, %v3332
      %v3349 = vld [vmem:[%s3246 + $0x1] sm:$0xff]
      %v3350 = vld [vmem:[%s3246 + $0x11] sm:$0xff]
      %v3351 = vld [vmem:[%s3246 + $0x21] sm:$0xff]
      %v3352 = vld [vmem:[%s3246 + $0x31] sm:$0xff]
      %v3353 = vld [vmem:[%s3246 + $0x41] sm:$0xff]
      %v3354 = vld [vmem:[%s3246 + $0x51] sm:$0xff]
      %v3355 = vld [vmem:[%s3246 + $0x61] sm:$0xff]
      %v3356 = vld [vmem:[%s3246 + $0x71] sm:$0xff]
      %v3357 = vld [vmem:[%s3246 + $0x81] sm:$0xff]
      %v3358 = vld [vmem:[%s3246 + $0x91] sm:$0xff]
      %v3359 = vld [vmem:[%s3246 + $0xa1] sm:$0xff]
      %v3360 = vld [vmem:[%s3246 + $0xb1] sm:$0xff]
      %v3361 = vld [vmem:[%s3246 + $0xc1] sm:$0xff]
      %v3362 = vld [vmem:[%s3246 + $0xd1] sm:$0xff]
      %v3363 = vld [vmem:[%s3246 + $0xe1] sm:$0xff]
      %v3364 = vld [vmem:[%s3246 + $0xf1] sm:$0xff]
      %v3366 = vperm.slane %v2669, 0
      %v3368 = vmul.f32 %v3349, %v3366
      %v3369 = vmul.f32 %v3350, %v3366
      %v3370 = vmul.f32 %v3351, %v3366
      %v3371 = vmul.f32 %v3352, %v3366
      %v3372 = vmul.f32 %v3353, %v3366
      %v3373 = vmul.f32 %v3354, %v3366
      %v3374 = vmul.f32 %v3355, %v3366
      %v3375 = vmul.f32 %v3356, %v3366
      %v3376 = vmul.f32 %v3357, %v3366
      %v3377 = vmul.f32 %v3358, %v3366
      %v3378 = vmul.f32 %v3359, %v3366
      %v3379 = vmul.f32 %v3360, %v3366
      %v3380 = vmul.f32 %v3361, %v3366
      %v3381 = vmul.f32 %v3362, %v3366
      %v3382 = vmul.f32 %v3363, %v3366
      %v3383 = vmul.f32 %v3364, %v3366
      %v3384 = vadd.f32 %v3282, %v3368
      %v3385 = vadd.f32 %v3283, %v3369
      %v3386 = vadd.f32 %v3284, %v3370
      %v3387 = vadd.f32 %v3285, %v3371
      %v3388 = vadd.f32 %v3286, %v3372
      %v3389 = vadd.f32 %v3287, %v3373
      %v3390 = vadd.f32 %v3288, %v3374
      %v3391 = vadd.f32 %v3289, %v3375
      %v3392 = vadd.f32 %v3290, %v3376
      %v3393 = vadd.f32 %v3291, %v3377
      %v3394 = vadd.f32 %v3292, %v3378
      %v3395 = vadd.f32 %v3293, %v3379
      %v3396 = vadd.f32 %v3294, %v3380
      %v3397 = vadd.f32 %v3295, %v3381
      %v3398 = vadd.f32 %v3296, %v3382
      %v3399 = vadd.f32 %v3297, %v3383
      %v3400 = vld [vmem:[%s2623 + $0x2] sm:$0xff]
      %v3401 = vld [vmem:[%s2623 + $0x12] sm:$0xff]
      %v3402 = vld [vmem:[%s2623 + $0x22] sm:$0xff]
      %v3403 = vld [vmem:[%s2623 + $0x32] sm:$0xff]
      %v3404 = vld [vmem:[%s2623 + $0x42] sm:$0xff]
      %v3405 = vld [vmem:[%s2623 + $0x52] sm:$0xff]
      %v3406 = vld [vmem:[%s2623 + $0x62] sm:$0xff]
      %v3407 = vld [vmem:[%s2623 + $0x72] sm:$0xff]
      %v3408 = vld [vmem:[%s2623 + $0x82] sm:$0xff]
      %v3409 = vld [vmem:[%s2623 + $0x92] sm:$0xff]
      %v3410 = vld [vmem:[%s2623 + $0xa2] sm:$0xff]
      %v3411 = vld [vmem:[%s2623 + $0xb2] sm:$0xff]
      %v3412 = vld [vmem:[%s2623 + $0xc2] sm:$0xff]
      %v3413 = vld [vmem:[%s2623 + $0xd2] sm:$0xff]
      %v3414 = vld [vmem:[%s2623 + $0xe2] sm:$0xff]
      %v3415 = vld [vmem:[%s2623 + $0xf2] sm:$0xff]
      %v3417 = vperm.slane %v2670, 0
      %v3419 = vmul.f32 %v3400, %v3417
      %v3420 = vmul.f32 %v3401, %v3417
      %v3421 = vmul.f32 %v3402, %v3417
      %v3422 = vmul.f32 %v3403, %v3417
      %v3423 = vmul.f32 %v3404, %v3417
      %v3424 = vmul.f32 %v3405, %v3417
      %v3425 = vmul.f32 %v3406, %v3417
      %v3426 = vmul.f32 %v3407, %v3417
      %v3427 = vmul.f32 %v3408, %v3417
      %v3428 = vmul.f32 %v3409, %v3417
      %v3429 = vmul.f32 %v3410, %v3417
      %v3430 = vmul.f32 %v3411, %v3417
      %v3431 = vmul.f32 %v3412, %v3417
      %v3432 = vmul.f32 %v3413, %v3417
      %v3433 = vmul.f32 %v3414, %v3417
      %v3434 = vmul.f32 %v3415, %v3417
      %v3435 = vadd.f32 %v3333, %v3419
      %v3436 = vadd.f32 %v3334, %v3420
      %v3437 = vadd.f32 %v3335, %v3421
      %v3438 = vadd.f32 %v3336, %v3422
      %v3439 = vadd.f32 %v3337, %v3423
      %v3440 = vadd.f32 %v3338, %v3424
      %v3441 = vadd.f32 %v3339, %v3425
      %v3442 = vadd.f32 %v3340, %v3426
      %v3443 = vadd.f32 %v3341, %v3427
      %v3444 = vadd.f32 %v3342, %v3428
      %v3445 = vadd.f32 %v3343, %v3429
      %v3446 = vadd.f32 %v3344, %v3430
      %v3447 = vadd.f32 %v3345, %v3431
      %v3448 = vadd.f32 %v3346, %v3432
      %v3449 = vadd.f32 %v3347, %v3433
      %v3450 = vadd.f32 %v3348, %v3434
      %s3451 = scalar_lea.vmem [#allocation2], 48
      %v3452 = vld [vmem:[%s3451] sm:$0xff]
      %v3453 = vld [vmem:[%s3451 + $0x10] sm:$0xff]
      %v3454 = vld [vmem:[%s3451 + $0x20] sm:$0xff]
      %v3455 = vld [vmem:[%s3451 + $0x30] sm:$0xff]
      %v3456 = vld [vmem:[%s3451 + $0x40] sm:$0xff]
      %v3457 = vld [vmem:[%s3451 + $0x50] sm:$0xff]
      %v3458 = vld [vmem:[%s3451 + $0x60] sm:$0xff]
      %v3459 = vld [vmem:[%s3451 + $0x70] sm:$0xff]
      %v3460 = vld [vmem:[%s3451 + $0x80] sm:$0xff]
      %v3461 = vld [vmem:[%s3451 + $0x90] sm:$0xff]
      %v3462 = vld [vmem:[%s3451 + $0xa0] sm:$0xff]
      %v3463 = vld [vmem:[%s3451 + $0xb0] sm:$0xff]
      %v3464 = vld [vmem:[%s3451 + $0xc0] sm:$0xff]
      %v3465 = vld [vmem:[%s3451 + $0xd0] sm:$0xff]
      %v3466 = vld [vmem:[%s3451 + $0xe0] sm:$0xff]
      %v3467 = vld [vmem:[%s3451 + $0xf0] sm:$0xff]
      %v3469 = vperm.slane %v2671, 0
      %v3471 = vmul.f32 %v3452, %v3469
      %v3472 = vmul.f32 %v3453, %v3469
      %v3473 = vmul.f32 %v3454, %v3469
      %v3474 = vmul.f32 %v3455, %v3469
      %v3475 = vmul.f32 %v3456, %v3469
      %v3476 = vmul.f32 %v3457, %v3469
      %v3477 = vmul.f32 %v3458, %v3469
      %v3478 = vmul.f32 %v3459, %v3469
      %v3479 = vmul.f32 %v3460, %v3469
      %v3480 = vmul.f32 %v3461, %v3469
      %v3481 = vmul.f32 %v3462, %v3469
      %v3482 = vmul.f32 %v3463, %v3469
      %v3483 = vmul.f32 %v3464, %v3469
      %v3484 = vmul.f32 %v3465, %v3469
      %v3485 = vmul.f32 %v3466, %v3469
      %v3486 = vmul.f32 %v3467, %v3469
      %v3487 = vadd.f32 %v3384, %v3471
      %v3488 = vadd.f32 %v3385, %v3472
      %v3489 = vadd.f32 %v3386, %v3473
      %v3490 = vadd.f32 %v3387, %v3474
      %v3491 = vadd.f32 %v3388, %v3475
      %v3492 = vadd.f32 %v3389, %v3476
      %v3493 = vadd.f32 %v3390, %v3477
      %v3494 = vadd.f32 %v3391, %v3478
      %v3495 = vadd.f32 %v3392, %v3479
      %v3496 = vadd.f32 %v3393, %v3480
      %v3497 = vadd.f32 %v3394, %v3481
      %v3498 = vadd.f32 %v3395, %v3482
      %v3499 = vadd.f32 %v3396, %v3483
      %v3500 = vadd.f32 %v3397, %v3484
      %v3501 = vadd.f32 %v3398, %v3485
      %v3502 = vadd.f32 %v3399, %v3486
      %s3503 = scalar_lea.vmem [#allocation2], 368
      %v3504 = vld [vmem:[%s3503] sm:$0xff]
      %v3505 = vld [vmem:[%s3503 + $0x10] sm:$0xff]
      %v3506 = vld [vmem:[%s3503 + $0x20] sm:$0xff]
      %v3507 = vld [vmem:[%s3503 + $0x30] sm:$0xff]
      %v3508 = vld [vmem:[%s3503 + $0x40] sm:$0xff]
      %v3509 = vld [vmem:[%s3503 + $0x50] sm:$0xff]
      %v3510 = vld [vmem:[%s3503 + $0x60] sm:$0xff]
      %v3511 = vld [vmem:[%s3503 + $0x70] sm:$0xff]
      %v3512 = vld [vmem:[%s3503 + $0x80] sm:$0xff]
      %v3513 = vld [vmem:[%s3503 + $0x90] sm:$0xff]
      %v3514 = vld [vmem:[%s3503 + $0xa0] sm:$0xff]
      %v3515 = vld [vmem:[%s3503 + $0xb0] sm:$0xff]
      %v3516 = vld [vmem:[%s3503 + $0xc0] sm:$0xff]
      %v3517 = vld [vmem:[%s3503 + $0xd0] sm:$0xff]
      %v3518 = vld [vmem:[%s3503 + $0xe0] sm:$0xff]
      %v3519 = vld [vmem:[%s3503 + $0xf0] sm:$0xff]
      %v3521 = vperm.slane %v2672, 0
      %v3523 = vmul.f32 %v3504, %v3521
      %v3524 = vmul.f32 %v3505, %v3521
      %v3525 = vmul.f32 %v3506, %v3521
      %v3526 = vmul.f32 %v3507, %v3521
      %v3527 = vmul.f32 %v3508, %v3521
      %v3528 = vmul.f32 %v3509, %v3521
      %v3529 = vmul.f32 %v3510, %v3521
      %v3530 = vmul.f32 %v3511, %v3521
      %v3531 = vmul.f32 %v3512, %v3521
      %v3532 = vmul.f32 %v3513, %v3521
      %v3533 = vmul.f32 %v3514, %v3521
      %v3534 = vmul.f32 %v3515, %v3521
      %v3535 = vmul.f32 %v3516, %v3521
      %v3536 = vmul.f32 %v3517, %v3521
      %v3537 = vmul.f32 %v3518, %v3521
      %v3538 = vmul.f32 %v3519, %v3521
      %v3539 = vadd.f32 %v3435, %v3523
      %v3540 = vadd.f32 %v3436, %v3524
      %v3541 = vadd.f32 %v3437, %v3525
      %v3542 = vadd.f32 %v3438, %v3526
      %v3543 = vadd.f32 %v3439, %v3527
      %v3544 = vadd.f32 %v3440, %v3528
      %v3545 = vadd.f32 %v3441, %v3529
      %v3546 = vadd.f32 %v3442, %v3530
      %v3547 = vadd.f32 %v3443, %v3531
      %v3548 = vadd.f32 %v3444, %v3532
      %v3549 = vadd.f32 %v3445, %v3533
      %v3550 = vadd.f32 %v3446, %v3534
      %v3551 = vadd.f32 %v3447, %v3535
      %v3552 = vadd.f32 %v3448, %v3536
      %v3553 = vadd.f32 %v3449, %v3537
      %v3554 = vadd.f32 %v3450, %v3538
      %v3555 = vld [vmem:[%s3451 + $0x1] sm:$0xff]
      %v3556 = vld [vmem:[%s3451 + $0x11] sm:$0xff]
      %v3557 = vld [vmem:[%s3451 + $0x21] sm:$0xff]
      %v3558 = vld [vmem:[%s3451 + $0x31] sm:$0xff]
      %v3559 = vld [vmem:[%s3451 + $0x41] sm:$0xff]
      %v3560 = vld [vmem:[%s3451 + $0x51] sm:$0xff]
      %v3561 = vld [vmem:[%s3451 + $0x61] sm:$0xff]
      %v3562 = vld [vmem:[%s3451 + $0x71] sm:$0xff]
      %v3563 = vld [vmem:[%s3451 + $0x81] sm:$0xff]
      %v3564 = vld [vmem:[%s3451 + $0x91] sm:$0xff]
      %v3565 = vld [vmem:[%s3451 + $0xa1] sm:$0xff]
      %v3566 = vld [vmem:[%s3451 + $0xb1] sm:$0xff]
      %v3567 = vld [vmem:[%s3451 + $0xc1] sm:$0xff]
      %v3568 = vld [vmem:[%s3451 + $0xd1] sm:$0xff]
      %v3569 = vld [vmem:[%s3451 + $0xe1] sm:$0xff]
      %v3570 = vld [vmem:[%s3451 + $0xf1] sm:$0xff]
      %v3572 = vperm.slane %v2673, 0
      %v3574 = vmul.f32 %v3555, %v3572
      %v3575 = vmul.f32 %v3556, %v3572
      %v3576 = vmul.f32 %v3557, %v3572
      %v3577 = vmul.f32 %v3558, %v3572
      %v3578 = vmul.f32 %v3559, %v3572
      %v3579 = vmul.f32 %v3560, %v3572
      %v3580 = vmul.f32 %v3561, %v3572
      %v3581 = vmul.f32 %v3562, %v3572
      %v3582 = vmul.f32 %v3563, %v3572
      %v3583 = vmul.f32 %v3564, %v3572
      %v3584 = vmul.f32 %v3565, %v3572
      %v3585 = vmul.f32 %v3566, %v3572
      %v3586 = vmul.f32 %v3567, %v3572
      %v3587 = vmul.f32 %v3568, %v3572
      %v3588 = vmul.f32 %v3569, %v3572
      %v3589 = vmul.f32 %v3570, %v3572
      %v3590 = vadd.f32 %v3487, %v3574
      %v3591 = vadd.f32 %v3488, %v3575
      %v3592 = vadd.f32 %v3489, %v3576
      %v3593 = vadd.f32 %v3490, %v3577
      %v3594 = vadd.f32 %v3491, %v3578
      %v3595 = vadd.f32 %v3492, %v3579
      %v3596 = vadd.f32 %v3493, %v3580
      %v3597 = vadd.f32 %v3494, %v3581
      %v3598 = vadd.f32 %v3495, %v3582
      %v3599 = vadd.f32 %v3496, %v3583
      %v3600 = vadd.f32 %v3497, %v3584
      %v3601 = vadd.f32 %v3498, %v3585
      %v3602 = vadd.f32 %v3499, %v3586
      %v3603 = vadd.f32 %v3500, %v3587
      %v3604 = vadd.f32 %v3501, %v3588
      %v3605 = vadd.f32 %v3502, %v3589
      %v3606 = vld [vmem:[%s3503 + $0x1] sm:$0xff]
      %v3607 = vld [vmem:[%s3503 + $0x11] sm:$0xff]
      %v3608 = vld [vmem:[%s3503 + $0x21] sm:$0xff]
      %v3609 = vld [vmem:[%s3503 + $0x31] sm:$0xff]
      %v3610 = vld [vmem:[%s3503 + $0x41] sm:$0xff]
      %v3611 = vld [vmem:[%s3503 + $0x51] sm:$0xff]
      %v3612 = vld [vmem:[%s3503 + $0x61] sm:$0xff]
      %v3613 = vld [vmem:[%s3503 + $0x71] sm:$0xff]
      %v3614 = vld [vmem:[%s3503 + $0x81] sm:$0xff]
      %v3615 = vld [vmem:[%s3503 + $0x91] sm:$0xff]
      %v3616 = vld [vmem:[%s3503 + $0xa1] sm:$0xff]
      %v3617 = vld [vmem:[%s3503 + $0xb1] sm:$0xff]
      %v3618 = vld [vmem:[%s3503 + $0xc1] sm:$0xff]
      %v3619 = vld [vmem:[%s3503 + $0xd1] sm:$0xff]
      %v3620 = vld [vmem:[%s3503 + $0xe1] sm:$0xff]
      %v3621 = vld [vmem:[%s3503 + $0xf1] sm:$0xff]
      %v3623 = vperm.slane %v2674, 0
      %v3625 = vmul.f32 %v3606, %v3623
      %v3626 = vmul.f32 %v3607, %v3623
      %v3627 = vmul.f32 %v3608, %v3623
      %v3628 = vmul.f32 %v3609, %v3623
      %v3629 = vmul.f32 %v3610, %v3623
      %v3630 = vmul.f32 %v3611, %v3623
      %v3631 = vmul.f32 %v3612, %v3623
      %v3632 = vmul.f32 %v3613, %v3623
      %v3633 = vmul.f32 %v3614, %v3623
      %v3634 = vmul.f32 %v3615, %v3623
      %v3635 = vmul.f32 %v3616, %v3623
      %v3636 = vmul.f32 %v3617, %v3623
      %v3637 = vmul.f32 %v3618, %v3623
      %v3638 = vmul.f32 %v3619, %v3623
      %v3639 = vmul.f32 %v3620, %v3623
      %v3640 = vmul.f32 %v3621, %v3623
      %v3641 = vadd.f32 %v3539, %v3625
      %v3642 = vadd.f32 %v3540, %v3626
      %v3643 = vadd.f32 %v3541, %v3627
      %v3644 = vadd.f32 %v3542, %v3628
      %v3645 = vadd.f32 %v3543, %v3629
      %v3646 = vadd.f32 %v3544, %v3630
      %v3647 = vadd.f32 %v3545, %v3631
      %v3648 = vadd.f32 %v3546, %v3632
      %v3649 = vadd.f32 %v3547, %v3633
      %v3650 = vadd.f32 %v3548, %v3634
      %v3651 = vadd.f32 %v3549, %v3635
      %v3652 = vadd.f32 %v3550, %v3636
      %v3653 = vadd.f32 %v3551, %v3637
      %v3654 = vadd.f32 %v3552, %v3638
      %v3655 = vadd.f32 %v3553, %v3639
      %v3656 = vadd.f32 %v3554, %v3640
      %v3657 = vld [vmem:[%s3451 + $0x2] sm:$0xff]
      %v3658 = vld [vmem:[%s3451 + $0x12] sm:$0xff]
      %v3659 = vld [vmem:[%s3451 + $0x22] sm:$0xff]
      %v3660 = vld [vmem:[%s3451 + $0x32] sm:$0xff]
      %v3661 = vld [vmem:[%s3451 + $0x42] sm:$0xff]
      %v3662 = vld [vmem:[%s3451 + $0x52] sm:$0xff]
      %v3663 = vld [vmem:[%s3451 + $0x62] sm:$0xff]
      %v3664 = vld [vmem:[%s3451 + $0x72] sm:$0xff]
      %v3665 = vld [vmem:[%s3451 + $0x82] sm:$0xff]
      %v3666 = vld [vmem:[%s3451 + $0x92] sm:$0xff]
      %v3667 = vld [vmem:[%s3451 + $0xa2] sm:$0xff]
      %v3668 = vld [vmem:[%s3451 + $0xb2] sm:$0xff]
      %v3669 = vld [vmem:[%s3451 + $0xc2] sm:$0xff]
      %v3670 = vld [vmem:[%s3451 + $0xd2] sm:$0xff]
      %v3671 = vld [vmem:[%s3451 + $0xe2] sm:$0xff]
      %v3672 = vld [vmem:[%s3451 + $0xf2] sm:$0xff]
      %v3674 = vperm.slane %v2675, 0
      %v3676 = vmul.f32 %v3657, %v3674
      %v3677 = vmul.f32 %v3658, %v3674
      %v3678 = vmul.f32 %v3659, %v3674
      %v3679 = vmul.f32 %v3660, %v3674
      %v3680 = vmul.f32 %v3661, %v3674
      %v3681 = vmul.f32 %v3662, %v3674
      %v3682 = vmul.f32 %v3663, %v3674
      %v3683 = vmul.f32 %v3664, %v3674
      %v3684 = vmul.f32 %v3665, %v3674
      %v3685 = vmul.f32 %v3666, %v3674
      %v3686 = vmul.f32 %v3667, %v3674
      %v3687 = vmul.f32 %v3668, %v3674
      %v3688 = vmul.f32 %v3669, %v3674
      %v3689 = vmul.f32 %v3670, %v3674
      %v3690 = vmul.f32 %v3671, %v3674
      %v3691 = vmul.f32 %v3672, %v3674
      %v3692 = vadd.f32 %v3590, %v3676
      %v3693 = vadd.f32 %v3591, %v3677
      %v3694 = vadd.f32 %v3592, %v3678
      %v3695 = vadd.f32 %v3593, %v3679
      %v3696 = vadd.f32 %v3594, %v3680
      %v3697 = vadd.f32 %v3595, %v3681
      %v3698 = vadd.f32 %v3596, %v3682
      %v3699 = vadd.f32 %v3597, %v3683
      %v3700 = vadd.f32 %v3598, %v3684
      %v3701 = vadd.f32 %v3599, %v3685
      %v3702 = vadd.f32 %v3600, %v3686
      %v3703 = vadd.f32 %v3601, %v3687
      %v3704 = vadd.f32 %v3602, %v3688
      %v3705 = vadd.f32 %v3603, %v3689
      %v3706 = vadd.f32 %v3604, %v3690
      %v3707 = vadd.f32 %v3605, %v3691
      %s3708 = scalar_lea.vmem [#allocation2], 64
      %v3709 = vld [vmem:[%s3708] sm:$0xff]
      %v3710 = vld [vmem:[%s3708 + $0x10] sm:$0xff]
      %v3711 = vld [vmem:[%s3708 + $0x20] sm:$0xff]
      %v3712 = vld [vmem:[%s3708 + $0x30] sm:$0xff]
      %v3713 = vld [vmem:[%s3708 + $0x40] sm:$0xff]
      %v3714 = vld [vmem:[%s3708 + $0x50] sm:$0xff]
      %v3715 = vld [vmem:[%s3708 + $0x60] sm:$0xff]
      %v3716 = vld [vmem:[%s3708 + $0x70] sm:$0xff]
      %v3717 = vld [vmem:[%s3708 + $0x80] sm:$0xff]
      %v3718 = vld [vmem:[%s3708 + $0x90] sm:$0xff]
      %v3719 = vld [vmem:[%s3708 + $0xa0] sm:$0xff]
      %v3720 = vld [vmem:[%s3708 + $0xb0] sm:$0xff]
      %v3721 = vld [vmem:[%s3708 + $0xc0] sm:$0xff]
      %v3722 = vld [vmem:[%s3708 + $0xd0] sm:$0xff]
      %v3723 = vld [vmem:[%s3708 + $0xe0] sm:$0xff]
      %v3724 = vld [vmem:[%s3708 + $0xf0] sm:$0xff]
      %v3726 = vperm.slane %v2676, 0
      %v3728 = vmul.f32 %v3709, %v3726
      %v3729 = vmul.f32 %v3710, %v3726
      %v3730 = vmul.f32 %v3711, %v3726
      %v3731 = vmul.f32 %v3712, %v3726
      %v3732 = vmul.f32 %v3713, %v3726
      %v3733 = vmul.f32 %v3714, %v3726
      %v3734 = vmul.f32 %v3715, %v3726
      %v3735 = vmul.f32 %v3716, %v3726
      %v3736 = vmul.f32 %v3717, %v3726
      %v3737 = vmul.f32 %v3718, %v3726
      %v3738 = vmul.f32 %v3719, %v3726
      %v3739 = vmul.f32 %v3720, %v3726
      %v3740 = vmul.f32 %v3721, %v3726
      %v3741 = vmul.f32 %v3722, %v3726
      %v3742 = vmul.f32 %v3723, %v3726
      %v3743 = vmul.f32 %v3724, %v3726
      %v3744 = vadd.f32 %v3641, %v3728
      %v3745 = vadd.f32 %v3642, %v3729
      %v3746 = vadd.f32 %v3643, %v3730
      %v3747 = vadd.f32 %v3644, %v3731
      %v3748 = vadd.f32 %v3645, %v3732
      %v3749 = vadd.f32 %v3646, %v3733
      %v3750 = vadd.f32 %v3647, %v3734
      %v3751 = vadd.f32 %v3648, %v3735
      %v3752 = vadd.f32 %v3649, %v3736
      %v3753 = vadd.f32 %v3650, %v3737
      %v3754 = vadd.f32 %v3651, %v3738
      %v3755 = vadd.f32 %v3652, %v3739
      %v3756 = vadd.f32 %v3653, %v3740
      %v3757 = vadd.f32 %v3654, %v3741
      %v3758 = vadd.f32 %v3655, %v3742
      %v3759 = vadd.f32 %v3656, %v3743
      %s3760 = scalar_lea.vmem [#allocation2], 384
      %v3761 = vld [vmem:[%s3760] sm:$0xff]
      %v3762 = vld [vmem:[%s3760 + $0x10] sm:$0xff]
      %v3763 = vld [vmem:[%s3760 + $0x20] sm:$0xff]
      %v3764 = vld [vmem:[%s3760 + $0x30] sm:$0xff]
      %v3765 = vld [vmem:[%s3760 + $0x40] sm:$0xff]
      %v3766 = vld [vmem:[%s3760 + $0x50] sm:$0xff]
      %v3767 = vld [vmem:[%s3760 + $0x60] sm:$0xff]
      %v3768 = vld [vmem:[%s3760 + $0x70] sm:$0xff]
      %v3769 = vld [vmem:[%s3760 + $0x80] sm:$0xff]
      %v3770 = vld [vmem:[%s3760 + $0x90] sm:$0xff]
      %v3771 = vld [vmem:[%s3760 + $0xa0] sm:$0xff]
      %v3772 = vld [vmem:[%s3760 + $0xb0] sm:$0xff]
      %v3773 = vld [vmem:[%s3760 + $0xc0] sm:$0xff]
      %v3774 = vld [vmem:[%s3760 + $0xd0] sm:$0xff]
      %v3775 = vld [vmem:[%s3760 + $0xe0] sm:$0xff]
      %v3776 = vld [vmem:[%s3760 + $0xf0] sm:$0xff]
      %v3778 = vperm.slane %v2677, 0
      %v3780 = vmul.f32 %v3761, %v3778
      %v3781 = vmul.f32 %v3762, %v3778
      %v3782 = vmul.f32 %v3763, %v3778
      %v3783 = vmul.f32 %v3764, %v3778
      %v3784 = vmul.f32 %v3765, %v3778
      %v3785 = vmul.f32 %v3766, %v3778
      %v3786 = vmul.f32 %v3767, %v3778
      %v3787 = vmul.f32 %v3768, %v3778
      %v3788 = vmul.f32 %v3769, %v3778
      %v3789 = vmul.f32 %v3770, %v3778
      %v3790 = vmul.f32 %v3771, %v3778
      %v3791 = vmul.f32 %v3772, %v3778
      %v3792 = vmul.f32 %v3773, %v3778
      %v3793 = vmul.f32 %v3774, %v3778
      %v3794 = vmul.f32 %v3775, %v3778
      %v3795 = vmul.f32 %v3776, %v3778
      %v3796 = vadd.f32 %v3692, %v3780
      %v3797 = vadd.f32 %v3693, %v3781
      %v3798 = vadd.f32 %v3694, %v3782
      %v3799 = vadd.f32 %v3695, %v3783
      %v3800 = vadd.f32 %v3696, %v3784
      %v3801 = vadd.f32 %v3697, %v3785
      %v3802 = vadd.f32 %v3698, %v3786
      %v3803 = vadd.f32 %v3699, %v3787
      %v3804 = vadd.f32 %v3700, %v3788
      %v3805 = vadd.f32 %v3701, %v3789
      %v3806 = vadd.f32 %v3702, %v3790
      %v3807 = vadd.f32 %v3703, %v3791
      %v3808 = vadd.f32 %v3704, %v3792
      %v3809 = vadd.f32 %v3705, %v3793
      %v3810 = vadd.f32 %v3706, %v3794
      %v3811 = vadd.f32 %v3707, %v3795
      %v3812 = vld [vmem:[%s3708 + $0x1] sm:$0xff]
      %v3813 = vld [vmem:[%s3708 + $0x11] sm:$0xff]
      %v3814 = vld [vmem:[%s3708 + $0x21] sm:$0xff]
      %v3815 = vld [vmem:[%s3708 + $0x31] sm:$0xff]
      %v3816 = vld [vmem:[%s3708 + $0x41] sm:$0xff]
      %v3817 = vld [vmem:[%s3708 + $0x51] sm:$0xff]
      %v3818 = vld [vmem:[%s3708 + $0x61] sm:$0xff]
      %v3819 = vld [vmem:[%s3708 + $0x71] sm:$0xff]
      %v3820 = vld [vmem:[%s3708 + $0x81] sm:$0xff]
      %v3821 = vld [vmem:[%s3708 + $0x91] sm:$0xff]
      %v3822 = vld [vmem:[%s3708 + $0xa1] sm:$0xff]
      %v3823 = vld [vmem:[%s3708 + $0xb1] sm:$0xff]
      %v3824 = vld [vmem:[%s3708 + $0xc1] sm:$0xff]
      %v3825 = vld [vmem:[%s3708 + $0xd1] sm:$0xff]
      %v3826 = vld [vmem:[%s3708 + $0xe1] sm:$0xff]
      %v3827 = vld [vmem:[%s3708 + $0xf1] sm:$0xff]
      %v3829 = vperm.slane %v2678, 0
      %v3831 = vmul.f32 %v3812, %v3829
      %v3832 = vmul.f32 %v3813, %v3829
      %v3833 = vmul.f32 %v3814, %v3829
      %v3834 = vmul.f32 %v3815, %v3829
      %v3835 = vmul.f32 %v3816, %v3829
      %v3836 = vmul.f32 %v3817, %v3829
      %v3837 = vmul.f32 %v3818, %v3829
      %v3838 = vmul.f32 %v3819, %v3829
      %v3839 = vmul.f32 %v3820, %v3829
      %v3840 = vmul.f32 %v3821, %v3829
      %v3841 = vmul.f32 %v3822, %v3829
      %v3842 = vmul.f32 %v3823, %v3829
      %v3843 = vmul.f32 %v3824, %v3829
      %v3844 = vmul.f32 %v3825, %v3829
      %v3845 = vmul.f32 %v3826, %v3829
      %v3846 = vmul.f32 %v3827, %v3829
      %v3847 = vadd.f32 %v3744, %v3831
      %v3848 = vadd.f32 %v3745, %v3832
      %v3849 = vadd.f32 %v3746, %v3833
      %v3850 = vadd.f32 %v3747, %v3834
      %v3851 = vadd.f32 %v3748, %v3835
      %v3852 = vadd.f32 %v3749, %v3836
      %v3853 = vadd.f32 %v3750, %v3837
      %v3854 = vadd.f32 %v3751, %v3838
      %v3855 = vadd.f32 %v3752, %v3839
      %v3856 = vadd.f32 %v3753, %v3840
      %v3857 = vadd.f32 %v3754, %v3841
      %v3858 = vadd.f32 %v3755, %v3842
      %v3859 = vadd.f32 %v3756, %v3843
      %v3860 = vadd.f32 %v3757, %v3844
      %v3861 = vadd.f32 %v3758, %v3845
      %v3862 = vadd.f32 %v3759, %v3846
      %v3863 = vld [vmem:[%s3760 + $0x1] sm:$0xff]
      %v3864 = vld [vmem:[%s3760 + $0x11] sm:$0xff]
      %v3865 = vld [vmem:[%s3760 + $0x21] sm:$0xff]
      %v3866 = vld [vmem:[%s3760 + $0x31] sm:$0xff]
      %v3867 = vld [vmem:[%s3760 + $0x41] sm:$0xff]
      %v3868 = vld [vmem:[%s3760 + $0x51] sm:$0xff]
      %v3869 = vld [vmem:[%s3760 + $0x61] sm:$0xff]
      %v3870 = vld [vmem:[%s3760 + $0x71] sm:$0xff]
      %v3871 = vld [vmem:[%s3760 + $0x81] sm:$0xff]
      %v3872 = vld [vmem:[%s3760 + $0x91] sm:$0xff]
      %v3873 = vld [vmem:[%s3760 + $0xa1] sm:$0xff]
      %v3874 = vld [vmem:[%s3760 + $0xb1] sm:$0xff]
      %v3875 = vld [vmem:[%s3760 + $0xc1] sm:$0xff]
      %v3876 = vld [vmem:[%s3760 + $0xd1] sm:$0xff]
      %v3877 = vld [vmem:[%s3760 + $0xe1] sm:$0xff]
      %v3878 = vld [vmem:[%s3760 + $0xf1] sm:$0xff]
      %v3880 = vperm.slane %v2679, 0
      %v3882 = vmul.f32 %v3863, %v3880
      %v3883 = vmul.f32 %v3864, %v3880
      %v3884 = vmul.f32 %v3865, %v3880
      %v3885 = vmul.f32 %v3866, %v3880
      %v3886 = vmul.f32 %v3867, %v3880
      %v3887 = vmul.f32 %v3868, %v3880
      %v3888 = vmul.f32 %v3869, %v3880
      %v3889 = vmul.f32 %v3870, %v3880
      %v3890 = vmul.f32 %v3871, %v3880
      %v3891 = vmul.f32 %v3872, %v3880
      %v3892 = vmul.f32 %v3873, %v3880
      %v3893 = vmul.f32 %v3874, %v3880
      %v3894 = vmul.f32 %v3875, %v3880
      %v3895 = vmul.f32 %v3876, %v3880
      %v3896 = vmul.f32 %v3877, %v3880
      %v3897 = vmul.f32 %v3878, %v3880
      %v3898 = vadd.f32 %v3796, %v3882
      %v3899 = vadd.f32 %v3797, %v3883
      %v3900 = vadd.f32 %v3798, %v3884
      %v3901 = vadd.f32 %v3799, %v3885
      %v3902 = vadd.f32 %v3800, %v3886
      %v3903 = vadd.f32 %v3801, %v3887
      %v3904 = vadd.f32 %v3802, %v3888
      %v3905 = vadd.f32 %v3803, %v3889
      %v3906 = vadd.f32 %v3804, %v3890
      %v3907 = vadd.f32 %v3805, %v3891
      %v3908 = vadd.f32 %v3806, %v3892
      %v3909 = vadd.f32 %v3807, %v3893
      %v3910 = vadd.f32 %v3808, %v3894
      %v3911 = vadd.f32 %v3809, %v3895
      %v3912 = vadd.f32 %v3810, %v3896
      %v3913 = vadd.f32 %v3811, %v3897
      %v3914 = vld [vmem:[%s3708 + $0x2] sm:$0xff]
      %v3915 = vld [vmem:[%s3708 + $0x12] sm:$0xff]
      %v3916 = vld [vmem:[%s3708 + $0x22] sm:$0xff]
      %v3917 = vld [vmem:[%s3708 + $0x32] sm:$0xff]
      %v3918 = vld [vmem:[%s3708 + $0x42] sm:$0xff]
      %v3919 = vld [vmem:[%s3708 + $0x52] sm:$0xff]
      %v3920 = vld [vmem:[%s3708 + $0x62] sm:$0xff]
      %v3921 = vld [vmem:[%s3708 + $0x72] sm:$0xff]
      %v3922 = vld [vmem:[%s3708 + $0x82] sm:$0xff]
      %v3923 = vld [vmem:[%s3708 + $0x92] sm:$0xff]
      %v3924 = vld [vmem:[%s3708 + $0xa2] sm:$0xff]
      %v3925 = vld [vmem:[%s3708 + $0xb2] sm:$0xff]
      %v3926 = vld [vmem:[%s3708 + $0xc2] sm:$0xff]
      %v3927 = vld [vmem:[%s3708 + $0xd2] sm:$0xff]
      %v3928 = vld [vmem:[%s3708 + $0xe2] sm:$0xff]
      %v3929 = vld [vmem:[%s3708 + $0xf2] sm:$0xff]
      %v3931 = vperm.slane %v2680, 0
      %v3933 = vmul.f32 %v3914, %v3931
      %v3934 = vmul.f32 %v3915, %v3931
      %v3935 = vmul.f32 %v3916, %v3931
      %v3936 = vmul.f32 %v3917, %v3931
      %v3937 = vmul.f32 %v3918, %v3931
      %v3938 = vmul.f32 %v3919, %v3931
      %v3939 = vmul.f32 %v3920, %v3931
      %v3940 = vmul.f32 %v3921, %v3931
      %v3941 = vmul.f32 %v3922, %v3931
      %v3942 = vmul.f32 %v3923, %v3931
      %v3943 = vmul.f32 %v3924, %v3931
      %v3944 = vmul.f32 %v3925, %v3931
      %v3945 = vmul.f32 %v3926, %v3931
      %v3946 = vmul.f32 %v3927, %v3931
      %v3947 = vmul.f32 %v3928, %v3931
      %v3948 = vmul.f32 %v3929, %v3931
      %v3949 = vadd.f32 %v3847, %v3933
      %v3950 = vadd.f32 %v3848, %v3934
      %v3951 = vadd.f32 %v3849, %v3935
      %v3952 = vadd.f32 %v3850, %v3936
      %v3953 = vadd.f32 %v3851, %v3937
      %v3954 = vadd.f32 %v3852, %v3938
      %v3955 = vadd.f32 %v3853, %v3939
      %v3956 = vadd.f32 %v3854, %v3940
      %v3957 = vadd.f32 %v3855, %v3941
      %v3958 = vadd.f32 %v3856, %v3942
      %v3959 = vadd.f32 %v3857, %v3943
      %v3960 = vadd.f32 %v3858, %v3944
      %v3961 = vadd.f32 %v3859, %v3945
      %v3962 = vadd.f32 %v3860, %v3946
      %v3963 = vadd.f32 %v3861, %v3947
      %v3964 = vadd.f32 %v3862, %v3948
      %v3965 = vadd.f32 %v3949, %v3898
      %v3966 = vadd.f32 %v3950, %v3899
      %v3967 = vadd.f32 %v3951, %v3900
      %v3968 = vadd.f32 %v3952, %v3901
      %v3969 = vadd.f32 %v3953, %v3902
      %v3970 = vadd.f32 %v3954, %v3903
      %v3971 = vadd.f32 %v3955, %v3904
      %v3972 = vadd.f32 %v3956, %v3905
      %v3973 = vadd.f32 %v3957, %v3906
      %v3974 = vadd.f32 %v3958, %v3907
      %v3975 = vadd.f32 %v3959, %v3908
      %v3976 = vadd.f32 %v3960, %v3909
      %v3977 = vadd.f32 %v3961, %v3910
      %v3978 = vadd.f32 %v3962, %v3911
      %v3979 = vadd.f32 %v3963, %v3912
      %v3980 = vadd.f32 %v3964, %v3913
      %v3982 = vperm.slane %v2681, 0
      %v3984 = vadd.f32 %v3965, %v3982
      %v3985 = vadd.f32 %v3966, %v3982
      %v3986 = vadd.f32 %v3967, %v3982
      %v3987 = vadd.f32 %v3968, %v3982
      %v3988 = vadd.f32 %v3969, %v3982
      %v3989 = vadd.f32 %v3970, %v3982
      %v3990 = vadd.f32 %v3971, %v3982
      %v3991 = vadd.f32 %v3972, %v3982
      %v3992 = vadd.f32 %v3973, %v3982
      %v3993 = vadd.f32 %v3974, %v3982
      %v3994 = vadd.f32 %v3975, %v3982
      %v3995 = vadd.f32 %v3976, %v3982
      %v3996 = vadd.f32 %v3977, %v3982
      %v3997 = vadd.f32 %v3978, %v3982
      %v3998 = vadd.f32 %v3979, %v3982
      %v3999 = vadd.f32 %v3980, %v3982
      %v4000 = vmul.f32 %v3298, %v1227
      %v4001 = vmul.f32 %v3299, %v1227
      %v4002 = vmul.f32 %v3300, %v1242
      %v4003 = vmul.f32 %v3301, %v1242
      %v4004 = vmul.f32 %v3302, %v1257
      %v4005 = vmul.f32 %v3303, %v1257
      %v4006 = vmul.f32 %v3304, %v1272
      %v4007 = vmul.f32 %v3305, %v1272
      %v4008 = vmul.f32 %v3306, %v1287
      %v4009 = vmul.f32 %v3307, %v1287
      %v4010 = vmul.f32 %v3308, %v1302
      %v4011 = vmul.f32 %v3309, %v1302
      %v4012 = vmul.f32 %v3310, %v1317
      %v4013 = vmul.f32 %v3311, %v1317
      %v4014 = vmul.f32 %v3312, %v1332
      %v4015 = vmul.f32 %v3313, %v1332
      %4024 = vrot.lane.b32.xlu0 %v1227, 124
      %v4025 = vpop.permute.xlu0 %4024
      %4026 = vrot.lane.b32.xlu0 %v1242, 124
      %v4027 = vpop.permute.xlu0 %4026
      %4028 = vrot.lane.b32.xlu0 %v1257, 124
      %v4029 = vpop.permute.xlu0 %4028
      %4030 = vrot.lane.b32.xlu0 %v1272, 124
      %v4031 = vpop.permute.xlu0 %4030
      %4032 = vrot.lane.b32.xlu0 %v1287, 124
      %v4033 = vpop.permute.xlu0 %4032
      %4034 = vrot.lane.b32.xlu0 %v1302, 124
      %v4035 = vpop.permute.xlu0 %4034
      %4036 = vrot.lane.b32.xlu0 %v1317, 124
      %v4037 = vpop.permute.xlu0 %4036
      %4038 = vrot.lane.b32.xlu0 %v1332, 124
      %v4039 = vpop.permute.xlu0 %4038
      %v4048 = vmul.f32 %v3984, %v4025
      %v4049 = vmul.f32 %v3985, %v4025
      %v4050 = vmul.f32 %v3986, %v4027
      %v4051 = vmul.f32 %v3987, %v4027
      %v4052 = vmul.f32 %v3988, %v4029
      %v4053 = vmul.f32 %v3989, %v4029
      %v4054 = vmul.f32 %v3990, %v4031
      %v4055 = vmul.f32 %v3991, %v4031
      %v4056 = vmul.f32 %v3992, %v4033
      %v4057 = vmul.f32 %v3993, %v4033
      %v4058 = vmul.f32 %v3994, %v4035
      %v4059 = vmul.f32 %v3995, %v4035
      %v4060 = vmul.f32 %v3996, %v4037
      %v4061 = vmul.f32 %v3997, %v4037
      %v4062 = vmul.f32 %v3998, %v4039
      %v4063 = vmul.f32 %v3999, %v4039
      %4080 = vrot.lane.b32.xlu0 %v4048, 4
      %v4081 = vpop.permute.xlu0 %4080
      %4082 = vrot.lane.b32.xlu0 %v4049, 4
      %v4083 = vpop.permute.xlu0 %4082
      %4084 = vrot.lane.b32.xlu0 %v4050, 4
      %v4085 = vpop.permute.xlu0 %4084
      %4086 = vrot.lane.b32.xlu0 %v4051, 4
      %v4087 = vpop.permute.xlu0 %4086
      %4088 = vrot.lane.b32.xlu0 %v4052, 4
      %v4089 = vpop.permute.xlu0 %4088
      %4090 = vrot.lane.b32.xlu0 %v4053, 4
      %v4091 = vpop.permute.xlu0 %4090
      %4092 = vrot.lane.b32.xlu0 %v4054, 4
      %v4093 = vpop.permute.xlu0 %4092
      %4094 = vrot.lane.b32.xlu0 %v4055, 4
      %v4095 = vpop.permute.xlu0 %4094
      %4096 = vrot.lane.b32.xlu0 %v4056, 4
      %v4097 = vpop.permute.xlu0 %4096
      %4098 = vrot.lane.b32.xlu0 %v4057, 4
      %v4099 = vpop.permute.xlu0 %4098
      %4100 = vrot.lane.b32.xlu0 %v4058, 4
      %v4101 = vpop.permute.xlu0 %4100
      %4102 = vrot.lane.b32.xlu0 %v4059, 4
      %v4103 = vpop.permute.xlu0 %4102
      %4104 = vrot.lane.b32.xlu0 %v4060, 4
      %v4105 = vpop.permute.xlu0 %4104
      %4106 = vrot.lane.b32.xlu0 %v4061, 4
      %v4107 = vpop.permute.xlu0 %4106
      %4108 = vrot.lane.b32.xlu0 %v4062, 4
      %v4109 = vpop.permute.xlu0 %4108
      %4110 = vrot.lane.b32.xlu0 %v4063, 4
      %v4111 = vpop.permute.xlu0 %4110
      %v4128 = vsel %vm2541, %v4000, %v4081
      %v4129 = vsel %vm2541, %v4001, %v4083
      %v4130 = vsel %vm2541, %v4002, %v4085
      %v4131 = vsel %vm2541, %v4003, %v4087
      %v4132 = vsel %vm2541, %v4004, %v4089
      %v4133 = vsel %vm2541, %v4005, %v4091
      %v4134 = vsel %vm2541, %v4006, %v4093
      %v4135 = vsel %vm2541, %v4007, %v4095
      %v4136 = vsel %vm2541, %v4008, %v4097
      %v4137 = vsel %vm2541, %v4009, %v4099
      %v4138 = vsel %vm2541, %v4010, %v4101
      %v4139 = vsel %vm2541, %v4011, %v4103
      %v4140 = vsel %vm2541, %v4012, %v4105
      %v4141 = vsel %vm2541, %v4013, %v4107
      %v4142 = vsel %vm2541, %v4014, %v4109
      %v4143 = vsel %vm2541, %v4015, %v4111
      %4144 = vst.msk [vmem:[%s386] sm:$0xff] %vm456, %v4128
      %4145 = vst.msk [vmem:[%s386 + $0x8] sm:$0xff] %vm456, %v4129
      %4146 = vst.msk [vmem:[%s386 + $0x10] sm:$0xff] %vm456, %v4130
      %4147 = vst.msk [vmem:[%s386 + $0x18] sm:$0xff] %vm456, %v4131
      %4148 = vst.msk [vmem:[%s386 + $0x20] sm:$0xff] %vm456, %v4132
      %4149 = vst.msk [vmem:[%s386 + $0x28] sm:$0xff] %vm456, %v4133
      %4150 = vst.msk [vmem:[%s386 + $0x30] sm:$0xff] %vm456, %v4134
      %4151 = vst.msk [vmem:[%s386 + $0x38] sm:$0xff] %vm456, %v4135
      %4152 = vst.msk [vmem:[%s386 + $0x40] sm:$0xff] %vm456, %v4136
      %4153 = vst.msk [vmem:[%s386 + $0x48] sm:$0xff] %vm456, %v4137
      %4154 = vst.msk [vmem:[%s386 + $0x50] sm:$0xff] %vm456, %v4138
      %4155 = vst.msk [vmem:[%s386 + $0x58] sm:$0xff] %vm456, %v4139
      %4156 = vst.msk [vmem:[%s386 + $0x60] sm:$0xff] %vm456, %v4140
      %4157 = vst.msk [vmem:[%s386 + $0x68] sm:$0xff] %vm456, %v4141
      %4158 = vst.msk [vmem:[%s386 + $0x70] sm:$0xff] %vm456, %v4142
      %4159 = vst.msk [vmem:[%s386 + $0x78] sm:$0xff] %vm456, %v4143
      %v4160 = vld [vmem:[%s2733] sm:$0xff]
      %v4161 = vld [vmem:[%s2733 + $0x10] sm:$0xff]
      %v4162 = vld [vmem:[%s2733 + $0x20] sm:$0xff]
      %v4163 = vld [vmem:[%s2733 + $0x30] sm:$0xff]
      %v4164 = vld [vmem:[%s2733 + $0x40] sm:$0xff]
      %v4165 = vld [vmem:[%s2733 + $0x50] sm:$0xff]
      %v4166 = vld [vmem:[%s2733 + $0x60] sm:$0xff]
      %v4167 = vld [vmem:[%s2733 + $0x70] sm:$0xff]
      %v4168 = vld [vmem:[%s2733 + $0x80] sm:$0xff]
      %v4169 = vld [vmem:[%s2733 + $0x90] sm:$0xff]
      %v4170 = vld [vmem:[%s2733 + $0xa0] sm:$0xff]
      %v4171 = vld [vmem:[%s2733 + $0xb0] sm:$0xff]
      %v4172 = vld [vmem:[%s2733 + $0xc0] sm:$0xff]
      %v4173 = vld [vmem:[%s2733 + $0xd0] sm:$0xff]
      %v4174 = vld [vmem:[%s2733 + $0xe0] sm:$0xff]
      %v4175 = vld [vmem:[%s2733 + $0xf0] sm:$0xff]
      %v4176 = vmul.f32 %v4160, %v2699
      %v4177 = vmul.f32 %v4161, %v2699
      %v4178 = vmul.f32 %v4162, %v2699
      %v4179 = vmul.f32 %v4163, %v2699
      %v4180 = vmul.f32 %v4164, %v2699
      %v4181 = vmul.f32 %v4165, %v2699
      %v4182 = vmul.f32 %v4166, %v2699
      %v4183 = vmul.f32 %v4167, %v2699
      %v4184 = vmul.f32 %v4168, %v2699
      %v4185 = vmul.f32 %v4169, %v2699
      %v4186 = vmul.f32 %v4170, %v2699
      %v4187 = vmul.f32 %v4171, %v2699
      %v4188 = vmul.f32 %v4172, %v2699
      %v4189 = vmul.f32 %v4173, %v2699
      %v4190 = vmul.f32 %v4174, %v2699
      %v4191 = vmul.f32 %v4175, %v2699
      %v4192 = vadd.f32 %v4176, 0.0
      %v4193 = vadd.f32 %v4177, 0.0
      %v4194 = vadd.f32 %v4178, 0.0
      %v4195 = vadd.f32 %v4179, 0.0
      %v4196 = vadd.f32 %v4180, 0.0
      %v4197 = vadd.f32 %v4181, 0.0
      %v4198 = vadd.f32 %v4182, 0.0
      %v4199 = vadd.f32 %v4183, 0.0
      %v4200 = vadd.f32 %v4184, 0.0
      %v4201 = vadd.f32 %v4185, 0.0
      %v4202 = vadd.f32 %v4186, 0.0
      %v4203 = vadd.f32 %v4187, 0.0
      %v4204 = vadd.f32 %v4188, 0.0
      %v4205 = vadd.f32 %v4189, 0.0
      %v4206 = vadd.f32 %v4190, 0.0
      %v4207 = vadd.f32 %v4191, 0.0
      %v4208 = vld [vmem:[#allocation2 + $0x1] sm:$0xff]
      %v4209 = vld [vmem:[#allocation2 + $0x11] sm:$0xff]
      %v4210 = vld [vmem:[#allocation2 + $0x21] sm:$0xff]
      %v4211 = vld [vmem:[#allocation2 + $0x31] sm:$0xff]
      %v4212 = vld [vmem:[#allocation2 + $0x41] sm:$0xff]
      %v4213 = vld [vmem:[#allocation2 + $0x51] sm:$0xff]
      %v4214 = vld [vmem:[#allocation2 + $0x61] sm:$0xff]
      %v4215 = vld [vmem:[#allocation2 + $0x71] sm:$0xff]
      %v4216 = vld [vmem:[#allocation2 + $0x81] sm:$0xff]
      %v4217 = vld [vmem:[#allocation2 + $0x91] sm:$0xff]
      %v4218 = vld [vmem:[#allocation2 + $0xa1] sm:$0xff]
      %v4219 = vld [vmem:[#allocation2 + $0xb1] sm:$0xff]
      %v4220 = vld [vmem:[#allocation2 + $0xc1] sm:$0xff]
      %v4221 = vld [vmem:[#allocation2 + $0xd1] sm:$0xff]
      %v4222 = vld [vmem:[#allocation2 + $0xe1] sm:$0xff]
      %v4223 = vld [vmem:[#allocation2 + $0xf1] sm:$0xff]
      %v4224 = vmul.f32 %v4208, %v2751
      %v4225 = vmul.f32 %v4209, %v2751
      %v4226 = vmul.f32 %v4210, %v2751
      %v4227 = vmul.f32 %v4211, %v2751
      %v4228 = vmul.f32 %v4212, %v2751
      %v4229 = vmul.f32 %v4213, %v2751
      %v4230 = vmul.f32 %v4214, %v2751
      %v4231 = vmul.f32 %v4215, %v2751
      %v4232 = vmul.f32 %v4216, %v2751
      %v4233 = vmul.f32 %v4217, %v2751
      %v4234 = vmul.f32 %v4218, %v2751
      %v4235 = vmul.f32 %v4219, %v2751
      %v4236 = vmul.f32 %v4220, %v2751
      %v4237 = vmul.f32 %v4221, %v2751
      %v4238 = vmul.f32 %v4222, %v2751
      %v4239 = vmul.f32 %v4223, %v2751
      %v4240 = vadd.f32 %v4224, 0.0
      %v4241 = vadd.f32 %v4225, 0.0
      %v4242 = vadd.f32 %v4226, 0.0
      %v4243 = vadd.f32 %v4227, 0.0
      %v4244 = vadd.f32 %v4228, 0.0
      %v4245 = vadd.f32 %v4229, 0.0
      %v4246 = vadd.f32 %v4230, 0.0
      %v4247 = vadd.f32 %v4231, 0.0
      %v4248 = vadd.f32 %v4232, 0.0
      %v4249 = vadd.f32 %v4233, 0.0
      %v4250 = vadd.f32 %v4234, 0.0
      %v4251 = vadd.f32 %v4235, 0.0
      %v4252 = vadd.f32 %v4236, 0.0
      %v4253 = vadd.f32 %v4237, 0.0
      %v4254 = vadd.f32 %v4238, 0.0
      %v4255 = vadd.f32 %v4239, 0.0
      %v4256 = vld [vmem:[%s2733 + $0x1] sm:$0xff]
      %v4257 = vld [vmem:[%s2733 + $0x11] sm:$0xff]
      %v4258 = vld [vmem:[%s2733 + $0x21] sm:$0xff]
      %v4259 = vld [vmem:[%s2733 + $0x31] sm:$0xff]
      %v4260 = vld [vmem:[%s2733 + $0x41] sm:$0xff]
      %v4261 = vld [vmem:[%s2733 + $0x51] sm:$0xff]
      %v4262 = vld [vmem:[%s2733 + $0x61] sm:$0xff]
      %v4263 = vld [vmem:[%s2733 + $0x71] sm:$0xff]
      %v4264 = vld [vmem:[%s2733 + $0x81] sm:$0xff]
      %v4265 = vld [vmem:[%s2733 + $0x91] sm:$0xff]
      %v4266 = vld [vmem:[%s2733 + $0xa1] sm:$0xff]
      %v4267 = vld [vmem:[%s2733 + $0xb1] sm:$0xff]
      %v4268 = vld [vmem:[%s2733 + $0xc1] sm:$0xff]
      %v4269 = vld [vmem:[%s2733 + $0xd1] sm:$0xff]
      %v4270 = vld [vmem:[%s2733 + $0xe1] sm:$0xff]
      %v4271 = vld [vmem:[%s2733 + $0xf1] sm:$0xff]
      %v4272 = vmul.f32 %v4256, %v2802
      %v4273 = vmul.f32 %v4257, %v2802
      %v4274 = vmul.f32 %v4258, %v2802
      %v4275 = vmul.f32 %v4259, %v2802
      %v4276 = vmul.f32 %v4260, %v2802
      %v4277 = vmul.f32 %v4261, %v2802
      %v4278 = vmul.f32 %v4262, %v2802
      %v4279 = vmul.f32 %v4263, %v2802
      %v4280 = vmul.f32 %v4264, %v2802
      %v4281 = vmul.f32 %v4265, %v2802
      %v4282 = vmul.f32 %v4266, %v2802
      %v4283 = vmul.f32 %v4267, %v2802
      %v4284 = vmul.f32 %v4268, %v2802
      %v4285 = vmul.f32 %v4269, %v2802
      %v4286 = vmul.f32 %v4270, %v2802
      %v4287 = vmul.f32 %v4271, %v2802
      %v4288 = vadd.f32 %v4192, %v4272
      %v4289 = vadd.f32 %v4193, %v4273
      %v4290 = vadd.f32 %v4194, %v4274
      %v4291 = vadd.f32 %v4195, %v4275
      %v4292 = vadd.f32 %v4196, %v4276
      %v4293 = vadd.f32 %v4197, %v4277
      %v4294 = vadd.f32 %v4198, %v4278
      %v4295 = vadd.f32 %v4199, %v4279
      %v4296 = vadd.f32 %v4200, %v4280
      %v4297 = vadd.f32 %v4201, %v4281
      %v4298 = vadd.f32 %v4202, %v4282
      %v4299 = vadd.f32 %v4203, %v4283
      %v4300 = vadd.f32 %v4204, %v4284
      %v4301 = vadd.f32 %v4205, %v4285
      %v4302 = vadd.f32 %v4206, %v4286
      %v4303 = vadd.f32 %v4207, %v4287
      %v4304 = vld [vmem:[#allocation2 + $0x2] sm:$0xff]
      %v4305 = vld [vmem:[#allocation2 + $0x12] sm:$0xff]
      %v4306 = vld [vmem:[#allocation2 + $0x22] sm:$0xff]
      %v4307 = vld [vmem:[#allocation2 + $0x32] sm:$0xff]
      %v4308 = vld [vmem:[#allocation2 + $0x42] sm:$0xff]
      %v4309 = vld [vmem:[#allocation2 + $0x52] sm:$0xff]
      %v4310 = vld [vmem:[#allocation2 + $0x62] sm:$0xff]
      %v4311 = vld [vmem:[#allocation2 + $0x72] sm:$0xff]
      %v4312 = vld [vmem:[#allocation2 + $0x82] sm:$0xff]
      %v4313 = vld [vmem:[#allocation2 + $0x92] sm:$0xff]
      %v4314 = vld [vmem:[#allocation2 + $0xa2] sm:$0xff]
      %v4315 = vld [vmem:[#allocation2 + $0xb2] sm:$0xff]
      %v4316 = vld [vmem:[#allocation2 + $0xc2] sm:$0xff]
      %v4317 = vld [vmem:[#allocation2 + $0xd2] sm:$0xff]
      %v4318 = vld [vmem:[#allocation2 + $0xe2] sm:$0xff]
      %v4319 = vld [vmem:[#allocation2 + $0xf2] sm:$0xff]
      %v4320 = vmul.f32 %v4304, %v2853
      %v4321 = vmul.f32 %v4305, %v2853
      %v4322 = vmul.f32 %v4306, %v2853
      %v4323 = vmul.f32 %v4307, %v2853
      %v4324 = vmul.f32 %v4308, %v2853
      %v4325 = vmul.f32 %v4309, %v2853
      %v4326 = vmul.f32 %v4310, %v2853
      %v4327 = vmul.f32 %v4311, %v2853
      %v4328 = vmul.f32 %v4312, %v2853
      %v4329 = vmul.f32 %v4313, %v2853
      %v4330 = vmul.f32 %v4314, %v2853
      %v4331 = vmul.f32 %v4315, %v2853
      %v4332 = vmul.f32 %v4316, %v2853
      %v4333 = vmul.f32 %v4317, %v2853
      %v4334 = vmul.f32 %v4318, %v2853
      %v4335 = vmul.f32 %v4319, %v2853
      %v4336 = vadd.f32 %v4240, %v4320
      %v4337 = vadd.f32 %v4241, %v4321
      %v4338 = vadd.f32 %v4242, %v4322
      %v4339 = vadd.f32 %v4243, %v4323
      %v4340 = vadd.f32 %v4244, %v4324
      %v4341 = vadd.f32 %v4245, %v4325
      %v4342 = vadd.f32 %v4246, %v4326
      %v4343 = vadd.f32 %v4247, %v4327
      %v4344 = vadd.f32 %v4248, %v4328
      %v4345 = vadd.f32 %v4249, %v4329
      %v4346 = vadd.f32 %v4250, %v4330
      %v4347 = vadd.f32 %v4251, %v4331
      %v4348 = vadd.f32 %v4252, %v4332
      %v4349 = vadd.f32 %v4253, %v4333
      %v4350 = vadd.f32 %v4254, %v4334
      %v4351 = vadd.f32 %v4255, %v4335
      %v4352 = vld [vmem:[%s2733 + $0x2] sm:$0xff]
      %v4353 = vld [vmem:[%s2733 + $0x12] sm:$0xff]
      %v4354 = vld [vmem:[%s2733 + $0x22] sm:$0xff]
      %v4355 = vld [vmem:[%s2733 + $0x32] sm:$0xff]
      %v4356 = vld [vmem:[%s2733 + $0x42] sm:$0xff]
      %v4357 = vld [vmem:[%s2733 + $0x52] sm:$0xff]
      %v4358 = vld [vmem:[%s2733 + $0x62] sm:$0xff]
      %v4359 = vld [vmem:[%s2733 + $0x72] sm:$0xff]
      %v4360 = vld [vmem:[%s2733 + $0x82] sm:$0xff]
      %v4361 = vld [vmem:[%s2733 + $0x92] sm:$0xff]
      %v4362 = vld [vmem:[%s2733 + $0xa2] sm:$0xff]
      %v4363 = vld [vmem:[%s2733 + $0xb2] sm:$0xff]
      %v4364 = vld [vmem:[%s2733 + $0xc2] sm:$0xff]
      %v4365 = vld [vmem:[%s2733 + $0xd2] sm:$0xff]
      %v4366 = vld [vmem:[%s2733 + $0xe2] sm:$0xff]
      %v4367 = vld [vmem:[%s2733 + $0xf2] sm:$0xff]
      %v4368 = vmul.f32 %v4352, %v2904
      %v4369 = vmul.f32 %v4353, %v2904
      %v4370 = vmul.f32 %v4354, %v2904
      %v4371 = vmul.f32 %v4355, %v2904
      %v4372 = vmul.f32 %v4356, %v2904
      %v4373 = vmul.f32 %v4357, %v2904
      %v4374 = vmul.f32 %v4358, %v2904
      %v4375 = vmul.f32 %v4359, %v2904
      %v4376 = vmul.f32 %v4360, %v2904
      %v4377 = vmul.f32 %v4361, %v2904
      %v4378 = vmul.f32 %v4362, %v2904
      %v4379 = vmul.f32 %v4363, %v2904
      %v4380 = vmul.f32 %v4364, %v2904
      %v4381 = vmul.f32 %v4365, %v2904
      %v4382 = vmul.f32 %v4366, %v2904
      %v4383 = vmul.f32 %v4367, %v2904
      %v4384 = vadd.f32 %v4288, %v4368
      %v4385 = vadd.f32 %v4289, %v4369
      %v4386 = vadd.f32 %v4290, %v4370
      %v4387 = vadd.f32 %v4291, %v4371
      %v4388 = vadd.f32 %v4292, %v4372
      %v4389 = vadd.f32 %v4293, %v4373
      %v4390 = vadd.f32 %v4294, %v4374
      %v4391 = vadd.f32 %v4295, %v4375
      %v4392 = vadd.f32 %v4296, %v4376
      %v4393 = vadd.f32 %v4297, %v4377
      %v4394 = vadd.f32 %v4298, %v4378
      %v4395 = vadd.f32 %v4299, %v4379
      %v4396 = vadd.f32 %v4300, %v4380
      %v4397 = vadd.f32 %v4301, %v4381
      %v4398 = vadd.f32 %v4302, %v4382
      %v4399 = vadd.f32 %v4303, %v4383
      %v4400 = vld [vmem:[%s2990] sm:$0xff]
      %v4401 = vld [vmem:[%s2990 + $0x10] sm:$0xff]
      %v4402 = vld [vmem:[%s2990 + $0x20] sm:$0xff]
      %v4403 = vld [vmem:[%s2990 + $0x30] sm:$0xff]
      %v4404 = vld [vmem:[%s2990 + $0x40] sm:$0xff]
      %v4405 = vld [vmem:[%s2990 + $0x50] sm:$0xff]
      %v4406 = vld [vmem:[%s2990 + $0x60] sm:$0xff]
      %v4407 = vld [vmem:[%s2990 + $0x70] sm:$0xff]
      %v4408 = vld [vmem:[%s2990 + $0x80] sm:$0xff]
      %v4409 = vld [vmem:[%s2990 + $0x90] sm:$0xff]
      %v4410 = vld [vmem:[%s2990 + $0xa0] sm:$0xff]
      %v4411 = vld [vmem:[%s2990 + $0xb0] sm:$0xff]
      %v4412 = vld [vmem:[%s2990 + $0xc0] sm:$0xff]
      %v4413 = vld [vmem:[%s2990 + $0xd0] sm:$0xff]
      %v4414 = vld [vmem:[%s2990 + $0xe0] sm:$0xff]
      %v4415 = vld [vmem:[%s2990 + $0xf0] sm:$0xff]
      %v4416 = vmul.f32 %v4400, %v2956
      %v4417 = vmul.f32 %v4401, %v2956
      %v4418 = vmul.f32 %v4402, %v2956
      %v4419 = vmul.f32 %v4403, %v2956
      %v4420 = vmul.f32 %v4404, %v2956
      %v4421 = vmul.f32 %v4405, %v2956
      %v4422 = vmul.f32 %v4406, %v2956
      %v4423 = vmul.f32 %v4407, %v2956
      %v4424 = vmul.f32 %v4408, %v2956
      %v4425 = vmul.f32 %v4409, %v2956
      %v4426 = vmul.f32 %v4410, %v2956
      %v4427 = vmul.f32 %v4411, %v2956
      %v4428 = vmul.f32 %v4412, %v2956
      %v4429 = vmul.f32 %v4413, %v2956
      %v4430 = vmul.f32 %v4414, %v2956
      %v4431 = vmul.f32 %v4415, %v2956
      %v4432 = vadd.f32 %v4336, %v4416
      %v4433 = vadd.f32 %v4337, %v4417
      %v4434 = vadd.f32 %v4338, %v4418
      %v4435 = vadd.f32 %v4339, %v4419
      %v4436 = vadd.f32 %v4340, %v4420
      %v4437 = vadd.f32 %v4341, %v4421
      %v4438 = vadd.f32 %v4342, %v4422
      %v4439 = vadd.f32 %v4343, %v4423
      %v4440 = vadd.f32 %v4344, %v4424
      %v4441 = vadd.f32 %v4345, %v4425
      %v4442 = vadd.f32 %v4346, %v4426
      %v4443 = vadd.f32 %v4347, %v4427
      %v4444 = vadd.f32 %v4348, %v4428
      %v4445 = vadd.f32 %v4349, %v4429
      %v4446 = vadd.f32 %v4350, %v4430
      %v4447 = vadd.f32 %v4351, %v4431
      %v4448 = vld [vmem:[%s2938 + $0x1] sm:$0xff]
      %v4449 = vld [vmem:[%s2938 + $0x11] sm:$0xff]
      %v4450 = vld [vmem:[%s2938 + $0x21] sm:$0xff]
      %v4451 = vld [vmem:[%s2938 + $0x31] sm:$0xff]
      %v4452 = vld [vmem:[%s2938 + $0x41] sm:$0xff]
      %v4453 = vld [vmem:[%s2938 + $0x51] sm:$0xff]
      %v4454 = vld [vmem:[%s2938 + $0x61] sm:$0xff]
      %v4455 = vld [vmem:[%s2938 + $0x71] sm:$0xff]
      %v4456 = vld [vmem:[%s2938 + $0x81] sm:$0xff]
      %v4457 = vld [vmem:[%s2938 + $0x91] sm:$0xff]
      %v4458 = vld [vmem:[%s2938 + $0xa1] sm:$0xff]
      %v4459 = vld [vmem:[%s2938 + $0xb1] sm:$0xff]
      %v4460 = vld [vmem:[%s2938 + $0xc1] sm:$0xff]
      %v4461 = vld [vmem:[%s2938 + $0xd1] sm:$0xff]
      %v4462 = vld [vmem:[%s2938 + $0xe1] sm:$0xff]
      %v4463 = vld [vmem:[%s2938 + $0xf1] sm:$0xff]
      %v4464 = vmul.f32 %v4448, %v3008
      %v4465 = vmul.f32 %v4449, %v3008
      %v4466 = vmul.f32 %v4450, %v3008
      %v4467 = vmul.f32 %v4451, %v3008
      %v4468 = vmul.f32 %v4452, %v3008
      %v4469 = vmul.f32 %v4453, %v3008
      %v4470 = vmul.f32 %v4454, %v3008
      %v4471 = vmul.f32 %v4455, %v3008
      %v4472 = vmul.f32 %v4456, %v3008
      %v4473 = vmul.f32 %v4457, %v3008
      %v4474 = vmul.f32 %v4458, %v3008
      %v4475 = vmul.f32 %v4459, %v3008
      %v4476 = vmul.f32 %v4460, %v3008
      %v4477 = vmul.f32 %v4461, %v3008
      %v4478 = vmul.f32 %v4462, %v3008
      %v4479 = vmul.f32 %v4463, %v3008
      %v4480 = vadd.f32 %v4384, %v4464
      %v4481 = vadd.f32 %v4385, %v4465
      %v4482 = vadd.f32 %v4386, %v4466
      %v4483 = vadd.f32 %v4387, %v4467
      %v4484 = vadd.f32 %v4388, %v4468
      %v4485 = vadd.f32 %v4389, %v4469
      %v4486 = vadd.f32 %v4390, %v4470
      %v4487 = vadd.f32 %v4391, %v4471
      %v4488 = vadd.f32 %v4392, %v4472
      %v4489 = vadd.f32 %v4393, %v4473
      %v4490 = vadd.f32 %v4394, %v4474
      %v4491 = vadd.f32 %v4395, %v4475
      %v4492 = vadd.f32 %v4396, %v4476
      %v4493 = vadd.f32 %v4397, %v4477
      %v4494 = vadd.f32 %v4398, %v4478
      %v4495 = vadd.f32 %v4399, %v4479
      %v4496 = vld [vmem:[%s2990 + $0x1] sm:$0xff]
      %v4497 = vld [vmem:[%s2990 + $0x11] sm:$0xff]
      %v4498 = vld [vmem:[%s2990 + $0x21] sm:$0xff]
      %v4499 = vld [vmem:[%s2990 + $0x31] sm:$0xff]
      %v4500 = vld [vmem:[%s2990 + $0x41] sm:$0xff]
      %v4501 = vld [vmem:[%s2990 + $0x51] sm:$0xff]
      %v4502 = vld [vmem:[%s2990 + $0x61] sm:$0xff]
      %v4503 = vld [vmem:[%s2990 + $0x71] sm:$0xff]
      %v4504 = vld [vmem:[%s2990 + $0x81] sm:$0xff]
      %v4505 = vld [vmem:[%s2990 + $0x91] sm:$0xff]
      %v4506 = vld [vmem:[%s2990 + $0xa1] sm:$0xff]
      %v4507 = vld [vmem:[%s2990 + $0xb1] sm:$0xff]
      %v4508 = vld [vmem:[%s2990 + $0xc1] sm:$0xff]
      %v4509 = vld [vmem:[%s2990 + $0xd1] sm:$0xff]
      %v4510 = vld [vmem:[%s2990 + $0xe1] sm:$0xff]
      %v4511 = vld [vmem:[%s2990 + $0xf1] sm:$0xff]
      %v4512 = vmul.f32 %v4496, %v3059
      %v4513 = vmul.f32 %v4497, %v3059
      %v4514 = vmul.f32 %v4498, %v3059
      %v4515 = vmul.f32 %v4499, %v3059
      %v4516 = vmul.f32 %v4500, %v3059
      %v4517 = vmul.f32 %v4501, %v3059
      %v4518 = vmul.f32 %v4502, %v3059
      %v4519 = vmul.f32 %v4503, %v3059
      %v4520 = vmul.f32 %v4504, %v3059
      %v4521 = vmul.f32 %v4505, %v3059
      %v4522 = vmul.f32 %v4506, %v3059
      %v4523 = vmul.f32 %v4507, %v3059
      %v4524 = vmul.f32 %v4508, %v3059
      %v4525 = vmul.f32 %v4509, %v3059
      %v4526 = vmul.f32 %v4510, %v3059
      %v4527 = vmul.f32 %v4511, %v3059
      %v4528 = vadd.f32 %v4432, %v4512
      %v4529 = vadd.f32 %v4433, %v4513
      %v4530 = vadd.f32 %v4434, %v4514
      %v4531 = vadd.f32 %v4435, %v4515
      %v4532 = vadd.f32 %v4436, %v4516
      %v4533 = vadd.f32 %v4437, %v4517
      %v4534 = vadd.f32 %v4438, %v4518
      %v4535 = vadd.f32 %v4439, %v4519
      %v4536 = vadd.f32 %v4440, %v4520
      %v4537 = vadd.f32 %v4441, %v4521
      %v4538 = vadd.f32 %v4442, %v4522
      %v4539 = vadd.f32 %v4443, %v4523
      %v4540 = vadd.f32 %v4444, %v4524
      %v4541 = vadd.f32 %v4445, %v4525
      %v4542 = vadd.f32 %v4446, %v4526
      %v4543 = vadd.f32 %v4447, %v4527
      %v4544 = vld [vmem:[%s2938 + $0x2] sm:$0xff]
      %v4545 = vld [vmem:[%s2938 + $0x12] sm:$0xff]
      %v4546 = vld [vmem:[%s2938 + $0x22] sm:$0xff]
      %v4547 = vld [vmem:[%s2938 + $0x32] sm:$0xff]
      %v4548 = vld [vmem:[%s2938 + $0x42] sm:$0xff]
      %v4549 = vld [vmem:[%s2938 + $0x52] sm:$0xff]
      %v4550 = vld [vmem:[%s2938 + $0x62] sm:$0xff]
      %v4551 = vld [vmem:[%s2938 + $0x72] sm:$0xff]
      %v4552 = vld [vmem:[%s2938 + $0x82] sm:$0xff]
      %v4553 = vld [vmem:[%s2938 + $0x92] sm:$0xff]
      %v4554 = vld [vmem:[%s2938 + $0xa2] sm:$0xff]
      %v4555 = vld [vmem:[%s2938 + $0xb2] sm:$0xff]
      %v4556 = vld [vmem:[%s2938 + $0xc2] sm:$0xff]
      %v4557 = vld [vmem:[%s2938 + $0xd2] sm:$0xff]
      %v4558 = vld [vmem:[%s2938 + $0xe2] sm:$0xff]
      %v4559 = vld [vmem:[%s2938 + $0xf2] sm:$0xff]
      %v4560 = vmul.f32 %v4544, %v3110
      %v4561 = vmul.f32 %v4545, %v3110
      %v4562 = vmul.f32 %v4546, %v3110
      %v4563 = vmul.f32 %v4547, %v3110
      %v4564 = vmul.f32 %v4548, %v3110
      %v4565 = vmul.f32 %v4549, %v3110
      %v4566 = vmul.f32 %v4550, %v3110
      %v4567 = vmul.f32 %v4551, %v3110
      %v4568 = vmul.f32 %v4552, %v3110
      %v4569 = vmul.f32 %v4553, %v3110
      %v4570 = vmul.f32 %v4554, %v3110
      %v4571 = vmul.f32 %v4555, %v3110
      %v4572 = vmul.f32 %v4556, %v3110
      %v4573 = vmul.f32 %v4557, %v3110
      %v4574 = vmul.f32 %v4558, %v3110
      %v4575 = vmul.f32 %v4559, %v3110
      %v4576 = vadd.f32 %v4480, %v4560
      %v4577 = vadd.f32 %v4481, %v4561
      %v4578 = vadd.f32 %v4482, %v4562
      %v4579 = vadd.f32 %v4483, %v4563
      %v4580 = vadd.f32 %v4484, %v4564
      %v4581 = vadd.f32 %v4485, %v4565
      %v4582 = vadd.f32 %v4486, %v4566
      %v4583 = vadd.f32 %v4487, %v4567
      %v4584 = vadd.f32 %v4488, %v4568
      %v4585 = vadd.f32 %v4489, %v4569
      %v4586 = vadd.f32 %v4490, %v4570
      %v4587 = vadd.f32 %v4491, %v4571
      %v4588 = vadd.f32 %v4492, %v4572
      %v4589 = vadd.f32 %v4493, %v4573
      %v4590 = vadd.f32 %v4494, %v4574
      %v4591 = vadd.f32 %v4495, %v4575
      %v4592 = vld [vmem:[%s2990 + $0x2] sm:$0xff]
      %v4593 = vld [vmem:[%s2990 + $0x12] sm:$0xff]
      %v4594 = vld [vmem:[%s2990 + $0x22] sm:$0xff]
      %v4595 = vld [vmem:[%s2990 + $0x32] sm:$0xff]
      %v4596 = vld [vmem:[%s2990 + $0x42] sm:$0xff]
      %v4597 = vld [vmem:[%s2990 + $0x52] sm:$0xff]
      %v4598 = vld [vmem:[%s2990 + $0x62] sm:$0xff]
      %v4599 = vld [vmem:[%s2990 + $0x72] sm:$0xff]
      %v4600 = vld [vmem:[%s2990 + $0x82] sm:$0xff]
      %v4601 = vld [vmem:[%s2990 + $0x92] sm:$0xff]
      %v4602 = vld [vmem:[%s2990 + $0xa2] sm:$0xff]
      %v4603 = vld [vmem:[%s2990 + $0xb2] sm:$0xff]
      %v4604 = vld [vmem:[%s2990 + $0xc2] sm:$0xff]
      %v4605 = vld [vmem:[%s2990 + $0xd2] sm:$0xff]
      %v4606 = vld [vmem:[%s2990 + $0xe2] sm:$0xff]
      %v4607 = vld [vmem:[%s2990 + $0xf2] sm:$0xff]
      %v4608 = vmul.f32 %v4592, %v3161
      %v4609 = vmul.f32 %v4593, %v3161
      %v4610 = vmul.f32 %v4594, %v3161
      %v4611 = vmul.f32 %v4595, %v3161
      %v4612 = vmul.f32 %v4596, %v3161
      %v4613 = vmul.f32 %v4597, %v3161
      %v4614 = vmul.f32 %v4598, %v3161
      %v4615 = vmul.f32 %v4599, %v3161
      %v4616 = vmul.f32 %v4600, %v3161
      %v4617 = vmul.f32 %v4601, %v3161
      %v4618 = vmul.f32 %v4602, %v3161
      %v4619 = vmul.f32 %v4603, %v3161
      %v4620 = vmul.f32 %v4604, %v3161
      %v4621 = vmul.f32 %v4605, %v3161
      %v4622 = vmul.f32 %v4606, %v3161
      %v4623 = vmul.f32 %v4607, %v3161
      %v4624 = vadd.f32 %v4528, %v4608
      %v4625 = vadd.f32 %v4529, %v4609
      %v4626 = vadd.f32 %v4530, %v4610
      %v4627 = vadd.f32 %v4531, %v4611
      %v4628 = vadd.f32 %v4532, %v4612
      %v4629 = vadd.f32 %v4533, %v4613
      %v4630 = vadd.f32 %v4534, %v4614
      %v4631 = vadd.f32 %v4535, %v4615
      %v4632 = vadd.f32 %v4536, %v4616
      %v4633 = vadd.f32 %v4537, %v4617
      %v4634 = vadd.f32 %v4538, %v4618
      %v4635 = vadd.f32 %v4539, %v4619
      %v4636 = vadd.f32 %v4540, %v4620
      %v4637 = vadd.f32 %v4541, %v4621
      %v4638 = vadd.f32 %v4542, %v4622
      %v4639 = vadd.f32 %v4543, %v4623
      %v4640 = vld [vmem:[%s3246] sm:$0xff]
      %v4641 = vld [vmem:[%s3246 + $0x10] sm:$0xff]
      %v4642 = vld [vmem:[%s3246 + $0x20] sm:$0xff]
      %v4643 = vld [vmem:[%s3246 + $0x30] sm:$0xff]
      %v4644 = vld [vmem:[%s3246 + $0x40] sm:$0xff]
      %v4645 = vld [vmem:[%s3246 + $0x50] sm:$0xff]
      %v4646 = vld [vmem:[%s3246 + $0x60] sm:$0xff]
      %v4647 = vld [vmem:[%s3246 + $0x70] sm:$0xff]
      %v4648 = vld [vmem:[%s3246 + $0x80] sm:$0xff]
      %v4649 = vld [vmem:[%s3246 + $0x90] sm:$0xff]
      %v4650 = vld [vmem:[%s3246 + $0xa0] sm:$0xff]
      %v4651 = vld [vmem:[%s3246 + $0xb0] sm:$0xff]
      %v4652 = vld [vmem:[%s3246 + $0xc0] sm:$0xff]
      %v4653 = vld [vmem:[%s3246 + $0xd0] sm:$0xff]
      %v4654 = vld [vmem:[%s3246 + $0xe0] sm:$0xff]
      %v4655 = vld [vmem:[%s3246 + $0xf0] sm:$0xff]
      %v4656 = vmul.f32 %v4640, %v3212
      %v4657 = vmul.f32 %v4641, %v3212
      %v4658 = vmul.f32 %v4642, %v3212
      %v4659 = vmul.f32 %v4643, %v3212
      %v4660 = vmul.f32 %v4644, %v3212
      %v4661 = vmul.f32 %v4645, %v3212
      %v4662 = vmul.f32 %v4646, %v3212
      %v4663 = vmul.f32 %v4647, %v3212
      %v4664 = vmul.f32 %v4648, %v3212
      %v4665 = vmul.f32 %v4649, %v3212
      %v4666 = vmul.f32 %v4650, %v3212
      %v4667 = vmul.f32 %v4651, %v3212
      %v4668 = vmul.f32 %v4652, %v3212
      %v4669 = vmul.f32 %v4653, %v3212
      %v4670 = vmul.f32 %v4654, %v3212
      %v4671 = vmul.f32 %v4655, %v3212
      %v4672 = vadd.f32 %v4576, %v4656
      %v4673 = vadd.f32 %v4577, %v4657
      %v4674 = vadd.f32 %v4578, %v4658
      %v4675 = vadd.f32 %v4579, %v4659
      %v4676 = vadd.f32 %v4580, %v4660
      %v4677 = vadd.f32 %v4581, %v4661
      %v4678 = vadd.f32 %v4582, %v4662
      %v4679 = vadd.f32 %v4583, %v4663
      %v4680 = vadd.f32 %v4584, %v4664
      %v4681 = vadd.f32 %v4585, %v4665
      %v4682 = vadd.f32 %v4586, %v4666
      %v4683 = vadd.f32 %v4587, %v4667
      %v4684 = vadd.f32 %v4588, %v4668
      %v4685 = vadd.f32 %v4589, %v4669
      %v4686 = vadd.f32 %v4590, %v4670
      %v4687 = vadd.f32 %v4591, %v4671
      %v4688 = vld [vmem:[%s2623 + $0x1] sm:$0xff]
      %v4689 = vld [vmem:[%s2623 + $0x11] sm:$0xff]
      %v4690 = vld [vmem:[%s2623 + $0x21] sm:$0xff]
      %v4691 = vld [vmem:[%s2623 + $0x31] sm:$0xff]
      %v4692 = vld [vmem:[%s2623 + $0x41] sm:$0xff]
      %v4693 = vld [vmem:[%s2623 + $0x51] sm:$0xff]
      %v4694 = vld [vmem:[%s2623 + $0x61] sm:$0xff]
      %v4695 = vld [vmem:[%s2623 + $0x71] sm:$0xff]
      %v4696 = vld [vmem:[%s2623 + $0x81] sm:$0xff]
      %v4697 = vld [vmem:[%s2623 + $0x91] sm:$0xff]
      %v4698 = vld [vmem:[%s2623 + $0xa1] sm:$0xff]
      %v4699 = vld [vmem:[%s2623 + $0xb1] sm:$0xff]
      %v4700 = vld [vmem:[%s2623 + $0xc1] sm:$0xff]
      %v4701 = vld [vmem:[%s2623 + $0xd1] sm:$0xff]
      %v4702 = vld [vmem:[%s2623 + $0xe1] sm:$0xff]
      %v4703 = vld [vmem:[%s2623 + $0xf1] sm:$0xff]
      %v4704 = vmul.f32 %v4688, %v3264
      %v4705 = vmul.f32 %v4689, %v3264
      %v4706 = vmul.f32 %v4690, %v3264
      %v4707 = vmul.f32 %v4691, %v3264
      %v4708 = vmul.f32 %v4692, %v3264
      %v4709 = vmul.f32 %v4693, %v3264
      %v4710 = vmul.f32 %v4694, %v3264
      %v4711 = vmul.f32 %v4695, %v3264
      %v4712 = vmul.f32 %v4696, %v3264
      %v4713 = vmul.f32 %v4697, %v3264
      %v4714 = vmul.f32 %v4698, %v3264
      %v4715 = vmul.f32 %v4699, %v3264
      %v4716 = vmul.f32 %v4700, %v3264
      %v4717 = vmul.f32 %v4701, %v3264
      %v4718 = vmul.f32 %v4702, %v3264
      %v4719 = vmul.f32 %v4703, %v3264
      %v4720 = vadd.f32 %v4624, %v4704
      %v4721 = vadd.f32 %v4625, %v4705
      %v4722 = vadd.f32 %v4626, %v4706
      %v4723 = vadd.f32 %v4627, %v4707
      %v4724 = vadd.f32 %v4628, %v4708
      %v4725 = vadd.f32 %v4629, %v4709
      %v4726 = vadd.f32 %v4630, %v4710
      %v4727 = vadd.f32 %v4631, %v4711
      %v4728 = vadd.f32 %v4632, %v4712
      %v4729 = vadd.f32 %v4633, %v4713
      %v4730 = vadd.f32 %v4634, %v4714
      %v4731 = vadd.f32 %v4635, %v4715
      %v4732 = vadd.f32 %v4636, %v4716
      %v4733 = vadd.f32 %v4637, %v4717
      %v4734 = vadd.f32 %v4638, %v4718
      %v4735 = vadd.f32 %v4639, %v4719
      %v4736 = vld [vmem:[%s3246 + $0x1] sm:$0xff]
      %v4737 = vld [vmem:[%s3246 + $0x11] sm:$0xff]
      %v4738 = vld [vmem:[%s3246 + $0x21] sm:$0xff]
      %v4739 = vld [vmem:[%s3246 + $0x31] sm:$0xff]
      %v4740 = vld [vmem:[%s3246 + $0x41] sm:$0xff]
      %v4741 = vld [vmem:[%s3246 + $0x51] sm:$0xff]
      %v4742 = vld [vmem:[%s3246 + $0x61] sm:$0xff]
      %v4743 = vld [vmem:[%s3246 + $0x71] sm:$0xff]
      %v4744 = vld [vmem:[%s3246 + $0x81] sm:$0xff]
      %v4745 = vld [vmem:[%s3246 + $0x91] sm:$0xff]
      %v4746 = vld [vmem:[%s3246 + $0xa1] sm:$0xff]
      %v4747 = vld [vmem:[%s3246 + $0xb1] sm:$0xff]
      %v4748 = vld [vmem:[%s3246 + $0xc1] sm:$0xff]
      %v4749 = vld [vmem:[%s3246 + $0xd1] sm:$0xff]
      %v4750 = vld [vmem:[%s3246 + $0xe1] sm:$0xff]
      %v4751 = vld [vmem:[%s3246 + $0xf1] sm:$0xff]
      %v4752 = vmul.f32 %v4736, %v3315
      %v4753 = vmul.f32 %v4737, %v3315
      %v4754 = vmul.f32 %v4738, %v3315
      %v4755 = vmul.f32 %v4739, %v3315
      %v4756 = vmul.f32 %v4740, %v3315
      %v4757 = vmul.f32 %v4741, %v3315
      %v4758 = vmul.f32 %v4742, %v3315
      %v4759 = vmul.f32 %v4743, %v3315
      %v4760 = vmul.f32 %v4744, %v3315
      %v4761 = vmul.f32 %v4745, %v3315
      %v4762 = vmul.f32 %v4746, %v3315
      %v4763 = vmul.f32 %v4747, %v3315
      %v4764 = vmul.f32 %v4748, %v3315
      %v4765 = vmul.f32 %v4749, %v3315
      %v4766 = vmul.f32 %v4750, %v3315
      %v4767 = vmul.f32 %v4751, %v3315
      %v4768 = vadd.f32 %v4672, %v4752
      %v4769 = vadd.f32 %v4673, %v4753
      %v4770 = vadd.f32 %v4674, %v4754
      %v4771 = vadd.f32 %v4675, %v4755
      %v4772 = vadd.f32 %v4676, %v4756
      %v4773 = vadd.f32 %v4677, %v4757
      %v4774 = vadd.f32 %v4678, %v4758
      %v4775 = vadd.f32 %v4679, %v4759
      %v4776 = vadd.f32 %v4680, %v4760
      %v4777 = vadd.f32 %v4681, %v4761
      %v4778 = vadd.f32 %v4682, %v4762
      %v4779 = vadd.f32 %v4683, %v4763
      %v4780 = vadd.f32 %v4684, %v4764
      %v4781 = vadd.f32 %v4685, %v4765
      %v4782 = vadd.f32 %v4686, %v4766
      %v4783 = vadd.f32 %v4687, %v4767
      %v4784 = vld [vmem:[%s2623 + $0x2] sm:$0xff]
      %v4785 = vld [vmem:[%s2623 + $0x12] sm:$0xff]
      %v4786 = vld [vmem:[%s2623 + $0x22] sm:$0xff]
      %v4787 = vld [vmem:[%s2623 + $0x32] sm:$0xff]
      %v4788 = vld [vmem:[%s2623 + $0x42] sm:$0xff]
      %v4789 = vld [vmem:[%s2623 + $0x52] sm:$0xff]
      %v4790 = vld [vmem:[%s2623 + $0x62] sm:$0xff]
      %v4791 = vld [vmem:[%s2623 + $0x72] sm:$0xff]
      %v4792 = vld [vmem:[%s2623 + $0x82] sm:$0xff]
      %v4793 = vld [vmem:[%s2623 + $0x92] sm:$0xff]
      %v4794 = vld [vmem:[%s2623 + $0xa2] sm:$0xff]
      %v4795 = vld [vmem:[%s2623 + $0xb2] sm:$0xff]
      %v4796 = vld [vmem:[%s2623 + $0xc2] sm:$0xff]
      %v4797 = vld [vmem:[%s2623 + $0xd2] sm:$0xff]
      %v4798 = vld [vmem:[%s2623 + $0xe2] sm:$0xff]
      %v4799 = vld [vmem:[%s2623 + $0xf2] sm:$0xff]
      %v4800 = vmul.f32 %v4784, %v3366
      %v4801 = vmul.f32 %v4785, %v3366
      %v4802 = vmul.f32 %v4786, %v3366
      %v4803 = vmul.f32 %v4787, %v3366
      %v4804 = vmul.f32 %v4788, %v3366
      %v4805 = vmul.f32 %v4789, %v3366
      %v4806 = vmul.f32 %v4790, %v3366
      %v4807 = vmul.f32 %v4791, %v3366
      %v4808 = vmul.f32 %v4792, %v3366
      %v4809 = vmul.f32 %v4793, %v3366
      %v4810 = vmul.f32 %v4794, %v3366
      %v4811 = vmul.f32 %v4795, %v3366
      %v4812 = vmul.f32 %v4796, %v3366
      %v4813 = vmul.f32 %v4797, %v3366
      %v4814 = vmul.f32 %v4798, %v3366
      %v4815 = vmul.f32 %v4799, %v3366
      %v4816 = vadd.f32 %v4720, %v4800
      %v4817 = vadd.f32 %v4721, %v4801
      %v4818 = vadd.f32 %v4722, %v4802
      %v4819 = vadd.f32 %v4723, %v4803
      %v4820 = vadd.f32 %v4724, %v4804
      %v4821 = vadd.f32 %v4725, %v4805
      %v4822 = vadd.f32 %v4726, %v4806
      %v4823 = vadd.f32 %v4727, %v4807
      %v4824 = vadd.f32 %v4728, %v4808
      %v4825 = vadd.f32 %v4729, %v4809
      %v4826 = vadd.f32 %v4730, %v4810
      %v4827 = vadd.f32 %v4731, %v4811
      %v4828 = vadd.f32 %v4732, %v4812
      %v4829 = vadd.f32 %v4733, %v4813
      %v4830 = vadd.f32 %v4734, %v4814
      %v4831 = vadd.f32 %v4735, %v4815
      %v4832 = vld [vmem:[%s3246 + $0x2] sm:$0xff]
      %v4833 = vld [vmem:[%s3246 + $0x12] sm:$0xff]
      %v4834 = vld [vmem:[%s3246 + $0x22] sm:$0xff]
      %v4835 = vld [vmem:[%s3246 + $0x32] sm:$0xff]
      %v4836 = vld [vmem:[%s3246 + $0x42] sm:$0xff]
      %v4837 = vld [vmem:[%s3246 + $0x52] sm:$0xff]
      %v4838 = vld [vmem:[%s3246 + $0x62] sm:$0xff]
      %v4839 = vld [vmem:[%s3246 + $0x72] sm:$0xff]
      %v4840 = vld [vmem:[%s3246 + $0x82] sm:$0xff]
      %v4841 = vld [vmem:[%s3246 + $0x92] sm:$0xff]
      %v4842 = vld [vmem:[%s3246 + $0xa2] sm:$0xff]
      %v4843 = vld [vmem:[%s3246 + $0xb2] sm:$0xff]
      %v4844 = vld [vmem:[%s3246 + $0xc2] sm:$0xff]
      %v4845 = vld [vmem:[%s3246 + $0xd2] sm:$0xff]
      %v4846 = vld [vmem:[%s3246 + $0xe2] sm:$0xff]
      %v4847 = vld [vmem:[%s3246 + $0xf2] sm:$0xff]
      %v4848 = vmul.f32 %v4832, %v3417
      %v4849 = vmul.f32 %v4833, %v3417
      %v4850 = vmul.f32 %v4834, %v3417
      %v4851 = vmul.f32 %v4835, %v3417
      %v4852 = vmul.f32 %v4836, %v3417
      %v4853 = vmul.f32 %v4837, %v3417
      %v4854 = vmul.f32 %v4838, %v3417
      %v4855 = vmul.f32 %v4839, %v3417
      %v4856 = vmul.f32 %v4840, %v3417
      %v4857 = vmul.f32 %v4841, %v3417
      %v4858 = vmul.f32 %v4842, %v3417
      %v4859 = vmul.f32 %v4843, %v3417
      %v4860 = vmul.f32 %v4844, %v3417
      %v4861 = vmul.f32 %v4845, %v3417
      %v4862 = vmul.f32 %v4846, %v3417
      %v4863 = vmul.f32 %v4847, %v3417
      %v4864 = vadd.f32 %v4768, %v4848
      %v4865 = vadd.f32 %v4769, %v4849
      %v4866 = vadd.f32 %v4770, %v4850
      %v4867 = vadd.f32 %v4771, %v4851
      %v4868 = vadd.f32 %v4772, %v4852
      %v4869 = vadd.f32 %v4773, %v4853
      %v4870 = vadd.f32 %v4774, %v4854
      %v4871 = vadd.f32 %v4775, %v4855
      %v4872 = vadd.f32 %v4776, %v4856
      %v4873 = vadd.f32 %v4777, %v4857
      %v4874 = vadd.f32 %v4778, %v4858
      %v4875 = vadd.f32 %v4779, %v4859
      %v4876 = vadd.f32 %v4780, %v4860
      %v4877 = vadd.f32 %v4781, %v4861
      %v4878 = vadd.f32 %v4782, %v4862
      %v4879 = vadd.f32 %v4783, %v4863
      %v4880 = vld [vmem:[%s3503] sm:$0xff]
      %v4881 = vld [vmem:[%s3503 + $0x10] sm:$0xff]
      %v4882 = vld [vmem:[%s3503 + $0x20] sm:$0xff]
      %v4883 = vld [vmem:[%s3503 + $0x30] sm:$0xff]
      %v4884 = vld [vmem:[%s3503 + $0x40] sm:$0xff]
      %v4885 = vld [vmem:[%s3503 + $0x50] sm:$0xff]
      %v4886 = vld [vmem:[%s3503 + $0x60] sm:$0xff]
      %v4887 = vld [vmem:[%s3503 + $0x70] sm:$0xff]
      %v4888 = vld [vmem:[%s3503 + $0x80] sm:$0xff]
      %v4889 = vld [vmem:[%s3503 + $0x90] sm:$0xff]
      %v4890 = vld [vmem:[%s3503 + $0xa0] sm:$0xff]
      %v4891 = vld [vmem:[%s3503 + $0xb0] sm:$0xff]
      %v4892 = vld [vmem:[%s3503 + $0xc0] sm:$0xff]
      %v4893 = vld [vmem:[%s3503 + $0xd0] sm:$0xff]
      %v4894 = vld [vmem:[%s3503 + $0xe0] sm:$0xff]
      %v4895 = vld [vmem:[%s3503 + $0xf0] sm:$0xff]
      %v4896 = vmul.f32 %v4880, %v3469
      %v4897 = vmul.f32 %v4881, %v3469
      %v4898 = vmul.f32 %v4882, %v3469
      %v4899 = vmul.f32 %v4883, %v3469
      %v4900 = vmul.f32 %v4884, %v3469
      %v4901 = vmul.f32 %v4885, %v3469
      %v4902 = vmul.f32 %v4886, %v3469
      %v4903 = vmul.f32 %v4887, %v3469
      %v4904 = vmul.f32 %v4888, %v3469
      %v4905 = vmul.f32 %v4889, %v3469
      %v4906 = vmul.f32 %v4890, %v3469
      %v4907 = vmul.f32 %v4891, %v3469
      %v4908 = vmul.f32 %v4892, %v3469
      %v4909 = vmul.f32 %v4893, %v3469
      %v4910 = vmul.f32 %v4894, %v3469
      %v4911 = vmul.f32 %v4895, %v3469
      %v4912 = vadd.f32 %v4816, %v4896
      %v4913 = vadd.f32 %v4817, %v4897
      %v4914 = vadd.f32 %v4818, %v4898
      %v4915 = vadd.f32 %v4819, %v4899
      %v4916 = vadd.f32 %v4820, %v4900
      %v4917 = vadd.f32 %v4821, %v4901
      %v4918 = vadd.f32 %v4822, %v4902
      %v4919 = vadd.f32 %v4823, %v4903
      %v4920 = vadd.f32 %v4824, %v4904
      %v4921 = vadd.f32 %v4825, %v4905
      %v4922 = vadd.f32 %v4826, %v4906
      %v4923 = vadd.f32 %v4827, %v4907
      %v4924 = vadd.f32 %v4828, %v4908
      %v4925 = vadd.f32 %v4829, %v4909
      %v4926 = vadd.f32 %v4830, %v4910
      %v4927 = vadd.f32 %v4831, %v4911
      %v4928 = vld [vmem:[%s3451 + $0x1] sm:$0xff]
      %v4929 = vld [vmem:[%s3451 + $0x11] sm:$0xff]
      %v4930 = vld [vmem:[%s3451 + $0x21] sm:$0xff]
      %v4931 = vld [vmem:[%s3451 + $0x31] sm:$0xff]
      %v4932 = vld [vmem:[%s3451 + $0x41] sm:$0xff]
      %v4933 = vld [vmem:[%s3451 + $0x51] sm:$0xff]
      %v4934 = vld [vmem:[%s3451 + $0x61] sm:$0xff]
      %v4935 = vld [vmem:[%s3451 + $0x71] sm:$0xff]
      %v4936 = vld [vmem:[%s3451 + $0x81] sm:$0xff]
      %v4937 = vld [vmem:[%s3451 + $0x91] sm:$0xff]
      %v4938 = vld [vmem:[%s3451 + $0xa1] sm:$0xff]
      %v4939 = vld [vmem:[%s3451 + $0xb1] sm:$0xff]
      %v4940 = vld [vmem:[%s3451 + $0xc1] sm:$0xff]
      %v4941 = vld [vmem:[%s3451 + $0xd1] sm:$0xff]
      %v4942 = vld [vmem:[%s3451 + $0xe1] sm:$0xff]
      %v4943 = vld [vmem:[%s3451 + $0xf1] sm:$0xff]
      %v4944 = vmul.f32 %v4928, %v3521
      %v4945 = vmul.f32 %v4929, %v3521
      %v4946 = vmul.f32 %v4930, %v3521
      %v4947 = vmul.f32 %v4931, %v3521
      %v4948 = vmul.f32 %v4932, %v3521
      %v4949 = vmul.f32 %v4933, %v3521
      %v4950 = vmul.f32 %v4934, %v3521
      %v4951 = vmul.f32 %v4935, %v3521
      %v4952 = vmul.f32 %v4936, %v3521
      %v4953 = vmul.f32 %v4937, %v3521
      %v4954 = vmul.f32 %v4938, %v3521
      %v4955 = vmul.f32 %v4939, %v3521
      %v4956 = vmul.f32 %v4940, %v3521
      %v4957 = vmul.f32 %v4941, %v3521
      %v4958 = vmul.f32 %v4942, %v3521
      %v4959 = vmul.f32 %v4943, %v3521
      %v4960 = vadd.f32 %v4864, %v4944
      %v4961 = vadd.f32 %v4865, %v4945
      %v4962 = vadd.f32 %v4866, %v4946
      %v4963 = vadd.f32 %v4867, %v4947
      %v4964 = vadd.f32 %v4868, %v4948
      %v4965 = vadd.f32 %v4869, %v4949
      %v4966 = vadd.f32 %v4870, %v4950
      %v4967 = vadd.f32 %v4871, %v4951
      %v4968 = vadd.f32 %v4872, %v4952
      %v4969 = vadd.f32 %v4873, %v4953
      %v4970 = vadd.f32 %v4874, %v4954
      %v4971 = vadd.f32 %v4875, %v4955
      %v4972 = vadd.f32 %v4876, %v4956
      %v4973 = vadd.f32 %v4877, %v4957
      %v4974 = vadd.f32 %v4878, %v4958
      %v4975 = vadd.f32 %v4879, %v4959
      %v4976 = vld [vmem:[%s3503 + $0x1] sm:$0xff]
      %v4977 = vld [vmem:[%s3503 + $0x11] sm:$0xff]
      %v4978 = vld [vmem:[%s3503 + $0x21] sm:$0xff]
      %v4979 = vld [vmem:[%s3503 + $0x31] sm:$0xff]
      %v4980 = vld [vmem:[%s3503 + $0x41] sm:$0xff]
      %v4981 = vld [vmem:[%s3503 + $0x51] sm:$0xff]
      %v4982 = vld [vmem:[%s3503 + $0x61] sm:$0xff]
      %v4983 = vld [vmem:[%s3503 + $0x71] sm:$0xff]
      %v4984 = vld [vmem:[%s3503 + $0x81] sm:$0xff]
      %v4985 = vld [vmem:[%s3503 + $0x91] sm:$0xff]
      %v4986 = vld [vmem:[%s3503 + $0xa1] sm:$0xff]
      %v4987 = vld [vmem:[%s3503 + $0xb1] sm:$0xff]
      %v4988 = vld [vmem:[%s3503 + $0xc1] sm:$0xff]
      %v4989 = vld [vmem:[%s3503 + $0xd1] sm:$0xff]
      %v4990 = vld [vmem:[%s3503 + $0xe1] sm:$0xff]
      %v4991 = vld [vmem:[%s3503 + $0xf1] sm:$0xff]
      %v4992 = vmul.f32 %v4976, %v3572
      %v4993 = vmul.f32 %v4977, %v3572
      %v4994 = vmul.f32 %v4978, %v3572
      %v4995 = vmul.f32 %v4979, %v3572
      %v4996 = vmul.f32 %v4980, %v3572
      %v4997 = vmul.f32 %v4981, %v3572
      %v4998 = vmul.f32 %v4982, %v3572
      %v4999 = vmul.f32 %v4983, %v3572
      %v5000 = vmul.f32 %v4984, %v3572
      %v5001 = vmul.f32 %v4985, %v3572
      %v5002 = vmul.f32 %v4986, %v3572
      %v5003 = vmul.f32 %v4987, %v3572
      %v5004 = vmul.f32 %v4988, %v3572
      %v5005 = vmul.f32 %v4989, %v3572
      %v5006 = vmul.f32 %v4990, %v3572
      %v5007 = vmul.f32 %v4991, %v3572
      %v5008 = vadd.f32 %v4912, %v4992
      %v5009 = vadd.f32 %v4913, %v4993
      %v5010 = vadd.f32 %v4914, %v4994
      %v5011 = vadd.f32 %v4915, %v4995
      %v5012 = vadd.f32 %v4916, %v4996
      %v5013 = vadd.f32 %v4917, %v4997
      %v5014 = vadd.f32 %v4918, %v4998
      %v5015 = vadd.f32 %v4919, %v4999
      %v5016 = vadd.f32 %v4920, %v5000
      %v5017 = vadd.f32 %v4921, %v5001
      %v5018 = vadd.f32 %v4922, %v5002
      %v5019 = vadd.f32 %v4923, %v5003
      %v5020 = vadd.f32 %v4924, %v5004
      %v5021 = vadd.f32 %v4925, %v5005
      %v5022 = vadd.f32 %v4926, %v5006
      %v5023 = vadd.f32 %v4927, %v5007
      %v5024 = vld [vmem:[%s3451 + $0x2] sm:$0xff]
      %v5025 = vld [vmem:[%s3451 + $0x12] sm:$0xff]
      %v5026 = vld [vmem:[%s3451 + $0x22] sm:$0xff]
      %v5027 = vld [vmem:[%s3451 + $0x32] sm:$0xff]
      %v5028 = vld [vmem:[%s3451 + $0x42] sm:$0xff]
      %v5029 = vld [vmem:[%s3451 + $0x52] sm:$0xff]
      %v5030 = vld [vmem:[%s3451 + $0x62] sm:$0xff]
      %v5031 = vld [vmem:[%s3451 + $0x72] sm:$0xff]
      %v5032 = vld [vmem:[%s3451 + $0x82] sm:$0xff]
      %v5033 = vld [vmem:[%s3451 + $0x92] sm:$0xff]
      %v5034 = vld [vmem:[%s3451 + $0xa2] sm:$0xff]
      %v5035 = vld [vmem:[%s3451 + $0xb2] sm:$0xff]
      %v5036 = vld [vmem:[%s3451 + $0xc2] sm:$0xff]
      %v5037 = vld [vmem:[%s3451 + $0xd2] sm:$0xff]
      %v5038 = vld [vmem:[%s3451 + $0xe2] sm:$0xff]
      %v5039 = vld [vmem:[%s3451 + $0xf2] sm:$0xff]
      %v5040 = vmul.f32 %v5024, %v3623
      %v5041 = vmul.f32 %v5025, %v3623
      %v5042 = vmul.f32 %v5026, %v3623
      %v5043 = vmul.f32 %v5027, %v3623
      %v5044 = vmul.f32 %v5028, %v3623
      %v5045 = vmul.f32 %v5029, %v3623
      %v5046 = vmul.f32 %v5030, %v3623
      %v5047 = vmul.f32 %v5031, %v3623
      %v5048 = vmul.f32 %v5032, %v3623
      %v5049 = vmul.f32 %v5033, %v3623
      %v5050 = vmul.f32 %v5034, %v3623
      %v5051 = vmul.f32 %v5035, %v3623
      %v5052 = vmul.f32 %v5036, %v3623
      %v5053 = vmul.f32 %v5037, %v3623
      %v5054 = vmul.f32 %v5038, %v3623
      %v5055 = vmul.f32 %v5039, %v3623
      %v5056 = vadd.f32 %v4960, %v5040
      %v5057 = vadd.f32 %v4961, %v5041
      %v5058 = vadd.f32 %v4962, %v5042
      %v5059 = vadd.f32 %v4963, %v5043
      %v5060 = vadd.f32 %v4964, %v5044
      %v5061 = vadd.f32 %v4965, %v5045
      %v5062 = vadd.f32 %v4966, %v5046
      %v5063 = vadd.f32 %v4967, %v5047
      %v5064 = vadd.f32 %v4968, %v5048
      %v5065 = vadd.f32 %v4969, %v5049
      %v5066 = vadd.f32 %v4970, %v5050
      %v5067 = vadd.f32 %v4971, %v5051
      %v5068 = vadd.f32 %v4972, %v5052
      %v5069 = vadd.f32 %v4973, %v5053
      %v5070 = vadd.f32 %v4974, %v5054
      %v5071 = vadd.f32 %v4975, %v5055
      %v5072 = vld [vmem:[%s3503 + $0x2] sm:$0xff]
      %v5073 = vld [vmem:[%s3503 + $0x12] sm:$0xff]
      %v5074 = vld [vmem:[%s3503 + $0x22] sm:$0xff]
      %v5075 = vld [vmem:[%s3503 + $0x32] sm:$0xff]
      %v5076 = vld [vmem:[%s3503 + $0x42] sm:$0xff]
      %v5077 = vld [vmem:[%s3503 + $0x52] sm:$0xff]
      %v5078 = vld [vmem:[%s3503 + $0x62] sm:$0xff]
      %v5079 = vld [vmem:[%s3503 + $0x72] sm:$0xff]
      %v5080 = vld [vmem:[%s3503 + $0x82] sm:$0xff]
      %v5081 = vld [vmem:[%s3503 + $0x92] sm:$0xff]
      %v5082 = vld [vmem:[%s3503 + $0xa2] sm:$0xff]
      %v5083 = vld [vmem:[%s3503 + $0xb2] sm:$0xff]
      %v5084 = vld [vmem:[%s3503 + $0xc2] sm:$0xff]
      %v5085 = vld [vmem:[%s3503 + $0xd2] sm:$0xff]
      %v5086 = vld [vmem:[%s3503 + $0xe2] sm:$0xff]
      %v5087 = vld [vmem:[%s3503 + $0xf2] sm:$0xff]
      %v5088 = vmul.f32 %v5072, %v3674
      %v5089 = vmul.f32 %v5073, %v3674
      %v5090 = vmul.f32 %v5074, %v3674
      %v5091 = vmul.f32 %v5075, %v3674
      %v5092 = vmul.f32 %v5076, %v3674
      %v5093 = vmul.f32 %v5077, %v3674
      %v5094 = vmul.f32 %v5078, %v3674
      %v5095 = vmul.f32 %v5079, %v3674
      %v5096 = vmul.f32 %v5080, %v3674
      %v5097 = vmul.f32 %v5081, %v3674
      %v5098 = vmul.f32 %v5082, %v3674
      %v5099 = vmul.f32 %v5083, %v3674
      %v5100 = vmul.f32 %v5084, %v3674
      %v5101 = vmul.f32 %v5085, %v3674
      %v5102 = vmul.f32 %v5086, %v3674
      %v5103 = vmul.f32 %v5087, %v3674
      %v5104 = vadd.f32 %v5008, %v5088
      %v5105 = vadd.f32 %v5009, %v5089
      %v5106 = vadd.f32 %v5010, %v5090
      %v5107 = vadd.f32 %v5011, %v5091
      %v5108 = vadd.f32 %v5012, %v5092
      %v5109 = vadd.f32 %v5013, %v5093
      %v5110 = vadd.f32 %v5014, %v5094
      %v5111 = vadd.f32 %v5015, %v5095
      %v5112 = vadd.f32 %v5016, %v5096
      %v5113 = vadd.f32 %v5017, %v5097
      %v5114 = vadd.f32 %v5018, %v5098
      %v5115 = vadd.f32 %v5019, %v5099
      %v5116 = vadd.f32 %v5020, %v5100
      %v5117 = vadd.f32 %v5021, %v5101
      %v5118 = vadd.f32 %v5022, %v5102
      %v5119 = vadd.f32 %v5023, %v5103
      %v5120 = vld [vmem:[%s3760] sm:$0xff]
      %v5121 = vld [vmem:[%s3760 + $0x10] sm:$0xff]
      %v5122 = vld [vmem:[%s3760 + $0x20] sm:$0xff]
      %v5123 = vld [vmem:[%s3760 + $0x30] sm:$0xff]
      %v5124 = vld [vmem:[%s3760 + $0x40] sm:$0xff]
      %v5125 = vld [vmem:[%s3760 + $0x50] sm:$0xff]
      %v5126 = vld [vmem:[%s3760 + $0x60] sm:$0xff]
      %v5127 = vld [vmem:[%s3760 + $0x70] sm:$0xff]
      %v5128 = vld [vmem:[%s3760 + $0x80] sm:$0xff]
      %v5129 = vld [vmem:[%s3760 + $0x90] sm:$0xff]
      %v5130 = vld [vmem:[%s3760 + $0xa0] sm:$0xff]
      %v5131 = vld [vmem:[%s3760 + $0xb0] sm:$0xff]
      %v5132 = vld [vmem:[%s3760 + $0xc0] sm:$0xff]
      %v5133 = vld [vmem:[%s3760 + $0xd0] sm:$0xff]
      %v5134 = vld [vmem:[%s3760 + $0xe0] sm:$0xff]
      %v5135 = vld [vmem:[%s3760 + $0xf0] sm:$0xff]
      %v5136 = vmul.f32 %v5120, %v3726
      %v5137 = vmul.f32 %v5121, %v3726
      %v5138 = vmul.f32 %v5122, %v3726
      %v5139 = vmul.f32 %v5123, %v3726
      %v5140 = vmul.f32 %v5124, %v3726
      %v5141 = vmul.f32 %v5125, %v3726
      %v5142 = vmul.f32 %v5126, %v3726
      %v5143 = vmul.f32 %v5127, %v3726
      %v5144 = vmul.f32 %v5128, %v3726
      %v5145 = vmul.f32 %v5129, %v3726
      %v5146 = vmul.f32 %v5130, %v3726
      %v5147 = vmul.f32 %v5131, %v3726
      %v5148 = vmul.f32 %v5132, %v3726
      %v5149 = vmul.f32 %v5133, %v3726
      %v5150 = vmul.f32 %v5134, %v3726
      %v5151 = vmul.f32 %v5135, %v3726
      %v5152 = vadd.f32 %v5056, %v5136
      %v5153 = vadd.f32 %v5057, %v5137
      %v5154 = vadd.f32 %v5058, %v5138
      %v5155 = vadd.f32 %v5059, %v5139
      %v5156 = vadd.f32 %v5060, %v5140
      %v5157 = vadd.f32 %v5061, %v5141
      %v5158 = vadd.f32 %v5062, %v5142
      %v5159 = vadd.f32 %v5063, %v5143
      %v5160 = vadd.f32 %v5064, %v5144
      %v5161 = vadd.f32 %v5065, %v5145
      %v5162 = vadd.f32 %v5066, %v5146
      %v5163 = vadd.f32 %v5067, %v5147
      %v5164 = vadd.f32 %v5068, %v5148
      %v5165 = vadd.f32 %v5069, %v5149
      %v5166 = vadd.f32 %v5070, %v5150
      %v5167 = vadd.f32 %v5071, %v5151
      %v5168 = vld [vmem:[%s3708 + $0x1] sm:$0xff]
      %v5169 = vld [vmem:[%s3708 + $0x11] sm:$0xff]
      %v5170 = vld [vmem:[%s3708 + $0x21] sm:$0xff]
      %v5171 = vld [vmem:[%s3708 + $0x31] sm:$0xff]
      %v5172 = vld [vmem:[%s3708 + $0x41] sm:$0xff]
      %v5173 = vld [vmem:[%s3708 + $0x51] sm:$0xff]
      %v5174 = vld [vmem:[%s3708 + $0x61] sm:$0xff]
      %v5175 = vld [vmem:[%s3708 + $0x71] sm:$0xff]
      %v5176 = vld [vmem:[%s3708 + $0x81] sm:$0xff]
      %v5177 = vld [vmem:[%s3708 + $0x91] sm:$0xff]
      %v5178 = vld [vmem:[%s3708 + $0xa1] sm:$0xff]
      %v5179 = vld [vmem:[%s3708 + $0xb1] sm:$0xff]
      %v5180 = vld [vmem:[%s3708 + $0xc1] sm:$0xff]
      %v5181 = vld [vmem:[%s3708 + $0xd1] sm:$0xff]
      %v5182 = vld [vmem:[%s3708 + $0xe1] sm:$0xff]
      %v5183 = vld [vmem:[%s3708 + $0xf1] sm:$0xff]
      %v5184 = vmul.f32 %v5168, %v3778
      %v5185 = vmul.f32 %v5169, %v3778
      %v5186 = vmul.f32 %v5170, %v3778
      %v5187 = vmul.f32 %v5171, %v3778
      %v5188 = vmul.f32 %v5172, %v3778
      %v5189 = vmul.f32 %v5173, %v3778
      %v5190 = vmul.f32 %v5174, %v3778
      %v5191 = vmul.f32 %v5175, %v3778
      %v5192 = vmul.f32 %v5176, %v3778
      %v5193 = vmul.f32 %v5177, %v3778
      %v5194 = vmul.f32 %v5178, %v3778
      %v5195 = vmul.f32 %v5179, %v3778
      %v5196 = vmul.f32 %v5180, %v3778
      %v5197 = vmul.f32 %v5181, %v3778
      %v5198 = vmul.f32 %v5182, %v3778
      %v5199 = vmul.f32 %v5183, %v3778
      %v5200 = vadd.f32 %v5104, %v5184
      %v5201 = vadd.f32 %v5105, %v5185
      %v5202 = vadd.f32 %v5106, %v5186
      %v5203 = vadd.f32 %v5107, %v5187
      %v5204 = vadd.f32 %v5108, %v5188
      %v5205 = vadd.f32 %v5109, %v5189
      %v5206 = vadd.f32 %v5110, %v5190
      %v5207 = vadd.f32 %v5111, %v5191
      %v5208 = vadd.f32 %v5112, %v5192
      %v5209 = vadd.f32 %v5113, %v5193
      %v5210 = vadd.f32 %v5114, %v5194
      %v5211 = vadd.f32 %v5115, %v5195
      %v5212 = vadd.f32 %v5116, %v5196
      %v5213 = vadd.f32 %v5117, %v5197
      %v5214 = vadd.f32 %v5118, %v5198
      %v5215 = vadd.f32 %v5119, %v5199
      %v5216 = vld [vmem:[%s3760 + $0x1] sm:$0xff]
      %v5217 = vld [vmem:[%s3760 + $0x11] sm:$0xff]
      %v5218 = vld [vmem:[%s3760 + $0x21] sm:$0xff]
      %v5219 = vld [vmem:[%s3760 + $0x31] sm:$0xff]
      %v5220 = vld [vmem:[%s3760 + $0x41] sm:$0xff]
      %v5221 = vld [vmem:[%s3760 + $0x51] sm:$0xff]
      %v5222 = vld [vmem:[%s3760 + $0x61] sm:$0xff]
      %v5223 = vld [vmem:[%s3760 + $0x71] sm:$0xff]
      %v5224 = vld [vmem:[%s3760 + $0x81] sm:$0xff]
      %v5225 = vld [vmem:[%s3760 + $0x91] sm:$0xff]
      %v5226 = vld [vmem:[%s3760 + $0xa1] sm:$0xff]
      %v5227 = vld [vmem:[%s3760 + $0xb1] sm:$0xff]
      %v5228 = vld [vmem:[%s3760 + $0xc1] sm:$0xff]
      %v5229 = vld [vmem:[%s3760 + $0xd1] sm:$0xff]
      %v5230 = vld [vmem:[%s3760 + $0xe1] sm:$0xff]
      %v5231 = vld [vmem:[%s3760 + $0xf1] sm:$0xff]
      %v5232 = vmul.f32 %v5216, %v3829
      %v5233 = vmul.f32 %v5217, %v3829
      %v5234 = vmul.f32 %v5218, %v3829
      %v5235 = vmul.f32 %v5219, %v3829
      %v5236 = vmul.f32 %v5220, %v3829
      %v5237 = vmul.f32 %v5221, %v3829
      %v5238 = vmul.f32 %v5222, %v3829
      %v5239 = vmul.f32 %v5223, %v3829
      %v5240 = vmul.f32 %v5224, %v3829
      %v5241 = vmul.f32 %v5225, %v3829
      %v5242 = vmul.f32 %v5226, %v3829
      %v5243 = vmul.f32 %v5227, %v3829
      %v5244 = vmul.f32 %v5228, %v3829
      %v5245 = vmul.f32 %v5229, %v3829
      %v5246 = vmul.f32 %v5230, %v3829
      %v5247 = vmul.f32 %v5231, %v3829
      %v5248 = vadd.f32 %v5152, %v5232
      %v5249 = vadd.f32 %v5153, %v5233
      %v5250 = vadd.f32 %v5154, %v5234
      %v5251 = vadd.f32 %v5155, %v5235
      %v5252 = vadd.f32 %v5156, %v5236
      %v5253 = vadd.f32 %v5157, %v5237
      %v5254 = vadd.f32 %v5158, %v5238
      %v5255 = vadd.f32 %v5159, %v5239
      %v5256 = vadd.f32 %v5160, %v5240
      %v5257 = vadd.f32 %v5161, %v5241
      %v5258 = vadd.f32 %v5162, %v5242
      %v5259 = vadd.f32 %v5163, %v5243
      %v5260 = vadd.f32 %v5164, %v5244
      %v5261 = vadd.f32 %v5165, %v5245
      %v5262 = vadd.f32 %v5166, %v5246
      %v5263 = vadd.f32 %v5167, %v5247
      %v5264 = vld [vmem:[%s3708 + $0x2] sm:$0xff]
      %v5265 = vld [vmem:[%s3708 + $0x12] sm:$0xff]
      %v5266 = vld [vmem:[%s3708 + $0x22] sm:$0xff]
      %v5267 = vld [vmem:[%s3708 + $0x32] sm:$0xff]
      %v5268 = vld [vmem:[%s3708 + $0x42] sm:$0xff]
      %v5269 = vld [vmem:[%s3708 + $0x52] sm:$0xff]
      %v5270 = vld [vmem:[%s3708 + $0x62] sm:$0xff]
      %v5271 = vld [vmem:[%s3708 + $0x72] sm:$0xff]
      %v5272 = vld [vmem:[%s3708 + $0x82] sm:$0xff]
      %v5273 = vld [vmem:[%s3708 + $0x92] sm:$0xff]
      %v5274 = vld [vmem:[%s3708 + $0xa2] sm:$0xff]
      %v5275 = vld [vmem:[%s3708 + $0xb2] sm:$0xff]
      %v5276 = vld [vmem:[%s3708 + $0xc2] sm:$0xff]
      %v5277 = vld [vmem:[%s3708 + $0xd2] sm:$0xff]
      %v5278 = vld [vmem:[%s3708 + $0xe2] sm:$0xff]
      %v5279 = vld [vmem:[%s3708 + $0xf2] sm:$0xff]
      %v5280 = vmul.f32 %v5264, %v3880
      %v5281 = vmul.f32 %v5265, %v3880
      %v5282 = vmul.f32 %v5266, %v3880
      %v5283 = vmul.f32 %v5267, %v3880
      %v5284 = vmul.f32 %v5268, %v3880
      %v5285 = vmul.f32 %v5269, %v3880
      %v5286 = vmul.f32 %v5270, %v3880
      %v5287 = vmul.f32 %v5271, %v3880
      %v5288 = vmul.f32 %v5272, %v3880
      %v5289 = vmul.f32 %v5273, %v3880
      %v5290 = vmul.f32 %v5274, %v3880
      %v5291 = vmul.f32 %v5275, %v3880
      %v5292 = vmul.f32 %v5276, %v3880
      %v5293 = vmul.f32 %v5277, %v3880
      %v5294 = vmul.f32 %v5278, %v3880
      %v5295 = vmul.f32 %v5279, %v3880
      %v5296 = vadd.f32 %v5200, %v5280
      %v5297 = vadd.f32 %v5201, %v5281
      %v5298 = vadd.f32 %v5202, %v5282
      %v5299 = vadd.f32 %v5203, %v5283
      %v5300 = vadd.f32 %v5204, %v5284
      %v5301 = vadd.f32 %v5205, %v5285
      %v5302 = vadd.f32 %v5206, %v5286
      %v5303 = vadd.f32 %v5207, %v5287
      %v5304 = vadd.f32 %v5208, %v5288
      %v5305 = vadd.f32 %v5209, %v5289
      %v5306 = vadd.f32 %v5210, %v5290
      %v5307 = vadd.f32 %v5211, %v5291
      %v5308 = vadd.f32 %v5212, %v5292
      %v5309 = vadd.f32 %v5213, %v5293
      %v5310 = vadd.f32 %v5214, %v5294
      %v5311 = vadd.f32 %v5215, %v5295
      %v5312 = vld [vmem:[%s3760 + $0x2] sm:$0xff]
      %v5313 = vld [vmem:[%s3760 + $0x12] sm:$0xff]
      %v5314 = vld [vmem:[%s3760 + $0x22] sm:$0xff]
      %v5315 = vld [vmem:[%s3760 + $0x32] sm:$0xff]
      %v5316 = vld [vmem:[%s3760 + $0x42] sm:$0xff]
      %v5317 = vld [vmem:[%s3760 + $0x52] sm:$0xff]
      %v5318 = vld [vmem:[%s3760 + $0x62] sm:$0xff]
      %v5319 = vld [vmem:[%s3760 + $0x72] sm:$0xff]
      %v5320 = vld [vmem:[%s3760 + $0x82] sm:$0xff]
      %v5321 = vld [vmem:[%s3760 + $0x92] sm:$0xff]
      %v5322 = vld [vmem:[%s3760 + $0xa2] sm:$0xff]
      %v5323 = vld [vmem:[%s3760 + $0xb2] sm:$0xff]
      %v5324 = vld [vmem:[%s3760 + $0xc2] sm:$0xff]
      %v5325 = vld [vmem:[%s3760 + $0xd2] sm:$0xff]
      %v5326 = vld [vmem:[%s3760 + $0xe2] sm:$0xff]
      %v5327 = vld [vmem:[%s3760 + $0xf2] sm:$0xff]
      %v5328 = vmul.f32 %v5312, %v3931
      %v5329 = vmul.f32 %v5313, %v3931
      %v5330 = vmul.f32 %v5314, %v3931
      %v5331 = vmul.f32 %v5315, %v3931
      %v5332 = vmul.f32 %v5316, %v3931
      %v5333 = vmul.f32 %v5317, %v3931
      %v5334 = vmul.f32 %v5318, %v3931
      %v5335 = vmul.f32 %v5319, %v3931
      %v5336 = vmul.f32 %v5320, %v3931
      %v5337 = vmul.f32 %v5321, %v3931
      %v5338 = vmul.f32 %v5322, %v3931
      %v5339 = vmul.f32 %v5323, %v3931
      %v5340 = vmul.f32 %v5324, %v3931
      %v5341 = vmul.f32 %v5325, %v3931
      %v5342 = vmul.f32 %v5326, %v3931
      %v5343 = vmul.f32 %v5327, %v3931
      %v5344 = vadd.f32 %v5248, %v5328
      %v5345 = vadd.f32 %v5249, %v5329
      %v5346 = vadd.f32 %v5250, %v5330
      %v5347 = vadd.f32 %v5251, %v5331
      %v5348 = vadd.f32 %v5252, %v5332
      %v5349 = vadd.f32 %v5253, %v5333
      %v5350 = vadd.f32 %v5254, %v5334
      %v5351 = vadd.f32 %v5255, %v5335
      %v5352 = vadd.f32 %v5256, %v5336
      %v5353 = vadd.f32 %v5257, %v5337
      %v5354 = vadd.f32 %v5258, %v5338
      %v5355 = vadd.f32 %v5259, %v5339
      %v5356 = vadd.f32 %v5260, %v5340
      %v5357 = vadd.f32 %v5261, %v5341
      %v5358 = vadd.f32 %v5262, %v5342
      %v5359 = vadd.f32 %v5263, %v5343
      %v5360 = vadd.f32 %v5344, %v5296
      %v5361 = vadd.f32 %v5345, %v5297
      %v5362 = vadd.f32 %v5346, %v5298
      %v5363 = vadd.f32 %v5347, %v5299
      %v5364 = vadd.f32 %v5348, %v5300
      %v5365 = vadd.f32 %v5349, %v5301
      %v5366 = vadd.f32 %v5350, %v5302
      %v5367 = vadd.f32 %v5351, %v5303
      %v5368 = vadd.f32 %v5352, %v5304
      %v5369 = vadd.f32 %v5353, %v5305
      %v5370 = vadd.f32 %v5354, %v5306
      %v5371 = vadd.f32 %v5355, %v5307
      %v5372 = vadd.f32 %v5356, %v5308
      %v5373 = vadd.f32 %v5357, %v5309
      %v5374 = vadd.f32 %v5358, %v5310
      %v5375 = vadd.f32 %v5359, %v5311
      %v5376 = vadd.f32 %v5360, %v3982
      %v5377 = vadd.f32 %v5361, %v3982
      %v5378 = vadd.f32 %v5362, %v3982
      %v5379 = vadd.f32 %v5363, %v3982
      %v5380 = vadd.f32 %v5364, %v3982
      %v5381 = vadd.f32 %v5365, %v3982
      %v5382 = vadd.f32 %v5366, %v3982
      %v5383 = vadd.f32 %v5367, %v3982
      %v5384 = vadd.f32 %v5368, %v3982
      %v5385 = vadd.f32 %v5369, %v3982
      %v5386 = vadd.f32 %v5370, %v3982
      %v5387 = vadd.f32 %v5371, %v3982
      %v5388 = vadd.f32 %v5372, %v3982
      %v5389 = vadd.f32 %v5373, %v3982
      %v5390 = vadd.f32 %v5374, %v3982
      %v5391 = vadd.f32 %v5375, %v3982
      %v5392 = vmul.f32 %v4736, %v1227
      %v5393 = vmul.f32 %v4737, %v1227
      %v5394 = vmul.f32 %v4738, %v1242
      %v5395 = vmul.f32 %v4739, %v1242
      %v5396 = vmul.f32 %v4740, %v1257
      %v5397 = vmul.f32 %v4741, %v1257
      %v5398 = vmul.f32 %v4742, %v1272
      %v5399 = vmul.f32 %v4743, %v1272
      %v5400 = vmul.f32 %v4744, %v1287
      %v5401 = vmul.f32 %v4745, %v1287
      %v5402 = vmul.f32 %v4746, %v1302
      %v5403 = vmul.f32 %v4747, %v1302
      %v5404 = vmul.f32 %v4748, %v1317
      %v5405 = vmul.f32 %v4749, %v1317
      %v5406 = vmul.f32 %v4750, %v1332
      %v5407 = vmul.f32 %v4751, %v1332
      %v5408 = vmul.f32 %v5376, %v4025
      %v5409 = vmul.f32 %v5377, %v4025
      %v5410 = vmul.f32 %v5378, %v4027
      %v5411 = vmul.f32 %v5379, %v4027
      %v5412 = vmul.f32 %v5380, %v4029
      %v5413 = vmul.f32 %v5381, %v4029
      %v5414 = vmul.f32 %v5382, %v4031
      %v5415 = vmul.f32 %v5383, %v4031
      %v5416 = vmul.f32 %v5384, %v4033
      %v5417 = vmul.f32 %v5385, %v4033
      %v5418 = vmul.f32 %v5386, %v4035
      %v5419 = vmul.f32 %v5387, %v4035
      %v5420 = vmul.f32 %v5388, %v4037
      %v5421 = vmul.f32 %v5389, %v4037
      %v5422 = vmul.f32 %v5390, %v4039
      %v5423 = vmul.f32 %v5391, %v4039
      %5440 = vrot.lane.b32.xlu0 %v5408, 4
      %v5441 = vpop.permute.xlu0 %5440
      %5442 = vrot.lane.b32.xlu0 %v5409, 4
      %v5443 = vpop.permute.xlu0 %5442
      %5444 = vrot.lane.b32.xlu0 %v5410, 4
      %v5445 = vpop.permute.xlu0 %5444
      %5446 = vrot.lane.b32.xlu0 %v5411, 4
      %v5447 = vpop.permute.xlu0 %5446
      %5448 = vrot.lane.b32.xlu0 %v5412, 4
      %v5449 = vpop.permute.xlu0 %5448
      %5450 = vrot.lane.b32.xlu0 %v5413, 4
      %v5451 = vpop.permute.xlu0 %5450
      %5452 = vrot.lane.b32.xlu0 %v5414, 4
      %v5453 = vpop.permute.xlu0 %5452
      %5454 = vrot.lane.b32.xlu0 %v5415, 4
      %v5455 = vpop.permute.xlu0 %5454
      %5456 = vrot.lane.b32.xlu0 %v5416, 4
      %v5457 = vpop.permute.xlu0 %5456
      %5458 = vrot.lane.b32.xlu0 %v5417, 4
      %v5459 = vpop.permute.xlu0 %5458
      %5460 = vrot.lane.b32.xlu0 %v5418, 4
      %v5461 = vpop.permute.xlu0 %5460
      %5462 = vrot.lane.b32.xlu0 %v5419, 4
      %v5463 = vpop.permute.xlu0 %5462
      %5464 = vrot.lane.b32.xlu0 %v5420, 4
      %v5465 = vpop.permute.xlu0 %5464
      %5466 = vrot.lane.b32.xlu0 %v5421, 4
      %v5467 = vpop.permute.xlu0 %5466
      %5468 = vrot.lane.b32.xlu0 %v5422, 4
      %v5469 = vpop.permute.xlu0 %5468
      %5470 = vrot.lane.b32.xlu0 %v5423, 4
      %v5471 = vpop.permute.xlu0 %5470
      %v5488 = vsel %vm2541, %v5392, %v5441
      %v5489 = vsel %vm2541, %v5393, %v5443
      %v5490 = vsel %vm2541, %v5394, %v5445
      %v5491 = vsel %vm2541, %v5395, %v5447
      %v5492 = vsel %vm2541, %v5396, %v5449
      %v5493 = vsel %vm2541, %v5397, %v5451
      %v5494 = vsel %vm2541, %v5398, %v5453
      %v5495 = vsel %vm2541, %v5399, %v5455
      %v5496 = vsel %vm2541, %v5400, %v5457
      %v5497 = vsel %vm2541, %v5401, %v5459
      %v5498 = vsel %vm2541, %v5402, %v5461
      %v5499 = vsel %vm2541, %v5403, %v5463
      %v5500 = vsel %vm2541, %v5404, %v5465
      %v5501 = vsel %vm2541, %v5405, %v5467
      %v5502 = vsel %vm2541, %v5406, %v5469
      %v5503 = vsel %vm2541, %v5407, %v5471
      %s5504 = scalar_lea.vmem %s386, 128
      %5505 = vst.msk [vmem:[%s5504] sm:$0xff] %vm456, %v5488
      %5506 = vst.msk [vmem:[%s5504 + $0x8] sm:$0xff] %vm456, %v5489
      %5507 = vst.msk [vmem:[%s5504 + $0x10] sm:$0xff] %vm456, %v5490
      %5508 = vst.msk [vmem:[%s5504 + $0x18] sm:$0xff] %vm456, %v5491
      %5509 = vst.msk [vmem:[%s5504 + $0x20] sm:$0xff] %vm456, %v5492
      %5510 = vst.msk [vmem:[%s5504 + $0x28] sm:$0xff] %vm456, %v5493
      %5511 = vst.msk [vmem:[%s5504 + $0x30] sm:$0xff] %vm456, %v5494
      %5512 = vst.msk [vmem:[%s5504 + $0x38] sm:$0xff] %vm456, %v5495
      %5513 = vst.msk [vmem:[%s5504 + $0x40] sm:$0xff] %vm456, %v5496
      %5514 = vst.msk [vmem:[%s5504 + $0x48] sm:$0xff] %vm456, %v5497
      %5515 = vst.msk [vmem:[%s5504 + $0x50] sm:$0xff] %vm456, %v5498
      %5516 = vst.msk [vmem:[%s5504 + $0x58] sm:$0xff] %vm456, %v5499
      %5517 = vst.msk [vmem:[%s5504 + $0x60] sm:$0xff] %vm456, %v5500
      %5518 = vst.msk [vmem:[%s5504 + $0x68] sm:$0xff] %vm456, %v5501
      %5519 = vst.msk [vmem:[%s5504 + $0x70] sm:$0xff] %vm456, %v5502
      %5520 = vst.msk [vmem:[%s5504 + $0x78] sm:$0xff] %vm456, %v5503
      %p5521 = scmp.lt.s32.totalorder %s22, 1
      %s5522 = scalar_select %p5521, %s22, 1
      %s5523 = smul.addr %s5522, 32
      %s5524 = smul.addr %s5523, 8
      %s5525 = scalar_lea.vmem %s11, %s5524
      // Predicated region
      $region65: #{tpu_custom_call.1} parent=63 // pred_check
        %p5526 = pneg %p276
      $region66: #{tpu_custom_call.1} parent=63 // pred_check_branch
        %5528 = sbr.rel (%p5526) target = $region68
      $region67: #{tpu_custom_call.1} parent=63 // pred_region
        _
      $region68: #{tpu_custom_call.1} parent=63 // pred_fallthru
        _
    $region64: #{tpu_custom_call.1} parent=5 // pred_fallthru
      _
    %p5529 = scmp.le.s32.totalorder 2, %s17
    // Predicated region
    $region69: #{tpu_custom_call.1} parent=5 // pred_check
      %p5530 = pneg %p5529
    $region70: #{tpu_custom_call.1} parent=5 // pred_check_branch
      %5532 = sbr.rel (%p5530) target = $region72
    $region71: #{tpu_custom_call.1} parent=5 // pred_region
      %s5533 = ssub.s32 %s17, 2
      // Predicated region
      $region73: #{tpu_custom_call.1} parent=71 // pred_check
        %p5534 = pneg %p282
      $region74: #{tpu_custom_call.1} parent=71 // pred_check_branch
        %5536 = sbr.rel (%p5534) target = $region76
      $region75: #{tpu_custom_call.1} parent=71 // pred_region
        %p5537 = scmp.lt.s32.totalorder %s23, 1
        %s5538 = scalar_select %p5537, %s23, 1
        %s5539 = smul.addr %s5538, 32
        %s5540 = smul.addr %s5539, 8
        %s5541 = scalar_lea.vmem %s11, %s5540
      $region76: #{tpu_custom_call.1} parent=71 // pred_fallthru
        _
    $region72: #{tpu_custom_call.1} parent=5 // pred_fallthru
      _
  $region6: #{tpu_custom_call.1} parent=0 // loop_footer
    %s21 = sadd.s32 1, %s17
  $region7: #{tpu_custom_call.1} parent=0 // loop_footer_branch
    %16 = sbr.rel target = $region3
  $region8: #{tpu_custom_call.1} parent=0 // loop_exit
    _

</llo_original>
